<compile_context>
chip_gen: v7x
topology: tpu7x:2x2x1
jax: 0.10.0
libtpu: 0.0.40
codegen_flags: <defaults>
</compile_context>

<pallas_src>
import functools
import math

import numpy as np
import jax
import jax.numpy as jnp
from jax.experimental import pallas as pl
from jax.experimental.pallas import tpu as pltpu

# ---------------- small (architecture-faithful) Swinv2 config ----------------
IMAGE_SIZE = 32
PATCH_SIZE = 4
NUM_CHANNELS = 3
EMBED_DIM = 32
DEPTHS = (2, 2)
NUM_HEADS = (2, 4)
WINDOW_SIZE = 4
MLP_RATIO = 2.0
QKV_BIAS = True
LAYER_NORM_EPS = 1e-5
CPB_HIDDEN = 512          # hard-coded in HF Swinv2 continuous-position-bias MLP
ENCODE_TYPE = "patch"


# ================================ in-kernel helpers ================================
def _ln_rows(x, g, b, eps):
    """LayerNorm over the last axis.  x:(rows,C) f32, g/b:(1,C)."""
    mean = jnp.mean(x, axis=-1, keepdims=True)
    xc = x - mean
    var = jnp.mean(xc * xc, axis=-1, keepdims=True)
    return xc * jax.lax.rsqrt(var + eps) * g + b


def _erf_poly(x):
    """Abramowitz&Stegun 7.1.26 erf approximation, |err| < 1.5e-7 (lax.erf has no Mosaic rule)."""
    a1, a2, a3, a4, a5 = 0.254829592, -0.284496736, 1.421413741, -1.453152027, 1.061405429
    p = 0.3275911
    sgn = jnp.where(x < 0.0, -1.0, 1.0)
    ax = jnp.abs(x)
    t = 1.0 / (1.0 + p * ax)
    poly = ((((a5 * t + a4) * t + a3) * t + a2) * t + a1) * t
    return sgn * (1.0 - poly * jnp.exp(-ax * ax))


def _gelu_exact(x):
    # exact GELU (hidden_act='gelu'), via high-accuracy erf polynomial
    return 0.5 * x * (1.0 + _erf_poly(x * 0.7071067811865476))


# ================================ Pallas kernels ================================
def _linear_ln_kernel(x_ref, w_ref, b_ref, g_ref, beta_ref, o_ref, *, eps):
    acc = jnp.dot(x_ref[...].astype(w_ref.dtype), w_ref[...],
                  preferred_element_type=jnp.float32) + b_ref[...]
    o_ref[...] = _ln_rows(acc, g_ref[...], beta_ref[...], eps).astype(o_ref.dtype)


def _linear_ln_nobias_kernel(x_ref, w_ref, g_ref, beta_ref, o_ref, *, eps):
    acc = jnp.dot(x_ref[...].astype(w_ref.dtype), w_ref[...],
                  preferred_element_type=jnp.float32)
    o_ref[...] = _ln_rows(acc, g_ref[...], beta_ref[...], eps).astype(o_ref.dtype)


def _layernorm_kernel(x_ref, g_ref, b_ref, o_ref, *, eps):
    o_ref[...] = _ln_rows(x_ref[...].astype(jnp.float32),
                          g_ref[...], b_ref[...], eps).astype(o_ref.dtype)


def _swin_block_kernel(x_ref, qkv_w_ref, qkv_b_ref, o_w_ref, o_b_ref,
                       scale_ref, bias_ref,
                       ln1_g_ref, ln1_b_ref, fc1_w_ref, fc1_b_ref,
                       fc2_w_ref, fc2_b_ref, ln2_g_ref, ln2_b_ref,
                       o_ref, *, windows, seq, heads, head_dim, eps):
    """One fused Swinv2 block over ALL `windows` windows of the whole batch (single grid step).

    x_ref: (rows, C) bf16, rows = windows*seq.  Everything stays in VMEM/vregs.
    """
    C = heads * head_dim
    R = windows * seq
    HW = heads * windows

    x_lp = x_ref[...]                                # (R, C) bf16 -> matmul operand
    x = x_lp.astype(jnp.float32)                     # residual shortcut (same token permutation)

    # ---- fused QKV projection: single (R,C)@(C,3C) bf16 MXU matmul, f32 accumulate ----
    qkv = jnp.dot(x_lp, qkv_w_ref[...], preferred_element_type=jnp.float32) + qkv_b_ref[...]

    # heads-major batched layout (heads*windows, seq, d): leading-dim stack/reshape only,
    # the lane dim stays head_dim so no lane relayout is needed.
    def gather_heads(base):
        parts = [qkv[:, base + h * head_dim: base + (h + 1) * head_dim] for h in range(heads)]
        return jnp.stack(parts, axis=0).reshape(HW, seq, head_dim)

    q = gather_heads(0)
    k = gather_heads(C)
    v = gather_heads(2 * C)

    # ---- cosine attention (torch.nn.functional.normalize, eps=1e-12) ----
    qn = q * jax.lax.rsqrt(jnp.maximum(jnp.sum(q * q, axis=-1, keepdims=True), 1e-24))
    kn = k * jax.lax.rsqrt(jnp.maximum(jnp.sum(k * k, axis=-1, keepdims=True), 1e-24))
    qn = qn * scale_ref[...]                         # clamped logit scale folded into q

    s = jnp.einsum("bnd,bmd->bnm", qn.astype(jnp.bfloat16), kn.astype(jnp.bfloat16),
                   preferred_element_type=jnp.float32)
    s = s + bias_ref[...]                            # rel-pos bias (+ shift mask), pre-tiled
    s = s - jnp.max(s, axis=-1, keepdims=True)       # keep: logits can reach ~116 pre-shift
    p = jnp.exp(s)
    p = p * pl.reciprocal(jnp.sum(p, axis=-1, keepdims=True), approx=True)

    ctx = jnp.einsum("bnm,bmd->bnd", p.astype(jnp.bfloat16), v.astype(jnp.bfloat16),
                     preferred_element_type=jnp.float32)

    # concat heads back onto lanes -> single K=C output projection
    ctx = ctx.reshape(heads, R, head_dim)
    ctx_full = jnp.concatenate([ctx[h] for h in range(heads)], axis=-1)      # (R, C)
    attn = jnp.dot(ctx_full.astype(jnp.bfloat16), o_w_ref[...],
                   preferred_element_type=jnp.float32) + o_b_ref[...]

    # ---- Swinv2 residual-post-norm + MLP (f32 element-wise, bf16 matmul operands) ----
    hidden = x + _ln_rows(attn, ln1_g_ref[...], ln1_b_ref[...], eps)
    m = jnp.dot(hidden.astype(jnp.bfloat16), fc1_w_ref[...],
                preferred_element_type=jnp.float32) + fc1_b_ref[...]
    m = _gelu_exact(m)
    m = jnp.dot(m.astype(jnp.bfloat16), fc2_w_ref[...],
                preferred_element_type=jnp.float32) + fc2_b_ref[...]
    out = hidden + _ln_rows(m, ln2_g_ref[...], ln2_b_ref[...], eps)

    o_ref[...] = out.astype(o_ref.dtype)


# ================================ kernel wrappers ================================
def _full_spec(shape):
    nd = len(shape)
    return pl.BlockSpec(tuple(int(d) for d in shape), lambda *_: (0,) * nd)


def linear_ln(x2, w, b, g, beta, eps=LAYER_NORM_EPS, out_dtype=None):
    """LayerNorm(x2 @ w (+ b)) in one single-step kernel.  x2:(R,K), w:(K,N)."""
    R, K = x2.shape
    N = w.shape[1]
    out_dtype = out_dtype if out_dtype is not None else x2.dtype
    if b is None:
        kern = functools.partial(_linear_ln_nobias_kernel, eps=eps)
        args = (x2, w, g.reshape(1, N), beta.reshape(1, N))
    else:
        kern = functools.partial(_linear_ln_kernel, eps=eps)
        args = (x2, w, b.reshape(1, N), g.reshape(1, N), beta.reshape(1, N))
    bytes_acc = sum(int(np.prod(a.shape)) * a.dtype.itemsize for a in args)
    bytes_acc += R * N * jnp.dtype(out_dtype).itemsize
    return pl.pallas_call(
        kern, grid=(1,),
        in_specs=[_full_spec(a.shape) for a in args],
        out_specs=_full_spec((R, N)),
        out_shape=jax.ShapeDtypeStruct((R, N), out_dtype),
        cost_estimate=pl.CostEstimate(flops=int(2 * R * K * N), transcendentals=int(R),
                                      bytes_accessed=int(bytes_acc)),
        compiler_params=pltpu.CompilerParams(dimension_semantics=("arbitrary",)),
    )(*args)


def layernorm(x, g, b, eps=LAYER_NORM_EPS, out_dtype=None):
    shape = x.shape
    C = shape[-1]
    x2 = x.reshape(-1, C)
    R = x2.shape[0]
    out_dtype = out_dtype if out_dtype is not None else x.dtype
    bytes_acc = R * C * (x2.dtype.itemsize + jnp.dtype(out_dtype).itemsize) + 2 * C * 4
    out = pl.pallas_call(
        functools.partial(_layernorm_kernel, eps=eps),
        grid=(1,),
        in_specs=[_full_spec((R, C)), _full_spec((1, C)), _full_spec((1, C))],
        out_specs=_full_spec((R, C)),
        out_shape=jax.ShapeDtypeStruct((R, C), out_dtype),
        cost_estimate=pl.CostEstimate(flops=int(8 * R * C), transcendentals=int(R),
                                      bytes_accessed=int(bytes_acc)),
        compiler_params=pltpu.CompilerParams(dimension_semantics=("arbitrary",)),
    )(x2, g.reshape(1, C), b.reshape(1, C))
    return out.reshape(shape)


def swin_block_pallas(p, x_flat, B, nW, N):
    """x_flat: (B*nW*N, C) window-partitioned tokens -> fused Swin block output (same shape)."""
    R, C = x_flat.shape
    heads = p["scale"].shape[0]
    d = C // heads
    M = p["fc1_w"].shape[1]
    windows = B * nW
    HW = heads * windows

    # Pre-tile the per-(head, window) logit scale and rel-pos bias (+ shift mask) to the
    # heads-major batch layout used inside the kernel.  Tiny tensors; pure XLA glue.
    bias = jnp.broadcast_to(p["bias"], (heads, nW, N, N))
    bias = jnp.broadcast_to(bias[:, None], (heads, B, nW, N, N)).reshape(HW, N, N)
    scale = jnp.broadcast_to(p["scale"].reshape(heads, 1, 1, 1),
                             (heads, windows, 1, 1)).reshape(HW, 1, 1)

    kern = functools.partial(_swin_block_kernel, windows=windows, seq=N, heads=heads,
                             head_dim=d, eps=LAYER_NORM_EPS)

    args = (x_flat, p["qkv_w"], p["qkv_b"], p["o_w"], p["o_b"], scale, bias,
            p["ln1_g"], p["ln1_b"], p["fc1_w"], p["fc1_b"],
            p["fc2_w"], p["fc2_b"], p["ln2_g"], p["ln2_b"])

    flops = (2 * R * C * 3 * C          # qkv projection
             + 2 * 2 * HW * N * N * d   # QK^T + PV
             + 2 * R * C * C            # output projection
             + 2 * R * C * M            # fc1
             + 2 * R * M * C)           # fc2
    trans = HW * N * N + R * M + HW * N
    bytes_acc = sum(int(np.prod(a.shape)) * a.dtype.itemsize for a in args)
    bytes_acc += R * C * jnp.dtype(x_flat.dtype).itemsize

    return pl.pallas_call(
        kern, grid=(1,),
        in_specs=[_full_spec(a.shape) for a in args],
        out_specs=_full_spec((R, C)),
        out_shape=jax.ShapeDtypeStruct((R, C), x_flat.dtype),
        cost_estimate=pl.CostEstimate(flops=int(flops), transcendentals=int(trans),
                                      bytes_accessed=int(bytes_acc)),
        compiler_params=pltpu.CompilerParams(dimension_semantics=("arbitrary",)),
    )(*args)


# ================================ JAX glue (layout plumbing) ================================
def window_partition(x, ws):
    B, H, W, C = x.shape
    x = x.reshape(B, H // ws, ws, W // ws, ws, C)
    return x.transpose(0, 1, 3, 2, 4, 5).reshape(-1, ws, ws, C)


def window_reverse(windows, ws, H, W):
    C = windows.shape[-1]
    x = windows.reshape(-1, H // ws, W // ws, ws, ws, C)
    return x.transpose(0, 1, 3, 2, 4, 5).reshape(-1, H, W, C)


def relative_coords_table_np(ws):
    rh = np.arange(-(ws - 1), ws, dtype=np.float32)
    rw = np.arange(-(ws - 1), ws, dtype=np.float32)
    table = np.stack(np.meshgrid(rh, rw, indexing="ij"), axis=-1)   # (2ws-1, 2ws-1, 2)
    if ws > 1:
        table = table / (ws - 1)
    table = table * 8.0
    table = np.sign(table) * np.log2(np.abs(table) + 1.0) / np.log2(8.0)
    return table.reshape(-1, 2).astype(np.float32)


def relative_position_index_np(ws):
    coords = np.stack(np.meshgrid(np.arange(ws), np.arange(ws), indexing="ij"))
    coords_flat = coords.reshape(2, -1)
    rel = coords_flat[:, :, None] - coords_flat[:, None, :]
    rel = rel.transpose(1, 2, 0).astype(np.int64)
    rel[:, :, 0] += ws - 1
    rel[:, :, 1] += ws - 1
    rel[:, :, 0] *= 2 * ws - 1
    return rel.sum(-1).reshape(-1)


def get_attn_mask_np(height, width, ws, ss):
    if ss <= 0:
        return None
    img_mask = np.zeros((1, height, width, 1), dtype=np.float32)
    slices = (slice(0, -ws), slice(-ws, -ss), slice(-ss, None))
    cnt = 0
    for h in slices:
        for w in slices:
            img_mask[:, h, w, :] = cnt
            cnt += 1
    mw = img_mask.reshape(1, height // ws, ws, width // ws, ws, 1)
    mw = mw.transpose(0, 1, 3, 2, 4, 5).reshape(-1, ws * ws)
    diff = mw[:, None, :] - mw[:, :, None]
    return np.where(diff != 0, -100.0, 0.0).astype(np.float32)


# ================================ Swinv2 modules ================================
def swinv2_block(p, hidden, dims):
    Hd, Wd = dims
    B, L, C = hidden.shape
    N = p["bias"].shape[-1]
    ws = int(math.isqrt(N))
    # shifted blocks carry a per-window (mask-folded) bias (nW > 1); unshifted carry (heads,1,N,N)
    ss = ws // 2 if p["bias"].shape[1] > 1 else 0

    x = hidden.reshape(B, Hd, Wd, C)
    pad_r = (ws - Wd % ws) % ws
    pad_b = (ws - Hd % ws) % ws
    if pad_r or pad_b:      # statically skipped for this config
        x = jnp.pad(x, ((0, 0), (0, pad_b), (0, pad_r), (0, 0)))
    Hp, Wp = Hd + pad_b, Wd + pad_r
    if ss > 0:
        x = jnp.roll(x, (-ss, -ss), axis=(1, 2))
    nW = (Hp // ws) * (Wp // ws)
    if nW == 1:
        x_win = x.reshape(B, N, C)                       # partition is a pure reshape
    else:
        x_win = window_partition(x, ws).reshape(B * nW, N, C)
    x_flat = x_win.reshape(B * nW * N, C)

    # fused block: the partitioned input is also the residual shortcut (same token permutation)
    out = swin_block_pallas(p, x_flat, B, nW, N)

    if nW == 1:
        x = out.reshape(B, Hp, Wp, C)
    else:
        x = window_reverse(out.reshape(B * nW, ws, ws, C), ws, Hp, Wp)
    if ss > 0:
        x = jnp.roll(x, (ss, ss), axis=(1, 2))
    if pad_r or pad_b:
        x = x[:, :Hd, :Wd, :]
    return x.reshape(B, Hd * Wd, C)


def patch_merging(p, x, dims):
    Hd, Wd = dims
    B, L, C = x.shape
    x = x.reshape(B, Hd, Wd, C)
    if (Hd % 2 == 1) or (Wd % 2 == 1):
        x = jnp.pad(x, ((0, 0), (0, Hd % 2), (0, Wd % 2), (0, 0)))
    x0 = x[:, 0::2, 0::2, :]
    x1 = x[:, 1::2, 0::2, :]
    x2 = x[:, 0::2, 1::2, :]
    x3 = x[:, 1::2, 1::2, :]
    cat = jnp.concatenate([x0, x1, x2, x3], axis=-1)
    flat = cat.reshape(-1, 4 * C)
    out = linear_ln(flat, p["red_w"], None, p["norm_g"], p["norm_b"],
                    out_dtype=jnp.bfloat16)              # reduction (no bias) + norm
    return out.reshape(B, -1, 2 * C)


def embed_patches(p, pixel_values):
    B, C, H, W = pixel_values.shape
    ps = PATCH_SIZE
    pad_w = (ps - W % ps) % ps
    pad_h = (ps - H % ps) % ps
    x = pixel_values
    if pad_h or pad_w:
        x = jnp.pad(x, ((0, 0), (0, 0), (0, pad_h), (0, pad_w)))
    Hp, Wp = H + pad_h, W + pad_w
    gh, gw = Hp // ps, Wp // ps
    # Conv2d(kernel=stride=patch) == per-patch matmul over (C, ph, pw)-ordered patch vectors
    patches = x.reshape(B, C, gh, ps, gw, ps).transpose(0, 2, 4, 1, 3, 5)
    patches = patches.reshape(B * gh * gw, C * ps * ps)
    emb = linear_ln(patches, p["proj_w"], p["proj_b"], p["norm_g"], p["norm_b"],
                    out_dtype=jnp.bfloat16)
    return emb.reshape(B, gh * gw, -1), (gh, gw)


def swinv2_forward(plan, pixel_values, encode_type=ENCODE_TYPE):
    hidden, (Hd, Wd) = embed_patches(plan["embeddings"], pixel_values)
    for stage in plan["stages"]:
        for blk in stage["blocks"]:
            hidden = swinv2_block(blk, hidden, (Hd, Wd))
        if "downsample" in stage:
            hidden = patch_merging(stage["downsample"], hidden, (Hd, Wd))
            Hd, Wd = (Hd + 1) // 2, (Wd + 1) // 2
    hidden = layernorm(hidden, plan["final_ln_g"], plan["final_ln_b"],
                       out_dtype=jnp.float32)
    if encode_type == "patch":
        return hidden                               # last_hidden_state
    pooled = jnp.mean(hidden, axis=1)               # AdaptiveAvgPool1d(1) over tokens
    return pooled[:, None, :]                       # pooler_output.unsqueeze(1)


# ================================ parameter precompute (once, off hot path) ================================
def prepare_params(params):
    """Derive kernel-ready tensors: fused QKV weights (bf16), rel-pos bias (CPB MLP + 16*sigmoid)
    with the shifted-window mask folded in, and the clamped/exp'ed logit scale."""
    bf = lambda t: t.astype(jnp.bfloat16)
    emb = params["embeddings"]
    plan = {"embeddings": dict(proj_w=bf(emb["proj_w"]), proj_b=emb["proj_b"],
                               norm_g=emb["norm_g"], norm_b=emb["norm_b"]),
            "final_ln_g": params["final_ln_g"], "final_ln_b": params["final_ln_b"],
            "stages": []}
    for s, stage in enumerate(params["stages"]):
        grid = IMAGE_SIZE // PATCH_SIZE
        res = (grid // (2 ** s), grid // (2 ** s))
        heads = NUM_HEADS[s]
        dim = EMBED_DIM * (2 ** s)
        blocks = []
        for blk in stage["blocks"]:
            ws, ss = blk["window_size"], blk["shift_size"]
            N = ws * ws
            a = blk["attn"]
            q_b = a["q_b"] if a["q_b"] is not None else jnp.zeros((dim,), jnp.float32)
            v_b = a["v_b"] if a["v_b"] is not None else jnp.zeros((dim,), jnp.float32)
            qkv_w = jnp.concatenate([a["q_w"], a["k_w"], a["v_w"]], axis=1)
            qkv_b = jnp.concatenate([q_b, jnp.zeros((dim,), jnp.float32), v_b])  # key has no bias
            # continuous relative position bias
            table = jnp.asarray(relative_coords_table_np(ws))
            hdn = jax.nn.relu(table @ a["cpb_w1"] + a["cpb_b1"])
            bias_table = hdn @ a["cpb_w2"]                                  # ((2ws-1)^2, H)
            idx = relative_position_index_np(ws)
            rel_bias = bias_table[idx].reshape(N, N, heads).transpose(2, 0, 1)
            rel_bias = 16.0 * jax.nn.sigmoid(rel_bias)                      # (heads, N, N)
            if ss > 0:
                Hp = math.ceil(res[0] / ws) * ws
                Wp = math.ceil(res[1] / ws) * ws
                mask = jnp.asarray(get_attn_mask_np(Hp, Wp, ws, ss))        # (nW, N, N)
                bias = rel_bias[:, None, :, :] + mask[None, :, :, :]        # (heads, nW, N, N)
            else:
                bias = rel_bias[:, None, :, :]                              # (heads, 1, N, N)
            scale = jnp.exp(jnp.minimum(a["logit_scale"], math.log(1.0 / 0.01))).reshape(heads)
            bp = dict(qkv_w=bf(qkv_w), qkv_b=qkv_b.reshape(1, 3 * dim),
                      o_w=bf(a["o_w"]), o_b=a["o_b"].reshape(1, dim),
                      scale=scale, bias=bias,
                      ln1_g=blk["ln1_g"].reshape(1, dim), ln1_b=blk["ln1_b"].reshape(1, dim),
                      fc1_w=bf(blk["fc1_w"]), fc1_b=blk["fc1_b"].reshape(1, -1),
                      fc2_w=bf(blk["fc2_w"]), fc2_b=blk["fc2_b"].reshape(1, dim),
                      ln2_g=blk["ln2_g"].reshape(1, dim), ln2_b=blk["ln2_b"].reshape(1, dim))
            blocks.append(bp)
        st = {"blocks": blocks}
        if "downsample" in stage:
            ds = stage["downsample"]
            st["downsample"] = dict(red_w=bf(ds["red_w"]),
                                    norm_g=ds["norm_g"], norm_b=ds["norm_b"])
        plan["stages"].append(st)
    return plan


# ================================ deterministic parameter init ================================
def init_params(key):
    counter = [0]

    def nxt():
        counter[0] += 1
        return jax.random.fold_in(key, counter[0])

    def nrm(shape):
        return jax.random.normal(nxt(), shape, jnp.float32) * 0.02

    zeros = lambda s: jnp.zeros(s, jnp.float32)
    ones = lambda s: jnp.ones(s, jnp.float32)

    params = {}
    patch_dim = NUM_CHANNELS * PATCH_SIZE * PATCH_SIZE
    params["embeddings"] = dict(
        proj_w=nrm((patch_dim, EMBED_DIM)), proj_b=nrm((EMBED_DIM,)),
        norm_g=ones((EMBED_DIM,)), norm_b=zeros((EMBED_DIM,)))

    grid = (IMAGE_SIZE // PATCH_SIZE, IMAGE_SIZE // PATCH_SIZE)
    num_stages = len(DEPTHS)
    stages = []
    for s in range(num_stages):
        dim = EMBED_DIM * (2 ** s)
        heads = NUM_HEADS[s]
        res = (grid[0] // (2 ** s), grid[1] // (2 ** s))
        mlp_dim = int(MLP_RATIO * dim)
        blocks = []
        for i in range(DEPTHS[s]):
            target_shift = 0 if i % 2 == 0 else WINDOW_SIZE // 2
            ws = res[0] if res[0] <= WINDOW_SIZE else WINDOW_SIZE
            ss = 0 if res[0] <= ws else target_shift
            attn = dict(
                logit_scale=jnp.full((heads, 1, 1), math.log(10.0), jnp.float32),
                cpb_w1=nrm((2, CPB_HIDDEN)), cpb_b1=nrm((CPB_HIDDEN,)),
                cpb_w2=nrm((CPB_HIDDEN, heads)),
                q_w=nrm((dim, dim)), q_b=nrm((dim,)) if QKV_BIAS else None,
                k_w=nrm((dim, dim)),                              # key has no bias in Swinv2
                v_w=nrm((dim, dim)), v_b=nrm((dim,)) if QKV_BIAS else None,
                o_w=nrm((dim, dim)), o_b=nrm((dim,)),
            )
            blocks.append(dict(
                window_size=ws, shift_size=ss, attn=attn,
                ln1_g=ones((dim,)), ln1_b=zeros((dim,)),
                fc1_w=nrm((dim, mlp_dim)), fc1_b=nrm((mlp_dim,)),
                fc2_w=nrm((mlp_dim, dim)), fc2_b=nrm((dim,)),
                ln2_g=ones((dim,)), ln2_b=zeros((dim,)),
            ))
        stage = dict(blocks=blocks)
        if s < num_stages - 1:
            stage["downsample"] = dict(
                red_w=nrm((4 * dim, 2 * dim)),
                norm_g=ones((2 * dim,)), norm_b=zeros((2 * dim,)))
        stages.append(stage)
    params["stages"] = stages

    final_dim = EMBED_DIM * (2 ** (num_stages - 1))
    params["final_ln_g"] = ones((final_dim,))
    params["final_ln_b"] = zeros((final_dim,))
    return params


# ================================ main ================================
if __name__ == "__main__":
    key = jax.random.PRNGKey(0)
    pkey, xkey = jax.random.split(key)
    params = init_params(pkey)
    plan = prepare_params(params)          # parameter-only precompute, off the forward hot path
    x = jax.random.normal(xkey, (2, NUM_CHANNELS, IMAGE_SIZE, IMAGE_SIZE), jnp.float32)

    fwd = jax.jit(swinv2_forward, static_argnames=("encode_type",))
    out = fwd(plan, x, encode_type="patch")
    out = jax.block_until_ready(out)

    final_tokens = (IMAGE_SIZE // PATCH_SIZE // 2) ** 2
    final_dim = EMBED_DIM * 2 ** (len(DEPTHS) - 1)
    assert out.shape == (2, final_tokens, final_dim), out.shape
    assert bool(jnp.all(jnp.isfinite(out)))
    print("KERNEL_OK")
</pallas_src>

<mosaic_0001>
module attributes {stable_mosaic.version = 11 : i64} {
  func.func @_linear_ln_kernel(%arg0: i32, %arg1: memref<128x48xf32, #tpu.memory_space<vmem>>, %arg2: memref<48x32xbf16, #tpu.memory_space<vmem>>, %arg3: memref<1x32xf32, #tpu.memory_space<vmem>>, %arg4: memref<1x32xf32, #tpu.memory_space<vmem>>, %arg5: memref<1x32xf32, #tpu.memory_space<vmem>>, %arg6: memref<128x32xbf16, #tpu.memory_space<vmem>>) attributes {dimension_semantics = [#tpu.dimension_semantics<arbitrary>], iteration_bounds = array<i64: 1>, scalar_prefetch = 0 : i64, scratch_operands = 0 : i64, tpu.core_type = #tpu.core_type<tc>, window_params = [{pipeline_mode = #tpu.pipeline_mode<synchronous>, transform_indices = @transform_0, window_bounds = array<i64: 128, 48>}, {pipeline_mode = #tpu.pipeline_mode<synchronous>, transform_indices = @transform_1, window_bounds = array<i64: 48, 32>}, {pipeline_mode = #tpu.pipeline_mode<synchronous>, transform_indices = @transform_2, window_bounds = array<i64: 1, 32>}, {pipeline_mode = #tpu.pipeline_mode<synchronous>, transform_indices = @transform_3, window_bounds = array<i64: 1, 32>}, {pipeline_mode = #tpu.pipeline_mode<synchronous>, transform_indices = @transform_4, window_bounds = array<i64: 1, 32>}, {pipeline_mode = #tpu.pipeline_mode<synchronous>, transform_indices = @transform_5, window_bounds = array<i64: 128, 32>}]} {
    %c0 = arith.constant 0 : index
    %c0_0 = arith.constant 0 : index
    %0 = vector.load %arg1[%c0, %c0_0] : memref<128x48xf32, #tpu.memory_space<vmem>>, vector<128x48xf32>
    %1 = arith.truncf %0 : vector<128x48xf32> to vector<128x48xbf16>
    %c0_1 = arith.constant 0 : index
    %c0_2 = arith.constant 0 : index
    %2 = vector.load %arg2[%c0_1, %c0_2] : memref<48x32xbf16, #tpu.memory_space<vmem>>, vector<48x32xbf16>
    %cst = arith.constant dense<0.000000e+00> : vector<128x32xf32>
    %3 = tpu.matmul %1, %2, %cst {dimension_numbers = #tpu.dot_dimension_numbers<[1], [0], [0], [1], [0, 0, 1, 1], [], []>} : vector<128x48xbf16>, vector<48x32xbf16>, vector<128x32xf32> -> vector<128x32xf32>
    %c0_3 = arith.constant 0 : index
    %c0_4 = arith.constant 0 : index
    %4 = vector.load %arg3[%c0_3, %c0_4] : memref<1x32xf32, #tpu.memory_space<vmem>>, vector<1x32xf32>
    %5 = vector.broadcast %4 : vector<1x32xf32> to vector<128x32xf32>
    %6 = arith.addf %3, %5 : vector<128x32xf32>
    %c0_5 = arith.constant 0 : index
    %c0_6 = arith.constant 0 : index
    %7 = vector.load %arg4[%c0_5, %c0_6] : memref<1x32xf32, #tpu.memory_space<vmem>>, vector<1x32xf32>
    %c0_7 = arith.constant 0 : index
    %c0_8 = arith.constant 0 : index
    %8 = vector.load %arg5[%c0_7, %c0_8] : memref<1x32xf32, #tpu.memory_space<vmem>>, vector<1x32xf32>
    %cst_9 = arith.constant dense<0.000000e+00> : vector<128xf32>
    %9 = vector.multi_reduction <add>, %6, %cst_9 [1] : vector<128x32xf32> to vector<128xf32>
    %10 = vector.shape_cast %9 : vector<128xf32> to vector<128x1xf32>
    %cst_10 = arith.constant 3.200000e+01 : f32
    %11 = vector.broadcast %cst_10 : f32 to vector<128x1xf32>
    %12 = arith.divf %10, %11 : vector<128x1xf32>
    %13 = vector.broadcast %12 : vector<128x1xf32> to vector<128x32xf32>
    %14 = arith.subf %6, %13 : vector<128x32xf32>
    %15 = arith.mulf %14, %14 : vector<128x32xf32>
    %cst_11 = arith.constant dense<0.000000e+00> : vector<128xf32>
    %16 = vector.multi_reduction <add>, %15, %cst_11 [1] : vector<128x32xf32> to vector<128xf32>
    %17 = vector.shape_cast %16 : vector<128xf32> to vector<128x1xf32>
    %cst_12 = arith.constant 3.200000e+01 : f32
    %18 = vector.broadcast %cst_12 : f32 to vector<128x1xf32>
    %19 = arith.divf %17, %18 : vector<128x1xf32>
    %cst_13 = arith.constant 9.99999974E-6 : f32
    %20 = vector.broadcast %cst_13 : f32 to vector<128x1xf32>
    %21 = arith.addf %19, %20 : vector<128x1xf32>
    %22 = math.rsqrt %21 : vector<128x1xf32>
    %23 = vector.broadcast %22 : vector<128x1xf32> to vector<128x32xf32>
    %24 = arith.mulf %14, %23 : vector<128x32xf32>
    %25 = vector.broadcast %7 : vector<1x32xf32> to vector<128x32xf32>
    %26 = arith.mulf %24, %25 : vector<128x32xf32>
    %27 = vector.broadcast %8 : vector<1x32xf32> to vector<128x32xf32>
    %28 = arith.addf %26, %27 : vector<128x32xf32>
    %29 = arith.truncf %28 : vector<128x32xf32> to vector<128x32xbf16>
    %c0_14 = arith.constant 0 : index
    %c0_15 = arith.constant 0 : index
    %30 = vector.load %arg6[%c0_14, %c0_15] : memref<128x32xbf16, #tpu.memory_space<vmem>>, vector<128x32xbf16>
    tpu.vector_store %arg6[%c0_14, %c0_15], %29 {strides = array<i32>} : memref<128x32xbf16, #tpu.memory_space<vmem>>, vector<128x32xbf16>,
    return
  }
  func.func @transform_0(%arg0: i32) -> (i32, i32) {
    %c0_i32 = arith.constant 0 : i32
    %c0_i32_0 = arith.constant 0 : i32
    %c0_i32_1 = arith.constant 0 : i32
    return %c0_i32, %c0_i32_0 : i32, i32
  }
  func.func @transform_1(%arg0: i32) -> (i32, i32) {
    %c0_i32 = arith.constant 0 : i32
    %c0_i32_0 = arith.constant 0 : i32
    %c0_i32_1 = arith.constant 0 : i32
    return %c0_i32, %c0_i32_0 : i32, i32
  }
  func.func @transform_2(%arg0: i32) -> (i32, i32) {
    %c0_i32 = arith.constant 0 : i32
    %c0_i32_0 = arith.constant 0 : i32
    %c0_i32_1 = arith.constant 0 : i32
    return %c0_i32, %c0_i32_0 : i32, i32
  }
  func.func @transform_3(%arg0: i32) -> (i32, i32) {
    %c0_i32 = arith.constant 0 : i32
    %c0_i32_0 = arith.constant 0 : i32
    %c0_i32_1 = arith.constant 0 : i32
    return %c0_i32, %c0_i32_0 : i32, i32
  }
  func.func @transform_4(%arg0: i32) -> (i32, i32) {
    %c0_i32 = arith.constant 0 : i32
    %c0_i32_0 = arith.constant 0 : i32
    %c0_i32_1 = arith.constant 0 : i32
    return %c0_i32, %c0_i32_0 : i32, i32
  }
  func.func @transform_5(%arg0: i32) -> (i32, i32) {
    %c0_i32 = arith.constant 0 : i32
    %c0_i32_0 = arith.constant 0 : i32
    %c0_i32_1 = arith.constant 0 : i32
    return %c0_i32, %c0_i32_0 : i32, i32
  }
}

module attributes {stable_mosaic.version = 11 : i64} {
  func.func @_swin_block_kernel(%arg0: i32, %arg1: memref<128x32xbf16, #tpu.memory_space<vmem>>, %arg2: memref<32x96xbf16, #tpu.memory_space<vmem>>, %arg3: memref<1x96xf32, #tpu.memory_space<vmem>>, %arg4: memref<32x32xbf16, #tpu.memory_space<vmem>>, %arg5: memref<1x32xf32, #tpu.memory_space<vmem>>, %arg6: memref<16x1x1xf32, #tpu.memory_space<vmem>>, %arg7: memref<16x16x16xf32, #tpu.memory_space<vmem>>, %arg8: memref<1x32xf32, #tpu.memory_space<vmem>>, %arg9: memref<1x32xf32, #tpu.memory_space<vmem>>, %arg10: memref<32x64xbf16, #tpu.memory_space<vmem>>, %arg11: memref<1x64xf32, #tpu.memory_space<vmem>>, %arg12: memref<64x32xbf16, #tpu.memory_space<vmem>>, %arg13: memref<1x32xf32, #tpu.memory_space<vmem>>, %arg14: memref<1x32xf32, #tpu.memory_space<vmem>>, %arg15: memref<1x32xf32, #tpu.memory_space<vmem>>, %arg16: memref<128x32xbf16, #tpu.memory_space<vmem>>) attributes {dimension_semantics = [#tpu.dimension_semantics<arbitrary>], iteration_bounds = array<i64: 1>, scalar_prefetch = 0 : i64, scratch_operands = 0 : i64, tpu.core_type = #tpu.core_type<tc>, window_params = [{pipeline_mode = #tpu.pipeline_mode<synchronous>, transform_indices = @transform_0, window_bounds = array<i64: 128, 32>}, {pipeline_mode = #tpu.pipeline_mode<synchronous>, transform_indices = @transform_1, window_bounds = array<i64: 32, 96>}, {pipeline_mode = #tpu.pipeline_mode<synchronous>, transform_indices = @transform_2, window_bounds = array<i64: 1, 96>}, {pipeline_mode = #tpu.pipeline_mode<synchronous>, transform_indices = @transform_3, window_bounds = array<i64: 32, 32>}, {pipeline_mode = #tpu.pipeline_mode<synchronous>, transform_indices = @transform_4, window_bounds = array<i64: 1, 32>}, {pipeline_mode = #tpu.pipeline_mode<synchronous>, transform_indices = @transform_5, window_bounds = array<i64: 16, 1, 1>}, {pipeline_mode = #tpu.pipeline_mode<synchronous>, transform_indices = @transform_6, window_bounds = array<i64: 16, 16, 16>}, {pipeline_mode = #tpu.pipeline_mode<synchronous>, transform_indices = @transform_7, window_bounds = array<i64: 1, 32>}, {pipeline_mode = #tpu.pipeline_mode<synchronous>, transform_indices = @transform_8, window_bounds = array<i64: 1, 32>}, {pipeline_mode = #tpu.pipeline_mode<synchronous>, transform_indices = @transform_9, window_bounds = array<i64: 32, 64>}, {pipeline_mode = #tpu.pipeline_mode<synchronous>, transform_indices = @transform_10, window_bounds = array<i64: 1, 64>}, {pipeline_mode = #tpu.pipeline_mode<synchronous>, transform_indices = @transform_11, window_bounds = array<i64: 64, 32>}, {pipeline_mode = #tpu.pipeline_mode<synchronous>, transform_indices = @transform_12, window_bounds = array<i64: 1, 32>}, {pipeline_mode = #tpu.pipeline_mode<synchronous>, transform_indices = @transform_13, window_bounds = array<i64: 1, 32>}, {pipeline_mode = #tpu.pipeline_mode<synchronous>, transform_indices = @transform_14, window_bounds = array<i64: 1, 32>}, {pipeline_mode = #tpu.pipeline_mode<synchronous>, transform_indices = @transform_15, window_bounds = array<i64: 128, 32>}]} {
    %c0 = arith.constant 0 : index
    %c0_0 = arith.constant 0 : index
    %0 = vector.load %arg1[%c0, %c0_0] : memref<128x32xbf16, #tpu.memory_space<vmem>>, vector<128x32xbf16>
    %1 = arith.extf %0 : vector<128x32xbf16> to vector<128x32xf32>
    %c0_1 = arith.constant 0 : index
    %c0_2 = arith.constant 0 : index
    %2 = vector.load %arg2[%c0_1, %c0_2] : memref<32x96xbf16, #tpu.memory_space<vmem>>, vector<32x96xbf16>
    %cst = arith.constant dense<0.000000e+00> : vector<128x96xf32>
    %3 = tpu.matmul %0, %2, %cst {dimension_numbers = #tpu.dot_dimension_numbers<[1], [0], [0], [1], [0, 0, 1, 1], [], []>} : vector<128x32xbf16>, vector<32x96xbf16>, vector<128x96xf32> -> vector<128x96xf32>
    %c0_3 = arith.constant 0 : index
    %c0_4 = arith.constant 0 : index
    %4 = vector.load %arg3[%c0_3, %c0_4] : memref<1x96xf32, #tpu.memory_space<vmem>>, vector<1x96xf32>
    %5 = vector.broadcast %4 : vector<1x96xf32> to vector<128x96xf32>
    %6 = arith.addf %3, %5 : vector<128x96xf32>
    %7 = vector.extract_strided_slice %6 {offsets = [0, 0], sizes = [128, 16], strides = [1, 1]} : vector<128x96xf32> to vector<128x16xf32>
    %8 = vector.extract_strided_slice %6 {offsets = [0, 16], sizes = [128, 16], strides = [1, 1]} : vector<128x96xf32> to vector<128x16xf32>
    %9 = vector.shape_cast %7 : vector<128x16xf32> to vector<1x128x16xf32>
    %10 = vector.shape_cast %8 : vector<128x16xf32> to vector<1x128x16xf32>
    %11 = tpu.concatenate %9, %10 in 0 : vector<1x128x16xf32>, vector<1x128x16xf32> -> vector<2x128x16xf32>
    %12 = vector.shape_cast %11 : vector<2x128x16xf32> to vector<16x16x16xf32>
    %13 = vector.extract_strided_slice %6 {offsets = [0, 32], sizes = [128, 16], strides = [1, 1]} : vector<128x96xf32> to vector<128x16xf32>
    %14 = vector.extract_strided_slice %6 {offsets = [0, 48], sizes = [128, 16], strides = [1, 1]} : vector<128x96xf32> to vector<128x16xf32>
    %15 = vector.shape_cast %13 : vector<128x16xf32> to vector<1x128x16xf32>
    %16 = vector.shape_cast %14 : vector<128x16xf32> to vector<1x128x16xf32>
    %17 = tpu.concatenate %15, %16 in 0 : vector<1x128x16xf32>, vector<1x128x16xf32> -> vector<2x128x16xf32>
    %18 = vector.shape_cast %17 : vector<2x128x16xf32> to vector<16x16x16xf32>
    %19 = vector.extract_strided_slice %6 {offsets = [0, 64], sizes = [128, 16], strides = [1, 1]} : vector<128x96xf32> to vector<128x16xf32>
    %20 = vector.extract_strided_slice %6 {offsets = [0, 80], sizes = [128, 16], strides = [1, 1]} : vector<128x96xf32> to vector<128x16xf32>
    %21 = vector.shape_cast %19 : vector<128x16xf32> to vector<1x128x16xf32>
    %22 = vector.shape_cast %20 : vector<128x16xf32> to vector<1x128x16xf32>
    %23 = tpu.concatenate %21, %22 in 0 : vector<1x128x16xf32>, vector<1x128x16xf32> -> vector<2x128x16xf32>
    %24 = vector.shape_cast %23 : vector<2x128x16xf32> to vector<16x16x16xf32>
    %25 = arith.mulf %12, %12 : vector<16x16x16xf32>
    %cst_5 = arith.constant dense<0.000000e+00> : vector<16x16xf32>
    %26 = vector.multi_reduction <add>, %25, %cst_5 [2] : vector<16x16x16xf32> to vector<16x16xf32>
    %27 = vector.shape_cast %26 : vector<16x16xf32> to vector<16x16x1xf32>
    %cst_6 = arith.constant 1.000000e-24 : f32
    %28 = vector.broadcast %cst_6 : f32 to vector<16x16x1xf32>
    %29 = arith.maximumf %27, %28 : vector<16x16x1xf32>
    %30 = math.rsqrt %29 : vector<16x16x1xf32>
    %31 = vector.broadcast %30 : vector<16x16x1xf32> to vector<16x16x16xf32>
    %32 = arith.mulf %12, %31 : vector<16x16x16xf32>
    %33 = arith.mulf %18, %18 : vector<16x16x16xf32>
    %cst_7 = arith.constant dense<0.000000e+00> : vector<16x16xf32>
    %34 = vector.multi_reduction <add>, %33, %cst_7 [2] : vector<16x16x16xf32> to vector<16x16xf32>
    %35 = vector.shape_cast %34 : vector<16x16xf32> to vector<16x16x1xf32>
    %cst_8 = arith.constant 1.000000e-24 : f32
    %36 = vector.broadcast %cst_8 : f32 to vector<16x16x1xf32>
    %37 = arith.maximumf %35, %36 : vector<16x16x1xf32>
    %38 = math.rsqrt %37 : vector<16x16x1xf32>
    %39 = vector.broadcast %38 : vector<16x16x1xf32> to vector<16x16x16xf32>
    %40 = arith.mulf %18, %39 : vector<16x16x16xf32>
    %c0_9 = arith.constant 0 : index
    %c0_10 = arith.constant 0 : index
    %c0_11 = arith.constant 0 : index
    %41 = vector.load %arg6[%c0_9, %c0_10, %c0_11] : memref<16x1x1xf32, #tpu.memory_space<vmem>>, vector<16x1x1xf32>
    %42 = vector.broadcast %41 : vector<16x1x1xf32> to vector<16x16x16xf32>
    %43 = arith.mulf %32, %42 : vector<16x16x16xf32>
    %44 = arith.truncf %43 : vector<16x16x16xf32> to vector<16x16x16xbf16>
    %45 = arith.truncf %40 : vector<16x16x16xf32> to vector<16x16x16xbf16>
    "tpu.trace_start"() <{level = 10 : i32, message = "bnd,bmd->bnm"}> : () -> ()
    %cst_12 = arith.constant dense<0.000000e+00> : vector<16x16x16xf32>
    %46 = tpu.matmul %44, %45, %cst_12 {dimension_numbers = #tpu.dot_dimension_numbers<[2], [2], [1], [1], [0, 0, 0, 1, 1, 1], [0], [0]>} : vector<16x16x16xbf16>, vector<16x16x16xbf16>, vector<16x16x16xf32> -> vector<16x16x16xf32>
    "tpu.trace_stop"() : () -> ()
    %c0_13 = arith.constant 0 : index
    %c0_14 = arith.constant 0 : index
    %c0_15 = arith.constant 0 : index
    %47 = vector.load %arg7[%c0_13, %c0_14, %c0_15] : memref<16x16x16xf32, #tpu.memory_space<vmem>>, vector<16x16x16xf32>
    %48 = arith.addf %46, %47 : vector<16x16x16xf32>
    %cst_16 = arith.constant dense<0xFF800000> : vector<16x16xf32>
    %49 = vector.multi_reduction <maximumf>, %48, %cst_16 [2] : vector<16x16x16xf32> to vector<16x16xf32>
    %50 = vector.shape_cast %49 : vector<16x16xf32> to vector<16x16x1xf32>
    %51 = vector.broadcast %50 : vector<16x16x1xf32> to vector<16x16x16xf32>
    %52 = arith.subf %48, %51 : vector<16x16x16xf32>
    %53 = math.exp %52 : vector<16x16x16xf32>
    %cst_17 = arith.constant dense<0.000000e+00> : vector<16x16xf32>
    %54 = vector.multi_reduction <add>, %53, %cst_17 [2] : vector<16x16x16xf32> to vector<16x16xf32>
    %55 = vector.shape_cast %54 : vector<16x16xf32> to vector<16x16x1xf32>
    %56 = tpu.reciprocal %55 {approx = true} : vector<16x16x1xf32> -> vector<16x16x1xf32>
    %57 = vector.broadcast %56 : vector<16x16x1xf32> to vector<16x16x16xf32>
    %58 = arith.mulf %53, %57 : vector<16x16x16xf32>
    %59 = arith.truncf %58 : vector<16x16x16xf32> to vector<16x16x16xbf16>
    %60 = arith.truncf %24 : vector<16x16x16xf32> to vector<16x16x16xbf16>
    "tpu.trace_start"() <{level = 10 : i32, message = "bnm,bmd->bnd"}> : () -> ()
    %cst_18 = arith.constant dense<0.000000e+00> : vector<16x16x16xf32>
    %61 = tpu.matmul %59, %60, %cst_18 {dimension_numbers = #tpu.dot_dimension_numbers<[2], [1], [1], [2], [0, 0, 0, 1, 1, 2], [0], [0]>} : vector<16x16x16xbf16>, vector<16x16x16xbf16>, vector<16x16x16xf32> -> vector<16x16x16xf32>
    "tpu.trace_stop"() : () -> ()
    %62 = vector.shape_cast %61 : vector<16x16x16xf32> to vector<2x128x16xf32>
    %63 = vector.extract_strided_slice %62 {offsets = [0, 0, 0], sizes = [1, 128, 16], strides = [1, 1, 1]} : vector<2x128x16xf32> to vector<1x128x16xf32>
    %64 = vector.shape_cast %63 : vector<1x128x16xf32> to vector<128x16xf32>
    %65 = vector.extract_strided_slice %62 {offsets = [1, 0, 0], sizes = [1, 128, 16], strides = [1, 1, 1]} : vector<2x128x16xf32> to vector<1x128x16xf32>
    %66 = vector.shape_cast %65 : vector<1x128x16xf32> to vector<128x16xf32>
    %67 = tpu.concatenate %64, %66 in 1 : vector<128x16xf32>, vector<128x16xf32> -> vector<128x32xf32>
    %68 = arith.truncf %67 : vector<128x32xf32> to vector<128x32xbf16>
    %c0_19 = arith.constant 0 : index
    %c0_20 = arith.constant 0 : index
    %69 = vector.load %arg4[%c0_19, %c0_20] : memref<32x32xbf16, #tpu.memory_space<vmem>>, vector<32x32xbf16>
    %cst_21 = arith.constant dense<0.000000e+00> : vector<128x32xf32>
    %70 = tpu.matmul %68, %69, %cst_21 {dimension_numbers = #tpu.dot_dimension_numbers<[1], [0], [0], [1], [0, 0, 1, 1], [], []>} : vector<128x32xbf16>, vector<32x32xbf16>, vector<128x32xf32> -> vector<128x32xf32>
    %c0_22 = arith.constant 0 : index
    %c0_23 = arith.constant 0 : index
    %71 = vector.load %arg5[%c0_22, %c0_23] : memref<1x32xf32, #tpu.memory_space<vmem>>, vector<1x32xf32>
    %72 = vector.broadcast %71 : vector<1x32xf32> to vector<128x32xf32>
    %73 = arith.addf %70, %72 : vector<128x32xf32>
    %c0_24 = arith.constant 0 : index
    %c0_25 = arith.constant 0 : index
    %74 = vector.load %arg8[%c0_24, %c0_25] : memref<1x32xf32, #tpu.memory_space<vmem>>, vector<1x32xf32>
    %c0_26 = arith.constant 0 : index
    %c0_27 = arith.constant 0 : index
    %75 = vector.load %arg9[%c0_26, %c0_27] : memref<1x32xf32, #tpu.memory_space<vmem>>, vector<1x32xf32>
    %cst_28 = arith.constant dense<0.000000e+00> : vector<128xf32>
    %76 = vector.multi_reduction <add>, %73, %cst_28 [1] : vector<128x32xf32> to vector<128xf32>
    %77 = vector.shape_cast %76 : vector<128xf32> to vector<128x1xf32>
    %cst_29 = arith.constant 3.200000e+01 : f32
    %78 = vector.broadcast %cst_29 : f32 to vector<128x1xf32>
    %79 = arith.divf %77, %78 : vector<128x1xf32>
    %80 = vector.broadcast %79 : vector<128x1xf32> to vector<128x32xf32>
    %81 = arith.subf %73, %80 : vector<128x32xf32>
    %82 = arith.mulf %81, %81 : vector<128x32xf32>
    %cst_30 = arith.constant dense<0.000000e+00> : vector<128xf32>
    %83 = vector.multi_reduction <add>, %82, %cst_30 [1] : vector<128x32xf32> to vector<128xf32>
    %84 = vector.shape_cast %83 : vector<128xf32> to vector<128x1xf32>
    %cst_31 = arith.constant 3.200000e+01 : f32
    %85 = vector.broadcast %cst_31 : f32 to vector<128x1xf32>
    %86 = arith.divf %84, %85 : vector<128x1xf32>
    %cst_32 = arith.constant 9.99999974E-6 : f32
    %87 = vector.broadcast %cst_32 : f32 to vector<128x1xf32>
    %88 = arith.addf %86, %87 : vector<128x1xf32>
    %89 = math.rsqrt %88 : vector<128x1xf32>
    %90 = vector.broadcast %89 : vector<128x1xf32> to vector<128x32xf32>
    %91 = arith.mulf %81, %90 : vector<128x32xf32>
    %92 = vector.broadcast %74 : vector<1x32xf32> to vector<128x32xf32>
    %93 = arith.mulf %91, %92 : vector<128x32xf32>
    %94 = vector.broadcast %75 : vector<1x32xf32> to vector<128x32xf32>
    %95 = arith.addf %93, %94 : vector<128x32xf32>
    %96 = arith.addf %1, %95 : vector<128x32xf32>
    %97 = arith.truncf %96 : vector<128x32xf32> to vector<128x32xbf16>
    %c0_33 = arith.constant 0 : index
    %c0_34 = arith.constant 0 : index
    %98 = vector.load %arg10[%c0_33, %c0_34] : memref<32x64xbf16, #tpu.memory_space<vmem>>, vector<32x64xbf16>
    %cst_35 = arith.constant dense<0.000000e+00> : vector<128x64xf32>
    %99 = tpu.matmul %97, %98, %cst_35 {dimension_numbers = #tpu.dot_dimension_numbers<[1], [0], [0], [1], [0, 0, 1, 1], [], []>} : vector<128x32xbf16>, vector<32x64xbf16>, vector<128x64xf32> -> vector<128x64xf32>
    %c0_36 = arith.constant 0 : index
    %c0_37 = arith.constant 0 : index
    %100 = vector.load %arg11[%c0_36, %c0_37] : memref<1x64xf32, #tpu.memory_space<vmem>>, vector<1x64xf32>
    %101 = vector.broadcast %100 : vector<1x64xf32> to vector<128x64xf32>
    %102 = arith.addf %99, %101 : vector<128x64xf32>
    %cst_38 = arith.constant 5.000000e-01 : f32
    %103 = vector.broadcast %cst_38 : f32 to vector<128x64xf32>
    %104 = arith.mulf %103, %102 : vector<128x64xf32>
    %cst_39 = arith.constant 0.707106769 : f32
    %105 = vector.broadcast %cst_39 : f32 to vector<128x64xf32>
    %106 = arith.mulf %102, %105 : vector<128x64xf32>
    %cst_40 = arith.constant 0.000000e+00 : f32
    %107 = vector.broadcast %cst_40 : f32 to vector<128x64xf32>
    %108 = arith.cmpf olt, %106, %107 : vector<128x64xf32>
    %cst_41 = arith.constant -1.000000e+00 : f32
    %cst_42 = arith.constant 1.000000e+00 : f32
    %109 = vector.broadcast %cst_41 : f32 to vector<128x64xf32>
    %110 = vector.broadcast %cst_42 : f32 to vector<128x64xf32>
    %111 = arith.select %108, %109, %110 : vector<128x64xi1>, vector<128x64xf32>
    %112 = math.absf %106 : vector<128x64xf32>
    %cst_43 = arith.constant 0.327591091 : f32
    %113 = vector.broadcast %cst_43 : f32 to vector<128x64xf32>
    %114 = arith.mulf %113, %112 : vector<128x64xf32>
    %cst_44 = arith.constant 1.000000e+00 : f32
    %115 = vector.broadcast %cst_44 : f32 to vector<128x64xf32>
    %116 = arith.addf %115, %114 : vector<128x64xf32>
    %cst_45 = arith.constant 1.000000e+00 : f32
    %117 = vector.broadcast %cst_45 : f32 to vector<128x64xf32>
    %118 = arith.divf %117, %116 : vector<128x64xf32>
    %cst_46 = arith.constant 1.06140542 : f32
    %119 = vector.broadcast %cst_46 : f32 to vector<128x64xf32>
    %120 = arith.mulf %119, %118 : vector<128x64xf32>
    %cst_47 = arith.constant -1.45315206 : f32
    %121 = vector.broadcast %cst_47 : f32 to vector<128x64xf32>
    %122 = arith.addf %120, %121 : vector<128x64xf32>
    %123 = arith.mulf %122, %118 : vector<128x64xf32>
    %cst_48 = arith.constant 1.42141378 : f32
    %124 = vector.broadcast %cst_48 : f32 to vector<128x64xf32>
    %125 = arith.addf %123, %124 : vector<128x64xf32>
    %126 = arith.mulf %125, %118 : vector<128x64xf32>
    %cst_49 = arith.constant -0.284496725 : f32
    %127 = vector.broadcast %cst_49 : f32 to vector<128x64xf32>
    %128 = arith.addf %126, %127 : vector<128x64xf32>
    %129 = arith.mulf %128, %118 : vector<128x64xf32>
    %cst_50 = arith.constant 0.254829586 : f32
    %130 = vector.broadcast %cst_50 : f32 to vector<128x64xf32>
    %131 = arith.addf %129, %130 : vector<128x64xf32>
    %132 = arith.mulf %131, %118 : vector<128x64xf32>
    %cst_51 = arith.constant 0.000000e+00 : f32
    %133 = vector.broadcast %cst_51 : f32 to vector<128x64xf32>
    %134 = arith.subf %133, %112 : vector<128x64xf32>
    %135 = arith.mulf %134, %112 : vector<128x64xf32>
    %136 = math.exp %135 : vector<128x64xf32>
    %137 = arith.mulf %132, %136 : vector<128x64xf32>
    %cst_52 = arith.constant 1.000000e+00 : f32
    %138 = vector.broadcast %cst_52 : f32 to vector<128x64xf32>
    %139 = arith.subf %138, %137 : vector<128x64xf32>
    %140 = arith.mulf %111, %139 : vector<128x64xf32>
    %cst_53 = arith.constant 1.000000e+00 : f32
    %141 = vector.broadcast %cst_53 : f32 to vector<128x64xf32>
    %142 = arith.addf %141, %140 : vector<128x64xf32>
    %143 = arith.mulf %104, %142 : vector<128x64xf32>
    %144 = arith.truncf %143 : vector<128x64xf32> to vector<128x64xbf16>
    %c0_54 = arith.constant 0 : index
    %c0_55 = arith.constant 0 : index
    %145 = vector.load %arg12[%c0_54, %c0_55] : memref<64x32xbf16, #tpu.memory_space<vmem>>, vector<64x32xbf16>
    %cst_56 = arith.constant dense<0.000000e+00> : vector<128x32xf32>
    %146 = tpu.matmul %144, %145, %cst_56 {dimension_numbers = #tpu.dot_dimension_numbers<[1], [0], [0], [1], [0, 0, 1, 1], [], []>} : vector<128x64xbf16>, vector<64x32xbf16>, vector<128x32xf32> -> vector<128x32xf32>
    %c0_57 = arith.constant 0 : index
    %c0_58 = arith.constant 0 : index
    %147 = vector.load %arg13[%c0_57, %c0_58] : memref<1x32xf32, #tpu.memory_space<vmem>>, vector<1x32xf32>
    %148 = vector.broadcast %147 : vector<1x32xf32> to vector<128x32xf32>
    %149 = arith.addf %146, %148 : vector<128x32xf32>
    %c0_59 = arith.constant 0 : index
    %c0_60 = arith.constant 0 : index
    %150 = vector.load %arg14[%c0_59, %c0_60] : memref<1x32xf32, #tpu.memory_space<vmem>>, vector<1x32xf32>
    %c0_61 = arith.constant 0 : index
    %c0_62 = arith.constant 0 : index
    %151 = vector.load %arg15[%c0_61, %c0_62] : memref<1x32xf32, #tpu.memory_space<vmem>>, vector<1x32xf32>
    %cst_63 = arith.constant dense<0.000000e+00> : vector<128xf32>
    %152 = vector.multi_reduction <add>, %149, %cst_63 [1] : vector<128x32xf32> to vector<128xf32>
    %153 = vector.shape_cast %152 : vector<128xf32> to vector<128x1xf32>
    %cst_64 = arith.constant 3.200000e+01 : f32
    %154 = vector.broadcast %cst_64 : f32 to vector<128x1xf32>
    %155 = arith.divf %153, %154 : vector<128x1xf32>
    %156 = vector.broadcast %155 : vector<128x1xf32> to vector<128x32xf32>
    %157 = arith.subf %149, %156 : vector<128x32xf32>
    %158 = arith.mulf %157, %157 : vector<128x32xf32>
    %cst_65 = arith.constant dense<0.000000e+00> : vector<128xf32>
    %159 = vector.multi_reduction <add>, %158, %cst_65 [1] : vector<128x32xf32> to vector<128xf32>
    %160 = vector.shape_cast %159 : vector<128xf32> to vector<128x1xf32>
    %cst_66 = arith.constant 3.200000e+01 : f32
    %161 = vector.broadcast %cst_66 : f32 to vector<128x1xf32>
    %162 = arith.divf %160, %161 : vector<128x1xf32>
    %cst_67 = arith.constant 9.99999974E-6 : f32
    %163 = vector.broadcast %cst_67 : f32 to vector<128x1xf32>
    %164 = arith.addf %162, %163 : vector<128x1xf32>
    %165 = math.rsqrt %164 : vector<128x1xf32>
    %166 = vector.broadcast %165 : vector<128x1xf32> to vector<128x32xf32>
    %167 = arith.mulf %157, %166 : vector<128x32xf32>
    %168 = vector.broadcast %150 : vector<1x32xf32> to vector<128x32xf32>
    %169 = arith.mulf %167, %168 : vector<128x32xf32>
    %170 = vector.broadcast %151 : vector<1x32xf32> to vector<128x32xf32>
    %171 = arith.addf %169, %170 : vector<128x32xf32>
    %172 = arith.addf %96, %171 : vector<128x32xf32>
    %173 = arith.truncf %172 : vector<128x32xf32> to vector<128x32xbf16>
    %c0_68 = arith.constant 0 : index
    %c0_69 = arith.constant 0 : index
    %174 = vector.load %arg16[%c0_68, %c0_69] : memref<128x32xbf16, #tpu.memory_space<vmem>>, vector<128x32xbf16>
    tpu.vector_store %arg16[%c0_68, %c0_69], %173 {strides = array<i32>} : memref<128x32xbf16, #tpu.memory_space<vmem>>, vector<128x32xbf16>,
    return
  }
  func.func @transform_0(%arg0: i32) -> (i32, i32) {
    %c0_i32 = arith.constant 0 : i32
    %c0_i32_0 = arith.constant 0 : i32
    %c0_i32_1 = arith.constant 0 : i32
    return %c0_i32, %c0_i32_0 : i32, i32
  }
  func.func @transform_1(%arg0: i32) -> (i32, i32) {
    %c0_i32 = arith.constant 0 : i32
    %c0_i32_0 = arith.constant 0 : i32
    %c0_i32_1 = arith.constant 0 : i32
    return %c0_i32, %c0_i32_0 : i32, i32
  }
  func.func @transform_2(%arg0: i32) -> (i32, i32) {
    %c0_i32 = arith.constant 0 : i32
    %c0_i32_0 = arith.constant 0 : i32
    %c0_i32_1 = arith.constant 0 : i32
    return %c0_i32, %c0_i32_0 : i32, i32
  }
  func.func @transform_3(%arg0: i32) -> (i32, i32) {
    %c0_i32 = arith.constant 0 : i32
    %c0_i32_0 = arith.constant 0 : i32
    %c0_i32_1 = arith.constant 0 : i32
    return %c0_i32, %c0_i32_0 : i32, i32
  }
  func.func @transform_4(%arg0: i32) -> (i32, i32) {
    %c0_i32 = arith.constant 0 : i32
    %c0_i32_0 = arith.constant 0 : i32
    %c0_i32_1 = arith.constant 0 : i32
    return %c0_i32, %c0_i32_0 : i32, i32
  }
  func.func @transform_5(%arg0: i32) -> (i32, i32, i32) {
    %c0_i32 = arith.constant 0 : i32
    %c0_i32_0 = arith.constant 0 : i32
    %c0_i32_1 = arith.constant 0 : i32
    %c0_i32_2 = arith.constant 0 : i32
    return %c0_i32, %c0_i32_0, %c0_i32_1 : i32, i32, i32
  }
  func.func @transform_6(%arg0: i32) -> (i32, i32, i32) {
    %c0_i32 = arith.constant 0 : i32
    %c0_i32_0 = arith.constant 0 : i32
    %c0_i32_1 = arith.constant 0 : i32
    %c0_i32_2 = arith.constant 0 : i32
    return %c0_i32, %c0_i32_0, %c0_i32_1 : i32, i32, i32
  }
  func.func @transform_7(%arg0: i32) -> (i32, i32) {
    %c0_i32 = arith.constant 0 : i32
    %c0_i32_0 = arith.constant 0 : i32
    %c0_i32_1 = arith.constant 0 : i32
    return %c0_i32, %c0_i32_0 : i32, i32
  }
  func.func @transform_8(%arg0: i32) -> (i32, i32) {
    %c0_i32 = arith.constant 0 : i32
    %c0_i32_0 = arith.constant 0 : i32
    %c0_i32_1 = arith.constant 0 : i32
    return %c0_i32, %c0_i32_0 : i32, i32
  }
  func.func @transform_9(%arg0: i32) -> (i32, i32) {
    %c0_i32 = arith.constant 0 : i32
    %c0_i32_0 = arith.constant 0 : i32
    %c0_i32_1 = arith.constant 0 : i32
    return %c0_i32, %c0_i32_0 : i32, i32
  }
  func.func @transform_10(%arg0: i32) -> (i32, i32) {
    %c0_i32 = arith.constant 0 : i32
    %c0_i32_0 = arith.constant 0 : i32
    %c0_i32_1 = arith.constant 0 : i32
    return %c0_i32, %c0_i32_0 : i32, i32
  }
  func.func @transform_11(%arg0: i32) -> (i32, i32) {
    %c0_i32 = arith.constant 0 : i32
    %c0_i32_0 = arith.constant 0 : i32
    %c0_i32_1 = arith.constant 0 : i32
    return %c0_i32, %c0_i32_0 : i32, i32
  }
  func.func @transform_12(%arg0: i32) -> (i32, i32) {
    %c0_i32 = arith.constant 0 : i32
    %c0_i32_0 = arith.constant 0 : i32
    %c0_i32_1 = arith.constant 0 : i32
    return %c0_i32, %c0_i32_0 : i32, i32
  }
  func.func @transform_13(%arg0: i32) -> (i32, i32) {
    %c0_i32 = arith.constant 0 : i32
    %c0_i32_0 = arith.constant 0 : i32
    %c0_i32_1 = arith.constant 0 : i32
    return %c0_i32, %c0_i32_0 : i32, i32
  }
  func.func @transform_14(%arg0: i32) -> (i32, i32) {
    %c0_i32 = arith.constant 0 : i32
    %c0_i32_0 = arith.constant 0 : i32
    %c0_i32_1 = arith.constant 0 : i32
    return %c0_i32, %c0_i32_0 : i32, i32
  }
  func.func @transform_15(%arg0: i32) -> (i32, i32) {
    %c0_i32 = arith.constant 0 : i32
    %c0_i32_0 = arith.constant 0 : i32
    %c0_i32_1 = arith.constant 0 : i32
    return %c0_i32, %c0_i32_0 : i32, i32
  }
}

module attributes {stable_mosaic.version = 11 : i64} {
  func.func @_linear_ln_nobias_kernel(%arg0: i32, %arg1: memref<32x128xbf16, #tpu.memory_space<vmem>>, %arg2: memref<128x64xbf16, #tpu.memory_space<vmem>>, %arg3: memref<1x64xf32, #tpu.memory_space<vmem>>, %arg4: memref<1x64xf32, #tpu.memory_space<vmem>>, %arg5: memref<32x64xbf16, #tpu.memory_space<vmem>>) attributes {dimension_semantics = [#tpu.dimension_semantics<arbitrary>], iteration_bounds = array<i64: 1>, scalar_prefetch = 0 : i64, scratch_operands = 0 : i64, tpu.core_type = #tpu.core_type<tc>, window_params = [{pipeline_mode = #tpu.pipeline_mode<synchronous>, transform_indices = @transform_0, window_bounds = array<i64: 32, 128>}, {pipeline_mode = #tpu.pipeline_mode<synchronous>, transform_indices = @transform_1, window_bounds = array<i64: 128, 64>}, {pipeline_mode = #tpu.pipeline_mode<synchronous>, transform_indices = @transform_2, window_bounds = array<i64: 1, 64>}, {pipeline_mode = #tpu.pipeline_mode<synchronous>, transform_indices = @transform_3, window_bounds = array<i64: 1, 64>}, {pipeline_mode = #tpu.pipeline_mode<synchronous>, transform_indices = @transform_4, window_bounds = array<i64: 32, 64>}]} {
    %c0 = arith.constant 0 : index
    %c0_0 = arith.constant 0 : index
    %0 = vector.load %arg1[%c0, %c0_0] : memref<32x128xbf16, #tpu.memory_space<vmem>>, vector<32x128xbf16>
    %c0_1 = arith.constant 0 : index
    %c0_2 = arith.constant 0 : index
    %1 = vector.load %arg2[%c0_1, %c0_2] : memref<128x64xbf16, #tpu.memory_space<vmem>>, vector<128x64xbf16>
    %cst = arith.constant dense<0.000000e+00> : vector<32x64xf32>
    %2 = tpu.matmul %0, %1, %cst {dimension_numbers = #tpu.dot_dimension_numbers<[1], [0], [0], [1], [0, 0, 1, 1], [], []>} : vector<32x128xbf16>, vector<128x64xbf16>, vector<32x64xf32> -> vector<32x64xf32>
    %c0_3 = arith.constant 0 : index
    %c0_4 = arith.constant 0 : index
    %3 = vector.load %arg3[%c0_3, %c0_4] : memref<1x64xf32, #tpu.memory_space<vmem>>, vector<1x64xf32>
    %c0_5 = arith.constant 0 : index
    %c0_6 = arith.constant 0 : index
    %4 = vector.load %arg4[%c0_5, %c0_6] : memref<1x64xf32, #tpu.memory_space<vmem>>, vector<1x64xf32>
    %cst_7 = arith.constant dense<0.000000e+00> : vector<32xf32>
    %5 = vector.multi_reduction <add>, %2, %cst_7 [1] : vector<32x64xf32> to vector<32xf32>
    %6 = vector.shape_cast %5 : vector<32xf32> to vector<32x1xf32>
    %cst_8 = arith.constant 6.400000e+01 : f32
    %7 = vector.broadcast %cst_8 : f32 to vector<32x1xf32>
    %8 = arith.divf %6, %7 : vector<32x1xf32>
    %9 = vector.broadcast %8 : vector<32x1xf32> to vector<32x64xf32>
    %10 = arith.subf %2, %9 : vector<32x64xf32>
    %11 = arith.mulf %10, %10 : vector<32x64xf32>
    %cst_9 = arith.constant dense<0.000000e+00> : vector<32xf32>
    %12 = vector.multi_reduction <add>, %11, %cst_9 [1] : vector<32x64xf32> to vector<32xf32>
    %13 = vector.shape_cast %12 : vector<32xf32> to vector<32x1xf32>
    %cst_10 = arith.constant 6.400000e+01 : f32
    %14 = vector.broadcast %cst_10 : f32 to vector<32x1xf32>
    %15 = arith.divf %13, %14 : vector<32x1xf32>
    %cst_11 = arith.constant 9.99999974E-6 : f32
    %16 = vector.broadcast %cst_11 : f32 to vector<32x1xf32>
    %17 = arith.addf %15, %16 : vector<32x1xf32>
    %18 = math.rsqrt %17 : vector<32x1xf32>
    %19 = vector.broadcast %18 : vector<32x1xf32> to vector<32x64xf32>
    %20 = arith.mulf %10, %19 : vector<32x64xf32>
    %21 = vector.broadcast %3 : vector<1x64xf32> to vector<32x64xf32>
    %22 = arith.mulf %20, %21 : vector<32x64xf32>
    %23 = vector.broadcast %4 : vector<1x64xf32> to vector<32x64xf32>
    %24 = arith.addf %22, %23 : vector<32x64xf32>
    %25 = arith.truncf %24 : vector<32x64xf32> to vector<32x64xbf16>
    %c0_12 = arith.constant 0 : index
    %c0_13 = arith.constant 0 : index
    %26 = vector.load %arg5[%c0_12, %c0_13] : memref<32x64xbf16, #tpu.memory_space<vmem>>, vector<32x64xbf16>
    tpu.vector_store %arg5[%c0_12, %c0_13], %25 {strides = array<i32>} : memref<32x64xbf16, #tpu.memory_space<vmem>>, vector<32x64xbf16>,
    return
  }
  func.func @transform_0(%arg0: i32) -> (i32, i32) {
    %c0_i32 = arith.constant 0 : i32
    %c0_i32_0 = arith.constant 0 : i32
    %c0_i32_1 = arith.constant 0 : i32
    return %c0_i32, %c0_i32_0 : i32, i32
  }
  func.func @transform_1(%arg0: i32) -> (i32, i32) {
    %c0_i32 = arith.constant 0 : i32
    %c0_i32_0 = arith.constant 0 : i32
    %c0_i32_1 = arith.constant 0 : i32
    return %c0_i32, %c0_i32_0 : i32, i32
  }
  func.func @transform_2(%arg0: i32) -> (i32, i32) {
    %c0_i32 = arith.constant 0 : i32
    %c0_i32_0 = arith.constant 0 : i32
    %c0_i32_1 = arith.constant 0 : i32
    return %c0_i32, %c0_i32_0 : i32, i32
  }
  func.func @transform_3(%arg0: i32) -> (i32, i32) {
    %c0_i32 = arith.constant 0 : i32
    %c0_i32_0 = arith.constant 0 : i32
    %c0_i32_1 = arith.constant 0 : i32
    return %c0_i32, %c0_i32_0 : i32, i32
  }
  func.func @transform_4(%arg0: i32) -> (i32, i32) {
    %c0_i32 = arith.constant 0 : i32
    %c0_i32_0 = arith.constant 0 : i32
    %c0_i32_1 = arith.constant 0 : i32
    return %c0_i32, %c0_i32_0 : i32, i32
  }
}

module attributes {stable_mosaic.version = 11 : i64} {
  func.func @_layernorm_kernel(%arg0: i32, %arg1: memref<32x64xbf16, #tpu.memory_space<vmem>>, %arg2: memref<1x64xf32, #tpu.memory_space<vmem>>, %arg3: memref<1x64xf32, #tpu.memory_space<vmem>>, %arg4: memref<32x64xf32, #tpu.memory_space<vmem>>) attributes {dimension_semantics = [#tpu.dimension_semantics<arbitrary>], iteration_bounds = array<i64: 1>, scalar_prefetch = 0 : i64, scratch_operands = 0 : i64, tpu.core_type = #tpu.core_type<tc>, window_params = [{pipeline_mode = #tpu.pipeline_mode<synchronous>, transform_indices = @transform_0, window_bounds = array<i64: 32, 64>}, {pipeline_mode = #tpu.pipeline_mode<synchronous>, transform_indices = @transform_1, window_bounds = array<i64: 1, 64>}, {pipeline_mode = #tpu.pipeline_mode<synchronous>, transform_indices = @transform_2, window_bounds = array<i64: 1, 64>}, {pipeline_mode = #tpu.pipeline_mode<synchronous>, transform_indices = @transform_3, window_bounds = array<i64: 32, 64>}]} {
    %c0 = arith.constant 0 : index
    %c0_0 = arith.constant 0 : index
    %0 = vector.load %arg1[%c0, %c0_0] : memref<32x64xbf16, #tpu.memory_space<vmem>>, vector<32x64xbf16>
    %1 = arith.extf %0 : vector<32x64xbf16> to vector<32x64xf32>
    %c0_1 = arith.constant 0 : index
    %c0_2 = arith.constant 0 : index
    %2 = vector.load %arg2[%c0_1, %c0_2] : memref<1x64xf32, #tpu.memory_space<vmem>>, vector<1x64xf32>
    %c0_3 = arith.constant 0 : index
    %c0_4 = arith.constant 0 : index
    %3 = vector.load %arg3[%c0_3, %c0_4] : memref<1x64xf32, #tpu.memory_space<vmem>>, vector<1x64xf32>
    %cst = arith.constant dense<0.000000e+00> : vector<32xf32>
    %4 = vector.multi_reduction <add>, %1, %cst [1] : vector<32x64xf32> to vector<32xf32>
    %5 = vector.shape_cast %4 : vector<32xf32> to vector<32x1xf32>
    %cst_5 = arith.constant 6.400000e+01 : f32
    %6 = vector.broadcast %cst_5 : f32 to vector<32x1xf32>
    %7 = arith.divf %5, %6 : vector<32x1xf32>
    %8 = vector.broadcast %7 : vector<32x1xf32> to vector<32x64xf32>
    %9 = arith.subf %1, %8 : vector<32x64xf32>
    %10 = arith.mulf %9, %9 : vector<32x64xf32>
    %cst_6 = arith.constant dense<0.000000e+00> : vector<32xf32>
    %11 = vector.multi_reduction <add>, %10, %cst_6 [1] : vector<32x64xf32> to vector<32xf32>
    %12 = vector.shape_cast %11 : vector<32xf32> to vector<32x1xf32>
    %cst_7 = arith.constant 6.400000e+01 : f32
    %13 = vector.broadcast %cst_7 : f32 to vector<32x1xf32>
    %14 = arith.divf %12, %13 : vector<32x1xf32>
    %cst_8 = arith.constant 9.99999974E-6 : f32
    %15 = vector.broadcast %cst_8 : f32 to vector<32x1xf32>
    %16 = arith.addf %14, %15 : vector<32x1xf32>
    %17 = math.rsqrt %16 : vector<32x1xf32>
    %18 = vector.broadcast %17 : vector<32x1xf32> to vector<32x64xf32>
    %19 = arith.mulf %9, %18 : vector<32x64xf32>
    %20 = vector.broadcast %2 : vector<1x64xf32> to vector<32x64xf32>
    %21 = arith.mulf %19, %20 : vector<32x64xf32>
    %22 = vector.broadcast %3 : vector<1x64xf32> to vector<32x64xf32>
    %23 = arith.addf %21, %22 : vector<32x64xf32>
    %c0_9 = arith.constant 0 : index
    %c0_10 = arith.constant 0 : index
    %24 = vector.load %arg4[%c0_9, %c0_10] : memref<32x64xf32, #tpu.memory_space<vmem>>, vector<32x64xf32>
    tpu.vector_store %arg4[%c0_9, %c0_10], %23 {strides = array<i32>} : memref<32x64xf32, #tpu.memory_space<vmem>>, vector<32x64xf32>,
    return
  }
  func.func @transform_0(%arg0: i32) -> (i32, i32) {
    %c0_i32 = arith.constant 0 : i32
    %c0_i32_0 = arith.constant 0 : i32
    %c0_i32_1 = arith.constant 0 : i32
    return %c0_i32, %c0_i32_0 : i32, i32
  }
  func.func @transform_1(%arg0: i32) -> (i32, i32) {
    %c0_i32 = arith.constant 0 : i32
    %c0_i32_0 = arith.constant 0 : i32
    %c0_i32_1 = arith.constant 0 : i32
    return %c0_i32, %c0_i32_0 : i32, i32
  }
  func.func @transform_2(%arg0: i32) -> (i32, i32) {
    %c0_i32 = arith.constant 0 : i32
    %c0_i32_0 = arith.constant 0 : i32
    %c0_i32_1 = arith.constant 0 : i32
    return %c0_i32, %c0_i32_0 : i32, i32
  }
  func.func @transform_3(%arg0: i32) -> (i32, i32) {
    %c0_i32 = arith.constant 0 : i32
    %c0_i32_0 = arith.constant 0 : i32
    %c0_i32_1 = arith.constant 0 : i32
    return %c0_i32, %c0_i32_0 : i32, i32
  }
}

module attributes {stable_mosaic.version = 11 : i64} {
  func.func @_swin_block_kernel(%arg0: i32, %arg1: memref<32x64xbf16, #tpu.memory_space<vmem>>, %arg2: memref<64x192xbf16, #tpu.memory_space<vmem>>, %arg3: memref<1x192xf32, #tpu.memory_space<vmem>>, %arg4: memref<64x64xbf16, #tpu.memory_space<vmem>>, %arg5: memref<1x64xf32, #tpu.memory_space<vmem>>, %arg6: memref<8x1x1xf32, #tpu.memory_space<vmem>>, %arg7: memref<8x16x16xf32, #tpu.memory_space<vmem>>, %arg8: memref<1x64xf32, #tpu.memory_space<vmem>>, %arg9: memref<1x64xf32, #tpu.memory_space<vmem>>, %arg10: memref<64x128xbf16, #tpu.memory_space<vmem>>, %arg11: memref<1x128xf32, #tpu.memory_space<vmem>>, %arg12: memref<128x64xbf16, #tpu.memory_space<vmem>>, %arg13: memref<1x64xf32, #tpu.memory_space<vmem>>, %arg14: memref<1x64xf32, #tpu.memory_space<vmem>>, %arg15: memref<1x64xf32, #tpu.memory_space<vmem>>, %arg16: memref<32x64xbf16, #tpu.memory_space<vmem>>) attributes {dimension_semantics = [#tpu.dimension_semantics<arbitrary>], iteration_bounds = array<i64: 1>, scalar_prefetch = 0 : i64, scratch_operands = 0 : i64, tpu.core_type = #tpu.core_type<tc>, window_params = [{pipeline_mode = #tpu.pipeline_mode<synchronous>, transform_indices = @transform_0, window_bounds = array<i64: 32, 64>}, {pipeline_mode = #tpu.pipeline_mode<synchronous>, transform_indices = @transform_1, window_bounds = array<i64: 64, 192>}, {pipeline_mode = #tpu.pipeline_mode<synchronous>, transform_indices = @transform_2, window_bounds = array<i64: 1, 192>}, {pipeline_mode = #tpu.pipeline_mode<synchronous>, transform_indices = @transform_3, window_bounds = array<i64: 64, 64>}, {pipeline_mode = #tpu.pipeline_mode<synchronous>, transform_indices = @transform_4, window_bounds = array<i64: 1, 64>}, {pipeline_mode = #tpu.pipeline_mode<synchronous>, transform_indices = @transform_5, window_bounds = array<i64: 8, 1, 1>}, {pipeline_mode = #tpu.pipeline_mode<synchronous>, transform_indices = @transform_6, window_bounds = array<i64: 8, 16, 16>}, {pipeline_mode = #tpu.pipeline_mode<synchronous>, transform_indices = @transform_7, window_bounds = array<i64: 1, 64>}, {pipeline_mode = #tpu.pipeline_mode<synchronous>, transform_indices = @transform_8, window_bounds = array<i64: 1, 64>}, {pipeline_mode = #tpu.pipeline_mode<synchronous>, transform_indices = @transform_9, window_bounds = array<i64: 64, 128>}, {pipeline_mode = #tpu.pipeline_mode<synchronous>, transform_indices = @transform_10, window_bounds = array<i64: 1, 128>}, {pipeline_mode = #tpu.pipeline_mode<synchronous>, transform_indices = @transform_11, window_bounds = array<i64: 128, 64>}, {pipeline_mode = #tpu.pipeline_mode<synchronous>, transform_indices = @transform_12, window_bounds = array<i64: 1, 64>}, {pipeline_mode = #tpu.pipeline_mode<synchronous>, transform_indices = @transform_13, window_bounds = array<i64: 1, 64>}, {pipeline_mode = #tpu.pipeline_mode<synchronous>, transform_indices = @transform_14, window_bounds = array<i64: 1, 64>}, {pipeline_mode = #tpu.pipeline_mode<synchronous>, transform_indices = @transform_15, window_bounds = array<i64: 32, 64>}]} {
    %c0 = arith.constant 0 : index
    %c0_0 = arith.constant 0 : index
    %0 = vector.load %arg1[%c0, %c0_0] : memref<32x64xbf16, #tpu.memory_space<vmem>>, vector<32x64xbf16>
    %1 = arith.extf %0 : vector<32x64xbf16> to vector<32x64xf32>
    %c0_1 = arith.constant 0 : index
    %c0_2 = arith.constant 0 : index
    %2 = vector.load %arg2[%c0_1, %c0_2] : memref<64x192xbf16, #tpu.memory_space<vmem>>, vector<64x192xbf16>
    %cst = arith.constant dense<0.000000e+00> : vector<32x192xf32>
    %3 = tpu.matmul %0, %2, %cst {dimension_numbers = #tpu.dot_dimension_numbers<[1], [0], [0], [1], [0, 0, 1, 1], [], []>} : vector<32x64xbf16>, vector<64x192xbf16>, vector<32x192xf32> -> vector<32x192xf32>
    %c0_3 = arith.constant 0 : index
    %c0_4 = arith.constant 0 : index
    %4 = vector.load %arg3[%c0_3, %c0_4] : memref<1x192xf32, #tpu.memory_space<vmem>>, vector<1x192xf32>
    %5 = vector.broadcast %4 : vector<1x192xf32> to vector<32x192xf32>
    %6 = arith.addf %3, %5 : vector<32x192xf32>
    %7 = vector.extract_strided_slice %6 {offsets = [0, 0], sizes = [32, 16], strides = [1, 1]} : vector<32x192xf32> to vector<32x16xf32>
    %8 = vector.extract_strided_slice %6 {offsets = [0, 16], sizes = [32, 16], strides = [1, 1]} : vector<32x192xf32> to vector<32x16xf32>
    %9 = vector.extract_strided_slice %6 {offsets = [0, 32], sizes = [32, 16], strides = [1, 1]} : vector<32x192xf32> to vector<32x16xf32>
    %10 = vector.extract_strided_slice %6 {offsets = [0, 48], sizes = [32, 16], strides = [1, 1]} : vector<32x192xf32> to vector<32x16xf32>
    %11 = vector.shape_cast %7 : vector<32x16xf32> to vector<1x32x16xf32>
    %12 = vector.shape_cast %8 : vector<32x16xf32> to vector<1x32x16xf32>
    %13 = vector.shape_cast %9 : vector<32x16xf32> to vector<1x32x16xf32>
    %14 = vector.shape_cast %10 : vector<32x16xf32> to vector<1x32x16xf32>
    %15 = tpu.concatenate %11, %12, %13, %14 in 0 : vector<1x32x16xf32>, vector<1x32x16xf32>, vector<1x32x16xf32>, vector<1x32x16xf32> -> vector<4x32x16xf32>
    %16 = vector.shape_cast %15 : vector<4x32x16xf32> to vector<8x16x16xf32>
    %17 = vector.extract_strided_slice %6 {offsets = [0, 64], sizes = [32, 16], strides = [1, 1]} : vector<32x192xf32> to vector<32x16xf32>
    %18 = vector.extract_strided_slice %6 {offsets = [0, 80], sizes = [32, 16], strides = [1, 1]} : vector<32x192xf32> to vector<32x16xf32>
    %19 = vector.extract_strided_slice %6 {offsets = [0, 96], sizes = [32, 16], strides = [1, 1]} : vector<32x192xf32> to vector<32x16xf32>
    %20 = vector.extract_strided_slice %6 {offsets = [0, 112], sizes = [32, 16], strides = [1, 1]} : vector<32x192xf32> to vector<32x16xf32>
    %21 = vector.shape_cast %17 : vector<32x16xf32> to vector<1x32x16xf32>
    %22 = vector.shape_cast %18 : vector<32x16xf32> to vector<1x32x16xf32>
    %23 = vector.shape_cast %19 : vector<32x16xf32> to vector<1x32x16xf32>
    %24 = vector.shape_cast %20 : vector<32x16xf32> to vector<1x32x16xf32>
    %25 = tpu.concatenate %21, %22, %23, %24 in 0 : vector<1x32x16xf32>, vector<1x32x16xf32>, vector<1x32x16xf32>, vector<1x32x16xf32> -> vector<4x32x16xf32>
    %26 = vector.shape_cast %25 : vector<4x32x16xf32> to vector<8x16x16xf32>
    %27 = vector.extract_strided_slice %6 {offsets = [0, 128], sizes = [32, 16], strides = [1, 1]} : vector<32x192xf32> to vector<32x16xf32>
    %28 = vector.extract_strided_slice %6 {offsets = [0, 144], sizes = [32, 16], strides = [1, 1]} : vector<32x192xf32> to vector<32x16xf32>
    %29 = vector.extract_strided_slice %6 {offsets = [0, 160], sizes = [32, 16], strides = [1, 1]} : vector<32x192xf32> to vector<32x16xf32>
    %30 = vector.extract_strided_slice %6 {offsets = [0, 176], sizes = [32, 16], strides = [1, 1]} : vector<32x192xf32> to vector<32x16xf32>
    %31 = vector.shape_cast %27 : vector<32x16xf32> to vector<1x32x16xf32>
    %32 = vector.shape_cast %28 : vector<32x16xf32> to vector<1x32x16xf32>
    %33 = vector.shape_cast %29 : vector<32x16xf32> to vector<1x32x16xf32>
    %34 = vector.shape_cast %30 : vector<32x16xf32> to vector<1x32x16xf32>
    %35 = tpu.concatenate %31, %32, %33, %34 in 0 : vector<1x32x16xf32>, vector<1x32x16xf32>, vector<1x32x16xf32>, vector<1x32x16xf32> -> vector<4x32x16xf32>
    %36 = vector.shape_cast %35 : vector<4x32x16xf32> to vector<8x16x16xf32>
    %37 = arith.mulf %16, %16 : vector<8x16x16xf32>
    %cst_5 = arith.constant dense<0.000000e+00> : vector<8x16xf32>
    %38 = vector.multi_reduction <add>, %37, %cst_5 [2] : vector<8x16x16xf32> to vector<8x16xf32>
    %39 = vector.shape_cast %38 : vector<8x16xf32> to vector<8x16x1xf32>
    %cst_6 = arith.constant 1.000000e-24 : f32
    %40 = vector.broadcast %cst_6 : f32 to vector<8x16x1xf32>
    %41 = arith.maximumf %39, %40 : vector<8x16x1xf32>
    %42 = math.rsqrt %41 : vector<8x16x1xf32>
    %43 = vector.broadcast %42 : vector<8x16x1xf32> to vector<8x16x16xf32>
    %44 = arith.mulf %16, %43 : vector<8x16x16xf32>
    %45 = arith.mulf %26, %26 : vector<8x16x16xf32>
    %cst_7 = arith.constant dense<0.000000e+00> : vector<8x16xf32>
    %46 = vector.multi_reduction <add>, %45, %cst_7 [2] : vector<8x16x16xf32> to vector<8x16xf32>
    %47 = vector.shape_cast %46 : vector<8x16xf32> to vector<8x16x1xf32>
    %cst_8 = arith.constant 1.000000e-24 : f32
    %48 = vector.broadcast %cst_8 : f32 to vector<8x16x1xf32>
    %49 = arith.maximumf %47, %48 : vector<8x16x1xf32>
    %50 = math.rsqrt %49 : vector<8x16x1xf32>
    %51 = vector.broadcast %50 : vector<8x16x1xf32> to vector<8x16x16xf32>
    %52 = arith.mulf %26, %51 : vector<8x16x16xf32>
    %c0_9 = arith.constant 0 : index
    %c0_10 = arith.constant 0 : index
    %c0_11 = arith.constant 0 : index
    %53 = vector.load %arg6[%c0_9, %c0_10, %c0_11] : memref<8x1x1xf32, #tpu.memory_space<vmem>>, vector<8x1x1xf32>
    %54 = vector.broadcast %53 : vector<8x1x1xf32> to vector<8x16x16xf32>
    %55 = arith.mulf %44, %54 : vector<8x16x16xf32>
    %56 = arith.truncf %55 : vector<8x16x16xf32> to vector<8x16x16xbf16>
    %57 = arith.truncf %52 : vector<8x16x16xf32> to vector<8x16x16xbf16>
    "tpu.trace_start"() <{level = 10 : i32, message = "bnd,bmd->bnm"}> : () -> ()
    %cst_12 = arith.constant dense<0.000000e+00> : vector<8x16x16xf32>
    %58 = tpu.matmul %56, %57, %cst_12 {dimension_numbers = #tpu.dot_dimension_numbers<[2], [2], [1], [1], [0, 0, 0, 1, 1, 1], [0], [0]>} : vector<8x16x16xbf16>, vector<8x16x16xbf16>, vector<8x16x16xf32> -> vector<8x16x16xf32>
    "tpu.trace_stop"() : () -> ()
    %c0_13 = arith.constant 0 : index
    %c0_14 = arith.constant 0 : index
    %c0_15 = arith.constant 0 : index
    %59 = vector.load %arg7[%c0_13, %c0_14, %c0_15] : memref<8x16x16xf32, #tpu.memory_space<vmem>>, vector<8x16x16xf32>
    %60 = arith.addf %58, %59 : vector<8x16x16xf32>
    %cst_16 = arith.constant dense<0xFF800000> : vector<8x16xf32>
    %61 = vector.multi_reduction <maximumf>, %60, %cst_16 [2] : vector<8x16x16xf32> to vector<8x16xf32>
    %62 = vector.shape_cast %61 : vector<8x16xf32> to vector<8x16x1xf32>
    %63 = vector.broadcast %62 : vector<8x16x1xf32> to vector<8x16x16xf32>
    %64 = arith.subf %60, %63 : vector<8x16x16xf32>
    %65 = math.exp %64 : vector<8x16x16xf32>
    %cst_17 = arith.constant dense<0.000000e+00> : vector<8x16xf32>
    %66 = vector.multi_reduction <add>, %65, %cst_17 [2] : vector<8x16x16xf32> to vector<8x16xf32>
    %67 = vector.shape_cast %66 : vector<8x16xf32> to vector<8x16x1xf32>
    %68 = tpu.reciprocal %67 {approx = true} : vector<8x16x1xf32> -> vector<8x16x1xf32>
    %69 = vector.broadcast %68 : vector<8x16x1xf32> to vector<8x16x16xf32>
    %70 = arith.mulf %65, %69 : vector<8x16x16xf32>
    %71 = arith.truncf %70 : vector<8x16x16xf32> to vector<8x16x16xbf16>
    %72 = arith.truncf %36 : vector<8x16x16xf32> to vector<8x16x16xbf16>
    "tpu.trace_start"() <{level = 10 : i32, message = "bnm,bmd->bnd"}> : () -> ()
    %cst_18 = arith.constant dense<0.000000e+00> : vector<8x16x16xf32>
    %73 = tpu.matmul %71, %72, %cst_18 {dimension_numbers = #tpu.dot_dimension_numbers<[2], [1], [1], [2], [0, 0, 0, 1, 1, 2], [0], [0]>} : vector<8x16x16xbf16>, vector<8x16x16xbf16>, vector<8x16x16xf32> -> vector<8x16x16xf32>
    "tpu.trace_stop"() : () -> ()
    %74 = vector.shape_cast %73 : vector<8x16x16xf32> to vector<4x32x16xf32>
    %75 = vector.extract_strided_slice %74 {offsets = [0, 0, 0], sizes = [1, 32, 16], strides = [1, 1, 1]} : vector<4x32x16xf32> to vector<1x32x16xf32>
    %76 = vector.shape_cast %75 : vector<1x32x16xf32> to vector<32x16xf32>
    %77 = vector.extract_strided_slice %74 {offsets = [1, 0, 0], sizes = [1, 32, 16], strides = [1, 1, 1]} : vector<4x32x16xf32> to vector<1x32x16xf32>
    %78 = vector.shape_cast %77 : vector<1x32x16xf32> to vector<32x16xf32>
    %79 = vector.extract_strided_slice %74 {offsets = [2, 0, 0], sizes = [1, 32, 16], strides = [1, 1, 1]} : vector<4x32x16xf32> to vector<1x32x16xf32>
    %80 = vector.shape_cast %79 : vector<1x32x16xf32> to vector<32x16xf32>
    %81 = vector.extract_strided_slice %74 {offsets = [3, 0, 0], sizes = [1, 32, 16], strides = [1, 1, 1]} : vector<4x32x16xf32> to vector<1x32x16xf32>
    %82 = vector.shape_cast %81 : vector<1x32x16xf32> to vector<32x16xf32>
    %83 = tpu.concatenate %76, %78, %80, %82 in 1 : vector<32x16xf32>, vector<32x16xf32>, vector<32x16xf32>, vector<32x16xf32> -> vector<32x64xf32>
    %84 = arith.truncf %83 : vector<32x64xf32> to vector<32x64xbf16>
    %c0_19 = arith.constant 0 : index
    %c0_20 = arith.constant 0 : index
    %85 = vector.load %arg4[%c0_19, %c0_20] : memref<64x64xbf16, #tpu.memory_space<vmem>>, vector<64x64xbf16>
    %cst_21 = arith.constant dense<0.000000e+00> : vector<32x64xf32>
    %86 = tpu.matmul %84, %85, %cst_21 {dimension_numbers = #tpu.dot_dimension_numbers<[1], [0], [0], [1], [0, 0, 1, 1], [], []>} : vector<32x64xbf16>, vector<64x64xbf16>, vector<32x64xf32> -> vector<32x64xf32>
    %c0_22 = arith.constant 0 : index
    %c0_23 = arith.constant 0 : index
    %87 = vector.load %arg5[%c0_22, %c0_23] : memref<1x64xf32, #tpu.memory_space<vmem>>, vector<1x64xf32>
    %88 = vector.broadcast %87 : vector<1x64xf32> to vector<32x64xf32>
    %89 = arith.addf %86, %88 : vector<32x64xf32>
    %c0_24 = arith.constant 0 : index
    %c0_25 = arith.constant 0 : index
    %90 = vector.load %arg8[%c0_24, %c0_25] : memref<1x64xf32, #tpu.memory_space<vmem>>, vector<1x64xf32>
    %c0_26 = arith.constant 0 : index
    %c0_27 = arith.constant 0 : index
    %91 = vector.load %arg9[%c0_26, %c0_27] : memref<1x64xf32, #tpu.memory_space<vmem>>, vector<1x64xf32>
    %cst_28 = arith.constant dense<0.000000e+00> : vector<32xf32>
    %92 = vector.multi_reduction <add>, %89, %cst_28 [1] : vector<32x64xf32> to vector<32xf32>
    %93 = vector.shape_cast %92 : vector<32xf32> to vector<32x1xf32>
    %cst_29 = arith.constant 6.400000e+01 : f32
    %94 = vector.broadcast %cst_29 : f32 to vector<32x1xf32>
    %95 = arith.divf %93, %94 : vector<32x1xf32>
    %96 = vector.broadcast %95 : vector<32x1xf32> to vector<32x64xf32>
    %97 = arith.subf %89, %96 : vector<32x64xf32>
    %98 = arith.mulf %97, %97 : vector<32x64xf32>
    %cst_30 = arith.constant dense<0.000000e+00> : vector<32xf32>
    %99 = vector.multi_reduction <add>, %98, %cst_30 [1] : vector<32x64xf32> to vector<32xf32>
    %100 = vector.shape_cast %99 : vector<32xf32> to vector<32x1xf32>
    %cst_31 = arith.constant 6.400000e+01 : f32
    %101 = vector.broadcast %cst_31 : f32 to vector<32x1xf32>
    %102 = arith.divf %100, %101 : vector<32x1xf32>
    %cst_32 = arith.constant 9.99999974E-6 : f32
    %103 = vector.broadcast %cst_32 : f32 to vector<32x1xf32>
    %104 = arith.addf %102, %103 : vector<32x1xf32>
    %105 = math.rsqrt %104 : vector<32x1xf32>
    %106 = vector.broadcast %105 : vector<32x1xf32> to vector<32x64xf32>
    %107 = arith.mulf %97, %106 : vector<32x64xf32>
    %108 = vector.broadcast %90 : vector<1x64xf32> to vector<32x64xf32>
    %109 = arith.mulf %107, %108 : vector<32x64xf32>
    %110 = vector.broadcast %91 : vector<1x64xf32> to vector<32x64xf32>
    %111 = arith.addf %109, %110 : vector<32x64xf32>
    %112 = arith.addf %1, %111 : vector<32x64xf32>
    %113 = arith.truncf %112 : vector<32x64xf32> to vector<32x64xbf16>
    %c0_33 = arith.constant 0 : index
    %c0_34 = arith.constant 0 : index
    %114 = vector.load %arg10[%c0_33, %c0_34] : memref<64x128xbf16, #tpu.memory_space<vmem>>, vector<64x128xbf16>
    %cst_35 = arith.constant dense<0.000000e+00> : vector<32x128xf32>
    %115 = tpu.matmul %113, %114, %cst_35 {dimension_numbers = #tpu.dot_dimension_numbers<[1], [0], [0], [1], [0, 0, 1, 1], [], []>} : vector<32x64xbf16>, vector<64x128xbf16>, vector<32x128xf32> -> vector<32x128xf32>
    %c0_36 = arith.constant 0 : index
    %c0_37 = arith.constant 0 : index
    %116 = vector.load %arg11[%c0_36, %c0_37] : memref<1x128xf32, #tpu.memory_space<vmem>>, vector<1x128xf32>
    %117 = vector.broadcast %116 : vector<1x128xf32> to vector<32x128xf32>
    %118 = arith.addf %115, %117 : vector<32x128xf32>
    %cst_38 = arith.constant 5.000000e-01 : f32
    %119 = vector.broadcast %cst_38 : f32 to vector<32x128xf32>
    %120 = arith.mulf %119, %118 : vector<32x128xf32>
    %cst_39 = arith.constant 0.707106769 : f32
    %121 = vector.broadcast %cst_39 : f32 to vector<32x128xf32>
    %122 = arith.mulf %118, %121 : vector<32x128xf32>
    %cst_40 = arith.constant 0.000000e+00 : f32
    %123 = vector.broadcast %cst_40 : f32 to vector<32x128xf32>
    %124 = arith.cmpf olt, %122, %123 : vector<32x128xf32>
    %cst_41 = arith.constant -1.000000e+00 : f32
    %cst_42 = arith.constant 1.000000e+00 : f32
    %125 = vector.broadcast %cst_41 : f32 to vector<32x128xf32>
    %126 = vector.broadcast %cst_42 : f32 to vector<32x128xf32>
    %127 = arith.select %124, %125, %126 : vector<32x128xi1>, vector<32x128xf32>
    %128 = math.absf %122 : vector<32x128xf32>
    %cst_43 = arith.constant 0.327591091 : f32
    %129 = vector.broadcast %cst_43 : f32 to vector<32x128xf32>
    %130 = arith.mulf %129, %128 : vector<32x128xf32>
    %cst_44 = arith.constant 1.000000e+00 : f32
    %131 = vector.broadcast %cst_44 : f32 to vector<32x128xf32>
    %132 = arith.addf %131, %130 : vector<32x128xf32>
    %cst_45 = arith.constant 1.000000e+00 : f32
    %133 = vector.broadcast %cst_45 : f32 to vector<32x128xf32>
    %134 = arith.divf %133, %132 : vector<32x128xf32>
    %cst_46 = arith.constant 1.06140542 : f32
    %135 = vector.broadcast %cst_46 : f32 to vector<32x128xf32>
    %136 = arith.mulf %135, %134 : vector<32x128xf32>
    %cst_47 = arith.constant -1.45315206 : f32
    %137 = vector.broadcast %cst_47 : f32 to vector<32x128xf32>
    %138 = arith.addf %136, %137 : vector<32x128xf32>
    %139 = arith.mulf %138, %134 : vector<32x128xf32>
    %cst_48 = arith.constant 1.42141378 : f32
    %140 = vector.broadcast %cst_48 : f32 to vector<32x128xf32>
    %141 = arith.addf %139, %140 : vector<32x128xf32>
    %142 = arith.mulf %141, %134 : vector<32x128xf32>
    %cst_49 = arith.constant -0.284496725 : f32
    %143 = vector.broadcast %cst_49 : f32 to vector<32x128xf32>
    %144 = arith.addf %142, %143 : vector<32x128xf32>
    %145 = arith.mulf %144, %134 : vector<32x128xf32>
    %cst_50 = arith.constant 0.254829586 : f32
    %146 = vector.broadcast %cst_50 : f32 to vector<32x128xf32>
    %147 = arith.addf %145, %146 : vector<32x128xf32>
    %148 = arith.mulf %147, %134 : vector<32x128xf32>
    %cst_51 = arith.constant 0.000000e+00 : f32
    %149 = vector.broadcast %cst_51 : f32 to vector<32x128xf32>
    %150 = arith.subf %149, %128 : vector<32x128xf32>
    %151 = arith.mulf %150, %128 : vector<32x128xf32>
    %152 = math.exp %151 : vector<32x128xf32>
    %153 = arith.mulf %148, %152 : vector<32x128xf32>
    %cst_52 = arith.constant 1.000000e+00 : f32
    %154 = vector.broadcast %cst_52 : f32 to vector<32x128xf32>
    %155 = arith.subf %154, %153 : vector<32x128xf32>
    %156 = arith.mulf %127, %155 : vector<32x128xf32>
    %cst_53 = arith.constant 1.000000e+00 : f32
    %157 = vector.broadcast %cst_53 : f32 to vector<32x128xf32>
    %158 = arith.addf %157, %156 : vector<32x128xf32>
    %159 = arith.mulf %120, %158 : vector<32x128xf32>
    %160 = arith.truncf %159 : vector<32x128xf32> to vector<32x128xbf16>
    %c0_54 = arith.constant 0 : index
    %c0_55 = arith.constant 0 : index
    %161 = vector.load %arg12[%c0_54, %c0_55] : memref<128x64xbf16, #tpu.memory_space<vmem>>, vector<128x64xbf16>
    %cst_56 = arith.constant dense<0.000000e+00> : vector<32x64xf32>
    %162 = tpu.matmul %160, %161, %cst_56 {dimension_numbers = #tpu.dot_dimension_numbers<[1], [0], [0], [1], [0, 0, 1, 1], [], []>} : vector<32x128xbf16>, vector<128x64xbf16>, vector<32x64xf32> -> vector<32x64xf32>
    %c0_57 = arith.constant 0 : index
    %c0_58 = arith.constant 0 : index
    %163 = vector.load %arg13[%c0_57, %c0_58] : memref<1x64xf32, #tpu.memory_space<vmem>>, vector<1x64xf32>
    %164 = vector.broadcast %163 : vector<1x64xf32> to vector<32x64xf32>
    %165 = arith.addf %162, %164 : vector<32x64xf32>
    %c0_59 = arith.constant 0 : index
    %c0_60 = arith.constant 0 : index
    %166 = vector.load %arg14[%c0_59, %c0_60] : memref<1x64xf32, #tpu.memory_space<vmem>>, vector<1x64xf32>
    %c0_61 = arith.constant 0 : index
    %c0_62 = arith.constant 0 : index
    %167 = vector.load %arg15[%c0_61, %c0_62] : memref<1x64xf32, #tpu.memory_space<vmem>>, vector<1x64xf32>
    %cst_63 = arith.constant dense<0.000000e+00> : vector<32xf32>
    %168 = vector.multi_reduction <add>, %165, %cst_63 [1] : vector<32x64xf32> to vector<32xf32>
    %169 = vector.shape_cast %168 : vector<32xf32> to vector<32x1xf32>
    %cst_64 = arith.constant 6.400000e+01 : f32
    %170 = vector.broadcast %cst_64 : f32 to vector<32x1xf32>
    %171 = arith.divf %169, %170 : vector<32x1xf32>
    %172 = vector.broadcast %171 : vector<32x1xf32> to vector<32x64xf32>
    %173 = arith.subf %165, %172 : vector<32x64xf32>
    %174 = arith.mulf %173, %173 : vector<32x64xf32>
    %cst_65 = arith.constant dense<0.000000e+00> : vector<32xf32>
    %175 = vector.multi_reduction <add>, %174, %cst_65 [1] : vector<32x64xf32> to vector<32xf32>
    %176 = vector.shape_cast %175 : vector<32xf32> to vector<32x1xf32>
    %cst_66 = arith.constant 6.400000e+01 : f32
    %177 = vector.broadcast %cst_66 : f32 to vector<32x1xf32>
    %178 = arith.divf %176, %177 : vector<32x1xf32>
    %cst_67 = arith.constant 9.99999974E-6 : f32
    %179 = vector.broadcast %cst_67 : f32 to vector<32x1xf32>
    %180 = arith.addf %178, %179 : vector<32x1xf32>
    %181 = math.rsqrt %180 : vector<32x1xf32>
    %182 = vector.broadcast %181 : vector<32x1xf32> to vector<32x64xf32>
    %183 = arith.mulf %173, %182 : vector<32x64xf32>
    %184 = vector.broadcast %166 : vector<1x64xf32> to vector<32x64xf32>
    %185 = arith.mulf %183, %184 : vector<32x64xf32>
    %186 = vector.broadcast %167 : vector<1x64xf32> to vector<32x64xf32>
    %187 = arith.addf %185, %186 : vector<32x64xf32>
    %188 = arith.addf %112, %187 : vector<32x64xf32>
    %189 = arith.truncf %188 : vector<32x64xf32> to vector<32x64xbf16>
    %c0_68 = arith.constant 0 : index
    %c0_69 = arith.constant 0 : index
    %190 = vector.load %arg16[%c0_68, %c0_69] : memref<32x64xbf16, #tpu.memory_space<vmem>>, vector<32x64xbf16>
    tpu.vector_store %arg16[%c0_68, %c0_69], %189 {strides = array<i32>} : memref<32x64xbf16, #tpu.memory_space<vmem>>, vector<32x64xbf16>,
    return
  }
  func.func @transform_0(%arg0: i32) -> (i32, i32) {
    %c0_i32 = arith.constant 0 : i32
    %c0_i32_0 = arith.constant 0 : i32
    %c0_i32_1 = arith.constant 0 : i32
    return %c0_i32, %c0_i32_0 : i32, i32
  }
  func.func @transform_1(%arg0: i32) -> (i32, i32) {
    %c0_i32 = arith.constant 0 : i32
    %c0_i32_0 = arith.constant 0 : i32
    %c0_i32_1 = arith.constant 0 : i32
    return %c0_i32, %c0_i32_0 : i32, i32
  }
  func.func @transform_2(%arg0: i32) -> (i32, i32) {
    %c0_i32 = arith.constant 0 : i32
    %c0_i32_0 = arith.constant 0 : i32
    %c0_i32_1 = arith.constant 0 : i32
    return %c0_i32, %c0_i32_0 : i32, i32
  }
  func.func @transform_3(%arg0: i32) -> (i32, i32) {
    %c0_i32 = arith.constant 0 : i32
    %c0_i32_0 = arith.constant 0 : i32
    %c0_i32_1 = arith.constant 0 : i32
    return %c0_i32, %c0_i32_0 : i32, i32
  }
  func.func @transform_4(%arg0: i32) -> (i32, i32) {
    %c0_i32 = arith.constant 0 : i32
    %c0_i32_0 = arith.constant 0 : i32
    %c0_i32_1 = arith.constant 0 : i32
    return %c0_i32, %c0_i32_0 : i32, i32
  }
  func.func @transform_5(%arg0: i32) -> (i32, i32, i32) {
    %c0_i32 = arith.constant 0 : i32
    %c0_i32_0 = arith.constant 0 : i32
    %c0_i32_1 = arith.constant 0 : i32
    %c0_i32_2 = arith.constant 0 : i32
    return %c0_i32, %c0_i32_0, %c0_i32_1 : i32, i32, i32
  }
  func.func @transform_6(%arg0: i32) -> (i32, i32, i32) {
    %c0_i32 = arith.constant 0 : i32
    %c0_i32_0 = arith.constant 0 : i32
    %c0_i32_1 = arith.constant 0 : i32
    %c0_i32_2 = arith.constant 0 : i32
    return %c0_i32, %c0_i32_0, %c0_i32_1 : i32, i32, i32
  }
  func.func @transform_7(%arg0: i32) -> (i32, i32) {
    %c0_i32 = arith.constant 0 : i32
    %c0_i32_0 = arith.constant 0 : i32
    %c0_i32_1 = arith.constant 0 : i32
    return %c0_i32, %c0_i32_0 : i32, i32
  }
  func.func @transform_8(%arg0: i32) -> (i32, i32) {
    %c0_i32 = arith.constant 0 : i32
    %c0_i32_0 = arith.constant 0 : i32
    %c0_i32_1 = arith.constant 0 : i32
    return %c0_i32, %c0_i32_0 : i32, i32
  }
  func.func @transform_9(%arg0: i32) -> (i32, i32) {
    %c0_i32 = arith.constant 0 : i32
    %c0_i32_0 = arith.constant 0 : i32
    %c0_i32_1 = arith.constant 0 : i32
    return %c0_i32, %c0_i32_0 : i32, i32
  }
  func.func @transform_10(%arg0: i32) -> (i32, i32) {
    %c0_i32 = arith.constant 0 : i32
    %c0_i32_0 = arith.constant 0 : i32
    %c0_i32_1 = arith.constant 0 : i32
    return %c0_i32, %c0_i32_0 : i32, i32
  }
  func.func @transform_11(%arg0: i32) -> (i32, i32) {
    %c0_i32 = arith.constant 0 : i32
    %c0_i32_0 = arith.constant 0 : i32
    %c0_i32_1 = arith.constant 0 : i32
    return %c0_i32, %c0_i32_0 : i32, i32
  }
  func.func @transform_12(%arg0: i32) -> (i32, i32) {
    %c0_i32 = arith.constant 0 : i32
    %c0_i32_0 = arith.constant 0 : i32
    %c0_i32_1 = arith.constant 0 : i32
    return %c0_i32, %c0_i32_0 : i32, i32
  }
  func.func @transform_13(%arg0: i32) -> (i32, i32) {
    %c0_i32 = arith.constant 0 : i32
    %c0_i32_0 = arith.constant 0 : i32
    %c0_i32_1 = arith.constant 0 : i32
    return %c0_i32, %c0_i32_0 : i32, i32
  }
  func.func @transform_14(%arg0: i32) -> (i32, i32) {
    %c0_i32 = arith.constant 0 : i32
    %c0_i32_0 = arith.constant 0 : i32
    %c0_i32_1 = arith.constant 0 : i32
    return %c0_i32, %c0_i32_0 : i32, i32
  }
  func.func @transform_15(%arg0: i32) -> (i32, i32) {
    %c0_i32 = arith.constant 0 : i32
    %c0_i32_0 = arith.constant 0 : i32
    %c0_i32_1 = arith.constant 0 : i32
    return %c0_i32, %c0_i32_0 : i32, i32
  }
}

</mosaic_0001>

<llo_original>
// kernel: swinv2_forward.7
$region0: #{swinv2_forward.7}
  #allocation0 [shape = 'u32[]', space=smem, size = 0x4, offset = 0x4, fixed_abs, tag = 'smem constant byte address 0x4 - core index']
  #allocation1 [shape = 'u32[144,128]{1,0:T(1,128)}', space=vmem, size = 0x12000, scoped, tag = 'internal scratch']
  %s0 = inlined_call_operand.vmem [shape: f32[128,48], index: 0, kind: input, shape index: {}]
  %s1 = inlined_call_operand.vmem [shape: bf16[48,32], index: 1, kind: input, shape index: {}]
  %s2 = inlined_call_operand.vmem [shape: f32[1,32], index: 2, kind: input, shape index: {}]
  %s3 = inlined_call_operand.vmem [shape: f32[1,32], index: 3, kind: input, shape index: {}]
  %s4 = inlined_call_operand.vmem [shape: f32[1,32], index: 4, kind: input, shape index: {}]
  %s5 = inlined_call_operand.vmem [shape: bf16[128,32], index: 5, kind: output, shape index: {}]
  %s6 = sld [smem:[#allocation0]]
  $region30: #{swinv2_forward.7} parent=0
    _
  %s8 = ssub.s32 1, %s6
  %s9 = scalar_select 0, %s8, %s6
  // Predicated region
  $region2: #{swinv2_forward.7} parent=0 // pred_check
    _
  $region3: #{swinv2_forward.7} parent=0 // pred_check_branch
    %11 = sbr.rel (0) target = $region5
  $region4: #{swinv2_forward.7} parent=0 // pred_region
    _
  $region5: #{swinv2_forward.7} parent=0 // pred_fallthru
    _
  // Predicated region
  $region6: #{swinv2_forward.7} parent=0 // pred_check
    _
  $region7: #{swinv2_forward.7} parent=0 // pred_check_branch
    %13 = sbr.rel (0) target = $region9
  $region8: #{swinv2_forward.7} parent=0 // pred_region
    _
  $region9: #{swinv2_forward.7} parent=0 // pred_fallthru
    _
  // Predicated region
  $region10: #{swinv2_forward.7} parent=0 // pred_check
    _
  $region11: #{swinv2_forward.7} parent=0 // pred_check_branch
    %15 = sbr.rel (0) target = $region13
  $region12: #{swinv2_forward.7} parent=0 // pred_region
    _
  $region13: #{swinv2_forward.7} parent=0 // pred_fallthru
    _
  // Predicated region
  $region14: #{swinv2_forward.7} parent=0 // pred_check
    _
  $region15: #{swinv2_forward.7} parent=0 // pred_check_branch
    %17 = sbr.rel (0) target = $region17
  $region16: #{swinv2_forward.7} parent=0 // pred_region
    _
  $region17: #{swinv2_forward.7} parent=0 // pred_fallthru
    _
  // Predicated region
  $region18: #{swinv2_forward.7} parent=0 // pred_check
    _
  $region19: #{swinv2_forward.7} parent=0 // pred_check_branch
    %19 = sbr.rel (0) target = $region21
  $region20: #{swinv2_forward.7} parent=0 // pred_region
    _
  $region21: #{swinv2_forward.7} parent=0 // pred_fallthru
    _
  %v21 = vld [vmem:[%s0] sm:$0xff]
  %v22 = vld [vmem:[%s0 + $0x8] sm:$0xff]
  %v23 = vld [vmem:[%s0 + $0x10] sm:$0xff]
  %v24 = vld [vmem:[%s0 + $0x18] sm:$0xff]
  %v25 = vld [vmem:[%s0 + $0x20] sm:$0xff]
  %v26 = vld [vmem:[%s0 + $0x28] sm:$0xff]
  %v27 = vld [vmem:[%s0 + $0x30] sm:$0xff]
  %v28 = vld [vmem:[%s0 + $0x38] sm:$0xff]
  %v29 = vld [vmem:[%s0 + $0x40] sm:$0xff]
  %v30 = vld [vmem:[%s0 + $0x48] sm:$0xff]
  %v31 = vld [vmem:[%s0 + $0x50] sm:$0xff]
  %v32 = vld [vmem:[%s0 + $0x58] sm:$0xff]
  %v33 = vld [vmem:[%s0 + $0x60] sm:$0xff]
  %v34 = vld [vmem:[%s0 + $0x68] sm:$0xff]
  %v35 = vld [vmem:[%s0 + $0x70] sm:$0xff]
  %v36 = vld [vmem:[%s0 + $0x78] sm:$0xff]
  %v37 = vpack.c.bf16 %v22, %v21
  %v38 = vpack.c.bf16 %v24, %v23
  %v39 = vpack.c.bf16 %v26, %v25
  %v40 = vpack.c.bf16 %v28, %v27
  %v41 = vpack.c.bf16 %v30, %v29
  %v42 = vpack.c.bf16 %v32, %v31
  %v43 = vpack.c.bf16 %v34, %v33
  %v44 = vpack.c.bf16 %v36, %v35
  %v45 = vld [vmem:[%s1] sm:$0xf]
  %v46 = vld [vmem:[%s1 + $0x4] sm:$0xf]
  %v47 = vld [vmem:[%s1 + $0x8] sm:$0xf]
  %v48 = vld [vmem:[%s1 + $0xc] sm:$0xf]
  %v49 = vld [vmem:[%s1 + $0x10] sm:$0xf]
  %v50 = vld [vmem:[%s1 + $0x14] sm:$0xf]
  %v51 = vld [vmem:[%s2] sm:$0x1]
  %v53 = vlaneseq
  %v54 = vshrl.u32 %v53, 7
  %v55 = vsub.s32 0, %v54
  %v56 = vrot.slane %v51, %v55
  %v64 = vunpack.c.l.b16 %v45
  %v65 = vunpack.c.l.b16 %v46
  %v66 = vunpack.c.l.b16 %v47
  %v67 = vunpack.c.l.b16 %v48
  %v68 = vunpack.c.l.b16 %v49
  %v69 = vunpack.c.l.b16 %v50
  %v70 = vpack.c.b16 %v65, %v64
  %v71 = vpack.c.b16 %v67, %v66
  %v72 = vpack.c.b16 %v69, %v68
  %vm76 = vcmask 392192
  %v78 = vsel %vm76, %v37, 0
  %v81 = vsel %vm76, %v38, 0
  %v84 = vsel %vm76, %v39, 0
  %v87 = vsel %vm76, %v40, 0
  %v90 = vsel %vm76, %v41, 0
  %v93 = vsel %vm76, %v42, 0
  %v96 = vsel %vm76, %v43, 0
  %v99 = vsel %vm76, %v44, 0
  %101 = vmatprep.subr.bf16.mxu0 0
  %102 = vmatpush1.bf16.msra.mxu0 %v70
  %103 = vmatprep.subr.bf16.mxu0 0
  %104 = vmatpush1.bf16.msra.mxu0 %v71
  %105 = vmatprep.subr.bf16.mxu0 0
  %106 = vmatpush1.bf16.msra.mxu0 %v72
  %107 = vmatprep.subr.bf16.mxu0 0
  %108 = vmatpush1.bf16.msra.mxu0 0
  %109 = vmatprep.subr.bf16.mxu0 0
  %110 = vmatpush1.bf16.msra.mxu0 0
  %111 = vmatprep.subr.bf16.mxu0 0
  %112 = vmatpush1.bf16.msra.mxu0 0
  %113 = vmatprep.subr.bf16.mxu0 0
  %114 = vmatpush1.bf16.msra.mxu0 0
  %115 = vmatprep.subr.bf16.mxu0 0
  %116 = vmatpush1.bf16.msra.mxu0 0
  %117 = vmatprep.subr.bf16.mxu0 0
  %118 = vmatpush1.bf16.msra.mxu0 0
  %119 = vmatprep.subr.bf16.mxu0 0
  %120 = vmatpush1.bf16.msra.mxu0 0
  %121 = vmatprep.subr.bf16.mxu0 0
  %122 = vmatpush1.bf16.msra.mxu0 0
  %123 = vmatprep.subr.bf16.mxu0 0
  %124 = vmatpush1.bf16.msra.mxu0 0
  %125 = vmatprep.subr.bf16.mxu0 0
  %126 = vmatpush1.bf16.msra.mxu0 0
  %127 = vmatprep.subr.bf16.mxu0 0
  %128 = vmatpush1.bf16.msra.mxu0 0
  %129 = vmatprep.subr.bf16.mxu0 0
  %130 = vmatpush1.bf16.msra.mxu0 0
  %131 = vmatprep.subr.bf16.mxu0 0
  %132 = vmatpush1.bf16.msra.mxu0 0
  %133 = vmatprep.mubr.bf16.mxu0 0
  %134 = vmatmul.mubr.bf16.gmra.mrb[0].mxu0 %v78
  %v135 = vpop.f32.mrb[0].mxu0
  %v136 = vadd.f32 %v56, %v135
  %v137 = vpop.f32.mrb[0].mxu0
  %v138 = vpop.f32.mrb[0].mxu0
  %v139 = vadd.f32 %v56, %v138
  %v140 = vpop.f32.mrb[0].mxu0
  %141 = vmatprep.mubr.bf16.mxu0 0
  %142 = vmatmul.mubr.bf16.gmra.mrb[0].mxu0 %v81
  %v143 = vpop.f32.mrb[0].mxu0
  %v144 = vadd.f32 %v56, %v143
  %v145 = vpop.f32.mrb[0].mxu0
  %v146 = vpop.f32.mrb[0].mxu0
  %v147 = vadd.f32 %v56, %v146
  %v148 = vpop.f32.mrb[0].mxu0
  %149 = vmatprep.mubr.bf16.mxu0 0
  %150 = vmatmul.mubr.bf16.gmra.mrb[0].mxu0 %v84
  %v151 = vpop.f32.mrb[0].mxu0
  %v152 = vadd.f32 %v56, %v151
  %v153 = vpop.f32.mrb[0].mxu0
  %v154 = vpop.f32.mrb[0].mxu0
  %v155 = vadd.f32 %v56, %v154
  %v156 = vpop.f32.mrb[0].mxu0
  %157 = vmatprep.mubr.bf16.mxu0 0
  %158 = vmatmul.mubr.bf16.gmra.mrb[0].mxu0 %v87
  %v159 = vpop.f32.mrb[0].mxu0
  %v160 = vadd.f32 %v56, %v159
  %v161 = vpop.f32.mrb[0].mxu0
  %v162 = vpop.f32.mrb[0].mxu0
  %v163 = vadd.f32 %v56, %v162
  %v164 = vpop.f32.mrb[0].mxu0
  %165 = vmatprep.mubr.bf16.mxu0 0
  %166 = vmatmul.mubr.bf16.gmra.mrb[0].mxu0 %v90
  %v167 = vpop.f32.mrb[0].mxu0
  %v168 = vadd.f32 %v56, %v167
  %v169 = vpop.f32.mrb[0].mxu0
  %v170 = vpop.f32.mrb[0].mxu0
  %v171 = vadd.f32 %v56, %v170
  %v172 = vpop.f32.mrb[0].mxu0
  %173 = vmatprep.mubr.bf16.mxu0 0
  %174 = vmatmul.mubr.bf16.gmra.mrb[0].mxu0 %v93
  %v175 = vpop.f32.mrb[0].mxu0
  %v176 = vadd.f32 %v56, %v175
  %v177 = vpop.f32.mrb[0].mxu0
  %v178 = vpop.f32.mrb[0].mxu0
  %v179 = vadd.f32 %v56, %v178
  %v180 = vpop.f32.mrb[0].mxu0
  %181 = vmatprep.mubr.bf16.mxu0 0
  %182 = vmatmul.mubr.bf16.gmra.mrb[0].mxu0 %v96
  %v183 = vpop.f32.mrb[0].mxu0
  %v184 = vadd.f32 %v56, %v183
  %v185 = vpop.f32.mrb[0].mxu0
  %v186 = vpop.f32.mrb[0].mxu0
  %v187 = vadd.f32 %v56, %v186
  %v188 = vpop.f32.mrb[0].mxu0
  %189 = vmatprep.mubr.bf16.mxu0 0
  %190 = vmatmul.mubr.bf16.gmra.mrb[0].mxu0 %v99
  %v191 = vpop.f32.mrb[0].mxu0
  %v192 = vadd.f32 %v56, %v191
  %v193 = vpop.f32.mrb[0].mxu0
  %v194 = vpop.f32.mrb[0].mxu0
  %v195 = vadd.f32 %v56, %v194
  %v196 = vpop.f32.mrb[0].mxu0
  %197 = vdwg.mxu0
  %v198 = vld [vmem:[%s3] sm:$0x1]
  %v199 = vld [vmem:[%s4] sm:$0x1]
  %vm200 = vcmask 261120
  %v201 = vsel %vm200, %v136, 0.0
  %202 = vadd.xlane.f32.xlu0 %v201
  %v203 = vpop.xlane.xlu0 %202
  %v204 = vsel %vm200, %v139, 0.0
  %205 = vadd.xlane.f32.xlu0 %v204
  %v206 = vpop.xlane.xlu0 %205
  %v207 = vsel %vm200, %v144, 0.0
  %208 = vadd.xlane.f32.xlu0 %v207
  %v209 = vpop.xlane.xlu0 %208
  %v210 = vsel %vm200, %v147, 0.0
  %211 = vadd.xlane.f32.xlu0 %v210
  %v212 = vpop.xlane.xlu0 %211
  %v213 = vsel %vm200, %v152, 0.0
  %214 = vadd.xlane.f32.xlu0 %v213
  %v215 = vpop.xlane.xlu0 %214
  %v216 = vsel %vm200, %v155, 0.0
  %217 = vadd.xlane.f32.xlu0 %v216
  %v218 = vpop.xlane.xlu0 %217
  %v219 = vsel %vm200, %v160, 0.0
  %220 = vadd.xlane.f32.xlu0 %v219
  %v221 = vpop.xlane.xlu0 %220
  %v222 = vsel %vm200, %v163, 0.0
  %223 = vadd.xlane.f32.xlu0 %v222
  %v224 = vpop.xlane.xlu0 %223
  %v225 = vsel %vm200, %v168, 0.0
  %226 = vadd.xlane.f32.xlu0 %v225
  %v227 = vpop.xlane.xlu0 %226
  %v228 = vsel %vm200, %v171, 0.0
  %229 = vadd.xlane.f32.xlu0 %v228
  %v230 = vpop.xlane.xlu0 %229
  %v231 = vsel %vm200, %v176, 0.0
  %232 = vadd.xlane.f32.xlu0 %v231
  %v233 = vpop.xlane.xlu0 %232
  %v234 = vsel %vm200, %v179, 0.0
  %235 = vadd.xlane.f32.xlu0 %v234
  %v236 = vpop.xlane.xlu0 %235
  %v237 = vsel %vm200, %v184, 0.0
  %238 = vadd.xlane.f32.xlu0 %v237
  %v239 = vpop.xlane.xlu0 %238
  %v240 = vsel %vm200, %v187, 0.0
  %241 = vadd.xlane.f32.xlu0 %v240
  %v242 = vpop.xlane.xlu0 %241
  %v243 = vsel %vm200, %v192, 0.0
  %244 = vadd.xlane.f32.xlu0 %v243
  %v245 = vpop.xlane.xlu0 %244
  %v246 = vsel %vm200, %v195, 0.0
  %247 = vadd.xlane.f32.xlu0 %v246
  %v248 = vpop.xlane.xlu0 %247
  %v249 = vrcp.pop 32.0
  %v250 = vmul.f32 %v203, %v249
  %v251 = vmul.f32 %v206, %v249
  %v252 = vmul.f32 %v209, %v249
  %v253 = vmul.f32 %v212, %v249
  %v254 = vmul.f32 %v215, %v249
  %v255 = vmul.f32 %v218, %v249
  %v256 = vmul.f32 %v221, %v249
  %v257 = vmul.f32 %v224, %v249
  %v258 = vmul.f32 %v227, %v249
  %v259 = vmul.f32 %v230, %v249
  %v260 = vmul.f32 %v233, %v249
  %v261 = vmul.f32 %v236, %v249
  %v262 = vmul.f32 %v239, %v249
  %v263 = vmul.f32 %v242, %v249
  %v264 = vmul.f32 %v245, %v249
  %v265 = vmul.f32 %v248, %v249
  %v266 = vsub.f32 %v136, %v250
  %v267 = vsub.f32 %v139, %v251
  %v268 = vsub.f32 %v144, %v252
  %v269 = vsub.f32 %v147, %v253
  %v270 = vsub.f32 %v152, %v254
  %v271 = vsub.f32 %v155, %v255
  %v272 = vsub.f32 %v160, %v256
  %v273 = vsub.f32 %v163, %v257
  %v274 = vsub.f32 %v168, %v258
  %v275 = vsub.f32 %v171, %v259
  %v276 = vsub.f32 %v176, %v260
  %v277 = vsub.f32 %v179, %v261
  %v278 = vsub.f32 %v184, %v262
  %v279 = vsub.f32 %v187, %v263
  %v280 = vsub.f32 %v192, %v264
  %v281 = vsub.f32 %v195, %v265
  %v282 = vmul.f32 %v266, %v266
  %v283 = vmul.f32 %v267, %v267
  %v284 = vmul.f32 %v268, %v268
  %v285 = vmul.f32 %v269, %v269
  %v286 = vmul.f32 %v270, %v270
  %v287 = vmul.f32 %v271, %v271
  %v288 = vmul.f32 %v272, %v272
  %v289 = vmul.f32 %v273, %v273
  %v290 = vmul.f32 %v274, %v274
  %v291 = vmul.f32 %v275, %v275
  %v292 = vmul.f32 %v276, %v276
  %v293 = vmul.f32 %v277, %v277
  %v294 = vmul.f32 %v278, %v278
  %v295 = vmul.f32 %v279, %v279
  %v296 = vmul.f32 %v280, %v280
  %v297 = vmul.f32 %v281, %v281
  %v298 = vsel %vm200, %v282, 0.0
  %299 = vadd.xlane.f32.xlu0 %v298
  %v300 = vpop.xlane.xlu0 %299
  %v301 = vsel %vm200, %v283, 0.0
  %302 = vadd.xlane.f32.xlu0 %v301
  %v303 = vpop.xlane.xlu0 %302
  %v304 = vsel %vm200, %v284, 0.0
  %305 = vadd.xlane.f32.xlu0 %v304
  %v306 = vpop.xlane.xlu0 %305
  %v307 = vsel %vm200, %v285, 0.0
  %308 = vadd.xlane.f32.xlu0 %v307
  %v309 = vpop.xlane.xlu0 %308
  %v310 = vsel %vm200, %v286, 0.0
  %311 = vadd.xlane.f32.xlu0 %v310
  %v312 = vpop.xlane.xlu0 %311
  %v313 = vsel %vm200, %v287, 0.0
  %314 = vadd.xlane.f32.xlu0 %v313
  %v315 = vpop.xlane.xlu0 %314
  %v316 = vsel %vm200, %v288, 0.0
  %317 = vadd.xlane.f32.xlu0 %v316
  %v318 = vpop.xlane.xlu0 %317
  %v319 = vsel %vm200, %v289, 0.0
  %320 = vadd.xlane.f32.xlu0 %v319
  %v321 = vpop.xlane.xlu0 %320
  %v322 = vsel %vm200, %v290, 0.0
  %323 = vadd.xlane.f32.xlu0 %v322
  %v324 = vpop.xlane.xlu0 %323
  %v325 = vsel %vm200, %v291, 0.0
  %326 = vadd.xlane.f32.xlu0 %v325
  %v327 = vpop.xlane.xlu0 %326
  %v328 = vsel %vm200, %v292, 0.0
  %329 = vadd.xlane.f32.xlu0 %v328
  %v330 = vpop.xlane.xlu0 %329
  %v331 = vsel %vm200, %v293, 0.0
  %332 = vadd.xlane.f32.xlu0 %v331
  %v333 = vpop.xlane.xlu0 %332
  %v334 = vsel %vm200, %v294, 0.0
  %335 = vadd.xlane.f32.xlu0 %v334
  %v336 = vpop.xlane.xlu0 %335
  %v337 = vsel %vm200, %v295, 0.0
  %338 = vadd.xlane.f32.xlu0 %v337
  %v339 = vpop.xlane.xlu0 %338
  %v340 = vsel %vm200, %v296, 0.0
  %341 = vadd.xlane.f32.xlu0 %v340
  %v342 = vpop.xlane.xlu0 %341
  %v343 = vsel %vm200, %v297, 0.0
  %344 = vadd.xlane.f32.xlu0 %v343
  %v345 = vpop.xlane.xlu0 %344
  %v346 = vmul.f32 %v300, %v249
  %v347 = vmul.f32 %v303, %v249
  %v348 = vmul.f32 %v306, %v249
  %v349 = vmul.f32 %v309, %v249
  %v350 = vmul.f32 %v312, %v249
  %v351 = vmul.f32 %v315, %v249
  %v352 = vmul.f32 %v318, %v249
  %v353 = vmul.f32 %v321, %v249
  %v354 = vmul.f32 %v324, %v249
  %v355 = vmul.f32 %v327, %v249
  %v356 = vmul.f32 %v330, %v249
  %v357 = vmul.f32 %v333, %v249
  %v358 = vmul.f32 %v336, %v249
  %v359 = vmul.f32 %v339, %v249
  %v360 = vmul.f32 %v342, %v249
  %v361 = vmul.f32 %v345, %v249
  %v362 = vadd.f32 %v346, 1e-05
  %v363 = vadd.f32 %v347, 1e-05
  %v364 = vadd.f32 %v348, 1e-05
  %v365 = vadd.f32 %v349, 1e-05
  %v366 = vadd.f32 %v350, 1e-05
  %v367 = vadd.f32 %v351, 1e-05
  %v368 = vadd.f32 %v352, 1e-05
  %v369 = vadd.f32 %v353, 1e-05
  %v370 = vadd.f32 %v354, 1e-05
  %v371 = vadd.f32 %v355, 1e-05
  %v372 = vadd.f32 %v356, 1e-05
  %v373 = vadd.f32 %v357, 1e-05
  %v374 = vadd.f32 %v358, 1e-05
  %v375 = vadd.f32 %v359, 1e-05
  %v376 = vadd.f32 %v360, 1e-05
  %v377 = vadd.f32 %v361, 1e-05
  %v378 = vrsqrt.pop %v362
  %v379 = vrsqrt.pop %v363
  %v380 = vrsqrt.pop %v364
  %v381 = vrsqrt.pop %v365
  %v382 = vrsqrt.pop %v366
  %v383 = vrsqrt.pop %v367
  %v384 = vrsqrt.pop %v368
  %v385 = vrsqrt.pop %v369
  %v386 = vrsqrt.pop %v370
  %v387 = vrsqrt.pop %v371
  %v388 = vrsqrt.pop %v372
  %v389 = vrsqrt.pop %v373
  %v390 = vrsqrt.pop %v374
  %v391 = vrsqrt.pop %v375
  %v392 = vrsqrt.pop %v376
  %v393 = vrsqrt.pop %v377
  %v394 = vmul.f32 %v266, %v378
  %v395 = vmul.f32 %v267, %v379
  %v396 = vmul.f32 %v268, %v380
  %v397 = vmul.f32 %v269, %v381
  %v398 = vmul.f32 %v270, %v382
  %v399 = vmul.f32 %v271, %v383
  %v400 = vmul.f32 %v272, %v384
  %v401 = vmul.f32 %v273, %v385
  %v402 = vmul.f32 %v274, %v386
  %v403 = vmul.f32 %v275, %v387
  %v404 = vmul.f32 %v276, %v388
  %v405 = vmul.f32 %v277, %v389
  %v406 = vmul.f32 %v278, %v390
  %v407 = vmul.f32 %v279, %v391
  %v408 = vmul.f32 %v280, %v392
  %v409 = vmul.f32 %v281, %v393
  %v411 = vlaneseq
  %v412 = vshrl.u32 %v411, 7
  %v413 = vsub.s32 0, %v412
  %v414 = vrot.slane %v198, %v413
  %v416 = vmul.f32 %v394, %v414
  %v417 = vmul.f32 %v395, %v414
  %v418 = vmul.f32 %v396, %v414
  %v419 = vmul.f32 %v397, %v414
  %v420 = vmul.f32 %v398, %v414
  %v421 = vmul.f32 %v399, %v414
  %v422 = vmul.f32 %v400, %v414
  %v423 = vmul.f32 %v401, %v414
  %v424 = vmul.f32 %v402, %v414
  %v425 = vmul.f32 %v403, %v414
  %v426 = vmul.f32 %v404, %v414
  %v427 = vmul.f32 %v405, %v414
  %v428 = vmul.f32 %v406, %v414
  %v429 = vmul.f32 %v407, %v414
  %v430 = vmul.f32 %v408, %v414
  %v431 = vmul.f32 %v409, %v414
  %v433 = vlaneseq
  %v434 = vshrl.u32 %v433, 7
  %v435 = vsub.s32 0, %v434
  %v436 = vrot.slane %v199, %v435
  %v438 = vadd.f32 %v416, %v436
  %v439 = vadd.f32 %v417, %v436
  %v440 = vadd.f32 %v418, %v436
  %v441 = vadd.f32 %v419, %v436
  %v442 = vadd.f32 %v420, %v436
  %v443 = vadd.f32 %v421, %v436
  %v444 = vadd.f32 %v422, %v436
  %v445 = vadd.f32 %v423, %v436
  %v446 = vadd.f32 %v424, %v436
  %v447 = vadd.f32 %v425, %v436
  %v448 = vadd.f32 %v426, %v436
  %v449 = vadd.f32 %v427, %v436
  %v450 = vadd.f32 %v428, %v436
  %v451 = vadd.f32 %v429, %v436
  %v452 = vadd.f32 %v430, %v436
  %v453 = vadd.f32 %v431, %v436
  %v454 = vpack.c.bf16 %v439, %v438
  %v455 = vpack.c.bf16 %v441, %v440
  %v456 = vpack.c.bf16 %v443, %v442
  %v457 = vpack.c.bf16 %v445, %v444
  %v458 = vpack.c.bf16 %v447, %v446
  %v459 = vpack.c.bf16 %v449, %v448
  %v460 = vpack.c.bf16 %v451, %v450
  %v461 = vpack.c.bf16 %v453, %v452
  %v470 = vunpack.c.l.b16 %v454
  %v471 = vunpack.c.h.b16 %v454
  %v472 = vunpack.c.l.b16 %v455
  %v473 = vunpack.c.h.b16 %v455
  %v474 = vunpack.c.l.b16 %v456
  %v475 = vunpack.c.h.b16 %v456
  %v476 = vunpack.c.l.b16 %v457
  %v477 = vunpack.c.h.b16 %v457
  %v478 = vunpack.c.l.b16 %v458
  %v479 = vunpack.c.h.b16 %v458
  %v480 = vunpack.c.l.b16 %v459
  %v481 = vunpack.c.h.b16 %v459
  %v482 = vunpack.c.l.b16 %v460
  %v483 = vunpack.c.h.b16 %v460
  %v484 = vunpack.c.l.b16 %v461
  %v485 = vunpack.c.h.b16 %v461
  %v486 = vpack.c.b16 %v470, %v470
  %v487 = vpack.c.b16 %v471, %v471
  %v488 = vpack.c.b16 %v472, %v472
  %v489 = vpack.c.b16 %v473, %v473
  %v490 = vpack.c.b16 %v474, %v474
  %v491 = vpack.c.b16 %v475, %v475
  %v492 = vpack.c.b16 %v476, %v476
  %v493 = vpack.c.b16 %v477, %v477
  %v494 = vpack.c.b16 %v478, %v478
  %v495 = vpack.c.b16 %v479, %v479
  %v496 = vpack.c.b16 %v480, %v480
  %v497 = vpack.c.b16 %v481, %v481
  %v498 = vpack.c.b16 %v482, %v482
  %v499 = vpack.c.b16 %v483, %v483
  %v500 = vpack.c.b16 %v484, %v484
  %v501 = vpack.c.b16 %v485, %v485
  %vm518 = vcmask 257024
  %519 = vst.msk [vmem:[%s5] sm:$0xf] %vm518, %v486
  %520 = vst.msk [vmem:[%s5 + $0x4] sm:$0xf] %vm518, %v487
  %521 = vst.msk [vmem:[%s5 + $0x8] sm:$0xf] %vm518, %v488
  %522 = vst.msk [vmem:[%s5 + $0xc] sm:$0xf] %vm518, %v489
  %523 = vst.msk [vmem:[%s5 + $0x10] sm:$0xf] %vm518, %v490
  %524 = vst.msk [vmem:[%s5 + $0x14] sm:$0xf] %vm518, %v491
  %525 = vst.msk [vmem:[%s5 + $0x18] sm:$0xf] %vm518, %v492
  %526 = vst.msk [vmem:[%s5 + $0x1c] sm:$0xf] %vm518, %v493
  %527 = vst.msk [vmem:[%s5 + $0x20] sm:$0xf] %vm518, %v494
  %528 = vst.msk [vmem:[%s5 + $0x24] sm:$0xf] %vm518, %v495
  %529 = vst.msk [vmem:[%s5 + $0x28] sm:$0xf] %vm518, %v496
  %530 = vst.msk [vmem:[%s5 + $0x2c] sm:$0xf] %vm518, %v497
  %531 = vst.msk [vmem:[%s5 + $0x30] sm:$0xf] %vm518, %v498
  %532 = vst.msk [vmem:[%s5 + $0x34] sm:$0xf] %vm518, %v499
  %533 = vst.msk [vmem:[%s5 + $0x38] sm:$0xf] %vm518, %v500
  %534 = vst.msk [vmem:[%s5 + $0x3c] sm:$0xf] %vm518, %v501
  // Predicated region
  $region22: #{swinv2_forward.7} parent=0 // pred_check
    _
  $region23: #{swinv2_forward.7} parent=0 // pred_check_branch
    %536 = sbr.rel (0) target = $region25
  $region24: #{swinv2_forward.7} parent=0 // pred_region
    _
  $region25: #{swinv2_forward.7} parent=0 // pred_fallthru
    _
  // Predicated region
  $region26: #{swinv2_forward.7} parent=0 // pred_check
    _
  $region27: #{swinv2_forward.7} parent=0 // pred_check_branch
    %538 = sbr.rel (0) target = $region29
  $region28: #{swinv2_forward.7} parent=0 // pred_region
    _
  $region29: #{swinv2_forward.7} parent=0 // pred_fallthru
    _

// kernel: swinv2_forward.10
$region0: #{swinv2_forward.10}
  #allocation0 [shape = 'u32[]', space=smem, size = 0x4, offset = 0x4, fixed_abs, tag = 'smem constant byte address 0x4 - core index']
  #allocation1 [shape = 'u32[144,128]{1,0:T(1,128)}', space=vmem, size = 0x12000, scoped, tag = 'internal scratch']
  %s0 = inlined_call_operand.vmem [shape: bf16[32,128], index: 0, kind: input, shape index: {}]
  %s1 = inlined_call_operand.vmem [shape: bf16[128,64], index: 1, kind: input, shape index: {}]
  %s2 = inlined_call_operand.vmem [shape: f32[1,64], index: 2, kind: input, shape index: {}]
  %s3 = inlined_call_operand.vmem [shape: f32[1,64], index: 3, kind: input, shape index: {}]
  %s4 = inlined_call_operand.vmem [shape: bf16[32,64], index: 4, kind: output, shape index: {}]
  %s5 = sld [smem:[#allocation0]]
  $region26: #{swinv2_forward.10} parent=0
    _
  %s7 = ssub.s32 1, %s5
  %s8 = scalar_select 0, %s7, %s5
  // Predicated region
  $region2: #{swinv2_forward.10} parent=0 // pred_check
    _
  $region3: #{swinv2_forward.10} parent=0 // pred_check_branch
    %10 = sbr.rel (0) target = $region5
  $region4: #{swinv2_forward.10} parent=0 // pred_region
    _
  $region5: #{swinv2_forward.10} parent=0 // pred_fallthru
    _
  // Predicated region
  $region6: #{swinv2_forward.10} parent=0 // pred_check
    _
  $region7: #{swinv2_forward.10} parent=0 // pred_check_branch
    %12 = sbr.rel (0) target = $region9
  $region8: #{swinv2_forward.10} parent=0 // pred_region
    _
  $region9: #{swinv2_forward.10} parent=0 // pred_fallthru
    _
  // Predicated region
  $region10: #{swinv2_forward.10} parent=0 // pred_check
    _
  $region11: #{swinv2_forward.10} parent=0 // pred_check_branch
    %14 = sbr.rel (0) target = $region13
  $region12: #{swinv2_forward.10} parent=0 // pred_region
    _
  $region13: #{swinv2_forward.10} parent=0 // pred_fallthru
    _
  // Predicated region
  $region14: #{swinv2_forward.10} parent=0 // pred_check
    _
  $region15: #{swinv2_forward.10} parent=0 // pred_check_branch
    %16 = sbr.rel (0) target = $region17
  $region16: #{swinv2_forward.10} parent=0 // pred_region
    _
  $region17: #{swinv2_forward.10} parent=0 // pred_fallthru
    _
  %v18 = vld [vmem:[%s0] sm:$0xf]
  %v19 = vld [vmem:[%s0 + $0x4] sm:$0xf]
  %v20 = vld [vmem:[%s0 + $0x8] sm:$0xf]
  %v21 = vld [vmem:[%s0 + $0xc] sm:$0xf]
  %v22 = vld [vmem:[%s1] sm:$0xf]
  %v23 = vld [vmem:[%s1 + $0x4] sm:$0xf]
  %v24 = vld [vmem:[%s1 + $0x8] sm:$0xf]
  %v25 = vld [vmem:[%s1 + $0xc] sm:$0xf]
  %v26 = vld [vmem:[%s1 + $0x10] sm:$0xf]
  %v27 = vld [vmem:[%s1 + $0x14] sm:$0xf]
  %v28 = vld [vmem:[%s1 + $0x18] sm:$0xf]
  %v29 = vld [vmem:[%s1 + $0x1c] sm:$0xf]
  %v30 = vld [vmem:[%s1 + $0x20] sm:$0xf]
  %v31 = vld [vmem:[%s1 + $0x24] sm:$0xf]
  %v32 = vld [vmem:[%s1 + $0x28] sm:$0xf]
  %v33 = vld [vmem:[%s1 + $0x2c] sm:$0xf]
  %v34 = vld [vmem:[%s1 + $0x30] sm:$0xf]
  %v35 = vld [vmem:[%s1 + $0x34] sm:$0xf]
  %v36 = vld [vmem:[%s1 + $0x38] sm:$0xf]
  %v37 = vld [vmem:[%s1 + $0x3c] sm:$0xf]
  %v42 = vunpack.c.l.b16 %v18
  %v43 = vunpack.c.l.b16 %v19
  %v44 = vunpack.c.l.b16 %v20
  %v45 = vunpack.c.l.b16 %v21
  %v46 = vpack.c.b16 %v43, %v42
  %v47 = vpack.c.b16 %v45, %v44
  %v66 = vunpack.c.l.b16 %v22
  %v67 = vunpack.c.l.b16 %v23
  %v68 = vunpack.c.l.b16 %v24
  %v69 = vunpack.c.l.b16 %v25
  %v70 = vunpack.c.l.b16 %v26
  %v71 = vunpack.c.l.b16 %v27
  %v72 = vunpack.c.l.b16 %v28
  %v73 = vunpack.c.l.b16 %v29
  %v74 = vunpack.c.l.b16 %v30
  %v75 = vunpack.c.l.b16 %v31
  %v76 = vunpack.c.l.b16 %v32
  %v77 = vunpack.c.l.b16 %v33
  %v78 = vunpack.c.l.b16 %v34
  %v79 = vunpack.c.l.b16 %v35
  %v80 = vunpack.c.l.b16 %v36
  %v81 = vunpack.c.l.b16 %v37
  %v82 = vpack.c.b16 %v67, %v66
  %v83 = vpack.c.b16 %v69, %v68
  %v84 = vpack.c.b16 %v71, %v70
  %v85 = vpack.c.b16 %v73, %v72
  %v86 = vpack.c.b16 %v75, %v74
  %v87 = vpack.c.b16 %v77, %v76
  %v88 = vpack.c.b16 %v79, %v78
  %v89 = vpack.c.b16 %v81, %v80
  %98 = vmatprep.subr.bf16.mxu0 0
  %99 = vmatpush1.bf16.msra.mxu0 %v82
  %100 = vmatprep.subr.bf16.mxu0 0
  %101 = vmatpush1.bf16.msra.mxu0 %v83
  %102 = vmatprep.subr.bf16.mxu0 0
  %103 = vmatpush1.bf16.msra.mxu0 %v84
  %104 = vmatprep.subr.bf16.mxu0 0
  %105 = vmatpush1.bf16.msra.mxu0 %v85
  %106 = vmatprep.subr.bf16.mxu0 0
  %107 = vmatpush1.bf16.msra.mxu0 %v86
  %108 = vmatprep.subr.bf16.mxu0 0
  %109 = vmatpush1.bf16.msra.mxu0 %v87
  %110 = vmatprep.subr.bf16.mxu0 0
  %111 = vmatpush1.bf16.msra.mxu0 %v88
  %112 = vmatprep.subr.bf16.mxu0 0
  %113 = vmatpush1.bf16.msra.mxu0 %v89
  %114 = vmatprep.subr.bf16.mxu0 0
  %115 = vmatpush1.bf16.msra.mxu0 0
  %116 = vmatprep.subr.bf16.mxu0 0
  %117 = vmatpush1.bf16.msra.mxu0 0
  %118 = vmatprep.subr.bf16.mxu0 0
  %119 = vmatpush1.bf16.msra.mxu0 0
  %120 = vmatprep.subr.bf16.mxu0 0
  %121 = vmatpush1.bf16.msra.mxu0 0
  %122 = vmatprep.subr.bf16.mxu0 0
  %123 = vmatpush1.bf16.msra.mxu0 0
  %124 = vmatprep.subr.bf16.mxu0 0
  %125 = vmatpush1.bf16.msra.mxu0 0
  %126 = vmatprep.subr.bf16.mxu0 0
  %127 = vmatpush1.bf16.msra.mxu0 0
  %128 = vmatprep.subr.bf16.mxu0 0
  %129 = vmatpush1.bf16.msra.mxu0 0
  %130 = vmatprep.mubr.bf16.mxu0 0
  %131 = vmatmul.mubr.bf16.gmra.mrb[0].mxu0 %v46
  %v132 = vpop.f32.mrb[0].mxu0
  %v133 = vadd.f32 0.0, %v132
  %v134 = vpop.f32.mrb[0].mxu0
  %v135 = vpop.f32.mrb[0].mxu0
  %v136 = vadd.f32 0.0, %v135
  %v137 = vpop.f32.mrb[0].mxu0
  %138 = vmatprep.mubr.bf16.mxu0 0
  %139 = vmatmul.mubr.bf16.gmra.mrb[0].mxu0 %v47
  %v140 = vpop.f32.mrb[0].mxu0
  %v141 = vadd.f32 0.0, %v140
  %v142 = vpop.f32.mrb[0].mxu0
  %v143 = vpop.f32.mrb[0].mxu0
  %v144 = vadd.f32 0.0, %v143
  %v145 = vpop.f32.mrb[0].mxu0
  %146 = vdwg.mxu0
  %v147 = vld [vmem:[%s2] sm:$0x1]
  %v148 = vld [vmem:[%s3] sm:$0x1]
  %vm149 = vcmask 523264
  %v150 = vsel %vm149, %v133, 0.0
  %151 = vadd.xlane.f32.xlu0 %v150
  %v152 = vpop.xlane.xlu0 %151
  %v153 = vsel %vm149, %v136, 0.0
  %154 = vadd.xlane.f32.xlu0 %v153
  %v155 = vpop.xlane.xlu0 %154
  %v156 = vsel %vm149, %v141, 0.0
  %157 = vadd.xlane.f32.xlu0 %v156
  %v158 = vpop.xlane.xlu0 %157
  %v159 = vsel %vm149, %v144, 0.0
  %160 = vadd.xlane.f32.xlu0 %v159
  %v161 = vpop.xlane.xlu0 %160
  %v162 = vrcp.pop 64.0
  %v163 = vmul.f32 %v152, %v162
  %v164 = vmul.f32 %v155, %v162
  %v165 = vmul.f32 %v158, %v162
  %v166 = vmul.f32 %v161, %v162
  %v167 = vsub.f32 %v133, %v163
  %v168 = vsub.f32 %v136, %v164
  %v169 = vsub.f32 %v141, %v165
  %v170 = vsub.f32 %v144, %v166
  %v171 = vmul.f32 %v167, %v167
  %v172 = vmul.f32 %v168, %v168
  %v173 = vmul.f32 %v169, %v169
  %v174 = vmul.f32 %v170, %v170
  %v175 = vsel %vm149, %v171, 0.0
  %176 = vadd.xlane.f32.xlu0 %v175
  %v177 = vpop.xlane.xlu0 %176
  %v178 = vsel %vm149, %v172, 0.0
  %179 = vadd.xlane.f32.xlu0 %v178
  %v180 = vpop.xlane.xlu0 %179
  %v181 = vsel %vm149, %v173, 0.0
  %182 = vadd.xlane.f32.xlu0 %v181
  %v183 = vpop.xlane.xlu0 %182
  %v184 = vsel %vm149, %v174, 0.0
  %185 = vadd.xlane.f32.xlu0 %v184
  %v186 = vpop.xlane.xlu0 %185
  %v187 = vmul.f32 %v177, %v162
  %v188 = vmul.f32 %v180, %v162
  %v189 = vmul.f32 %v183, %v162
  %v190 = vmul.f32 %v186, %v162
  %v191 = vadd.f32 %v187, 1e-05
  %v192 = vadd.f32 %v188, 1e-05
  %v193 = vadd.f32 %v189, 1e-05
  %v194 = vadd.f32 %v190, 1e-05
  %v195 = vrsqrt.pop %v191
  %v196 = vrsqrt.pop %v192
  %v197 = vrsqrt.pop %v193
  %v198 = vrsqrt.pop %v194
  %v199 = vmul.f32 %v167, %v195
  %v200 = vmul.f32 %v168, %v196
  %v201 = vmul.f32 %v169, %v197
  %v202 = vmul.f32 %v170, %v198
  %v204 = vlaneseq
  %v205 = vshrl.u32 %v204, 7
  %v206 = vsub.s32 0, %v205
  %v207 = vrot.slane %v147, %v206
  %v209 = vmul.f32 %v199, %v207
  %v210 = vmul.f32 %v200, %v207
  %v211 = vmul.f32 %v201, %v207
  %v212 = vmul.f32 %v202, %v207
  %v214 = vlaneseq
  %v215 = vshrl.u32 %v214, 7
  %v216 = vsub.s32 0, %v215
  %v217 = vrot.slane %v148, %v216
  %v219 = vadd.f32 %v209, %v217
  %v220 = vadd.f32 %v210, %v217
  %v221 = vadd.f32 %v211, %v217
  %v222 = vadd.f32 %v212, %v217
  %v223 = vpack.c.bf16 %v220, %v219
  %v224 = vpack.c.bf16 %v222, %v221
  %v227 = vunpack.c.l.b16 %v223
  %v228 = vunpack.c.h.b16 %v223
  %v229 = vunpack.c.l.b16 %v224
  %v230 = vunpack.c.h.b16 %v224
  %v231 = vpack.c.b16 %v227, %v227
  %v232 = vpack.c.b16 %v228, %v228
  %v233 = vpack.c.b16 %v229, %v229
  %v234 = vpack.c.b16 %v230, %v230
  %vm239 = vcmask 519168
  %240 = vst.msk [vmem:[%s4] sm:$0xf] %vm239, %v231
  %241 = vst.msk [vmem:[%s4 + $0x4] sm:$0xf] %vm239, %v232
  %242 = vst.msk [vmem:[%s4 + $0x8] sm:$0xf] %vm239, %v233
  %243 = vst.msk [vmem:[%s4 + $0xc] sm:$0xf] %vm239, %v234
  // Predicated region
  $region18: #{swinv2_forward.10} parent=0 // pred_check
    _
  $region19: #{swinv2_forward.10} parent=0 // pred_check_branch
    %245 = sbr.rel (0) target = $region21
  $region20: #{swinv2_forward.10} parent=0 // pred_region
    _
  $region21: #{swinv2_forward.10} parent=0 // pred_fallthru
    _
  // Predicated region
  $region22: #{swinv2_forward.10} parent=0 // pred_check
    _
  $region23: #{swinv2_forward.10} parent=0 // pred_check_branch
    %247 = sbr.rel (0) target = $region25
  $region24: #{swinv2_forward.10} parent=0 // pred_region
    _
  $region25: #{swinv2_forward.10} parent=0 // pred_fallthru
    _

// kernel: swinv2_forward.13
$region0: #{swinv2_forward.13}
  #allocation0 [shape = 'u32[]', space=smem, size = 0x4, offset = 0x4, fixed_abs, tag = 'smem constant byte address 0x4 - core index']
  #allocation1 [shape = 'u32[144,128]{1,0:T(1,128)}', space=vmem, size = 0x12000, scoped, tag = 'internal scratch']
  %s0 = inlined_call_operand.vmem [shape: bf16[32,64], index: 0, kind: input, shape index: {}]
  %s1 = inlined_call_operand.vmem [shape: f32[1,64], index: 1, kind: input, shape index: {}]
  %s2 = inlined_call_operand.vmem [shape: f32[1,64], index: 2, kind: input, shape index: {}]
  %s3 = inlined_call_operand.hbm [shape: f32[32,64], index: 3, kind: output, shape index: {}]
  %s4 = sld [smem:[#allocation0]]
  $region22: #{swinv2_forward.13} parent=0
    _
  %s6 = ssub.s32 1, %s4
  %s7 = scalar_select 0, %s6, %s4
  $region1: #{swinv2_forward.13} parent=0
    #allocation2 [shape = 'u8[16384]{0}', space=vmem, size = 0x4000, scoped, tag = 'output window, operand 0, single buffered']
    #allocation3 [shape = 's32[1]{0}', space=sflag, size = 0x4, scoped, tag = 'scoped memory for swinv2_forward.13']
    %8 = vsyncpa [#allocation3], 0
    // Predicated region
    $region2: #{swinv2_forward.13} parent=1 // pred_check
      _
    $region3: #{swinv2_forward.13} parent=1 // pred_check_branch
      %10 = sbr.rel (0) target = $region5
    $region4: #{swinv2_forward.13} parent=1 // pred_region
      _
    $region5: #{swinv2_forward.13} parent=1 // pred_fallthru
      _
    // Predicated region
    $region6: #{swinv2_forward.13} parent=1 // pred_check
      _
    $region7: #{swinv2_forward.13} parent=1 // pred_check_branch
      %12 = sbr.rel (0) target = $region9
    $region8: #{swinv2_forward.13} parent=1 // pred_region
      _
    $region9: #{swinv2_forward.13} parent=1 // pred_fallthru
      _
    // Predicated region
    $region10: #{swinv2_forward.13} parent=1 // pred_check
      _
    $region11: #{swinv2_forward.13} parent=1 // pred_check_branch
      %14 = sbr.rel (0) target = $region13
    $region12: #{swinv2_forward.13} parent=1 // pred_region
      _
    $region13: #{swinv2_forward.13} parent=1 // pred_fallthru
      _
    %v15 = vld [vmem:[%s0] sm:$0xf]
    %v16 = vld [vmem:[%s0 + $0x4] sm:$0xf]
    %v17 = vld [vmem:[%s0 + $0x8] sm:$0xf]
    %v18 = vld [vmem:[%s0 + $0xc] sm:$0xf]
    %v19 = vunpack.c.l.bf16 %v15
    %v20 = vunpack.c.l.bf16 %v16
    %v21 = vunpack.c.l.bf16 %v17
    %v22 = vunpack.c.l.bf16 %v18
    %v23 = vld [vmem:[%s1] sm:$0x1]
    %v24 = vld [vmem:[%s2] sm:$0x1]
    %vm25 = vcmask 523264
    %v26 = vsel %vm25, %v19, 0.0
    %27 = vadd.xlane.f32.xlu0 %v26
    %v28 = vpop.xlane.xlu0 %27
    %v29 = vsel %vm25, %v20, 0.0
    %30 = vadd.xlane.f32.xlu0 %v29
    %v31 = vpop.xlane.xlu0 %30
    %v32 = vsel %vm25, %v21, 0.0
    %33 = vadd.xlane.f32.xlu0 %v32
    %v34 = vpop.xlane.xlu0 %33
    %v35 = vsel %vm25, %v22, 0.0
    %36 = vadd.xlane.f32.xlu0 %v35
    %v37 = vpop.xlane.xlu0 %36
    %v38 = vrcp.pop 64.0
    %v39 = vmul.f32 %v28, %v38
    %v40 = vmul.f32 %v31, %v38
    %v41 = vmul.f32 %v34, %v38
    %v42 = vmul.f32 %v37, %v38
    %v43 = vsub.f32 %v19, %v39
    %v44 = vsub.f32 %v20, %v40
    %v45 = vsub.f32 %v21, %v41
    %v46 = vsub.f32 %v22, %v42
    %v47 = vmul.f32 %v43, %v43
    %v48 = vmul.f32 %v44, %v44
    %v49 = vmul.f32 %v45, %v45
    %v50 = vmul.f32 %v46, %v46
    %v51 = vsel %vm25, %v47, 0.0
    %52 = vadd.xlane.f32.xlu0 %v51
    %v53 = vpop.xlane.xlu0 %52
    %v54 = vsel %vm25, %v48, 0.0
    %55 = vadd.xlane.f32.xlu0 %v54
    %v56 = vpop.xlane.xlu0 %55
    %v57 = vsel %vm25, %v49, 0.0
    %58 = vadd.xlane.f32.xlu0 %v57
    %v59 = vpop.xlane.xlu0 %58
    %v60 = vsel %vm25, %v50, 0.0
    %61 = vadd.xlane.f32.xlu0 %v60
    %v62 = vpop.xlane.xlu0 %61
    %v63 = vmul.f32 %v53, %v38
    %v64 = vmul.f32 %v56, %v38
    %v65 = vmul.f32 %v59, %v38
    %v66 = vmul.f32 %v62, %v38
    %v67 = vadd.f32 %v63, 1e-05
    %v68 = vadd.f32 %v64, 1e-05
    %v69 = vadd.f32 %v65, 1e-05
    %v70 = vadd.f32 %v66, 1e-05
    %v71 = vrsqrt.pop %v67
    %v72 = vrsqrt.pop %v68
    %v73 = vrsqrt.pop %v69
    %v74 = vrsqrt.pop %v70
    %v75 = vmul.f32 %v43, %v71
    %v76 = vmul.f32 %v44, %v72
    %v77 = vmul.f32 %v45, %v73
    %v78 = vmul.f32 %v46, %v74
    %v80 = vlaneseq
    %v81 = vshrl.u32 %v80, 7
    %v82 = vsub.s32 0, %v81
    %v83 = vrot.slane %v23, %v82
    %v85 = vmul.f32 %v75, %v83
    %v86 = vmul.f32 %v76, %v83
    %v87 = vmul.f32 %v77, %v83
    %v88 = vmul.f32 %v78, %v83
    %v90 = vlaneseq
    %v91 = vshrl.u32 %v90, 7
    %v92 = vsub.s32 0, %v91
    %v93 = vrot.slane %v24, %v92
    %v95 = vadd.f32 %v85, %v93
    %v96 = vadd.f32 %v86, %v93
    %v97 = vadd.f32 %v87, %v93
    %v98 = vadd.f32 %v88, %v93
    %99 = vst.msk [vmem:[#allocation2] sm:$0xff] %vm25, %v95
    %100 = vst.msk [vmem:[#allocation2 + $0x8] sm:$0xff] %vm25, %v96
    %101 = vst.msk [vmem:[#allocation2 + $0x10] sm:$0xff] %vm25, %v97
    %102 = vst.msk [vmem:[#allocation2 + $0x18] sm:$0xff] %vm25, %v98
    // Predicated region
    $region14: #{swinv2_forward.13} parent=1 // pred_check
      _
    $region15: #{swinv2_forward.13} parent=1 // pred_check_branch
      %104 = sbr.rel (0) target = $region17
    $region16: #{swinv2_forward.13} parent=1 // pred_region
      %s106 = ssub.s32 512, 512
      %107 = vsyncadd [#allocation3], %s106
      %s108 = sshll.u32 [#allocation2], 4
      %s109 = int_to_ptr.vmem [resolvable:$true] %s108
      %114 = dma.vmem_to_hbm [thread:$0]  %s109, 512, %s3, [#allocation3], 128, 128, 8
    $region17: #{swinv2_forward.13} parent=1 // pred_fallthru
      _
    // Predicated region
    $region18: #{swinv2_forward.13} parent=1 // pred_check
      _
    $region19: #{swinv2_forward.13} parent=1 // pred_check_branch
      %116 = sbr.rel (0) target = $region21
    $region20: #{swinv2_forward.13} parent=1 // pred_region
      %117 = dma.done [#allocation3], 512
    $region21: #{swinv2_forward.13} parent=1 // pred_fallthru
      _
    %118 = vsyncpa [#allocation3], 1

// kernel: swinv2_forward.8
$region0: #{swinv2_forward.8}
  #allocation0 [shape = 'u32[]', space=smem, size = 0x4, offset = 0x4, fixed_abs, tag = 'smem constant byte address 0x4 - core index']
  #allocation1 [shape = 'u32[144,128]{1,0:T(1,128)}', space=vmem, size = 0x12000, scoped, tag = 'internal scratch']
  %s0 = inlined_call_operand.vmem [shape: bf16[128,32], index: 0, kind: input, shape index: {}]
  %s1 = inlined_call_operand.vmem [shape: bf16[32,96], index: 1, kind: input, shape index: {}]
  %s2 = inlined_call_operand.vmem [shape: f32[1,96], index: 2, kind: input, shape index: {}]
  %s3 = inlined_call_operand.vmem [shape: bf16[32,32], index: 3, kind: input, shape index: {}]
  %s4 = inlined_call_operand.vmem [shape: f32[1,32], index: 4, kind: input, shape index: {}]
  %s5 = inlined_call_operand.vmem [shape: f32[16,1,1], index: 5, kind: input, shape index: {}]
  %s6 = inlined_call_operand.vmem [shape: f32[16,16,16], index: 6, kind: input, shape index: {}]
  %s7 = inlined_call_operand.vmem [shape: f32[1,32], index: 7, kind: input, shape index: {}]
  %s8 = inlined_call_operand.vmem [shape: f32[1,32], index: 8, kind: input, shape index: {}]
  %s9 = inlined_call_operand.vmem [shape: bf16[32,64], index: 9, kind: input, shape index: {}]
  %s10 = inlined_call_operand.vmem [shape: f32[1,64], index: 10, kind: input, shape index: {}]
  %s11 = inlined_call_operand.vmem [shape: bf16[64,32], index: 11, kind: input, shape index: {}]
  %s12 = inlined_call_operand.vmem [shape: f32[1,32], index: 12, kind: input, shape index: {}]
  %s13 = inlined_call_operand.vmem [shape: f32[1,32], index: 13, kind: input, shape index: {}]
  %s14 = inlined_call_operand.vmem [shape: f32[1,32], index: 14, kind: input, shape index: {}]
  %s15 = inlined_call_operand.vmem [shape: bf16[128,32], index: 15, kind: output, shape index: {}]
  %s16 = sld [smem:[#allocation0]]
  $region70: #{swinv2_forward.8} parent=0
    _
  %s18 = ssub.s32 1, %s16
  %s19 = scalar_select 0, %s18, %s16
  // Predicated region
  $region2: #{swinv2_forward.8} parent=0 // pred_check
    _
  $region3: #{swinv2_forward.8} parent=0 // pred_check_branch
    %21 = sbr.rel (0) target = $region5
  $region4: #{swinv2_forward.8} parent=0 // pred_region
    _
  $region5: #{swinv2_forward.8} parent=0 // pred_fallthru
    _
  // Predicated region
  $region6: #{swinv2_forward.8} parent=0 // pred_check
    _
  $region7: #{swinv2_forward.8} parent=0 // pred_check_branch
    %23 = sbr.rel (0) target = $region9
  $region8: #{swinv2_forward.8} parent=0 // pred_region
    _
  $region9: #{swinv2_forward.8} parent=0 // pred_fallthru
    _
  // Predicated region
  $region10: #{swinv2_forward.8} parent=0 // pred_check
    _
  $region11: #{swinv2_forward.8} parent=0 // pred_check_branch
    %25 = sbr.rel (0) target = $region13
  $region12: #{swinv2_forward.8} parent=0 // pred_region
    _
  $region13: #{swinv2_forward.8} parent=0 // pred_fallthru
    _
  // Predicated region
  $region14: #{swinv2_forward.8} parent=0 // pred_check
    _
  $region15: #{swinv2_forward.8} parent=0 // pred_check_branch
    %27 = sbr.rel (0) target = $region17
  $region16: #{swinv2_forward.8} parent=0 // pred_region
    _
  $region17: #{swinv2_forward.8} parent=0 // pred_fallthru
    _
  // Predicated region
  $region18: #{swinv2_forward.8} parent=0 // pred_check
    _
  $region19: #{swinv2_forward.8} parent=0 // pred_check_branch
    %29 = sbr.rel (0) target = $region21
  $region20: #{swinv2_forward.8} parent=0 // pred_region
    _
  $region21: #{swinv2_forward.8} parent=0 // pred_fallthru
    _
  // Predicated region
  $region22: #{swinv2_forward.8} parent=0 // pred_check
    _
  $region23: #{swinv2_forward.8} parent=0 // pred_check_branch
    %31 = sbr.rel (0) target = $region25
  $region24: #{swinv2_forward.8} parent=0 // pred_region
    _
  $region25: #{swinv2_forward.8} parent=0 // pred_fallthru
    _
  // Predicated region
  $region26: #{swinv2_forward.8} parent=0 // pred_check
    _
  $region27: #{swinv2_forward.8} parent=0 // pred_check_branch
    %33 = sbr.rel (0) target = $region29
  $region28: #{swinv2_forward.8} parent=0 // pred_region
    _
  $region29: #{swinv2_forward.8} parent=0 // pred_fallthru
    _
  // Predicated region
  $region30: #{swinv2_forward.8} parent=0 // pred_check
    _
  $region31: #{swinv2_forward.8} parent=0 // pred_check_branch
    %35 = sbr.rel (0) target = $region33
  $region32: #{swinv2_forward.8} parent=0 // pred_region
    _
  $region33: #{swinv2_forward.8} parent=0 // pred_fallthru
    _
  // Predicated region
  $region34: #{swinv2_forward.8} parent=0 // pred_check
    _
  $region35: #{swinv2_forward.8} parent=0 // pred_check_branch
    %37 = sbr.rel (0) target = $region37
  $region36: #{swinv2_forward.8} parent=0 // pred_region
    _
  $region37: #{swinv2_forward.8} parent=0 // pred_fallthru
    _
  // Predicated region
  $region38: #{swinv2_forward.8} parent=0 // pred_check
    _
  $region39: #{swinv2_forward.8} parent=0 // pred_check_branch
    %39 = sbr.rel (0) target = $region41
  $region40: #{swinv2_forward.8} parent=0 // pred_region
    _
  $region41: #{swinv2_forward.8} parent=0 // pred_fallthru
    _
  // Predicated region
  $region42: #{swinv2_forward.8} parent=0 // pred_check
    _
  $region43: #{swinv2_forward.8} parent=0 // pred_check_branch
    %41 = sbr.rel (0) target = $region45
  $region44: #{swinv2_forward.8} parent=0 // pred_region
    _
  $region45: #{swinv2_forward.8} parent=0 // pred_fallthru
    _
  // Predicated region
  $region46: #{swinv2_forward.8} parent=0 // pred_check
    _
  $region47: #{swinv2_forward.8} parent=0 // pred_check_branch
    %43 = sbr.rel (0) target = $region49
  $region48: #{swinv2_forward.8} parent=0 // pred_region
    _
  $region49: #{swinv2_forward.8} parent=0 // pred_fallthru
    _
  // Predicated region
  $region50: #{swinv2_forward.8} parent=0 // pred_check
    _
  $region51: #{swinv2_forward.8} parent=0 // pred_check_branch
    %45 = sbr.rel (0) target = $region53
  $region52: #{swinv2_forward.8} parent=0 // pred_region
    _
  $region53: #{swinv2_forward.8} parent=0 // pred_fallthru
    _
  // Predicated region
  $region54: #{swinv2_forward.8} parent=0 // pred_check
    _
  $region55: #{swinv2_forward.8} parent=0 // pred_check_branch
    %47 = sbr.rel (0) target = $region57
  $region56: #{swinv2_forward.8} parent=0 // pred_region
    _
  $region57: #{swinv2_forward.8} parent=0 // pred_fallthru
    _
  // Predicated region
  $region58: #{swinv2_forward.8} parent=0 // pred_check
    _
  $region59: #{swinv2_forward.8} parent=0 // pred_check_branch
    %49 = sbr.rel (0) target = $region61
  $region60: #{swinv2_forward.8} parent=0 // pred_region
    _
  $region61: #{swinv2_forward.8} parent=0 // pred_fallthru
    _
  %v51 = vld [vmem:[%s0] sm:$0xf]
  %v52 = vld [vmem:[%s0 + $0x4] sm:$0xf]
  %v53 = vld [vmem:[%s0 + $0x8] sm:$0xf]
  %v54 = vld [vmem:[%s0 + $0xc] sm:$0xf]
  %v55 = vld [vmem:[%s0 + $0x10] sm:$0xf]
  %v56 = vld [vmem:[%s0 + $0x14] sm:$0xf]
  %v57 = vld [vmem:[%s0 + $0x18] sm:$0xf]
  %v58 = vld [vmem:[%s0 + $0x1c] sm:$0xf]
  %v59 = vld [vmem:[%s0 + $0x20] sm:$0xf]
  %v60 = vld [vmem:[%s0 + $0x24] sm:$0xf]
  %v61 = vld [vmem:[%s0 + $0x28] sm:$0xf]
  %v62 = vld [vmem:[%s0 + $0x2c] sm:$0xf]
  %v63 = vld [vmem:[%s0 + $0x30] sm:$0xf]
  %v64 = vld [vmem:[%s0 + $0x34] sm:$0xf]
  %v65 = vld [vmem:[%s0 + $0x38] sm:$0xf]
  %v66 = vld [vmem:[%s0 + $0x3c] sm:$0xf]
  %v67 = vunpack.c.l.bf16 %v51
  %v68 = vunpack.c.l.bf16 %v52
  %v69 = vunpack.c.l.bf16 %v53
  %v70 = vunpack.c.l.bf16 %v54
  %v71 = vunpack.c.l.bf16 %v55
  %v72 = vunpack.c.l.bf16 %v56
  %v73 = vunpack.c.l.bf16 %v57
  %v74 = vunpack.c.l.bf16 %v58
  %v75 = vunpack.c.l.bf16 %v59
  %v76 = vunpack.c.l.bf16 %v60
  %v77 = vunpack.c.l.bf16 %v61
  %v78 = vunpack.c.l.bf16 %v62
  %v79 = vunpack.c.l.bf16 %v63
  %v80 = vunpack.c.l.bf16 %v64
  %v81 = vunpack.c.l.bf16 %v65
  %v82 = vunpack.c.l.bf16 %v66
  %v83 = vld [vmem:[%s1] sm:$0xf]
  %v84 = vld [vmem:[%s1 + $0x4] sm:$0xf]
  %v85 = vld [vmem:[%s1 + $0x8] sm:$0xf]
  %v86 = vld [vmem:[%s1 + $0xc] sm:$0xf]
  %v87 = vld [vmem:[%s2] sm:$0x1]
  %v89 = vlaneseq
  %v90 = vshrl.u32 %v89, 7
  %v91 = vsub.s32 0, %v90
  %v92 = vrot.slane %v87, %v91
  %v110 = vunpack.c.l.b16 %v51
  %v111 = vunpack.c.l.b16 %v52
  %v112 = vunpack.c.l.b16 %v53
  %v113 = vunpack.c.l.b16 %v54
  %v114 = vunpack.c.l.b16 %v55
  %v115 = vunpack.c.l.b16 %v56
  %v116 = vunpack.c.l.b16 %v57
  %v117 = vunpack.c.l.b16 %v58
  %v118 = vunpack.c.l.b16 %v59
  %v119 = vunpack.c.l.b16 %v60
  %v120 = vunpack.c.l.b16 %v61
  %v121 = vunpack.c.l.b16 %v62
  %v122 = vunpack.c.l.b16 %v63
  %v123 = vunpack.c.l.b16 %v64
  %v124 = vunpack.c.l.b16 %v65
  %v125 = vunpack.c.l.b16 %v66
  %v126 = vpack.c.b16 %v111, %v110
  %v127 = vpack.c.b16 %v113, %v112
  %v128 = vpack.c.b16 %v115, %v114
  %v129 = vpack.c.b16 %v117, %v116
  %v130 = vpack.c.b16 %v119, %v118
  %v131 = vpack.c.b16 %v121, %v120
  %v132 = vpack.c.b16 %v123, %v122
  %v133 = vpack.c.b16 %v125, %v124
  %v138 = vunpack.c.l.b16 %v83
  %v139 = vunpack.c.l.b16 %v84
  %v140 = vunpack.c.l.b16 %v85
  %v141 = vunpack.c.l.b16 %v86
  %v142 = vpack.c.b16 %v139, %v138
  %v143 = vpack.c.b16 %v141, %v140
  %vm146 = vcmask 261120
  %v148 = vsel %vm146, %v126, 0
  %v151 = vsel %vm146, %v127, 0
  %v154 = vsel %vm146, %v128, 0
  %v157 = vsel %vm146, %v129, 0
  %v160 = vsel %vm146, %v130, 0
  %v163 = vsel %vm146, %v131, 0
  %v166 = vsel %vm146, %v132, 0
  %v169 = vsel %vm146, %v133, 0
  %171 = vmatprep.subr.bf16.mxu0 0
  %172 = vmatpush1.bf16.msra.mxu0 %v142
  %173 = vmatprep.subr.bf16.mxu0 0
  %174 = vmatpush1.bf16.msra.mxu0 %v143
  %175 = vmatprep.subr.bf16.mxu0 0
  %176 = vmatpush1.bf16.msra.mxu0 0
  %177 = vmatprep.subr.bf16.mxu0 0
  %178 = vmatpush1.bf16.msra.mxu0 0
  %179 = vmatprep.subr.bf16.mxu0 0
  %180 = vmatpush1.bf16.msra.mxu0 0
  %181 = vmatprep.subr.bf16.mxu0 0
  %182 = vmatpush1.bf16.msra.mxu0 0
  %183 = vmatprep.subr.bf16.mxu0 0
  %184 = vmatpush1.bf16.msra.mxu0 0
  %185 = vmatprep.subr.bf16.mxu0 0
  %186 = vmatpush1.bf16.msra.mxu0 0
  %187 = vmatprep.subr.bf16.mxu0 0
  %188 = vmatpush1.bf16.msra.mxu0 0
  %189 = vmatprep.subr.bf16.mxu0 0
  %190 = vmatpush1.bf16.msra.mxu0 0
  %191 = vmatprep.subr.bf16.mxu0 0
  %192 = vmatpush1.bf16.msra.mxu0 0
  %193 = vmatprep.subr.bf16.mxu0 0
  %194 = vmatpush1.bf16.msra.mxu0 0
  %195 = vmatprep.subr.bf16.mxu0 0
  %196 = vmatpush1.bf16.msra.mxu0 0
  %197 = vmatprep.subr.bf16.mxu0 0
  %198 = vmatpush1.bf16.msra.mxu0 0
  %199 = vmatprep.subr.bf16.mxu0 0
  %200 = vmatpush1.bf16.msra.mxu0 0
  %201 = vmatprep.subr.bf16.mxu0 0
  %202 = vmatpush1.bf16.msra.mxu0 0
  %203 = vmatprep.mubr.bf16.mxu0 0
  %204 = vmatmul.mubr.bf16.gmra.mrb[0].mxu0 %v148
  %v205 = vpop.f32.mrb[0].mxu0
  %v206 = vadd.f32 %v92, %v205
  %v207 = vpop.f32.mrb[0].mxu0
  %v208 = vpop.f32.mrb[0].mxu0
  %v209 = vadd.f32 %v92, %v208
  %v210 = vpop.f32.mrb[0].mxu0
  %211 = vmatprep.mubr.bf16.mxu0 0
  %212 = vmatmul.mubr.bf16.gmra.mrb[0].mxu0 %v151
  %v213 = vpop.f32.mrb[0].mxu0
  %v214 = vadd.f32 %v92, %v213
  %v215 = vpop.f32.mrb[0].mxu0
  %v216 = vpop.f32.mrb[0].mxu0
  %v217 = vadd.f32 %v92, %v216
  %v218 = vpop.f32.mrb[0].mxu0
  %219 = vmatprep.mubr.bf16.mxu0 0
  %220 = vmatmul.mubr.bf16.gmra.mrb[0].mxu0 %v154
  %v221 = vpop.f32.mrb[0].mxu0
  %v222 = vadd.f32 %v92, %v221
  %v223 = vpop.f32.mrb[0].mxu0
  %v224 = vpop.f32.mrb[0].mxu0
  %v225 = vadd.f32 %v92, %v224
  %v226 = vpop.f32.mrb[0].mxu0
  %227 = vmatprep.mubr.bf16.mxu0 0
  %228 = vmatmul.mubr.bf16.gmra.mrb[0].mxu0 %v157
  %v229 = vpop.f32.mrb[0].mxu0
  %v230 = vadd.f32 %v92, %v229
  %v231 = vpop.f32.mrb[0].mxu0
  %v232 = vpop.f32.mrb[0].mxu0
  %v233 = vadd.f32 %v92, %v232
  %v234 = vpop.f32.mrb[0].mxu0
  %235 = vmatprep.mubr.bf16.mxu0 0
  %236 = vmatmul.mubr.bf16.gmra.mrb[0].mxu0 %v160
  %v237 = vpop.f32.mrb[0].mxu0
  %v238 = vadd.f32 %v92, %v237
  %v239 = vpop.f32.mrb[0].mxu0
  %v240 = vpop.f32.mrb[0].mxu0
  %v241 = vadd.f32 %v92, %v240
  %v242 = vpop.f32.mrb[0].mxu0
  %243 = vmatprep.mubr.bf16.mxu0 0
  %244 = vmatmul.mubr.bf16.gmra.mrb[0].mxu0 %v163
  %v245 = vpop.f32.mrb[0].mxu0
  %v246 = vadd.f32 %v92, %v245
  %v247 = vpop.f32.mrb[0].mxu0
  %v248 = vpop.f32.mrb[0].mxu0
  %v249 = vadd.f32 %v92, %v248
  %v250 = vpop.f32.mrb[0].mxu0
  %251 = vmatprep.mubr.bf16.mxu0 0
  %252 = vmatmul.mubr.bf16.gmra.mrb[0].mxu0 %v166
  %v253 = vpop.f32.mrb[0].mxu0
  %v254 = vadd.f32 %v92, %v253
  %v255 = vpop.f32.mrb[0].mxu0
  %v256 = vpop.f32.mrb[0].mxu0
  %v257 = vadd.f32 %v92, %v256
  %v258 = vpop.f32.mrb[0].mxu0
  %259 = vmatprep.mubr.bf16.mxu0 0
  %260 = vmatmul.mubr.bf16.gmra.mrb[0].mxu0 %v169
  %v261 = vpop.f32.mrb[0].mxu0
  %v262 = vadd.f32 %v92, %v261
  %v263 = vpop.f32.mrb[0].mxu0
  %v264 = vpop.f32.mrb[0].mxu0
  %v265 = vadd.f32 %v92, %v264
  %v266 = vpop.f32.mrb[0].mxu0
  %267 = vdwg.mxu0
  %284 = vrot.lane.b32.xlu0 %v206, 112
  %v285 = vpop.permute.xlu0 %284
  %286 = vrot.lane.b32.xlu0 %v209, 112
  %v287 = vpop.permute.xlu0 %286
  %288 = vrot.lane.b32.xlu0 %v214, 112
  %v289 = vpop.permute.xlu0 %288
  %290 = vrot.lane.b32.xlu0 %v217, 112
  %v291 = vpop.permute.xlu0 %290
  %292 = vrot.lane.b32.xlu0 %v222, 112
  %v293 = vpop.permute.xlu0 %292
  %294 = vrot.lane.b32.xlu0 %v225, 112
  %v295 = vpop.permute.xlu0 %294
  %296 = vrot.lane.b32.xlu0 %v230, 112
  %v297 = vpop.permute.xlu0 %296
  %298 = vrot.lane.b32.xlu0 %v233, 112
  %v299 = vpop.permute.xlu0 %298
  %300 = vrot.lane.b32.xlu0 %v238, 112
  %v301 = vpop.permute.xlu0 %300
  %302 = vrot.lane.b32.xlu0 %v241, 112
  %v303 = vpop.permute.xlu0 %302
  %304 = vrot.lane.b32.xlu0 %v246, 112
  %v305 = vpop.permute.xlu0 %304
  %306 = vrot.lane.b32.xlu0 %v249, 112
  %v307 = vpop.permute.xlu0 %306
  %308 = vrot.lane.b32.xlu0 %v254, 112
  %v309 = vpop.permute.xlu0 %308
  %310 = vrot.lane.b32.xlu0 %v257, 112
  %v311 = vpop.permute.xlu0 %310
  %312 = vrot.lane.b32.xlu0 %v262, 112
  %v313 = vpop.permute.xlu0 %312
  %314 = vrot.lane.b32.xlu0 %v265, 112
  %v315 = vpop.permute.xlu0 %314
  %v332 = vmul.f32 %v206, %v206
  %v333 = vmul.f32 %v209, %v209
  %v334 = vmul.f32 %v214, %v214
  %v335 = vmul.f32 %v217, %v217
  %v336 = vmul.f32 %v222, %v222
  %v337 = vmul.f32 %v225, %v225
  %v338 = vmul.f32 %v230, %v230
  %v339 = vmul.f32 %v233, %v233
  %v340 = vmul.f32 %v238, %v238
  %v341 = vmul.f32 %v241, %v241
  %v342 = vmul.f32 %v246, %v246
  %v343 = vmul.f32 %v249, %v249
  %v344 = vmul.f32 %v254, %v254
  %v345 = vmul.f32 %v257, %v257
  %v346 = vmul.f32 %v262, %v262
  %v347 = vmul.f32 %v265, %v265
  %v348 = vmul.f32 %v285, %v285
  %v349 = vmul.f32 %v287, %v287
  %v350 = vmul.f32 %v289, %v289
  %v351 = vmul.f32 %v291, %v291
  %v352 = vmul.f32 %v293, %v293
  %v353 = vmul.f32 %v295, %v295
  %v354 = vmul.f32 %v297, %v297
  %v355 = vmul.f32 %v299, %v299
  %v356 = vmul.f32 %v301, %v301
  %v357 = vmul.f32 %v303, %v303
  %v358 = vmul.f32 %v305, %v305
  %v359 = vmul.f32 %v307, %v307
  %v360 = vmul.f32 %v309, %v309
  %v361 = vmul.f32 %v311, %v311
  %v362 = vmul.f32 %v313, %v313
  %v363 = vmul.f32 %v315, %v315
  %vm364 = vcmask 130048
  %v365 = vsel %vm364, %v332, 0.0
  %366 = vadd.xlane.f32.xlu0 %v365
  %v367 = vpop.xlane.xlu0 %366
  %v368 = vsel %vm364, %v333, 0.0
  %369 = vadd.xlane.f32.xlu0 %v368
  %v370 = vpop.xlane.xlu0 %369
  %v371 = vsel %vm364, %v334, 0.0
  %372 = vadd.xlane.f32.xlu0 %v371
  %v373 = vpop.xlane.xlu0 %372
  %v374 = vsel %vm364, %v335, 0.0
  %375 = vadd.xlane.f32.xlu0 %v374
  %v376 = vpop.xlane.xlu0 %375
  %v377 = vsel %vm364, %v336, 0.0
  %378 = vadd.xlane.f32.xlu0 %v377
  %v379 = vpop.xlane.xlu0 %378
  %v380 = vsel %vm364, %v337, 0.0
  %381 = vadd.xlane.f32.xlu0 %v380
  %v382 = vpop.xlane.xlu0 %381
  %v383 = vsel %vm364, %v338, 0.0
  %384 = vadd.xlane.f32.xlu0 %v383
  %v385 = vpop.xlane.xlu0 %384
  %v386 = vsel %vm364, %v339, 0.0
  %387 = vadd.xlane.f32.xlu0 %v386
  %v388 = vpop.xlane.xlu0 %387
  %v389 = vsel %vm364, %v340, 0.0
  %390 = vadd.xlane.f32.xlu0 %v389
  %v391 = vpop.xlane.xlu0 %390
  %v392 = vsel %vm364, %v341, 0.0
  %393 = vadd.xlane.f32.xlu0 %v392
  %v394 = vpop.xlane.xlu0 %393
  %v395 = vsel %vm364, %v342, 0.0
  %396 = vadd.xlane.f32.xlu0 %v395
  %v397 = vpop.xlane.xlu0 %396
  %v398 = vsel %vm364, %v343, 0.0
  %399 = vadd.xlane.f32.xlu0 %v398
  %v400 = vpop.xlane.xlu0 %399
  %v401 = vsel %vm364, %v344, 0.0
  %402 = vadd.xlane.f32.xlu0 %v401
  %v403 = vpop.xlane.xlu0 %402
  %v404 = vsel %vm364, %v345, 0.0
  %405 = vadd.xlane.f32.xlu0 %v404
  %v406 = vpop.xlane.xlu0 %405
  %v407 = vsel %vm364, %v346, 0.0
  %408 = vadd.xlane.f32.xlu0 %v407
  %v409 = vpop.xlane.xlu0 %408
  %v410 = vsel %vm364, %v347, 0.0
  %411 = vadd.xlane.f32.xlu0 %v410
  %v412 = vpop.xlane.xlu0 %411
  %v413 = vsel %vm364, %v348, 0.0
  %414 = vadd.xlane.f32.xlu0 %v413
  %v415 = vpop.xlane.xlu0 %414
  %v416 = vsel %vm364, %v349, 0.0
  %417 = vadd.xlane.f32.xlu0 %v416
  %v418 = vpop.xlane.xlu0 %417
  %v419 = vsel %vm364, %v350, 0.0
  %420 = vadd.xlane.f32.xlu0 %v419
  %v421 = vpop.xlane.xlu0 %420
  %v422 = vsel %vm364, %v351, 0.0
  %423 = vadd.xlane.f32.xlu0 %v422
  %v424 = vpop.xlane.xlu0 %423
  %v425 = vsel %vm364, %v352, 0.0
  %426 = vadd.xlane.f32.xlu0 %v425
  %v427 = vpop.xlane.xlu0 %426
  %v428 = vsel %vm364, %v353, 0.0
  %429 = vadd.xlane.f32.xlu0 %v428
  %v430 = vpop.xlane.xlu0 %429
  %v431 = vsel %vm364, %v354, 0.0
  %432 = vadd.xlane.f32.xlu0 %v431
  %v433 = vpop.xlane.xlu0 %432
  %v434 = vsel %vm364, %v355, 0.0
  %435 = vadd.xlane.f32.xlu0 %v434
  %v436 = vpop.xlane.xlu0 %435
  %v437 = vsel %vm364, %v356, 0.0
  %438 = vadd.xlane.f32.xlu0 %v437
  %v439 = vpop.xlane.xlu0 %438
  %v440 = vsel %vm364, %v357, 0.0
  %441 = vadd.xlane.f32.xlu0 %v440
  %v442 = vpop.xlane.xlu0 %441
  %v443 = vsel %vm364, %v358, 0.0
  %444 = vadd.xlane.f32.xlu0 %v443
  %v445 = vpop.xlane.xlu0 %444
  %v446 = vsel %vm364, %v359, 0.0
  %447 = vadd.xlane.f32.xlu0 %v446
  %v448 = vpop.xlane.xlu0 %447
  %v449 = vsel %vm364, %v360, 0.0
  %450 = vadd.xlane.f32.xlu0 %v449
  %v451 = vpop.xlane.xlu0 %450
  %v452 = vsel %vm364, %v361, 0.0
  %453 = vadd.xlane.f32.xlu0 %v452
  %v454 = vpop.xlane.xlu0 %453
  %v455 = vsel %vm364, %v362, 0.0
  %456 = vadd.xlane.f32.xlu0 %v455
  %v457 = vpop.xlane.xlu0 %456
  %v458 = vsel %vm364, %v363, 0.0
  %459 = vadd.xlane.f32.xlu0 %v458
  %v460 = vpop.xlane.xlu0 %459
  %v461 = vmax.f32 %v367, 1e-24
  %v462 = vmax.f32 %v370, 1e-24
  %v463 = vmax.f32 %v373, 1e-24
  %v464 = vmax.f32 %v376, 1e-24
  %v465 = vmax.f32 %v379, 1e-24
  %v466 = vmax.f32 %v382, 1e-24
  %v467 = vmax.f32 %v385, 1e-24
  %v468 = vmax.f32 %v388, 1e-24
  %v469 = vmax.f32 %v391, 1e-24
  %v470 = vmax.f32 %v394, 1e-24
  %v471 = vmax.f32 %v397, 1e-24
  %v472 = vmax.f32 %v400, 1e-24
  %v473 = vmax.f32 %v403, 1e-24
  %v474 = vmax.f32 %v406, 1e-24
  %v475 = vmax.f32 %v409, 1e-24
  %v476 = vmax.f32 %v412, 1e-24
  %v477 = vmax.f32 %v415, 1e-24
  %v478 = vmax.f32 %v418, 1e-24
  %v479 = vmax.f32 %v421, 1e-24
  %v480 = vmax.f32 %v424, 1e-24
  %v481 = vmax.f32 %v427, 1e-24
  %v482 = vmax.f32 %v430, 1e-24
  %v483 = vmax.f32 %v433, 1e-24
  %v484 = vmax.f32 %v436, 1e-24
  %v485 = vmax.f32 %v439, 1e-24
  %v486 = vmax.f32 %v442, 1e-24
  %v487 = vmax.f32 %v445, 1e-24
  %v488 = vmax.f32 %v448, 1e-24
  %v489 = vmax.f32 %v451, 1e-24
  %v490 = vmax.f32 %v454, 1e-24
  %v491 = vmax.f32 %v457, 1e-24
  %v492 = vmax.f32 %v460, 1e-24
  %v493 = vrsqrt.pop %v461
  %v494 = vrsqrt.pop %v462
  %v495 = vrsqrt.pop %v463
  %v496 = vrsqrt.pop %v464
  %v497 = vrsqrt.pop %v465
  %v498 = vrsqrt.pop %v466
  %v499 = vrsqrt.pop %v467
  %v500 = vrsqrt.pop %v468
  %v501 = vrsqrt.pop %v469
  %v502 = vrsqrt.pop %v470
  %v503 = vrsqrt.pop %v471
  %v504 = vrsqrt.pop %v472
  %v505 = vrsqrt.pop %v473
  %v506 = vrsqrt.pop %v474
  %v507 = vrsqrt.pop %v475
  %v508 = vrsqrt.pop %v476
  %v509 = vrsqrt.pop %v477
  %v510 = vrsqrt.pop %v478
  %v511 = vrsqrt.pop %v479
  %v512 = vrsqrt.pop %v480
  %v513 = vrsqrt.pop %v481
  %v514 = vrsqrt.pop %v482
  %v515 = vrsqrt.pop %v483
  %v516 = vrsqrt.pop %v484
  %v517 = vrsqrt.pop %v485
  %v518 = vrsqrt.pop %v486
  %v519 = vrsqrt.pop %v487
  %v520 = vrsqrt.pop %v488
  %v521 = vrsqrt.pop %v489
  %v522 = vrsqrt.pop %v490
  %v523 = vrsqrt.pop %v491
  %v524 = vrsqrt.pop %v492
  %v525 = vmul.f32 %v206, %v493
  %v526 = vmul.f32 %v209, %v494
  %v527 = vmul.f32 %v214, %v495
  %v528 = vmul.f32 %v217, %v496
  %v529 = vmul.f32 %v222, %v497
  %v530 = vmul.f32 %v225, %v498
  %v531 = vmul.f32 %v230, %v499
  %v532 = vmul.f32 %v233, %v500
  %v533 = vmul.f32 %v238, %v501
  %v534 = vmul.f32 %v241, %v502
  %v535 = vmul.f32 %v246, %v503
  %v536 = vmul.f32 %v249, %v504
  %v537 = vmul.f32 %v254, %v505
  %v538 = vmul.f32 %v257, %v506
  %v539 = vmul.f32 %v262, %v507
  %v540 = vmul.f32 %v265, %v508
  %v541 = vmul.f32 %v285, %v509
  %v542 = vmul.f32 %v287, %v510
  %v543 = vmul.f32 %v289, %v511
  %v544 = vmul.f32 %v291, %v512
  %v545 = vmul.f32 %v293, %v513
  %v546 = vmul.f32 %v295, %v514
  %v547 = vmul.f32 %v297, %v515
  %v548 = vmul.f32 %v299, %v516
  %v549 = vmul.f32 %v301, %v517
  %v550 = vmul.f32 %v303, %v518
  %v551 = vmul.f32 %v305, %v519
  %v552 = vmul.f32 %v307, %v520
  %v553 = vmul.f32 %v309, %v521
  %v554 = vmul.f32 %v311, %v522
  %v555 = vmul.f32 %v313, %v523
  %v556 = vmul.f32 %v315, %v524
  %589 = vrot.lane.b32.xlu0 %v332, 96
  %v590 = vpop.permute.xlu0 %589
  %591 = vrot.lane.b32.xlu0 %v333, 96
  %v592 = vpop.permute.xlu0 %591
  %593 = vrot.lane.b32.xlu0 %v334, 96
  %v594 = vpop.permute.xlu0 %593
  %595 = vrot.lane.b32.xlu0 %v335, 96
  %v596 = vpop.permute.xlu0 %595
  %597 = vrot.lane.b32.xlu0 %v336, 96
  %v598 = vpop.permute.xlu0 %597
  %599 = vrot.lane.b32.xlu0 %v337, 96
  %v600 = vpop.permute.xlu0 %599
  %601 = vrot.lane.b32.xlu0 %v338, 96
  %v602 = vpop.permute.xlu0 %601
  %603 = vrot.lane.b32.xlu0 %v339, 96
  %v604 = vpop.permute.xlu0 %603
  %605 = vrot.lane.b32.xlu0 %v340, 96
  %v606 = vpop.permute.xlu0 %605
  %607 = vrot.lane.b32.xlu0 %v341, 96
  %v608 = vpop.permute.xlu0 %607
  %609 = vrot.lane.b32.xlu0 %v342, 96
  %v610 = vpop.permute.xlu0 %609
  %611 = vrot.lane.b32.xlu0 %v343, 96
  %v612 = vpop.permute.xlu0 %611
  %613 = vrot.lane.b32.xlu0 %v344, 96
  %v614 = vpop.permute.xlu0 %613
  %615 = vrot.lane.b32.xlu0 %v345, 96
  %v616 = vpop.permute.xlu0 %615
  %617 = vrot.lane.b32.xlu0 %v346, 96
  %v618 = vpop.permute.xlu0 %617
  %619 = vrot.lane.b32.xlu0 %v347, 96
  %v620 = vpop.permute.xlu0 %619
  %621 = vrot.lane.b32.xlu0 %v348, 96
  %v622 = vpop.permute.xlu0 %621
  %623 = vrot.lane.b32.xlu0 %v349, 96
  %v624 = vpop.permute.xlu0 %623
  %625 = vrot.lane.b32.xlu0 %v350, 96
  %v626 = vpop.permute.xlu0 %625
  %627 = vrot.lane.b32.xlu0 %v351, 96
  %v628 = vpop.permute.xlu0 %627
  %629 = vrot.lane.b32.xlu0 %v352, 96
  %v630 = vpop.permute.xlu0 %629
  %631 = vrot.lane.b32.xlu0 %v353, 96
  %v632 = vpop.permute.xlu0 %631
  %633 = vrot.lane.b32.xlu0 %v354, 96
  %v634 = vpop.permute.xlu0 %633
  %635 = vrot.lane.b32.xlu0 %v355, 96
  %v636 = vpop.permute.xlu0 %635
  %637 = vrot.lane.b32.xlu0 %v356, 96
  %v638 = vpop.permute.xlu0 %637
  %639 = vrot.lane.b32.xlu0 %v357, 96
  %v640 = vpop.permute.xlu0 %639
  %641 = vrot.lane.b32.xlu0 %v358, 96
  %v642 = vpop.permute.xlu0 %641
  %643 = vrot.lane.b32.xlu0 %v359, 96
  %v644 = vpop.permute.xlu0 %643
  %645 = vrot.lane.b32.xlu0 %v360, 96
  %v646 = vpop.permute.xlu0 %645
  %647 = vrot.lane.b32.xlu0 %v361, 96
  %v648 = vpop.permute.xlu0 %647
  %649 = vrot.lane.b32.xlu0 %v362, 96
  %v650 = vpop.permute.xlu0 %649
  %651 = vrot.lane.b32.xlu0 %v363, 96
  %v652 = vpop.permute.xlu0 %651
  %v685 = vsel %vm364, %v590, 0.0
  %686 = vadd.xlane.f32.xlu0 %v685
  %v687 = vpop.xlane.xlu0 %686
  %v688 = vsel %vm364, %v592, 0.0
  %689 = vadd.xlane.f32.xlu0 %v688
  %v690 = vpop.xlane.xlu0 %689
  %v691 = vsel %vm364, %v594, 0.0
  %692 = vadd.xlane.f32.xlu0 %v691
  %v693 = vpop.xlane.xlu0 %692
  %v694 = vsel %vm364, %v596, 0.0
  %695 = vadd.xlane.f32.xlu0 %v694
  %v696 = vpop.xlane.xlu0 %695
  %v697 = vsel %vm364, %v598, 0.0
  %698 = vadd.xlane.f32.xlu0 %v697
  %v699 = vpop.xlane.xlu0 %698
  %v700 = vsel %vm364, %v600, 0.0
  %701 = vadd.xlane.f32.xlu0 %v700
  %v702 = vpop.xlane.xlu0 %701
  %v703 = vsel %vm364, %v602, 0.0
  %704 = vadd.xlane.f32.xlu0 %v703
  %v705 = vpop.xlane.xlu0 %704
  %v706 = vsel %vm364, %v604, 0.0
  %707 = vadd.xlane.f32.xlu0 %v706
  %v708 = vpop.xlane.xlu0 %707
  %v709 = vsel %vm364, %v606, 0.0
  %710 = vadd.xlane.f32.xlu0 %v709
  %v711 = vpop.xlane.xlu0 %710
  %v712 = vsel %vm364, %v608, 0.0
  %713 = vadd.xlane.f32.xlu0 %v712
  %v714 = vpop.xlane.xlu0 %713
  %v715 = vsel %vm364, %v610, 0.0
  %716 = vadd.xlane.f32.xlu0 %v715
  %v717 = vpop.xlane.xlu0 %716
  %v718 = vsel %vm364, %v612, 0.0
  %719 = vadd.xlane.f32.xlu0 %v718
  %v720 = vpop.xlane.xlu0 %719
  %v721 = vsel %vm364, %v614, 0.0
  %722 = vadd.xlane.f32.xlu0 %v721
  %v723 = vpop.xlane.xlu0 %722
  %v724 = vsel %vm364, %v616, 0.0
  %725 = vadd.xlane.f32.xlu0 %v724
  %v726 = vpop.xlane.xlu0 %725
  %v727 = vsel %vm364, %v618, 0.0
  %728 = vadd.xlane.f32.xlu0 %v727
  %v729 = vpop.xlane.xlu0 %728
  %v730 = vsel %vm364, %v620, 0.0
  %731 = vadd.xlane.f32.xlu0 %v730
  %v732 = vpop.xlane.xlu0 %731
  %v733 = vsel %vm364, %v622, 0.0
  %734 = vadd.xlane.f32.xlu0 %v733
  %v735 = vpop.xlane.xlu0 %734
  %v736 = vsel %vm364, %v624, 0.0
  %737 = vadd.xlane.f32.xlu0 %v736
  %v738 = vpop.xlane.xlu0 %737
  %v739 = vsel %vm364, %v626, 0.0
  %740 = vadd.xlane.f32.xlu0 %v739
  %v741 = vpop.xlane.xlu0 %740
  %v742 = vsel %vm364, %v628, 0.0
  %743 = vadd.xlane.f32.xlu0 %v742
  %v744 = vpop.xlane.xlu0 %743
  %v745 = vsel %vm364, %v630, 0.0
  %746 = vadd.xlane.f32.xlu0 %v745
  %v747 = vpop.xlane.xlu0 %746
  %v748 = vsel %vm364, %v632, 0.0
  %749 = vadd.xlane.f32.xlu0 %v748
  %v750 = vpop.xlane.xlu0 %749
  %v751 = vsel %vm364, %v634, 0.0
  %752 = vadd.xlane.f32.xlu0 %v751
  %v753 = vpop.xlane.xlu0 %752
  %v754 = vsel %vm364, %v636, 0.0
  %755 = vadd.xlane.f32.xlu0 %v754
  %v756 = vpop.xlane.xlu0 %755
  %v757 = vsel %vm364, %v638, 0.0
  %758 = vadd.xlane.f32.xlu0 %v757
  %v759 = vpop.xlane.xlu0 %758
  %v760 = vsel %vm364, %v640, 0.0
  %761 = vadd.xlane.f32.xlu0 %v760
  %v762 = vpop.xlane.xlu0 %761
  %v763 = vsel %vm364, %v642, 0.0
  %764 = vadd.xlane.f32.xlu0 %v763
  %v765 = vpop.xlane.xlu0 %764
  %v766 = vsel %vm364, %v644, 0.0
  %767 = vadd.xlane.f32.xlu0 %v766
  %v768 = vpop.xlane.xlu0 %767
  %v769 = vsel %vm364, %v646, 0.0
  %770 = vadd.xlane.f32.xlu0 %v769
  %v771 = vpop.xlane.xlu0 %770
  %v772 = vsel %vm364, %v648, 0.0
  %773 = vadd.xlane.f32.xlu0 %v772
  %v774 = vpop.xlane.xlu0 %773
  %v775 = vsel %vm364, %v650, 0.0
  %776 = vadd.xlane.f32.xlu0 %v775
  %v777 = vpop.xlane.xlu0 %776
  %v778 = vsel %vm364, %v652, 0.0
  %779 = vadd.xlane.f32.xlu0 %v778
  %v780 = vpop.xlane.xlu0 %779
  %v781 = vmax.f32 %v687, 1e-24
  %v782 = vmax.f32 %v690, 1e-24
  %v783 = vmax.f32 %v693, 1e-24
  %v784 = vmax.f32 %v696, 1e-24
  %v785 = vmax.f32 %v699, 1e-24
  %v786 = vmax.f32 %v702, 1e-24
  %v787 = vmax.f32 %v705, 1e-24
  %v788 = vmax.f32 %v708, 1e-24
  %v789 = vmax.f32 %v711, 1e-24
  %v790 = vmax.f32 %v714, 1e-24
  %v791 = vmax.f32 %v717, 1e-24
  %v792 = vmax.f32 %v720, 1e-24
  %v793 = vmax.f32 %v723, 1e-24
  %v794 = vmax.f32 %v726, 1e-24
  %v795 = vmax.f32 %v729, 1e-24
  %v796 = vmax.f32 %v732, 1e-24
  %v797 = vmax.f32 %v735, 1e-24
  %v798 = vmax.f32 %v738, 1e-24
  %v799 = vmax.f32 %v741, 1e-24
  %v800 = vmax.f32 %v744, 1e-24
  %v801 = vmax.f32 %v747, 1e-24
  %v802 = vmax.f32 %v750, 1e-24
  %v803 = vmax.f32 %v753, 1e-24
  %v804 = vmax.f32 %v756, 1e-24
  %v805 = vmax.f32 %v759, 1e-24
  %v806 = vmax.f32 %v762, 1e-24
  %v807 = vmax.f32 %v765, 1e-24
  %v808 = vmax.f32 %v768, 1e-24
  %v809 = vmax.f32 %v771, 1e-24
  %v810 = vmax.f32 %v774, 1e-24
  %v811 = vmax.f32 %v777, 1e-24
  %v812 = vmax.f32 %v780, 1e-24
  %v813 = vrsqrt.pop %v781
  %v814 = vrsqrt.pop %v782
  %v815 = vrsqrt.pop %v783
  %v816 = vrsqrt.pop %v784
  %v817 = vrsqrt.pop %v785
  %v818 = vrsqrt.pop %v786
  %v819 = vrsqrt.pop %v787
  %v820 = vrsqrt.pop %v788
  %v821 = vrsqrt.pop %v789
  %v822 = vrsqrt.pop %v790
  %v823 = vrsqrt.pop %v791
  %v824 = vrsqrt.pop %v792
  %v825 = vrsqrt.pop %v793
  %v826 = vrsqrt.pop %v794
  %v827 = vrsqrt.pop %v795
  %v828 = vrsqrt.pop %v796
  %v829 = vrsqrt.pop %v797
  %v830 = vrsqrt.pop %v798
  %v831 = vrsqrt.pop %v799
  %v832 = vrsqrt.pop %v800
  %v833 = vrsqrt.pop %v801
  %v834 = vrsqrt.pop %v802
  %v835 = vrsqrt.pop %v803
  %v836 = vrsqrt.pop %v804
  %v837 = vrsqrt.pop %v805
  %v838 = vrsqrt.pop %v806
  %v839 = vrsqrt.pop %v807
  %v840 = vrsqrt.pop %v808
  %v841 = vrsqrt.pop %v809
  %v842 = vrsqrt.pop %v810
  %v843 = vrsqrt.pop %v811
  %v844 = vrsqrt.pop %v812
  %v845 = vmul.f32 %v206, %v813
  %v846 = vmul.f32 %v209, %v814
  %v847 = vmul.f32 %v214, %v815
  %v848 = vmul.f32 %v217, %v816
  %v849 = vmul.f32 %v222, %v817
  %v850 = vmul.f32 %v225, %v818
  %v851 = vmul.f32 %v230, %v819
  %v852 = vmul.f32 %v233, %v820
  %v853 = vmul.f32 %v238, %v821
  %v854 = vmul.f32 %v241, %v822
  %v855 = vmul.f32 %v246, %v823
  %v856 = vmul.f32 %v249, %v824
  %v857 = vmul.f32 %v254, %v825
  %v858 = vmul.f32 %v257, %v826
  %v859 = vmul.f32 %v262, %v827
  %v860 = vmul.f32 %v265, %v828
  %v861 = vmul.f32 %v285, %v829
  %v862 = vmul.f32 %v287, %v830
  %v863 = vmul.f32 %v289, %v831
  %v864 = vmul.f32 %v291, %v832
  %v865 = vmul.f32 %v293, %v833
  %v866 = vmul.f32 %v295, %v834
  %v867 = vmul.f32 %v297, %v835
  %v868 = vmul.f32 %v299, %v836
  %v869 = vmul.f32 %v301, %v837
  %v870 = vmul.f32 %v303, %v838
  %v871 = vmul.f32 %v305, %v839
  %v872 = vmul.f32 %v307, %v840
  %v873 = vmul.f32 %v309, %v841
  %v874 = vmul.f32 %v311, %v842
  %v875 = vmul.f32 %v313, %v843
  %v876 = vmul.f32 %v315, %v844
  %v877 = vld [vmem:[%s5] sm:$0x1]
  %v878 = vld [vmem:[%s5 + $0x1] sm:$0x1]
  %v879 = vld [vmem:[%s5 + $0x2] sm:$0x1]
  %v880 = vld [vmem:[%s5 + $0x3] sm:$0x1]
  %v881 = vld [vmem:[%s5 + $0x4] sm:$0x1]
  %v882 = vld [vmem:[%s5 + $0x5] sm:$0x1]
  %v883 = vld [vmem:[%s5 + $0x6] sm:$0x1]
  %v884 = vld [vmem:[%s5 + $0x7] sm:$0x1]
  %v885 = vld [vmem:[%s5 + $0x8] sm:$0x1]
  %v886 = vld [vmem:[%s5 + $0x9] sm:$0x1]
  %v887 = vld [vmem:[%s5 + $0xa] sm:$0x1]
  %v888 = vld [vmem:[%s5 + $0xb] sm:$0x1]
  %v889 = vld [vmem:[%s5 + $0xc] sm:$0x1]
  %v890 = vld [vmem:[%s5 + $0xd] sm:$0x1]
  %v891 = vld [vmem:[%s5 + $0xe] sm:$0x1]
  %v892 = vld [vmem:[%s5 + $0xf] sm:$0x1]
  %v909 = vlaneseq
  %v910 = vshrl.u32 %v909, 7
  %v911 = vsub.s32 0, %v910
  %v912 = vrot.slane %v877, %v911
  %v913 = vlaneseq
  %v914 = vshrl.u32 %v913, 7
  %v915 = vsub.s32 0, %v914
  %v916 = vrot.slane %v878, %v915
  %v917 = vlaneseq
  %v918 = vshrl.u32 %v917, 7
  %v919 = vsub.s32 0, %v918
  %v920 = vrot.slane %v879, %v919
  %v921 = vlaneseq
  %v922 = vshrl.u32 %v921, 7
  %v923 = vsub.s32 0, %v922
  %v924 = vrot.slane %v880, %v923
  %v925 = vlaneseq
  %v926 = vshrl.u32 %v925, 7
  %v927 = vsub.s32 0, %v926
  %v928 = vrot.slane %v881, %v927
  %v929 = vlaneseq
  %v930 = vshrl.u32 %v929, 7
  %v931 = vsub.s32 0, %v930
  %v932 = vrot.slane %v882, %v931
  %v933 = vlaneseq
  %v934 = vshrl.u32 %v933, 7
  %v935 = vsub.s32 0, %v934
  %v936 = vrot.slane %v883, %v935
  %v937 = vlaneseq
  %v938 = vshrl.u32 %v937, 7
  %v939 = vsub.s32 0, %v938
  %v940 = vrot.slane %v884, %v939
  %v941 = vlaneseq
  %v942 = vshrl.u32 %v941, 7
  %v943 = vsub.s32 0, %v942
  %v944 = vrot.slane %v885, %v943
  %v945 = vlaneseq
  %v946 = vshrl.u32 %v945, 7
  %v947 = vsub.s32 0, %v946
  %v948 = vrot.slane %v886, %v947
  %v949 = vlaneseq
  %v950 = vshrl.u32 %v949, 7
  %v951 = vsub.s32 0, %v950
  %v952 = vrot.slane %v887, %v951
  %v953 = vlaneseq
  %v954 = vshrl.u32 %v953, 7
  %v955 = vsub.s32 0, %v954
  %v956 = vrot.slane %v888, %v955
  %v957 = vlaneseq
  %v958 = vshrl.u32 %v957, 7
  %v959 = vsub.s32 0, %v958
  %v960 = vrot.slane %v889, %v959
  %v961 = vlaneseq
  %v962 = vshrl.u32 %v961, 7
  %v963 = vsub.s32 0, %v962
  %v964 = vrot.slane %v890, %v963
  %v965 = vlaneseq
  %v966 = vshrl.u32 %v965, 7
  %v967 = vsub.s32 0, %v966
  %v968 = vrot.slane %v891, %v967
  %v969 = vlaneseq
  %v970 = vshrl.u32 %v969, 7
  %v971 = vsub.s32 0, %v970
  %v972 = vrot.slane %v892, %v971
  %973 = vset.pattern.permute.xlu0 0
  %974 = vperm.xlu0 %973, %v912
  %v975 = vpop.permute.xlu0 %974
  %977 = vset.pattern.permute.xlu0 0
  %978 = vperm.xlu0 %977, %v916
  %v979 = vpop.permute.xlu0 %978
  %981 = vset.pattern.permute.xlu0 0
  %982 = vperm.xlu0 %981, %v920
  %v983 = vpop.permute.xlu0 %982
  %985 = vset.pattern.permute.xlu0 0
  %986 = vperm.xlu0 %985, %v924
  %v987 = vpop.permute.xlu0 %986
  %989 = vset.pattern.permute.xlu0 0
  %990 = vperm.xlu0 %989, %v928
  %v991 = vpop.permute.xlu0 %990
  %993 = vset.pattern.permute.xlu0 0
  %994 = vperm.xlu0 %993, %v932
  %v995 = vpop.permute.xlu0 %994
  %997 = vset.pattern.permute.xlu0 0
  %998 = vperm.xlu0 %997, %v936
  %v999 = vpop.permute.xlu0 %998
  %1001 = vset.pattern.permute.xlu0 0
  %1002 = vperm.xlu0 %1001, %v940
  %v1003 = vpop.permute.xlu0 %1002
  %1005 = vset.pattern.permute.xlu0 0
  %1006 = vperm.xlu0 %1005, %v944
  %v1007 = vpop.permute.xlu0 %1006
  %1009 = vset.pattern.permute.xlu0 0
  %1010 = vperm.xlu0 %1009, %v948
  %v1011 = vpop.permute.xlu0 %1010
  %1013 = vset.pattern.permute.xlu0 0
  %1014 = vperm.xlu0 %1013, %v952
  %v1015 = vpop.permute.xlu0 %1014
  %1017 = vset.pattern.permute.xlu0 0
  %1018 = vperm.xlu0 %1017, %v956
  %v1019 = vpop.permute.xlu0 %1018
  %1021 = vset.pattern.permute.xlu0 0
  %1022 = vperm.xlu0 %1021, %v960
  %v1023 = vpop.permute.xlu0 %1022
  %1025 = vset.pattern.permute.xlu0 0
  %1026 = vperm.xlu0 %1025, %v964
  %v1027 = vpop.permute.xlu0 %1026
  %1029 = vset.pattern.permute.xlu0 0
  %1030 = vperm.xlu0 %1029, %v968
  %v1031 = vpop.permute.xlu0 %1030
  %1033 = vset.pattern.permute.xlu0 0
  %1034 = vperm.xlu0 %1033, %v972
  %v1035 = vpop.permute.xlu0 %1034
  %v1037 = vmul.f32 %v525, %v975
  %v1038 = vmul.f32 %v526, %v975
  %v1039 = vmul.f32 %v527, %v979
  %v1040 = vmul.f32 %v528, %v979
  %v1041 = vmul.f32 %v529, %v983
  %v1042 = vmul.f32 %v530, %v983
  %v1043 = vmul.f32 %v531, %v987
  %v1044 = vmul.f32 %v532, %v987
  %v1045 = vmul.f32 %v533, %v991
  %v1046 = vmul.f32 %v534, %v991
  %v1047 = vmul.f32 %v535, %v995
  %v1048 = vmul.f32 %v536, %v995
  %v1049 = vmul.f32 %v537, %v999
  %v1050 = vmul.f32 %v538, %v999
  %v1051 = vmul.f32 %v539, %v1003
  %v1052 = vmul.f32 %v540, %v1003
  %v1053 = vmul.f32 %v541, %v1007
  %v1054 = vmul.f32 %v542, %v1007
  %v1055 = vmul.f32 %v543, %v1011
  %v1056 = vmul.f32 %v544, %v1011
  %v1057 = vmul.f32 %v545, %v1015
  %v1058 = vmul.f32 %v546, %v1015
  %v1059 = vmul.f32 %v547, %v1019
  %v1060 = vmul.f32 %v548, %v1019
  %v1061 = vmul.f32 %v549, %v1023
  %v1062 = vmul.f32 %v550, %v1023
  %v1063 = vmul.f32 %v551, %v1027
  %v1064 = vmul.f32 %v552, %v1027
  %v1065 = vmul.f32 %v553, %v1031
  %v1066 = vmul.f32 %v554, %v1031
  %v1067 = vmul.f32 %v555, %v1035
  %v1068 = vmul.f32 %v556, %v1035
  %v1069 = vpack.c.bf16 %v1038, %v1037
  %v1070 = vpack.c.bf16 %v1040, %v1039
  %v1071 = vpack.c.bf16 %v1042, %v1041
  %v1072 = vpack.c.bf16 %v1044, %v1043
  %v1073 = vpack.c.bf16 %v1046, %v1045
  %v1074 = vpack.c.bf16 %v1048, %v1047
  %v1075 = vpack.c.bf16 %v1050, %v1049
  %v1076 = vpack.c.bf16 %v1052, %v1051
  %v1077 = vpack.c.bf16 %v1054, %v1053
  %v1078 = vpack.c.bf16 %v1056, %v1055
  %v1079 = vpack.c.bf16 %v1058, %v1057
  %v1080 = vpack.c.bf16 %v1060, %v1059
  %v1081 = vpack.c.bf16 %v1062, %v1061
  %v1082 = vpack.c.bf16 %v1064, %v1063
  %v1083 = vpack.c.bf16 %v1066, %v1065
  %v1084 = vpack.c.bf16 %v1068, %v1067
  %v1085 = vpack.c.bf16 %v846, %v845
  %v1086 = vpack.c.bf16 %v848, %v847
  %v1087 = vpack.c.bf16 %v850, %v849
  %v1088 = vpack.c.bf16 %v852, %v851
  %v1089 = vpack.c.bf16 %v854, %v853
  %v1090 = vpack.c.bf16 %v856, %v855
  %v1091 = vpack.c.bf16 %v858, %v857
  %v1092 = vpack.c.bf16 %v860, %v859
  %v1093 = vpack.c.bf16 %v862, %v861
  %v1094 = vpack.c.bf16 %v864, %v863
  %v1095 = vpack.c.bf16 %v866, %v865
  %v1096 = vpack.c.bf16 %v868, %v867
  %v1097 = vpack.c.bf16 %v870, %v869
  %v1098 = vpack.c.bf16 %v872, %v871
  %v1099 = vpack.c.bf16 %v874, %v873
  %v1100 = vpack.c.bf16 %v876, %v875
  %v1101 = vld [vmem:[%s6] sm:$0xff]
  %v1102 = vld [vmem:[%s6 + $0x8] sm:$0xff]
  %v1103 = vld [vmem:[%s6 + $0x10] sm:$0xff]
  %v1104 = vld [vmem:[%s6 + $0x18] sm:$0xff]
  %v1105 = vld [vmem:[%s6 + $0x20] sm:$0xff]
  %v1106 = vld [vmem:[%s6 + $0x28] sm:$0xff]
  %v1107 = vld [vmem:[%s6 + $0x30] sm:$0xff]
  %v1108 = vld [vmem:[%s6 + $0x38] sm:$0xff]
  %v1109 = vld [vmem:[%s6 + $0x40] sm:$0xff]
  %v1110 = vld [vmem:[%s6 + $0x48] sm:$0xff]
  %v1111 = vld [vmem:[%s6 + $0x50] sm:$0xff]
  %v1112 = vld [vmem:[%s6 + $0x58] sm:$0xff]
  %v1113 = vld [vmem:[%s6 + $0x60] sm:$0xff]
  %v1114 = vld [vmem:[%s6 + $0x68] sm:$0xff]
  %v1115 = vld [vmem:[%s6 + $0x70] sm:$0xff]
  %v1116 = vld [vmem:[%s6 + $0x78] sm:$0xff]
  %v1117 = vld [vmem:[%s6 + $0x80] sm:$0xff]
  %v1118 = vld [vmem:[%s6 + $0x88] sm:$0xff]
  %v1119 = vld [vmem:[%s6 + $0x90] sm:$0xff]
  %v1120 = vld [vmem:[%s6 + $0x98] sm:$0xff]
  %v1121 = vld [vmem:[%s6 + $0xa0] sm:$0xff]
  %v1122 = vld [vmem:[%s6 + $0xa8] sm:$0xff]
  %v1123 = vld [vmem:[%s6 + $0xb0] sm:$0xff]
  %v1124 = vld [vmem:[%s6 + $0xb8] sm:$0xff]
  %v1125 = vld [vmem:[%s6 + $0xc0] sm:$0xff]
  %v1126 = vld [vmem:[%s6 + $0xc8] sm:$0xff]
  %v1127 = vld [vmem:[%s6 + $0xd0] sm:$0xff]
  %v1128 = vld [vmem:[%s6 + $0xd8] sm:$0xff]
  %v1129 = vld [vmem:[%s6 + $0xe0] sm:$0xff]
  %v1130 = vld [vmem:[%s6 + $0xe8] sm:$0xff]
  %v1131 = vld [vmem:[%s6 + $0xf0] sm:$0xff]
  %v1132 = vld [vmem:[%s6 + $0xf8] sm:$0xff]
  %1134 = vrot.lane.b32.xlu0 %v1085, 96
  %v1135 = vpop.permute.xlu0 %1134
  %v1137 = vsel %vm364, %v1069, 0
  %v1140 = vsel %vm364, %v1135, 0
  %1142 = vmatprep.subr.bf16.mxu0 0
  %1143 = vmatpush1.bf16.xpose.msra.mxu0 %v1140
  %1144 = vmatprep.subr.bf16.mxu0 0
  %1145 = vmatpush1.bf16.xpose.msra.mxu0 0
  %1146 = vmatprep.subr.bf16.mxu0 0
  %1147 = vmatpush1.bf16.xpose.msra.mxu0 0
  %1148 = vmatprep.subr.bf16.mxu0 0
  %1149 = vmatpush1.bf16.xpose.msra.mxu0 0
  %1150 = vmatprep.subr.bf16.mxu0 0
  %1151 = vmatpush1.bf16.xpose.msra.mxu0 0
  %1152 = vmatprep.subr.bf16.mxu0 0
  %1153 = vmatpush1.bf16.xpose.msra.mxu0 0
  %1154 = vmatprep.subr.bf16.mxu0 0
  %1155 = vmatpush1.bf16.xpose.msra.mxu0 0
  %1156 = vmatprep.subr.bf16.mxu0 0
  %1157 = vmatpush1.bf16.xpose.msra.mxu0 0
  %1158 = vmatprep.subr.bf16.mxu0 0
  %1159 = vmatpush1.bf16.xpose.msra.mxu0 0
  %1160 = vmatprep.subr.bf16.mxu0 0
  %1161 = vmatpush1.bf16.xpose.msra.mxu0 0
  %1162 = vmatprep.subr.bf16.mxu0 0
  %1163 = vmatpush1.bf16.xpose.msra.mxu0 0
  %1164 = vmatprep.subr.bf16.mxu0 0
  %1165 = vmatpush1.bf16.xpose.msra.mxu0 0
  %1166 = vmatprep.subr.bf16.mxu0 0
  %1167 = vmatpush1.bf16.xpose.msra.mxu0 0
  %1168 = vmatprep.subr.bf16.mxu0 0
  %1169 = vmatpush1.bf16.xpose.msra.mxu0 0
  %1170 = vmatprep.subr.bf16.mxu0 0
  %1171 = vmatpush1.bf16.xpose.msra.mxu0 0
  %1172 = vmatprep.subr.bf16.mxu0 0
  %1173 = vmatpush1.bf16.xpose.msra.mxu0 0
  %1174 = vmatprep.mubr.bf16.mxu0 0
  %1175 = vmatmul.mubr.bf16.gmra.mrb[0].mxu0 %v1137
  %v1176 = vpop.f32.mrb[0].mxu0
  %v1177 = vadd.f32 %v1101, %v1176
  %v1178 = vpop.f32.mrb[0].mxu0
  %v1179 = vpop.f32.mrb[0].mxu0
  %v1180 = vadd.f32 %v1102, %v1179
  %v1181 = vpop.f32.mrb[0].mxu0
  %1182 = vdwg.mxu0
  %1184 = vrot.lane.b32.xlu0 %v1086, 96
  %v1185 = vpop.permute.xlu0 %1184
  %v1187 = vsel %vm364, %v1070, 0
  %v1190 = vsel %vm364, %v1185, 0
  %1192 = vmatprep.subr.bf16.mxu0 0
  %1193 = vmatpush1.bf16.xpose.msra.mxu0 %v1190
  %1194 = vmatprep.subr.bf16.mxu0 0
  %1195 = vmatpush1.bf16.xpose.msra.mxu0 0
  %1196 = vmatprep.subr.bf16.mxu0 0
  %1197 = vmatpush1.bf16.xpose.msra.mxu0 0
  %1198 = vmatprep.subr.bf16.mxu0 0
  %1199 = vmatpush1.bf16.xpose.msra.mxu0 0
  %1200 = vmatprep.subr.bf16.mxu0 0
  %1201 = vmatpush1.bf16.xpose.msra.mxu0 0
  %1202 = vmatprep.subr.bf16.mxu0 0
  %1203 = vmatpush1.bf16.xpose.msra.mxu0 0
  %1204 = vmatprep.subr.bf16.mxu0 0
  %1205 = vmatpush1.bf16.xpose.msra.mxu0 0
  %1206 = vmatprep.subr.bf16.mxu0 0
  %1207 = vmatpush1.bf16.xpose.msra.mxu0 0
  %1208 = vmatprep.subr.bf16.mxu0 0
  %1209 = vmatpush1.bf16.xpose.msra.mxu0 0
  %1210 = vmatprep.subr.bf16.mxu0 0
  %1211 = vmatpush1.bf16.xpose.msra.mxu0 0
  %1212 = vmatprep.subr.bf16.mxu0 0
  %1213 = vmatpush1.bf16.xpose.msra.mxu0 0
  %1214 = vmatprep.subr.bf16.mxu0 0
  %1215 = vmatpush1.bf16.xpose.msra.mxu0 0
  %1216 = vmatprep.subr.bf16.mxu0 0
  %1217 = vmatpush1.bf16.xpose.msra.mxu0 0
  %1218 = vmatprep.subr.bf16.mxu0 0
  %1219 = vmatpush1.bf16.xpose.msra.mxu0 0
  %1220 = vmatprep.subr.bf16.mxu0 0
  %1221 = vmatpush1.bf16.xpose.msra.mxu0 0
  %1222 = vmatprep.subr.bf16.mxu0 0
  %1223 = vmatpush1.bf16.xpose.msra.mxu0 0
  %1224 = vmatprep.mubr.bf16.mxu0 0
  %1225 = vmatmul.mubr.bf16.gmra.mrb[0].mxu0 %v1187
  %v1226 = vpop.f32.mrb[0].mxu0
  %v1227 = vadd.f32 %v1103, %v1226
  %v1228 = vpop.f32.mrb[0].mxu0
  %v1229 = vpop.f32.mrb[0].mxu0
  %v1230 = vadd.f32 %v1104, %v1229
  %v1231 = vpop.f32.mrb[0].mxu0
  %1232 = vdwg.mxu0
  %1234 = vrot.lane.b32.xlu0 %v1087, 96
  %v1235 = vpop.permute.xlu0 %1234
  %v1237 = vsel %vm364, %v1071, 0
  %v1240 = vsel %vm364, %v1235, 0
  %1242 = vmatprep.subr.bf16.mxu0 0
  %1243 = vmatpush1.bf16.xpose.msra.mxu0 %v1240
  %1244 = vmatprep.subr.bf16.mxu0 0
  %1245 = vmatpush1.bf16.xpose.msra.mxu0 0
  %1246 = vmatprep.subr.bf16.mxu0 0
  %1247 = vmatpush1.bf16.xpose.msra.mxu0 0
  %1248 = vmatprep.subr.bf16.mxu0 0
  %1249 = vmatpush1.bf16.xpose.msra.mxu0 0
  %1250 = vmatprep.subr.bf16.mxu0 0
  %1251 = vmatpush1.bf16.xpose.msra.mxu0 0
  %1252 = vmatprep.subr.bf16.mxu0 0
  %1253 = vmatpush1.bf16.xpose.msra.mxu0 0
  %1254 = vmatprep.subr.bf16.mxu0 0
  %1255 = vmatpush1.bf16.xpose.msra.mxu0 0
  %1256 = vmatprep.subr.bf16.mxu0 0
  %1257 = vmatpush1.bf16.xpose.msra.mxu0 0
  %1258 = vmatprep.subr.bf16.mxu0 0
  %1259 = vmatpush1.bf16.xpose.msra.mxu0 0
  %1260 = vmatprep.subr.bf16.mxu0 0
  %1261 = vmatpush1.bf16.xpose.msra.mxu0 0
  %1262 = vmatprep.subr.bf16.mxu0 0
  %1263 = vmatpush1.bf16.xpose.msra.mxu0 0
  %1264 = vmatprep.subr.bf16.mxu0 0
  %1265 = vmatpush1.bf16.xpose.msra.mxu0 0
  %1266 = vmatprep.subr.bf16.mxu0 0
  %1267 = vmatpush1.bf16.xpose.msra.mxu0 0
  %1268 = vmatprep.subr.bf16.mxu0 0
  %1269 = vmatpush1.bf16.xpose.msra.mxu0 0
  %1270 = vmatprep.subr.bf16.mxu0 0
  %1271 = vmatpush1.bf16.xpose.msra.mxu0 0
  %1272 = vmatprep.subr.bf16.mxu0 0
  %1273 = vmatpush1.bf16.xpose.msra.mxu0 0
  %1274 = vmatprep.mubr.bf16.mxu0 0
  %1275 = vmatmul.mubr.bf16.gmra.mrb[0].mxu0 %v1237
  %v1276 = vpop.f32.mrb[0].mxu0
  %v1277 = vadd.f32 %v1105, %v1276
  %v1278 = vpop.f32.mrb[0].mxu0
  %v1279 = vpop.f32.mrb[0].mxu0
  %v1280 = vadd.f32 %v1106, %v1279
  %v1281 = vpop.f32.mrb[0].mxu0
  %1282 = vdwg.mxu0
  %1284 = vrot.lane.b32.xlu0 %v1088, 96
  %v1285 = vpop.permute.xlu0 %1284
  %v1287 = vsel %vm364, %v1072, 0
  %v1290 = vsel %vm364, %v1285, 0
  %1292 = vmatprep.subr.bf16.mxu0 0
  %1293 = vmatpush1.bf16.xpose.msra.mxu0 %v1290
  %1294 = vmatprep.subr.bf16.mxu0 0
  %1295 = vmatpush1.bf16.xpose.msra.mxu0 0
  %1296 = vmatprep.subr.bf16.mxu0 0
  %1297 = vmatpush1.bf16.xpose.msra.mxu0 0
  %1298 = vmatprep.subr.bf16.mxu0 0
  %1299 = vmatpush1.bf16.xpose.msra.mxu0 0
  %1300 = vmatprep.subr.bf16.mxu0 0
  %1301 = vmatpush1.bf16.xpose.msra.mxu0 0
  %1302 = vmatprep.subr.bf16.mxu0 0
  %1303 = vmatpush1.bf16.xpose.msra.mxu0 0
  %1304 = vmatprep.subr.bf16.mxu0 0
  %1305 = vmatpush1.bf16.xpose.msra.mxu0 0
  %1306 = vmatprep.subr.bf16.mxu0 0
  %1307 = vmatpush1.bf16.xpose.msra.mxu0 0
  %1308 = vmatprep.subr.bf16.mxu0 0
  %1309 = vmatpush1.bf16.xpose.msra.mxu0 0
  %1310 = vmatprep.subr.bf16.mxu0 0
  %1311 = vmatpush1.bf16.xpose.msra.mxu0 0
  %1312 = vmatprep.subr.bf16.mxu0 0
  %1313 = vmatpush1.bf16.xpose.msra.mxu0 0
  %1314 = vmatprep.subr.bf16.mxu0 0
  %1315 = vmatpush1.bf16.xpose.msra.mxu0 0
  %1316 = vmatprep.subr.bf16.mxu0 0
  %1317 = vmatpush1.bf16.xpose.msra.mxu0 0
  %1318 = vmatprep.subr.bf16.mxu0 0
  %1319 = vmatpush1.bf16.xpose.msra.mxu0 0
  %1320 = vmatprep.subr.bf16.mxu0 0
  %1321 = vmatpush1.bf16.xpose.msra.mxu0 0
  %1322 = vmatprep.subr.bf16.mxu0 0
  %1323 = vmatpush1.bf16.xpose.msra.mxu0 0
  %1324 = vmatprep.mubr.bf16.mxu0 0
  %1325 = vmatmul.mubr.bf16.gmra.mrb[0].mxu0 %v1287
  %v1326 = vpop.f32.mrb[0].mxu0
  %v1327 = vadd.f32 %v1107, %v1326
  %v1328 = vpop.f32.mrb[0].mxu0
  %v1329 = vpop.f32.mrb[0].mxu0
  %v1330 = vadd.f32 %v1108, %v1329
  %v1331 = vpop.f32.mrb[0].mxu0
  %1332 = vdwg.mxu0
  %1334 = vrot.lane.b32.xlu0 %v1089, 96
  %v1335 = vpop.permute.xlu0 %1334
  %v1337 = vsel %vm364, %v1073, 0
  %v1340 = vsel %vm364, %v1335, 0
  %1342 = vmatprep.subr.bf16.mxu0 0
  %1343 = vmatpush1.bf16.xpose.msra.mxu0 %v1340
  %1344 = vmatprep.subr.bf16.mxu0 0
  %1345 = vmatpush1.bf16.xpose.msra.mxu0 0
  %1346 = vmatprep.subr.bf16.mxu0 0
  %1347 = vmatpush1.bf16.xpose.msra.mxu0 0
  %1348 = vmatprep.subr.bf16.mxu0 0
  %1349 = vmatpush1.bf16.xpose.msra.mxu0 0
  %1350 = vmatprep.subr.bf16.mxu0 0
  %1351 = vmatpush1.bf16.xpose.msra.mxu0 0
  %1352 = vmatprep.subr.bf16.mxu0 0
  %1353 = vmatpush1.bf16.xpose.msra.mxu0 0
  %1354 = vmatprep.subr.bf16.mxu0 0
  %1355 = vmatpush1.bf16.xpose.msra.mxu0 0
  %1356 = vmatprep.subr.bf16.mxu0 0
  %1357 = vmatpush1.bf16.xpose.msra.mxu0 0
  %1358 = vmatprep.subr.bf16.mxu0 0
  %1359 = vmatpush1.bf16.xpose.msra.mxu0 0
  %1360 = vmatprep.subr.bf16.mxu0 0
  %1361 = vmatpush1.bf16.xpose.msra.mxu0 0
  %1362 = vmatprep.subr.bf16.mxu0 0
  %1363 = vmatpush1.bf16.xpose.msra.mxu0 0
  %1364 = vmatprep.subr.bf16.mxu0 0
  %1365 = vmatpush1.bf16.xpose.msra.mxu0 0
  %1366 = vmatprep.subr.bf16.mxu0 0
  %1367 = vmatpush1.bf16.xpose.msra.mxu0 0
  %1368 = vmatprep.subr.bf16.mxu0 0
  %1369 = vmatpush1.bf16.xpose.msra.mxu0 0
  %1370 = vmatprep.subr.bf16.mxu0 0
  %1371 = vmatpush1.bf16.xpose.msra.mxu0 0
  %1372 = vmatprep.subr.bf16.mxu0 0
  %1373 = vmatpush1.bf16.xpose.msra.mxu0 0
  %1374 = vmatprep.mubr.bf16.mxu0 0
  %1375 = vmatmul.mubr.bf16.gmra.mrb[0].mxu0 %v1337
  %v1376 = vpop.f32.mrb[0].mxu0
  %v1377 = vadd.f32 %v1109, %v1376
  %v1378 = vpop.f32.mrb[0].mxu0
  %v1379 = vpop.f32.mrb[0].mxu0
  %v1380 = vadd.f32 %v1110, %v1379
  %v1381 = vpop.f32.mrb[0].mxu0
  %1382 = vdwg.mxu0
  %1384 = vrot.lane.b32.xlu0 %v1090, 96
  %v1385 = vpop.permute.xlu0 %1384
  %v1387 = vsel %vm364, %v1074, 0
  %v1390 = vsel %vm364, %v1385, 0
  %1392 = vmatprep.subr.bf16.mxu0 0
  %1393 = vmatpush1.bf16.xpose.msra.mxu0 %v1390
  %1394 = vmatprep.subr.bf16.mxu0 0
  %1395 = vmatpush1.bf16.xpose.msra.mxu0 0
  %1396 = vmatprep.subr.bf16.mxu0 0
  %1397 = vmatpush1.bf16.xpose.msra.mxu0 0
  %1398 = vmatprep.subr.bf16.mxu0 0
  %1399 = vmatpush1.bf16.xpose.msra.mxu0 0
  %1400 = vmatprep.subr.bf16.mxu0 0
  %1401 = vmatpush1.bf16.xpose.msra.mxu0 0
  %1402 = vmatprep.subr.bf16.mxu0 0
  %1403 = vmatpush1.bf16.xpose.msra.mxu0 0
  %1404 = vmatprep.subr.bf16.mxu0 0
  %1405 = vmatpush1.bf16.xpose.msra.mxu0 0
  %1406 = vmatprep.subr.bf16.mxu0 0
  %1407 = vmatpush1.bf16.xpose.msra.mxu0 0
  %1408 = vmatprep.subr.bf16.mxu0 0
  %1409 = vmatpush1.bf16.xpose.msra.mxu0 0
  %1410 = vmatprep.subr.bf16.mxu0 0
  %1411 = vmatpush1.bf16.xpose.msra.mxu0 0
  %1412 = vmatprep.subr.bf16.mxu0 0
  %1413 = vmatpush1.bf16.xpose.msra.mxu0 0
  %1414 = vmatprep.subr.bf16.mxu0 0
  %1415 = vmatpush1.bf16.xpose.msra.mxu0 0
  %1416 = vmatprep.subr.bf16.mxu0 0
  %1417 = vmatpush1.bf16.xpose.msra.mxu0 0
  %1418 = vmatprep.subr.bf16.mxu0 0
  %1419 = vmatpush1.bf16.xpose.msra.mxu0 0
  %1420 = vmatprep.subr.bf16.mxu0 0
  %1421 = vmatpush1.bf16.xpose.msra.mxu0 0
  %1422 = vmatprep.subr.bf16.mxu0 0
  %1423 = vmatpush1.bf16.xpose.msra.mxu0 0
  %1424 = vmatprep.mubr.bf16.mxu0 0
  %1425 = vmatmul.mubr.bf16.gmra.mrb[0].mxu0 %v1387
  %v1426 = vpop.f32.mrb[0].mxu0
  %v1427 = vadd.f32 %v1111, %v1426
  %v1428 = vpop.f32.mrb[0].mxu0
  %v1429 = vpop.f32.mrb[0].mxu0
  %v1430 = vadd.f32 %v1112, %v1429
  %v1431 = vpop.f32.mrb[0].mxu0
  %1432 = vdwg.mxu0
  %1434 = vrot.lane.b32.xlu0 %v1091, 96
  %v1435 = vpop.permute.xlu0 %1434
  %v1437 = vsel %vm364, %v1075, 0
  %v1440 = vsel %vm364, %v1435, 0
  %1442 = vmatprep.subr.bf16.mxu0 0
  %1443 = vmatpush1.bf16.xpose.msra.mxu0 %v1440
  %1444 = vmatprep.subr.bf16.mxu0 0
  %1445 = vmatpush1.bf16.xpose.msra.mxu0 0
  %1446 = vmatprep.subr.bf16.mxu0 0
  %1447 = vmatpush1.bf16.xpose.msra.mxu0 0
  %1448 = vmatprep.subr.bf16.mxu0 0
  %1449 = vmatpush1.bf16.xpose.msra.mxu0 0
  %1450 = vmatprep.subr.bf16.mxu0 0
  %1451 = vmatpush1.bf16.xpose.msra.mxu0 0
  %1452 = vmatprep.subr.bf16.mxu0 0
  %1453 = vmatpush1.bf16.xpose.msra.mxu0 0
  %1454 = vmatprep.subr.bf16.mxu0 0
  %1455 = vmatpush1.bf16.xpose.msra.mxu0 0
  %1456 = vmatprep.subr.bf16.mxu0 0
  %1457 = vmatpush1.bf16.xpose.msra.mxu0 0
  %1458 = vmatprep.subr.bf16.mxu0 0
  %1459 = vmatpush1.bf16.xpose.msra.mxu0 0
  %1460 = vmatprep.subr.bf16.mxu0 0
  %1461 = vmatpush1.bf16.xpose.msra.mxu0 0
  %1462 = vmatprep.subr.bf16.mxu0 0
  %1463 = vmatpush1.bf16.xpose.msra.mxu0 0
  %1464 = vmatprep.subr.bf16.mxu0 0
  %1465 = vmatpush1.bf16.xpose.msra.mxu0 0
  %1466 = vmatprep.subr.bf16.mxu0 0
  %1467 = vmatpush1.bf16.xpose.msra.mxu0 0
  %1468 = vmatprep.subr.bf16.mxu0 0
  %1469 = vmatpush1.bf16.xpose.msra.mxu0 0
  %1470 = vmatprep.subr.bf16.mxu0 0
  %1471 = vmatpush1.bf16.xpose.msra.mxu0 0
  %1472 = vmatprep.subr.bf16.mxu0 0
  %1473 = vmatpush1.bf16.xpose.msra.mxu0 0
  %1474 = vmatprep.mubr.bf16.mxu0 0
  %1475 = vmatmul.mubr.bf16.gmra.mrb[0].mxu0 %v1437
  %v1476 = vpop.f32.mrb[0].mxu0
  %v1477 = vadd.f32 %v1113, %v1476
  %v1478 = vpop.f32.mrb[0].mxu0
  %v1479 = vpop.f32.mrb[0].mxu0
  %v1480 = vadd.f32 %v1114, %v1479
  %v1481 = vpop.f32.mrb[0].mxu0
  %1482 = vdwg.mxu0
  %1484 = vrot.lane.b32.xlu0 %v1092, 96
  %v1485 = vpop.permute.xlu0 %1484
  %v1487 = vsel %vm364, %v1076, 0
  %v1490 = vsel %vm364, %v1485, 0
  %1492 = vmatprep.subr.bf16.mxu0 0
  %1493 = vmatpush1.bf16.xpose.msra.mxu0 %v1490
  %1494 = vmatprep.subr.bf16.mxu0 0
  %1495 = vmatpush1.bf16.xpose.msra.mxu0 0
  %1496 = vmatprep.subr.bf16.mxu0 0
  %1497 = vmatpush1.bf16.xpose.msra.mxu0 0
  %1498 = vmatprep.subr.bf16.mxu0 0
  %1499 = vmatpush1.bf16.xpose.msra.mxu0 0
  %1500 = vmatprep.subr.bf16.mxu0 0
  %1501 = vmatpush1.bf16.xpose.msra.mxu0 0
  %1502 = vmatprep.subr.bf16.mxu0 0
  %1503 = vmatpush1.bf16.xpose.msra.mxu0 0
  %1504 = vmatprep.subr.bf16.mxu0 0
  %1505 = vmatpush1.bf16.xpose.msra.mxu0 0
  %1506 = vmatprep.subr.bf16.mxu0 0
  %1507 = vmatpush1.bf16.xpose.msra.mxu0 0
  %1508 = vmatprep.subr.bf16.mxu0 0
  %1509 = vmatpush1.bf16.xpose.msra.mxu0 0
  %1510 = vmatprep.subr.bf16.mxu0 0
  %1511 = vmatpush1.bf16.xpose.msra.mxu0 0
  %1512 = vmatprep.subr.bf16.mxu0 0
  %1513 = vmatpush1.bf16.xpose.msra.mxu0 0
  %1514 = vmatprep.subr.bf16.mxu0 0
  %1515 = vmatpush1.bf16.xpose.msra.mxu0 0
  %1516 = vmatprep.subr.bf16.mxu0 0
  %1517 = vmatpush1.bf16.xpose.msra.mxu0 0
  %1518 = vmatprep.subr.bf16.mxu0 0
  %1519 = vmatpush1.bf16.xpose.msra.mxu0 0
  %1520 = vmatprep.subr.bf16.mxu0 0
  %1521 = vmatpush1.bf16.xpose.msra.mxu0 0
  %1522 = vmatprep.subr.bf16.mxu0 0
  %1523 = vmatpush1.bf16.xpose.msra.mxu0 0
  %1524 = vmatprep.mubr.bf16.mxu0 0
  %1525 = vmatmul.mubr.bf16.gmra.mrb[0].mxu0 %v1487
  %v1526 = vpop.f32.mrb[0].mxu0
  %v1527 = vadd.f32 %v1115, %v1526
  %v1528 = vpop.f32.mrb[0].mxu0
  %v1529 = vpop.f32.mrb[0].mxu0
  %v1530 = vadd.f32 %v1116, %v1529
  %v1531 = vpop.f32.mrb[0].mxu0
  %1532 = vdwg.mxu0
  %1534 = vrot.lane.b32.xlu0 %v1093, 96
  %v1535 = vpop.permute.xlu0 %1534
  %v1537 = vsel %vm364, %v1077, 0
  %v1540 = vsel %vm364, %v1535, 0
  %1542 = vmatprep.subr.bf16.mxu0 0
  %1543 = vmatpush1.bf16.xpose.msra.mxu0 %v1540
  %1544 = vmatprep.subr.bf16.mxu0 0
  %1545 = vmatpush1.bf16.xpose.msra.mxu0 0
  %1546 = vmatprep.subr.bf16.mxu0 0
  %1547 = vmatpush1.bf16.xpose.msra.mxu0 0
  %1548 = vmatprep.subr.bf16.mxu0 0
  %1549 = vmatpush1.bf16.xpose.msra.mxu0 0
  %1550 = vmatprep.subr.bf16.mxu0 0
  %1551 = vmatpush1.bf16.xpose.msra.mxu0 0
  %1552 = vmatprep.subr.bf16.mxu0 0
  %1553 = vmatpush1.bf16.xpose.msra.mxu0 0
  %1554 = vmatprep.subr.bf16.mxu0 0
  %1555 = vmatpush1.bf16.xpose.msra.mxu0 0
  %1556 = vmatprep.subr.bf16.mxu0 0
  %1557 = vmatpush1.bf16.xpose.msra.mxu0 0
  %1558 = vmatprep.subr.bf16.mxu0 0
  %1559 = vmatpush1.bf16.xpose.msra.mxu0 0
  %1560 = vmatprep.subr.bf16.mxu0 0
  %1561 = vmatpush1.bf16.xpose.msra.mxu0 0
  %1562 = vmatprep.subr.bf16.mxu0 0
  %1563 = vmatpush1.bf16.xpose.msra.mxu0 0
  %1564 = vmatprep.subr.bf16.mxu0 0
  %1565 = vmatpush1.bf16.xpose.msra.mxu0 0
  %1566 = vmatprep.subr.bf16.mxu0 0
  %1567 = vmatpush1.bf16.xpose.msra.mxu0 0
  %1568 = vmatprep.subr.bf16.mxu0 0
  %1569 = vmatpush1.bf16.xpose.msra.mxu0 0
  %1570 = vmatprep.subr.bf16.mxu0 0
  %1571 = vmatpush1.bf16.xpose.msra.mxu0 0
  %1572 = vmatprep.subr.bf16.mxu0 0
  %1573 = vmatpush1.bf16.xpose.msra.mxu0 0
  %1574 = vmatprep.mubr.bf16.mxu0 0
  %1575 = vmatmul.mubr.bf16.gmra.mrb[0].mxu0 %v1537
  %v1576 = vpop.f32.mrb[0].mxu0
  %v1577 = vadd.f32 %v1117, %v1576
  %v1578 = vpop.f32.mrb[0].mxu0
  %v1579 = vpop.f32.mrb[0].mxu0
  %v1580 = vadd.f32 %v1118, %v1579
  %v1581 = vpop.f32.mrb[0].mxu0
  %1582 = vdwg.mxu0
  %1584 = vrot.lane.b32.xlu0 %v1094, 96
  %v1585 = vpop.permute.xlu0 %1584
  %v1587 = vsel %vm364, %v1078, 0
  %v1590 = vsel %vm364, %v1585, 0
  %1592 = vmatprep.subr.bf16.mxu0 0
  %1593 = vmatpush1.bf16.xpose.msra.mxu0 %v1590
  %1594 = vmatprep.subr.bf16.mxu0 0
  %1595 = vmatpush1.bf16.xpose.msra.mxu0 0
  %1596 = vmatprep.subr.bf16.mxu0 0
  %1597 = vmatpush1.bf16.xpose.msra.mxu0 0
  %1598 = vmatprep.subr.bf16.mxu0 0
  %1599 = vmatpush1.bf16.xpose.msra.mxu0 0
  %1600 = vmatprep.subr.bf16.mxu0 0
  %1601 = vmatpush1.bf16.xpose.msra.mxu0 0
  %1602 = vmatprep.subr.bf16.mxu0 0
  %1603 = vmatpush1.bf16.xpose.msra.mxu0 0
  %1604 = vmatprep.subr.bf16.mxu0 0
  %1605 = vmatpush1.bf16.xpose.msra.mxu0 0
  %1606 = vmatprep.subr.bf16.mxu0 0
  %1607 = vmatpush1.bf16.xpose.msra.mxu0 0
  %1608 = vmatprep.subr.bf16.mxu0 0
  %1609 = vmatpush1.bf16.xpose.msra.mxu0 0
  %1610 = vmatprep.subr.bf16.mxu0 0
  %1611 = vmatpush1.bf16.xpose.msra.mxu0 0
  %1612 = vmatprep.subr.bf16.mxu0 0
  %1613 = vmatpush1.bf16.xpose.msra.mxu0 0
  %1614 = vmatprep.subr.bf16.mxu0 0
  %1615 = vmatpush1.bf16.xpose.msra.mxu0 0
  %1616 = vmatprep.subr.bf16.mxu0 0
  %1617 = vmatpush1.bf16.xpose.msra.mxu0 0
  %1618 = vmatprep.subr.bf16.mxu0 0
  %1619 = vmatpush1.bf16.xpose.msra.mxu0 0
  %1620 = vmatprep.subr.bf16.mxu0 0
  %1621 = vmatpush1.bf16.xpose.msra.mxu0 0
  %1622 = vmatprep.subr.bf16.mxu0 0
  %1623 = vmatpush1.bf16.xpose.msra.mxu0 0
  %1624 = vmatprep.mubr.bf16.mxu0 0
  %1625 = vmatmul.mubr.bf16.gmra.mrb[0].mxu0 %v1587
  %v1626 = vpop.f32.mrb[0].mxu0
  %v1627 = vadd.f32 %v1119, %v1626
  %v1628 = vpop.f32.mrb[0].mxu0
  %v1629 = vpop.f32.mrb[0].mxu0
  %v1630 = vadd.f32 %v1120, %v1629
  %v1631 = vpop.f32.mrb[0].mxu0
  %1632 = vdwg.mxu0
  %1634 = vrot.lane.b32.xlu0 %v1095, 96
  %v1635 = vpop.permute.xlu0 %1634
  %v1637 = vsel %vm364, %v1079, 0
  %v1640 = vsel %vm364, %v1635, 0
  %1642 = vmatprep.subr.bf16.mxu0 0
  %1643 = vmatpush1.bf16.xpose.msra.mxu0 %v1640
  %1644 = vmatprep.subr.bf16.mxu0 0
  %1645 = vmatpush1.bf16.xpose.msra.mxu0 0
  %1646 = vmatprep.subr.bf16.mxu0 0
  %1647 = vmatpush1.bf16.xpose.msra.mxu0 0
  %1648 = vmatprep.subr.bf16.mxu0 0
  %1649 = vmatpush1.bf16.xpose.msra.mxu0 0
  %1650 = vmatprep.subr.bf16.mxu0 0
  %1651 = vmatpush1.bf16.xpose.msra.mxu0 0
  %1652 = vmatprep.subr.bf16.mxu0 0
  %1653 = vmatpush1.bf16.xpose.msra.mxu0 0
  %1654 = vmatprep.subr.bf16.mxu0 0
  %1655 = vmatpush1.bf16.xpose.msra.mxu0 0
  %1656 = vmatprep.subr.bf16.mxu0 0
  %1657 = vmatpush1.bf16.xpose.msra.mxu0 0
  %1658 = vmatprep.subr.bf16.mxu0 0
  %1659 = vmatpush1.bf16.xpose.msra.mxu0 0
  %1660 = vmatprep.subr.bf16.mxu0 0
  %1661 = vmatpush1.bf16.xpose.msra.mxu0 0
  %1662 = vmatprep.subr.bf16.mxu0 0
  %1663 = vmatpush1.bf16.xpose.msra.mxu0 0
  %1664 = vmatprep.subr.bf16.mxu0 0
  %1665 = vmatpush1.bf16.xpose.msra.mxu0 0
  %1666 = vmatprep.subr.bf16.mxu0 0
  %1667 = vmatpush1.bf16.xpose.msra.mxu0 0
  %1668 = vmatprep.subr.bf16.mxu0 0
  %1669 = vmatpush1.bf16.xpose.msra.mxu0 0
  %1670 = vmatprep.subr.bf16.mxu0 0
  %1671 = vmatpush1.bf16.xpose.msra.mxu0 0
  %1672 = vmatprep.subr.bf16.mxu0 0
  %1673 = vmatpush1.bf16.xpose.msra.mxu0 0
  %1674 = vmatprep.mubr.bf16.mxu0 0
  %1675 = vmatmul.mubr.bf16.gmra.mrb[0].mxu0 %v1637
  %v1676 = vpop.f32.mrb[0].mxu0
  %v1677 = vadd.f32 %v1121, %v1676
  %v1678 = vpop.f32.mrb[0].mxu0
  %v1679 = vpop.f32.mrb[0].mxu0
  %v1680 = vadd.f32 %v1122, %v1679
  %v1681 = vpop.f32.mrb[0].mxu0
  %1682 = vdwg.mxu0
  %1684 = vrot.lane.b32.xlu0 %v1096, 96
  %v1685 = vpop.permute.xlu0 %1684
  %v1687 = vsel %vm364, %v1080, 0
  %v1690 = vsel %vm364, %v1685, 0
  %1692 = vmatprep.subr.bf16.mxu0 0
  %1693 = vmatpush1.bf16.xpose.msra.mxu0 %v1690
  %1694 = vmatprep.subr.bf16.mxu0 0
  %1695 = vmatpush1.bf16.xpose.msra.mxu0 0
  %1696 = vmatprep.subr.bf16.mxu0 0
  %1697 = vmatpush1.bf16.xpose.msra.mxu0 0
  %1698 = vmatprep.subr.bf16.mxu0 0
  %1699 = vmatpush1.bf16.xpose.msra.mxu0 0
  %1700 = vmatprep.subr.bf16.mxu0 0
  %1701 = vmatpush1.bf16.xpose.msra.mxu0 0
  %1702 = vmatprep.subr.bf16.mxu0 0
  %1703 = vmatpush1.bf16.xpose.msra.mxu0 0
  %1704 = vmatprep.subr.bf16.mxu0 0
  %1705 = vmatpush1.bf16.xpose.msra.mxu0 0
  %1706 = vmatprep.subr.bf16.mxu0 0
  %1707 = vmatpush1.bf16.xpose.msra.mxu0 0
  %1708 = vmatprep.subr.bf16.mxu0 0
  %1709 = vmatpush1.bf16.xpose.msra.mxu0 0
  %1710 = vmatprep.subr.bf16.mxu0 0
  %1711 = vmatpush1.bf16.xpose.msra.mxu0 0
  %1712 = vmatprep.subr.bf16.mxu0 0
  %1713 = vmatpush1.bf16.xpose.msra.mxu0 0
  %1714 = vmatprep.subr.bf16.mxu0 0
  %1715 = vmatpush1.bf16.xpose.msra.mxu0 0
  %1716 = vmatprep.subr.bf16.mxu0 0
  %1717 = vmatpush1.bf16.xpose.msra.mxu0 0
  %1718 = vmatprep.subr.bf16.mxu0 0
  %1719 = vmatpush1.bf16.xpose.msra.mxu0 0
  %1720 = vmatprep.subr.bf16.mxu0 0
  %1721 = vmatpush1.bf16.xpose.msra.mxu0 0
  %1722 = vmatprep.subr.bf16.mxu0 0
  %1723 = vmatpush1.bf16.xpose.msra.mxu0 0
  %1724 = vmatprep.mubr.bf16.mxu0 0
  %1725 = vmatmul.mubr.bf16.gmra.mrb[0].mxu0 %v1687
  %v1726 = vpop.f32.mrb[0].mxu0
  %v1727 = vadd.f32 %v1123, %v1726
  %v1728 = vpop.f32.mrb[0].mxu0
  %v1729 = vpop.f32.mrb[0].mxu0
  %v1730 = vadd.f32 %v1124, %v1729
  %v1731 = vpop.f32.mrb[0].mxu0
  %1732 = vdwg.mxu0
  %1734 = vrot.lane.b32.xlu0 %v1097, 96
  %v1735 = vpop.permute.xlu0 %1734
  %v1737 = vsel %vm364, %v1081, 0
  %v1740 = vsel %vm364, %v1735, 0
  %1742 = vmatprep.subr.bf16.mxu0 0
  %1743 = vmatpush1.bf16.xpose.msra.mxu0 %v1740
  %1744 = vmatprep.subr.bf16.mxu0 0
  %1745 = vmatpush1.bf16.xpose.msra.mxu0 0
  %1746 = vmatprep.subr.bf16.mxu0 0
  %1747 = vmatpush1.bf16.xpose.msra.mxu0 0
  %1748 = vmatprep.subr.bf16.mxu0 0
  %1749 = vmatpush1.bf16.xpose.msra.mxu0 0
  %1750 = vmatprep.subr.bf16.mxu0 0
  %1751 = vmatpush1.bf16.xpose.msra.mxu0 0
  %1752 = vmatprep.subr.bf16.mxu0 0
  %1753 = vmatpush1.bf16.xpose.msra.mxu0 0
  %1754 = vmatprep.subr.bf16.mxu0 0
  %1755 = vmatpush1.bf16.xpose.msra.mxu0 0
  %1756 = vmatprep.subr.bf16.mxu0 0
  %1757 = vmatpush1.bf16.xpose.msra.mxu0 0
  %1758 = vmatprep.subr.bf16.mxu0 0
  %1759 = vmatpush1.bf16.xpose.msra.mxu0 0
  %1760 = vmatprep.subr.bf16.mxu0 0
  %1761 = vmatpush1.bf16.xpose.msra.mxu0 0
  %1762 = vmatprep.subr.bf16.mxu0 0
  %1763 = vmatpush1.bf16.xpose.msra.mxu0 0
  %1764 = vmatprep.subr.bf16.mxu0 0
  %1765 = vmatpush1.bf16.xpose.msra.mxu0 0
  %1766 = vmatprep.subr.bf16.mxu0 0
  %1767 = vmatpush1.bf16.xpose.msra.mxu0 0
  %1768 = vmatprep.subr.bf16.mxu0 0
  %1769 = vmatpush1.bf16.xpose.msra.mxu0 0
  %1770 = vmatprep.subr.bf16.mxu0 0
  %1771 = vmatpush1.bf16.xpose.msra.mxu0 0
  %1772 = vmatprep.subr.bf16.mxu0 0
  %1773 = vmatpush1.bf16.xpose.msra.mxu0 0
  %1774 = vmatprep.mubr.bf16.mxu0 0
  %1775 = vmatmul.mubr.bf16.gmra.mrb[0].mxu0 %v1737
  %v1776 = vpop.f32.mrb[0].mxu0
  %v1777 = vadd.f32 %v1125, %v1776
  %v1778 = vpop.f32.mrb[0].mxu0
  %v1779 = vpop.f32.mrb[0].mxu0
  %v1780 = vadd.f32 %v1126, %v1779
  %v1781 = vpop.f32.mrb[0].mxu0
  %1782 = vdwg.mxu0
  %1784 = vrot.lane.b32.xlu0 %v1098, 96
  %v1785 = vpop.permute.xlu0 %1784
  %v1787 = vsel %vm364, %v1082, 0
  %v1790 = vsel %vm364, %v1785, 0
  %1792 = vmatprep.subr.bf16.mxu0 0
  %1793 = vmatpush1.bf16.xpose.msra.mxu0 %v1790
  %1794 = vmatprep.subr.bf16.mxu0 0
  %1795 = vmatpush1.bf16.xpose.msra.mxu0 0
  %1796 = vmatprep.subr.bf16.mxu0 0
  %1797 = vmatpush1.bf16.xpose.msra.mxu0 0
  %1798 = vmatprep.subr.bf16.mxu0 0
  %1799 = vmatpush1.bf16.xpose.msra.mxu0 0
  %1800 = vmatprep.subr.bf16.mxu0 0
  %1801 = vmatpush1.bf16.xpose.msra.mxu0 0
  %1802 = vmatprep.subr.bf16.mxu0 0
  %1803 = vmatpush1.bf16.xpose.msra.mxu0 0
  %1804 = vmatprep.subr.bf16.mxu0 0
  %1805 = vmatpush1.bf16.xpose.msra.mxu0 0
  %1806 = vmatprep.subr.bf16.mxu0 0
  %1807 = vmatpush1.bf16.xpose.msra.mxu0 0
  %1808 = vmatprep.subr.bf16.mxu0 0
  %1809 = vmatpush1.bf16.xpose.msra.mxu0 0
  %1810 = vmatprep.subr.bf16.mxu0 0
  %1811 = vmatpush1.bf16.xpose.msra.mxu0 0
  %1812 = vmatprep.subr.bf16.mxu0 0
  %1813 = vmatpush1.bf16.xpose.msra.mxu0 0
  %1814 = vmatprep.subr.bf16.mxu0 0
  %1815 = vmatpush1.bf16.xpose.msra.mxu0 0
  %1816 = vmatprep.subr.bf16.mxu0 0
  %1817 = vmatpush1.bf16.xpose.msra.mxu0 0
  %1818 = vmatprep.subr.bf16.mxu0 0
  %1819 = vmatpush1.bf16.xpose.msra.mxu0 0
  %1820 = vmatprep.subr.bf16.mxu0 0
  %1821 = vmatpush1.bf16.xpose.msra.mxu0 0
  %1822 = vmatprep.subr.bf16.mxu0 0
  %1823 = vmatpush1.bf16.xpose.msra.mxu0 0
  %1824 = vmatprep.mubr.bf16.mxu0 0
  %1825 = vmatmul.mubr.bf16.gmra.mrb[0].mxu0 %v1787
  %v1826 = vpop.f32.mrb[0].mxu0
  %v1827 = vadd.f32 %v1127, %v1826
  %v1828 = vpop.f32.mrb[0].mxu0
  %v1829 = vpop.f32.mrb[0].mxu0
  %v1830 = vadd.f32 %v1128, %v1829
  %v1831 = vpop.f32.mrb[0].mxu0
  %1832 = vdwg.mxu0
  %1834 = vrot.lane.b32.xlu0 %v1099, 96
  %v1835 = vpop.permute.xlu0 %1834
  %v1837 = vsel %vm364, %v1083, 0
  %v1840 = vsel %vm364, %v1835, 0
  %1842 = vmatprep.subr.bf16.mxu0 0
  %1843 = vmatpush1.bf16.xpose.msra.mxu0 %v1840
  %1844 = vmatprep.subr.bf16.mxu0 0
  %1845 = vmatpush1.bf16.xpose.msra.mxu0 0
  %1846 = vmatprep.subr.bf16.mxu0 0
  %1847 = vmatpush1.bf16.xpose.msra.mxu0 0
  %1848 = vmatprep.subr.bf16.mxu0 0
  %1849 = vmatpush1.bf16.xpose.msra.mxu0 0
  %1850 = vmatprep.subr.bf16.mxu0 0
  %1851 = vmatpush1.bf16.xpose.msra.mxu0 0
  %1852 = vmatprep.subr.bf16.mxu0 0
  %1853 = vmatpush1.bf16.xpose.msra.mxu0 0
  %1854 = vmatprep.subr.bf16.mxu0 0
  %1855 = vmatpush1.bf16.xpose.msra.mxu0 0
  %1856 = vmatprep.subr.bf16.mxu0 0
  %1857 = vmatpush1.bf16.xpose.msra.mxu0 0
  %1858 = vmatprep.subr.bf16.mxu0 0
  %1859 = vmatpush1.bf16.xpose.msra.mxu0 0
  %1860 = vmatprep.subr.bf16.mxu0 0
  %1861 = vmatpush1.bf16.xpose.msra.mxu0 0
  %1862 = vmatprep.subr.bf16.mxu0 0
  %1863 = vmatpush1.bf16.xpose.msra.mxu0 0
  %1864 = vmatprep.subr.bf16.mxu0 0
  %1865 = vmatpush1.bf16.xpose.msra.mxu0 0
  %1866 = vmatprep.subr.bf16.mxu0 0
  %1867 = vmatpush1.bf16.xpose.msra.mxu0 0
  %1868 = vmatprep.subr.bf16.mxu0 0
  %1869 = vmatpush1.bf16.xpose.msra.mxu0 0
  %1870 = vmatprep.subr.bf16.mxu0 0
  %1871 = vmatpush1.bf16.xpose.msra.mxu0 0
  %1872 = vmatprep.subr.bf16.mxu0 0
  %1873 = vmatpush1.bf16.xpose.msra.mxu0 0
  %1874 = vmatprep.mubr.bf16.mxu0 0
  %1875 = vmatmul.mubr.bf16.gmra.mrb[0].mxu0 %v1837
  %v1876 = vpop.f32.mrb[0].mxu0
  %v1877 = vadd.f32 %v1129, %v1876
  %v1878 = vpop.f32.mrb[0].mxu0
  %v1879 = vpop.f32.mrb[0].mxu0
  %v1880 = vadd.f32 %v1130, %v1879
  %v1881 = vpop.f32.mrb[0].mxu0
  %1882 = vdwg.mxu0
  %1884 = vrot.lane.b32.xlu0 %v1100, 96
  %v1885 = vpop.permute.xlu0 %1884
  %v1887 = vsel %vm364, %v1084, 0
  %v1890 = vsel %vm364, %v1885, 0
  %1892 = vmatprep.subr.bf16.mxu0 0
  %1893 = vmatpush1.bf16.xpose.msra.mxu0 %v1890
  %1894 = vmatprep.subr.bf16.mxu0 0
  %1895 = vmatpush1.bf16.xpose.msra.mxu0 0
  %1896 = vmatprep.subr.bf16.mxu0 0
  %1897 = vmatpush1.bf16.xpose.msra.mxu0 0
  %1898 = vmatprep.subr.bf16.mxu0 0
  %1899 = vmatpush1.bf16.xpose.msra.mxu0 0
  %1900 = vmatprep.subr.bf16.mxu0 0
  %1901 = vmatpush1.bf16.xpose.msra.mxu0 0
  %1902 = vmatprep.subr.bf16.mxu0 0
  %1903 = vmatpush1.bf16.xpose.msra.mxu0 0
  %1904 = vmatprep.subr.bf16.mxu0 0
  %1905 = vmatpush1.bf16.xpose.msra.mxu0 0
  %1906 = vmatprep.subr.bf16.mxu0 0
  %1907 = vmatpush1.bf16.xpose.msra.mxu0 0
  %1908 = vmatprep.subr.bf16.mxu0 0
  %1909 = vmatpush1.bf16.xpose.msra.mxu0 0
  %1910 = vmatprep.subr.bf16.mxu0 0
  %1911 = vmatpush1.bf16.xpose.msra.mxu0 0
  %1912 = vmatprep.subr.bf16.mxu0 0
  %1913 = vmatpush1.bf16.xpose.msra.mxu0 0
  %1914 = vmatprep.subr.bf16.mxu0 0
  %1915 = vmatpush1.bf16.xpose.msra.mxu0 0
  %1916 = vmatprep.subr.bf16.mxu0 0
  %1917 = vmatpush1.bf16.xpose.msra.mxu0 0
  %1918 = vmatprep.subr.bf16.mxu0 0
  %1919 = vmatpush1.bf16.xpose.msra.mxu0 0
  %1920 = vmatprep.subr.bf16.mxu0 0
  %1921 = vmatpush1.bf16.xpose.msra.mxu0 0
  %1922 = vmatprep.subr.bf16.mxu0 0
  %1923 = vmatpush1.bf16.xpose.msra.mxu0 0
  %1924 = vmatprep.mubr.bf16.mxu0 0
  %1925 = vmatmul.mubr.bf16.gmra.mrb[0].mxu0 %v1887
  %v1926 = vpop.f32.mrb[0].mxu0
  %v1927 = vadd.f32 %v1131, %v1926
  %v1928 = vpop.f32.mrb[0].mxu0
  %v1929 = vpop.f32.mrb[0].mxu0
  %v1930 = vadd.f32 %v1132, %v1929
  %v1931 = vpop.f32.mrb[0].mxu0
  %1932 = vdwg.mxu0
  %v1933 = vsel %vm364, %v1177, -inf
  %1934 = vmax.xlane.f32.xlu0 %v1933
  %v1935 = vpop.xlane.xlu0 %1934
  %v1936 = vsel %vm364, %v1180, -inf
  %1937 = vmax.xlane.f32.xlu0 %v1936
  %v1938 = vpop.xlane.xlu0 %1937
  %v1939 = vsel %vm364, %v1227, -inf
  %1940 = vmax.xlane.f32.xlu0 %v1939
  %v1941 = vpop.xlane.xlu0 %1940
  %v1942 = vsel %vm364, %v1230, -inf
  %1943 = vmax.xlane.f32.xlu0 %v1942
  %v1944 = vpop.xlane.xlu0 %1943
  %v1945 = vsel %vm364, %v1277, -inf
  %1946 = vmax.xlane.f32.xlu0 %v1945
  %v1947 = vpop.xlane.xlu0 %1946
  %v1948 = vsel %vm364, %v1280, -inf
  %1949 = vmax.xlane.f32.xlu0 %v1948
  %v1950 = vpop.xlane.xlu0 %1949
  %v1951 = vsel %vm364, %v1327, -inf
  %1952 = vmax.xlane.f32.xlu0 %v1951
  %v1953 = vpop.xlane.xlu0 %1952
  %v1954 = vsel %vm364, %v1330, -inf
  %1955 = vmax.xlane.f32.xlu0 %v1954
  %v1956 = vpop.xlane.xlu0 %1955
  %v1957 = vsel %vm364, %v1377, -inf
  %1958 = vmax.xlane.f32.xlu0 %v1957
  %v1959 = vpop.xlane.xlu0 %1958
  %v1960 = vsel %vm364, %v1380, -inf
  %1961 = vmax.xlane.f32.xlu0 %v1960
  %v1962 = vpop.xlane.xlu0 %1961
  %v1963 = vsel %vm364, %v1427, -inf
  %1964 = vmax.xlane.f32.xlu0 %v1963
  %v1965 = vpop.xlane.xlu0 %1964
  %v1966 = vsel %vm364, %v1430, -inf
  %1967 = vmax.xlane.f32.xlu0 %v1966
  %v1968 = vpop.xlane.xlu0 %1967
  %v1969 = vsel %vm364, %v1477, -inf
  %1970 = vmax.xlane.f32.xlu0 %v1969
  %v1971 = vpop.xlane.xlu0 %1970
  %v1972 = vsel %vm364, %v1480, -inf
  %1973 = vmax.xlane.f32.xlu0 %v1972
  %v1974 = vpop.xlane.xlu0 %1973
  %v1975 = vsel %vm364, %v1527, -inf
  %1976 = vmax.xlane.f32.xlu0 %v1975
  %v1977 = vpop.xlane.xlu0 %1976
  %v1978 = vsel %vm364, %v1530, -inf
  %1979 = vmax.xlane.f32.xlu0 %v1978
  %v1980 = vpop.xlane.xlu0 %1979
  %v1981 = vsel %vm364, %v1577, -inf
  %1982 = vmax.xlane.f32.xlu0 %v1981
  %v1983 = vpop.xlane.xlu0 %1982
  %v1984 = vsel %vm364, %v1580, -inf
  %1985 = vmax.xlane.f32.xlu0 %v1984
  %v1986 = vpop.xlane.xlu0 %1985
  %v1987 = vsel %vm364, %v1627, -inf
  %1988 = vmax.xlane.f32.xlu0 %v1987
  %v1989 = vpop.xlane.xlu0 %1988
  %v1990 = vsel %vm364, %v1630, -inf
  %1991 = vmax.xlane.f32.xlu0 %v1990
  %v1992 = vpop.xlane.xlu0 %1991
  %v1993 = vsel %vm364, %v1677, -inf
  %1994 = vmax.xlane.f32.xlu0 %v1993
  %v1995 = vpop.xlane.xlu0 %1994
  %v1996 = vsel %vm364, %v1680, -inf
  %1997 = vmax.xlane.f32.xlu0 %v1996
  %v1998 = vpop.xlane.xlu0 %1997
  %v1999 = vsel %vm364, %v1727, -inf
  %2000 = vmax.xlane.f32.xlu0 %v1999
  %v2001 = vpop.xlane.xlu0 %2000
  %v2002 = vsel %vm364, %v1730, -inf
  %2003 = vmax.xlane.f32.xlu0 %v2002
  %v2004 = vpop.xlane.xlu0 %2003
  %v2005 = vsel %vm364, %v1777, -inf
  %2006 = vmax.xlane.f32.xlu0 %v2005
  %v2007 = vpop.xlane.xlu0 %2006
  %v2008 = vsel %vm364, %v1780, -inf
  %2009 = vmax.xlane.f32.xlu0 %v2008
  %v2010 = vpop.xlane.xlu0 %2009
  %v2011 = vsel %vm364, %v1827, -inf
  %2012 = vmax.xlane.f32.xlu0 %v2011
  %v2013 = vpop.xlane.xlu0 %2012
  %v2014 = vsel %vm364, %v1830, -inf
  %2015 = vmax.xlane.f32.xlu0 %v2014
  %v2016 = vpop.xlane.xlu0 %2015
  %v2017 = vsel %vm364, %v1877, -inf
  %2018 = vmax.xlane.f32.xlu0 %v2017
  %v2019 = vpop.xlane.xlu0 %2018
  %v2020 = vsel %vm364, %v1880, -inf
  %2021 = vmax.xlane.f32.xlu0 %v2020
  %v2022 = vpop.xlane.xlu0 %2021
  %v2023 = vsel %vm364, %v1927, -inf
  %2024 = vmax.xlane.f32.xlu0 %v2023
  %v2025 = vpop.xlane.xlu0 %2024
  %v2026 = vsel %vm364, %v1930, -inf
  %2027 = vmax.xlane.f32.xlu0 %v2026
  %v2028 = vpop.xlane.xlu0 %2027
  %v2029 = vsub.f32 %v1177, %v1935
  %v2030 = vsub.f32 %v1180, %v1938
  %v2031 = vsub.f32 %v1227, %v1941
  %v2032 = vsub.f32 %v1230, %v1944
  %v2033 = vsub.f32 %v1277, %v1947
  %v2034 = vsub.f32 %v1280, %v1950
  %v2035 = vsub.f32 %v1327, %v1953
  %v2036 = vsub.f32 %v1330, %v1956
  %v2037 = vsub.f32 %v1377, %v1959
  %v2038 = vsub.f32 %v1380, %v1962
  %v2039 = vsub.f32 %v1427, %v1965
  %v2040 = vsub.f32 %v1430, %v1968
  %v2041 = vsub.f32 %v1477, %v1971
  %v2042 = vsub.f32 %v1480, %v1974
  %v2043 = vsub.f32 %v1527, %v1977
  %v2044 = vsub.f32 %v1530, %v1980
  %v2045 = vsub.f32 %v1577, %v1983
  %v2046 = vsub.f32 %v1580, %v1986
  %v2047 = vsub.f32 %v1627, %v1989
  %v2048 = vsub.f32 %v1630, %v1992
  %v2049 = vsub.f32 %v1677, %v1995
  %v2050 = vsub.f32 %v1680, %v1998
  %v2051 = vsub.f32 %v1727, %v2001
  %v2052 = vsub.f32 %v1730, %v2004
  %v2053 = vsub.f32 %v1777, %v2007
  %v2054 = vsub.f32 %v1780, %v2010
  %v2055 = vsub.f32 %v1827, %v2013
  %v2056 = vsub.f32 %v1830, %v2016
  %v2057 = vsub.f32 %v1877, %v2019
  %v2058 = vsub.f32 %v1880, %v2022
  %v2059 = vsub.f32 %v1927, %v2025
  %v2060 = vsub.f32 %v1930, %v2028
  %v2061 = vmul.f32 %v2029, 1.442695
  %v2062 = vpow.pop %v2061
  %v2063 = vmul.f32 %v2030, 1.442695
  %v2064 = vpow.pop %v2063
  %v2065 = vmul.f32 %v2031, 1.442695
  %v2066 = vpow.pop %v2065
  %v2067 = vmul.f32 %v2032, 1.442695
  %v2068 = vpow.pop %v2067
  %v2069 = vmul.f32 %v2033, 1.442695
  %v2070 = vpow.pop %v2069
  %v2071 = vmul.f32 %v2034, 1.442695
  %v2072 = vpow.pop %v2071
  %v2073 = vmul.f32 %v2035, 1.442695
  %v2074 = vpow.pop %v2073
  %v2075 = vmul.f32 %v2036, 1.442695
  %v2076 = vpow.pop %v2075
  %v2077 = vmul.f32 %v2037, 1.442695
  %v2078 = vpow.pop %v2077
  %v2079 = vmul.f32 %v2038, 1.442695
  %v2080 = vpow.pop %v2079
  %v2081 = vmul.f32 %v2039, 1.442695
  %v2082 = vpow.pop %v2081
  %v2083 = vmul.f32 %v2040, 1.442695
  %v2084 = vpow.pop %v2083
  %v2085 = vmul.f32 %v2041, 1.442695
  %v2086 = vpow.pop %v2085
  %v2087 = vmul.f32 %v2042, 1.442695
  %v2088 = vpow.pop %v2087
  %v2089 = vmul.f32 %v2043, 1.442695
  %v2090 = vpow.pop %v2089
  %v2091 = vmul.f32 %v2044, 1.442695
  %v2092 = vpow.pop %v2091
  %v2093 = vmul.f32 %v2045, 1.442695
  %v2094 = vpow.pop %v2093
  %v2095 = vmul.f32 %v2046, 1.442695
  %v2096 = vpow.pop %v2095
  %v2097 = vmul.f32 %v2047, 1.442695
  %v2098 = vpow.pop %v2097
  %v2099 = vmul.f32 %v2048, 1.442695
  %v2100 = vpow.pop %v2099
  %v2101 = vmul.f32 %v2049, 1.442695
  %v2102 = vpow.pop %v2101
  %v2103 = vmul.f32 %v2050, 1.442695
  %v2104 = vpow.pop %v2103
  %v2105 = vmul.f32 %v2051, 1.442695
  %v2106 = vpow.pop %v2105
  %v2107 = vmul.f32 %v2052, 1.442695
  %v2108 = vpow.pop %v2107
  %v2109 = vmul.f32 %v2053, 1.442695
  %v2110 = vpow.pop %v2109
  %v2111 = vmul.f32 %v2054, 1.442695
  %v2112 = vpow.pop %v2111
  %v2113 = vmul.f32 %v2055, 1.442695
  %v2114 = vpow.pop %v2113
  %v2115 = vmul.f32 %v2056, 1.442695
  %v2116 = vpow.pop %v2115
  %v2117 = vmul.f32 %v2057, 1.442695
  %v2118 = vpow.pop %v2117
  %v2119 = vmul.f32 %v2058, 1.442695
  %v2120 = vpow.pop %v2119
  %v2121 = vmul.f32 %v2059, 1.442695
  %v2122 = vpow.pop %v2121
  %v2123 = vmul.f32 %v2060, 1.442695
  %v2124 = vpow.pop %v2123
  %v2125 = vsel %vm364, %v2062, 0.0
  %2126 = vadd.xlane.f32.xlu0 %v2125
  %v2127 = vpop.xlane.xlu0 %2126
  %v2128 = vsel %vm364, %v2064, 0.0
  %2129 = vadd.xlane.f32.xlu0 %v2128
  %v2130 = vpop.xlane.xlu0 %2129
  %v2131 = vsel %vm364, %v2066, 0.0
  %2132 = vadd.xlane.f32.xlu0 %v2131
  %v2133 = vpop.xlane.xlu0 %2132
  %v2134 = vsel %vm364, %v2068, 0.0
  %2135 = vadd.xlane.f32.xlu0 %v2134
  %v2136 = vpop.xlane.xlu0 %2135
  %v2137 = vsel %vm364, %v2070, 0.0
  %2138 = vadd.xlane.f32.xlu0 %v2137
  %v2139 = vpop.xlane.xlu0 %2138
  %v2140 = vsel %vm364, %v2072, 0.0
  %2141 = vadd.xlane.f32.xlu0 %v2140
  %v2142 = vpop.xlane.xlu0 %2141
  %v2143 = vsel %vm364, %v2074, 0.0
  %2144 = vadd.xlane.f32.xlu0 %v2143
  %v2145 = vpop.xlane.xlu0 %2144
  %v2146 = vsel %vm364, %v2076, 0.0
  %2147 = vadd.xlane.f32.xlu0 %v2146
  %v2148 = vpop.xlane.xlu0 %2147
  %v2149 = vsel %vm364, %v2078, 0.0
  %2150 = vadd.xlane.f32.xlu0 %v2149
  %v2151 = vpop.xlane.xlu0 %2150
  %v2152 = vsel %vm364, %v2080, 0.0
  %2153 = vadd.xlane.f32.xlu0 %v2152
  %v2154 = vpop.xlane.xlu0 %2153
  %v2155 = vsel %vm364, %v2082, 0.0
  %2156 = vadd.xlane.f32.xlu0 %v2155
  %v2157 = vpop.xlane.xlu0 %2156
  %v2158 = vsel %vm364, %v2084, 0.0
  %2159 = vadd.xlane.f32.xlu0 %v2158
  %v2160 = vpop.xlane.xlu0 %2159
  %v2161 = vsel %vm364, %v2086, 0.0
  %2162 = vadd.xlane.f32.xlu0 %v2161
  %v2163 = vpop.xlane.xlu0 %2162
  %v2164 = vsel %vm364, %v2088, 0.0
  %2165 = vadd.xlane.f32.xlu0 %v2164
  %v2166 = vpop.xlane.xlu0 %2165
  %v2167 = vsel %vm364, %v2090, 0.0
  %2168 = vadd.xlane.f32.xlu0 %v2167
  %v2169 = vpop.xlane.xlu0 %2168
  %v2170 = vsel %vm364, %v2092, 0.0
  %2171 = vadd.xlane.f32.xlu0 %v2170
  %v2172 = vpop.xlane.xlu0 %2171
  %v2173 = vsel %vm364, %v2094, 0.0
  %2174 = vadd.xlane.f32.xlu0 %v2173
  %v2175 = vpop.xlane.xlu0 %2174
  %v2176 = vsel %vm364, %v2096, 0.0
  %2177 = vadd.xlane.f32.xlu0 %v2176
  %v2178 = vpop.xlane.xlu0 %2177
  %v2179 = vsel %vm364, %v2098, 0.0
  %2180 = vadd.xlane.f32.xlu0 %v2179
  %v2181 = vpop.xlane.xlu0 %2180
  %v2182 = vsel %vm364, %v2100, 0.0
  %2183 = vadd.xlane.f32.xlu0 %v2182
  %v2184 = vpop.xlane.xlu0 %2183
  %v2185 = vsel %vm364, %v2102, 0.0
  %2186 = vadd.xlane.f32.xlu0 %v2185
  %v2187 = vpop.xlane.xlu0 %2186
  %v2188 = vsel %vm364, %v2104, 0.0
  %2189 = vadd.xlane.f32.xlu0 %v2188
  %v2190 = vpop.xlane.xlu0 %2189
  %v2191 = vsel %vm364, %v2106, 0.0
  %2192 = vadd.xlane.f32.xlu0 %v2191
  %v2193 = vpop.xlane.xlu0 %2192
  %v2194 = vsel %vm364, %v2108, 0.0
  %2195 = vadd.xlane.f32.xlu0 %v2194
  %v2196 = vpop.xlane.xlu0 %2195
  %v2197 = vsel %vm364, %v2110, 0.0
  %2198 = vadd.xlane.f32.xlu0 %v2197
  %v2199 = vpop.xlane.xlu0 %2198
  %v2200 = vsel %vm364, %v2112, 0.0
  %2201 = vadd.xlane.f32.xlu0 %v2200
  %v2202 = vpop.xlane.xlu0 %2201
  %v2203 = vsel %vm364, %v2114, 0.0
  %2204 = vadd.xlane.f32.xlu0 %v2203
  %v2205 = vpop.xlane.xlu0 %2204
  %v2206 = vsel %vm364, %v2116, 0.0
  %2207 = vadd.xlane.f32.xlu0 %v2206
  %v2208 = vpop.xlane.xlu0 %2207
  %v2209 = vsel %vm364, %v2118, 0.0
  %2210 = vadd.xlane.f32.xlu0 %v2209
  %v2211 = vpop.xlane.xlu0 %2210
  %v2212 = vsel %vm364, %v2120, 0.0
  %2213 = vadd.xlane.f32.xlu0 %v2212
  %v2214 = vpop.xlane.xlu0 %2213
  %v2215 = vsel %vm364, %v2122, 0.0
  %2216 = vadd.xlane.f32.xlu0 %v2215
  %v2217 = vpop.xlane.xlu0 %2216
  %v2218 = vsel %vm364, %v2124, 0.0
  %2219 = vadd.xlane.f32.xlu0 %v2218
  %v2220 = vpop.xlane.xlu0 %2219
  %v2221 = vrcp.pop %v2127
  %v2222 = vrcp.pop %v2130
  %v2223 = vrcp.pop %v2133
  %v2224 = vrcp.pop %v2136
  %v2225 = vrcp.pop %v2139
  %v2226 = vrcp.pop %v2142
  %v2227 = vrcp.pop %v2145
  %v2228 = vrcp.pop %v2148
  %v2229 = vrcp.pop %v2151
  %v2230 = vrcp.pop %v2154
  %v2231 = vrcp.pop %v2157
  %v2232 = vrcp.pop %v2160
  %v2233 = vrcp.pop %v2163
  %v2234 = vrcp.pop %v2166
  %v2235 = vrcp.pop %v2169
  %v2236 = vrcp.pop %v2172
  %v2237 = vrcp.pop %v2175
  %v2238 = vrcp.pop %v2178
  %v2239 = vrcp.pop %v2181
  %v2240 = vrcp.pop %v2184
  %v2241 = vrcp.pop %v2187
  %v2242 = vrcp.pop %v2190
  %v2243 = vrcp.pop %v2193
  %v2244 = vrcp.pop %v2196
  %v2245 = vrcp.pop %v2199
  %v2246 = vrcp.pop %v2202
  %v2247 = vrcp.pop %v2205
  %v2248 = vrcp.pop %v2208
  %v2249 = vrcp.pop %v2211
  %v2250 = vrcp.pop %v2214
  %v2251 = vrcp.pop %v2217
  %v2252 = vrcp.pop %v2220
  %v2253 = vmul.f32 %v2062, %v2221
  %v2254 = vmul.f32 %v2064, %v2222
  %v2255 = vmul.f32 %v2066, %v2223
  %v2256 = vmul.f32 %v2068, %v2224
  %v2257 = vmul.f32 %v2070, %v2225
  %v2258 = vmul.f32 %v2072, %v2226
  %v2259 = vmul.f32 %v2074, %v2227
  %v2260 = vmul.f32 %v2076, %v2228
  %v2261 = vmul.f32 %v2078, %v2229
  %v2262 = vmul.f32 %v2080, %v2230
  %v2263 = vmul.f32 %v2082, %v2231
  %v2264 = vmul.f32 %v2084, %v2232
  %v2265 = vmul.f32 %v2086, %v2233
  %v2266 = vmul.f32 %v2088, %v2234
  %v2267 = vmul.f32 %v2090, %v2235
  %v2268 = vmul.f32 %v2092, %v2236
  %v2269 = vmul.f32 %v2094, %v2237
  %v2270 = vmul.f32 %v2096, %v2238
  %v2271 = vmul.f32 %v2098, %v2239
  %v2272 = vmul.f32 %v2100, %v2240
  %v2273 = vmul.f32 %v2102, %v2241
  %v2274 = vmul.f32 %v2104, %v2242
  %v2275 = vmul.f32 %v2106, %v2243
  %v2276 = vmul.f32 %v2108, %v2244
  %v2277 = vmul.f32 %v2110, %v2245
  %v2278 = vmul.f32 %v2112, %v2246
  %v2279 = vmul.f32 %v2114, %v2247
  %v2280 = vmul.f32 %v2116, %v2248
  %v2281 = vmul.f32 %v2118, %v2249
  %v2282 = vmul.f32 %v2120, %v2250
  %v2283 = vmul.f32 %v2122, %v2251
  %v2284 = vmul.f32 %v2124, %v2252
  %v2285 = vpack.c.bf16 %v2254, %v2253
  %v2286 = vpack.c.bf16 %v2256, %v2255
  %v2287 = vpack.c.bf16 %v2258, %v2257
  %v2288 = vpack.c.bf16 %v2260, %v2259
  %v2289 = vpack.c.bf16 %v2262, %v2261
  %v2290 = vpack.c.bf16 %v2264, %v2263
  %v2291 = vpack.c.bf16 %v2266, %v2265
  %v2292 = vpack.c.bf16 %v2268, %v2267
  %v2293 = vpack.c.bf16 %v2270, %v2269
  %v2294 = vpack.c.bf16 %v2272, %v2271
  %v2295 = vpack.c.bf16 %v2274, %v2273
  %v2296 = vpack.c.bf16 %v2276, %v2275
  %v2297 = vpack.c.bf16 %v2278, %v2277
  %v2298 = vpack.c.bf16 %v2280, %v2279
  %v2299 = vpack.c.bf16 %v2282, %v2281
  %v2300 = vpack.c.bf16 %v2284, %v2283
  %v2301 = vpack.c.bf16 %v209, %v206
  %v2302 = vpack.c.bf16 %v217, %v214
  %v2303 = vpack.c.bf16 %v225, %v222
  %v2304 = vpack.c.bf16 %v233, %v230
  %v2305 = vpack.c.bf16 %v241, %v238
  %v2306 = vpack.c.bf16 %v249, %v246
  %v2307 = vpack.c.bf16 %v257, %v254
  %v2308 = vpack.c.bf16 %v265, %v262
  %v2309 = vpack.c.bf16 %v287, %v285
  %v2310 = vpack.c.bf16 %v291, %v289
  %v2311 = vpack.c.bf16 %v295, %v293
  %v2312 = vpack.c.bf16 %v299, %v297
  %v2313 = vpack.c.bf16 %v303, %v301
  %v2314 = vpack.c.bf16 %v307, %v305
  %v2315 = vpack.c.bf16 %v311, %v309
  %v2316 = vpack.c.bf16 %v315, %v313
  %2318 = vrot.lane.b32.xlu0 %v2301, 64
  %v2319 = vpop.permute.xlu0 %2318
  %v2322 = vsel %vm364, %v2285, 0
  %2324 = vmatprep.subr.bf16.mxu0 0
  %2325 = vmatpush1.bf16.msra.mxu0 %v2319
  %2326 = vmatprep.subr.bf16.mxu0 0
  %2327 = vmatpush1.bf16.msra.mxu0 0
  %2328 = vmatprep.subr.bf16.mxu0 0
  %2329 = vmatpush1.bf16.msra.mxu0 0
  %2330 = vmatprep.subr.bf16.mxu0 0
  %2331 = vmatpush1.bf16.msra.mxu0 0
  %2332 = vmatprep.subr.bf16.mxu0 0
  %2333 = vmatpush1.bf16.msra.mxu0 0
  %2334 = vmatprep.subr.bf16.mxu0 0
  %2335 = vmatpush1.bf16.msra.mxu0 0
  %2336 = vmatprep.subr.bf16.mxu0 0
  %2337 = vmatpush1.bf16.msra.mxu0 0
  %2338 = vmatprep.subr.bf16.mxu0 0
  %2339 = vmatpush1.bf16.msra.mxu0 0
  %2340 = vmatprep.subr.bf16.mxu0 0
  %2341 = vmatpush1.bf16.msra.mxu0 0
  %2342 = vmatprep.subr.bf16.mxu0 0
  %2343 = vmatpush1.bf16.msra.mxu0 0
  %2344 = vmatprep.subr.bf16.mxu0 0
  %2345 = vmatpush1.bf16.msra.mxu0 0
  %2346 = vmatprep.subr.bf16.mxu0 0
  %2347 = vmatpush1.bf16.msra.mxu0 0
  %2348 = vmatprep.subr.bf16.mxu0 0
  %2349 = vmatpush1.bf16.msra.mxu0 0
  %2350 = vmatprep.subr.bf16.mxu0 0
  %2351 = vmatpush1.bf16.msra.mxu0 0
  %2352 = vmatprep.subr.bf16.mxu0 0
  %2353 = vmatpush1.bf16.msra.mxu0 0
  %2354 = vmatprep.subr.bf16.mxu0 0
  %2355 = vmatpush1.bf16.msra.mxu0 0
  %2356 = vmatprep.mubr.bf16.mxu0 0
  %2357 = vmatmul.mubr.bf16.gmra.mrb[0].mxu0 %v2322
  %v2358 = vpop.f32.mrb[0].mxu0
  %v2359 = vadd.f32 0.0, %v2358
  %v2360 = vpop.f32.mrb[0].mxu0
  %v2361 = vpop.f32.mrb[0].mxu0
  %v2362 = vadd.f32 0.0, %v2361
  %v2363 = vpop.f32.mrb[0].mxu0
  %2364 = vdwg.mxu0
  %2366 = vrot.lane.b32.xlu0 %v2302, 64
  %v2367 = vpop.permute.xlu0 %2366
  %v2370 = vsel %vm364, %v2286, 0
  %2372 = vmatprep.subr.bf16.mxu0 0
  %2373 = vmatpush1.bf16.msra.mxu0 %v2367
  %2374 = vmatprep.subr.bf16.mxu0 0
  %2375 = vmatpush1.bf16.msra.mxu0 0
  %2376 = vmatprep.subr.bf16.mxu0 0
  %2377 = vmatpush1.bf16.msra.mxu0 0
  %2378 = vmatprep.subr.bf16.mxu0 0
  %2379 = vmatpush1.bf16.msra.mxu0 0
  %2380 = vmatprep.subr.bf16.mxu0 0
  %2381 = vmatpush1.bf16.msra.mxu0 0
  %2382 = vmatprep.subr.bf16.mxu0 0
  %2383 = vmatpush1.bf16.msra.mxu0 0
  %2384 = vmatprep.subr.bf16.mxu0 0
  %2385 = vmatpush1.bf16.msra.mxu0 0
  %2386 = vmatprep.subr.bf16.mxu0 0
  %2387 = vmatpush1.bf16.msra.mxu0 0
  %2388 = vmatprep.subr.bf16.mxu0 0
  %2389 = vmatpush1.bf16.msra.mxu0 0
  %2390 = vmatprep.subr.bf16.mxu0 0
  %2391 = vmatpush1.bf16.msra.mxu0 0
  %2392 = vmatprep.subr.bf16.mxu0 0
  %2393 = vmatpush1.bf16.msra.mxu0 0
  %2394 = vmatprep.subr.bf16.mxu0 0
  %2395 = vmatpush1.bf16.msra.mxu0 0
  %2396 = vmatprep.subr.bf16.mxu0 0
  %2397 = vmatpush1.bf16.msra.mxu0 0
  %2398 = vmatprep.subr.bf16.mxu0 0
  %2399 = vmatpush1.bf16.msra.mxu0 0
  %2400 = vmatprep.subr.bf16.mxu0 0
  %2401 = vmatpush1.bf16.msra.mxu0 0
  %2402 = vmatprep.subr.bf16.mxu0 0
  %2403 = vmatpush1.bf16.msra.mxu0 0
  %2404 = vmatprep.mubr.bf16.mxu0 0
  %2405 = vmatmul.mubr.bf16.gmra.mrb[0].mxu0 %v2370
  %v2406 = vpop.f32.mrb[0].mxu0
  %v2407 = vadd.f32 0.0, %v2406
  %v2408 = vpop.f32.mrb[0].mxu0
  %v2409 = vpop.f32.mrb[0].mxu0
  %v2410 = vadd.f32 0.0, %v2409
  %v2411 = vpop.f32.mrb[0].mxu0
  %2412 = vdwg.mxu0
  %2414 = vrot.lane.b32.xlu0 %v2303, 64
  %v2415 = vpop.permute.xlu0 %2414
  %v2418 = vsel %vm364, %v2287, 0
  %2420 = vmatprep.subr.bf16.mxu0 0
  %2421 = vmatpush1.bf16.msra.mxu0 %v2415
  %2422 = vmatprep.subr.bf16.mxu0 0
  %2423 = vmatpush1.bf16.msra.mxu0 0
  %2424 = vmatprep.subr.bf16.mxu0 0
  %2425 = vmatpush1.bf16.msra.mxu0 0
  %2426 = vmatprep.subr.bf16.mxu0 0
  %2427 = vmatpush1.bf16.msra.mxu0 0
  %2428 = vmatprep.subr.bf16.mxu0 0
  %2429 = vmatpush1.bf16.msra.mxu0 0
  %2430 = vmatprep.subr.bf16.mxu0 0
  %2431 = vmatpush1.bf16.msra.mxu0 0
  %2432 = vmatprep.subr.bf16.mxu0 0
  %2433 = vmatpush1.bf16.msra.mxu0 0
  %2434 = vmatprep.subr.bf16.mxu0 0
  %2435 = vmatpush1.bf16.msra.mxu0 0
  %2436 = vmatprep.subr.bf16.mxu0 0
  %2437 = vmatpush1.bf16.msra.mxu0 0
  %2438 = vmatprep.subr.bf16.mxu0 0
  %2439 = vmatpush1.bf16.msra.mxu0 0
  %2440 = vmatprep.subr.bf16.mxu0 0
  %2441 = vmatpush1.bf16.msra.mxu0 0
  %2442 = vmatprep.subr.bf16.mxu0 0
  %2443 = vmatpush1.bf16.msra.mxu0 0
  %2444 = vmatprep.subr.bf16.mxu0 0
  %2445 = vmatpush1.bf16.msra.mxu0 0
  %2446 = vmatprep.subr.bf16.mxu0 0
  %2447 = vmatpush1.bf16.msra.mxu0 0
  %2448 = vmatprep.subr.bf16.mxu0 0
  %2449 = vmatpush1.bf16.msra.mxu0 0
  %2450 = vmatprep.subr.bf16.mxu0 0
  %2451 = vmatpush1.bf16.msra.mxu0 0
  %2452 = vmatprep.mubr.bf16.mxu0 0
  %2453 = vmatmul.mubr.bf16.gmra.mrb[0].mxu0 %v2418
  %v2454 = vpop.f32.mrb[0].mxu0
  %v2455 = vadd.f32 0.0, %v2454
  %v2456 = vpop.f32.mrb[0].mxu0
  %v2457 = vpop.f32.mrb[0].mxu0
  %v2458 = vadd.f32 0.0, %v2457
  %v2459 = vpop.f32.mrb[0].mxu0
  %2460 = vdwg.mxu0
  %2462 = vrot.lane.b32.xlu0 %v2304, 64
  %v2463 = vpop.permute.xlu0 %2462
  %v2466 = vsel %vm364, %v2288, 0
  %2468 = vmatprep.subr.bf16.mxu0 0
  %2469 = vmatpush1.bf16.msra.mxu0 %v2463
  %2470 = vmatprep.subr.bf16.mxu0 0
  %2471 = vmatpush1.bf16.msra.mxu0 0
  %2472 = vmatprep.subr.bf16.mxu0 0
  %2473 = vmatpush1.bf16.msra.mxu0 0
  %2474 = vmatprep.subr.bf16.mxu0 0
  %2475 = vmatpush1.bf16.msra.mxu0 0
  %2476 = vmatprep.subr.bf16.mxu0 0
  %2477 = vmatpush1.bf16.msra.mxu0 0
  %2478 = vmatprep.subr.bf16.mxu0 0
  %2479 = vmatpush1.bf16.msra.mxu0 0
  %2480 = vmatprep.subr.bf16.mxu0 0
  %2481 = vmatpush1.bf16.msra.mxu0 0
  %2482 = vmatprep.subr.bf16.mxu0 0
  %2483 = vmatpush1.bf16.msra.mxu0 0
  %2484 = vmatprep.subr.bf16.mxu0 0
  %2485 = vmatpush1.bf16.msra.mxu0 0
  %2486 = vmatprep.subr.bf16.mxu0 0
  %2487 = vmatpush1.bf16.msra.mxu0 0
  %2488 = vmatprep.subr.bf16.mxu0 0
  %2489 = vmatpush1.bf16.msra.mxu0 0
  %2490 = vmatprep.subr.bf16.mxu0 0
  %2491 = vmatpush1.bf16.msra.mxu0 0
  %2492 = vmatprep.subr.bf16.mxu0 0
  %2493 = vmatpush1.bf16.msra.mxu0 0
  %2494 = vmatprep.subr.bf16.mxu0 0
  %2495 = vmatpush1.bf16.msra.mxu0 0
  %2496 = vmatprep.subr.bf16.mxu0 0
  %2497 = vmatpush1.bf16.msra.mxu0 0
  %2498 = vmatprep.subr.bf16.mxu0 0
  %2499 = vmatpush1.bf16.msra.mxu0 0
  %2500 = vmatprep.mubr.bf16.mxu0 0
  %2501 = vmatmul.mubr.bf16.gmra.mrb[0].mxu0 %v2466
  %v2502 = vpop.f32.mrb[0].mxu0
  %v2503 = vadd.f32 0.0, %v2502
  %v2504 = vpop.f32.mrb[0].mxu0
  %v2505 = vpop.f32.mrb[0].mxu0
  %v2506 = vadd.f32 0.0, %v2505
  %v2507 = vpop.f32.mrb[0].mxu0
  %2508 = vdwg.mxu0
  %2510 = vrot.lane.b32.xlu0 %v2305, 64
  %v2511 = vpop.permute.xlu0 %2510
  %v2514 = vsel %vm364, %v2289, 0
  %2516 = vmatprep.subr.bf16.mxu0 0
  %2517 = vmatpush1.bf16.msra.mxu0 %v2511
  %2518 = vmatprep.subr.bf16.mxu0 0
  %2519 = vmatpush1.bf16.msra.mxu0 0
  %2520 = vmatprep.subr.bf16.mxu0 0
  %2521 = vmatpush1.bf16.msra.mxu0 0
  %2522 = vmatprep.subr.bf16.mxu0 0
  %2523 = vmatpush1.bf16.msra.mxu0 0
  %2524 = vmatprep.subr.bf16.mxu0 0
  %2525 = vmatpush1.bf16.msra.mxu0 0
  %2526 = vmatprep.subr.bf16.mxu0 0
  %2527 = vmatpush1.bf16.msra.mxu0 0
  %2528 = vmatprep.subr.bf16.mxu0 0
  %2529 = vmatpush1.bf16.msra.mxu0 0
  %2530 = vmatprep.subr.bf16.mxu0 0
  %2531 = vmatpush1.bf16.msra.mxu0 0
  %2532 = vmatprep.subr.bf16.mxu0 0
  %2533 = vmatpush1.bf16.msra.mxu0 0
  %2534 = vmatprep.subr.bf16.mxu0 0
  %2535 = vmatpush1.bf16.msra.mxu0 0
  %2536 = vmatprep.subr.bf16.mxu0 0
  %2537 = vmatpush1.bf16.msra.mxu0 0
  %2538 = vmatprep.subr.bf16.mxu0 0
  %2539 = vmatpush1.bf16.msra.mxu0 0
  %2540 = vmatprep.subr.bf16.mxu0 0
  %2541 = vmatpush1.bf16.msra.mxu0 0
  %2542 = vmatprep.subr.bf16.mxu0 0
  %2543 = vmatpush1.bf16.msra.mxu0 0
  %2544 = vmatprep.subr.bf16.mxu0 0
  %2545 = vmatpush1.bf16.msra.mxu0 0
  %2546 = vmatprep.subr.bf16.mxu0 0
  %2547 = vmatpush1.bf16.msra.mxu0 0
  %2548 = vmatprep.mubr.bf16.mxu0 0
  %2549 = vmatmul.mubr.bf16.gmra.mrb[0].mxu0 %v2514
  %v2550 = vpop.f32.mrb[0].mxu0
  %v2551 = vadd.f32 0.0, %v2550
  %v2552 = vpop.f32.mrb[0].mxu0
  %v2553 = vpop.f32.mrb[0].mxu0
  %v2554 = vadd.f32 0.0, %v2553
  %v2555 = vpop.f32.mrb[0].mxu0
  %2556 = vdwg.mxu0
  %2558 = vrot.lane.b32.xlu0 %v2306, 64
  %v2559 = vpop.permute.xlu0 %2558
  %v2562 = vsel %vm364, %v2290, 0
  %2564 = vmatprep.subr.bf16.mxu0 0
  %2565 = vmatpush1.bf16.msra.mxu0 %v2559
  %2566 = vmatprep.subr.bf16.mxu0 0
  %2567 = vmatpush1.bf16.msra.mxu0 0
  %2568 = vmatprep.subr.bf16.mxu0 0
  %2569 = vmatpush1.bf16.msra.mxu0 0
  %2570 = vmatprep.subr.bf16.mxu0 0
  %2571 = vmatpush1.bf16.msra.mxu0 0
  %2572 = vmatprep.subr.bf16.mxu0 0
  %2573 = vmatpush1.bf16.msra.mxu0 0
  %2574 = vmatprep.subr.bf16.mxu0 0
  %2575 = vmatpush1.bf16.msra.mxu0 0
  %2576 = vmatprep.subr.bf16.mxu0 0
  %2577 = vmatpush1.bf16.msra.mxu0 0
  %2578 = vmatprep.subr.bf16.mxu0 0
  %2579 = vmatpush1.bf16.msra.mxu0 0
  %2580 = vmatprep.subr.bf16.mxu0 0
  %2581 = vmatpush1.bf16.msra.mxu0 0
  %2582 = vmatprep.subr.bf16.mxu0 0
  %2583 = vmatpush1.bf16.msra.mxu0 0
  %2584 = vmatprep.subr.bf16.mxu0 0
  %2585 = vmatpush1.bf16.msra.mxu0 0
  %2586 = vmatprep.subr.bf16.mxu0 0
  %2587 = vmatpush1.bf16.msra.mxu0 0
  %2588 = vmatprep.subr.bf16.mxu0 0
  %2589 = vmatpush1.bf16.msra.mxu0 0
  %2590 = vmatprep.subr.bf16.mxu0 0
  %2591 = vmatpush1.bf16.msra.mxu0 0
  %2592 = vmatprep.subr.bf16.mxu0 0
  %2593 = vmatpush1.bf16.msra.mxu0 0
  %2594 = vmatprep.subr.bf16.mxu0 0
  %2595 = vmatpush1.bf16.msra.mxu0 0
  %2596 = vmatprep.mubr.bf16.mxu0 0
  %2597 = vmatmul.mubr.bf16.gmra.mrb[0].mxu0 %v2562
  %v2598 = vpop.f32.mrb[0].mxu0
  %v2599 = vadd.f32 0.0, %v2598
  %v2600 = vpop.f32.mrb[0].mxu0
  %v2601 = vpop.f32.mrb[0].mxu0
  %v2602 = vadd.f32 0.0, %v2601
  %v2603 = vpop.f32.mrb[0].mxu0
  %2604 = vdwg.mxu0
  %2606 = vrot.lane.b32.xlu0 %v2307, 64
  %v2607 = vpop.permute.xlu0 %2606
  %v2610 = vsel %vm364, %v2291, 0
  %2612 = vmatprep.subr.bf16.mxu0 0
  %2613 = vmatpush1.bf16.msra.mxu0 %v2607
  %2614 = vmatprep.subr.bf16.mxu0 0
  %2615 = vmatpush1.bf16.msra.mxu0 0
  %2616 = vmatprep.subr.bf16.mxu0 0
  %2617 = vmatpush1.bf16.msra.mxu0 0
  %2618 = vmatprep.subr.bf16.mxu0 0
  %2619 = vmatpush1.bf16.msra.mxu0 0
  %2620 = vmatprep.subr.bf16.mxu0 0
  %2621 = vmatpush1.bf16.msra.mxu0 0
  %2622 = vmatprep.subr.bf16.mxu0 0
  %2623 = vmatpush1.bf16.msra.mxu0 0
  %2624 = vmatprep.subr.bf16.mxu0 0
  %2625 = vmatpush1.bf16.msra.mxu0 0
  %2626 = vmatprep.subr.bf16.mxu0 0
  %2627 = vmatpush1.bf16.msra.mxu0 0
  %2628 = vmatprep.subr.bf16.mxu0 0
  %2629 = vmatpush1.bf16.msra.mxu0 0
  %2630 = vmatprep.subr.bf16.mxu0 0
  %2631 = vmatpush1.bf16.msra.mxu0 0
  %2632 = vmatprep.subr.bf16.mxu0 0
  %2633 = vmatpush1.bf16.msra.mxu0 0
  %2634 = vmatprep.subr.bf16.mxu0 0
  %2635 = vmatpush1.bf16.msra.mxu0 0
  %2636 = vmatprep.subr.bf16.mxu0 0
  %2637 = vmatpush1.bf16.msra.mxu0 0
  %2638 = vmatprep.subr.bf16.mxu0 0
  %2639 = vmatpush1.bf16.msra.mxu0 0
  %2640 = vmatprep.subr.bf16.mxu0 0
  %2641 = vmatpush1.bf16.msra.mxu0 0
  %2642 = vmatprep.subr.bf16.mxu0 0
  %2643 = vmatpush1.bf16.msra.mxu0 0
  %2644 = vmatprep.mubr.bf16.mxu0 0
  %2645 = vmatmul.mubr.bf16.gmra.mrb[0].mxu0 %v2610
  %v2646 = vpop.f32.mrb[0].mxu0
  %v2647 = vadd.f32 0.0, %v2646
  %v2648 = vpop.f32.mrb[0].mxu0
  %v2649 = vpop.f32.mrb[0].mxu0
  %v2650 = vadd.f32 0.0, %v2649
  %v2651 = vpop.f32.mrb[0].mxu0
  %2652 = vdwg.mxu0
  %2654 = vrot.lane.b32.xlu0 %v2308, 64
  %v2655 = vpop.permute.xlu0 %2654
  %v2658 = vsel %vm364, %v2292, 0
  %2660 = vmatprep.subr.bf16.mxu0 0
  %2661 = vmatpush1.bf16.msra.mxu0 %v2655
  %2662 = vmatprep.subr.bf16.mxu0 0
  %2663 = vmatpush1.bf16.msra.mxu0 0
  %2664 = vmatprep.subr.bf16.mxu0 0
  %2665 = vmatpush1.bf16.msra.mxu0 0
  %2666 = vmatprep.subr.bf16.mxu0 0
  %2667 = vmatpush1.bf16.msra.mxu0 0
  %2668 = vmatprep.subr.bf16.mxu0 0
  %2669 = vmatpush1.bf16.msra.mxu0 0
  %2670 = vmatprep.subr.bf16.mxu0 0
  %2671 = vmatpush1.bf16.msra.mxu0 0
  %2672 = vmatprep.subr.bf16.mxu0 0
  %2673 = vmatpush1.bf16.msra.mxu0 0
  %2674 = vmatprep.subr.bf16.mxu0 0
  %2675 = vmatpush1.bf16.msra.mxu0 0
  %2676 = vmatprep.subr.bf16.mxu0 0
  %2677 = vmatpush1.bf16.msra.mxu0 0
  %2678 = vmatprep.subr.bf16.mxu0 0
  %2679 = vmatpush1.bf16.msra.mxu0 0
  %2680 = vmatprep.subr.bf16.mxu0 0
  %2681 = vmatpush1.bf16.msra.mxu0 0
  %2682 = vmatprep.subr.bf16.mxu0 0
  %2683 = vmatpush1.bf16.msra.mxu0 0
  %2684 = vmatprep.subr.bf16.mxu0 0
  %2685 = vmatpush1.bf16.msra.mxu0 0
  %2686 = vmatprep.subr.bf16.mxu0 0
  %2687 = vmatpush1.bf16.msra.mxu0 0
  %2688 = vmatprep.subr.bf16.mxu0 0
  %2689 = vmatpush1.bf16.msra.mxu0 0
  %2690 = vmatprep.subr.bf16.mxu0 0
  %2691 = vmatpush1.bf16.msra.mxu0 0
  %2692 = vmatprep.mubr.bf16.mxu0 0
  %2693 = vmatmul.mubr.bf16.gmra.mrb[0].mxu0 %v2658
  %v2694 = vpop.f32.mrb[0].mxu0
  %v2695 = vadd.f32 0.0, %v2694
  %v2696 = vpop.f32.mrb[0].mxu0
  %v2697 = vpop.f32.mrb[0].mxu0
  %v2698 = vadd.f32 0.0, %v2697
  %v2699 = vpop.f32.mrb[0].mxu0
  %2700 = vdwg.mxu0
  %2702 = vrot.lane.b32.xlu0 %v2309, 64
  %v2703 = vpop.permute.xlu0 %2702
  %v2706 = vsel %vm364, %v2293, 0
  %2708 = vmatprep.subr.bf16.mxu0 0
  %2709 = vmatpush1.bf16.msra.mxu0 %v2703
  %2710 = vmatprep.subr.bf16.mxu0 0
  %2711 = vmatpush1.bf16.msra.mxu0 0
  %2712 = vmatprep.subr.bf16.mxu0 0
  %2713 = vmatpush1.bf16.msra.mxu0 0
  %2714 = vmatprep.subr.bf16.mxu0 0
  %2715 = vmatpush1.bf16.msra.mxu0 0
  %2716 = vmatprep.subr.bf16.mxu0 0
  %2717 = vmatpush1.bf16.msra.mxu0 0
  %2718 = vmatprep.subr.bf16.mxu0 0
  %2719 = vmatpush1.bf16.msra.mxu0 0
  %2720 = vmatprep.subr.bf16.mxu0 0
  %2721 = vmatpush1.bf16.msra.mxu0 0
  %2722 = vmatprep.subr.bf16.mxu0 0
  %2723 = vmatpush1.bf16.msra.mxu0 0
  %2724 = vmatprep.subr.bf16.mxu0 0
  %2725 = vmatpush1.bf16.msra.mxu0 0
  %2726 = vmatprep.subr.bf16.mxu0 0
  %2727 = vmatpush1.bf16.msra.mxu0 0
  %2728 = vmatprep.subr.bf16.mxu0 0
  %2729 = vmatpush1.bf16.msra.mxu0 0
  %2730 = vmatprep.subr.bf16.mxu0 0
  %2731 = vmatpush1.bf16.msra.mxu0 0
  %2732 = vmatprep.subr.bf16.mxu0 0
  %2733 = vmatpush1.bf16.msra.mxu0 0
  %2734 = vmatprep.subr.bf16.mxu0 0
  %2735 = vmatpush1.bf16.msra.mxu0 0
  %2736 = vmatprep.subr.bf16.mxu0 0
  %2737 = vmatpush1.bf16.msra.mxu0 0
  %2738 = vmatprep.subr.bf16.mxu0 0
  %2739 = vmatpush1.bf16.msra.mxu0 0
  %2740 = vmatprep.mubr.bf16.mxu0 0
  %2741 = vmatmul.mubr.bf16.gmra.mrb[0].mxu0 %v2706
  %v2742 = vpop.f32.mrb[0].mxu0
  %v2743 = vadd.f32 0.0, %v2742
  %v2744 = vpop.f32.mrb[0].mxu0
  %v2745 = vpop.f32.mrb[0].mxu0
  %v2746 = vadd.f32 0.0, %v2745
  %v2747 = vpop.f32.mrb[0].mxu0
  %2748 = vdwg.mxu0
  %2750 = vrot.lane.b32.xlu0 %v2310, 64
  %v2751 = vpop.permute.xlu0 %2750
  %v2754 = vsel %vm364, %v2294, 0
  %2756 = vmatprep.subr.bf16.mxu0 0
  %2757 = vmatpush1.bf16.msra.mxu0 %v2751
  %2758 = vmatprep.subr.bf16.mxu0 0
  %2759 = vmatpush1.bf16.msra.mxu0 0
  %2760 = vmatprep.subr.bf16.mxu0 0
  %2761 = vmatpush1.bf16.msra.mxu0 0
  %2762 = vmatprep.subr.bf16.mxu0 0
  %2763 = vmatpush1.bf16.msra.mxu0 0
  %2764 = vmatprep.subr.bf16.mxu0 0
  %2765 = vmatpush1.bf16.msra.mxu0 0
  %2766 = vmatprep.subr.bf16.mxu0 0
  %2767 = vmatpush1.bf16.msra.mxu0 0
  %2768 = vmatprep.subr.bf16.mxu0 0
  %2769 = vmatpush1.bf16.msra.mxu0 0
  %2770 = vmatprep.subr.bf16.mxu0 0
  %2771 = vmatpush1.bf16.msra.mxu0 0
  %2772 = vmatprep.subr.bf16.mxu0 0
  %2773 = vmatpush1.bf16.msra.mxu0 0
  %2774 = vmatprep.subr.bf16.mxu0 0
  %2775 = vmatpush1.bf16.msra.mxu0 0
  %2776 = vmatprep.subr.bf16.mxu0 0
  %2777 = vmatpush1.bf16.msra.mxu0 0
  %2778 = vmatprep.subr.bf16.mxu0 0
  %2779 = vmatpush1.bf16.msra.mxu0 0
  %2780 = vmatprep.subr.bf16.mxu0 0
  %2781 = vmatpush1.bf16.msra.mxu0 0
  %2782 = vmatprep.subr.bf16.mxu0 0
  %2783 = vmatpush1.bf16.msra.mxu0 0
  %2784 = vmatprep.subr.bf16.mxu0 0
  %2785 = vmatpush1.bf16.msra.mxu0 0
  %2786 = vmatprep.subr.bf16.mxu0 0
  %2787 = vmatpush1.bf16.msra.mxu0 0
  %2788 = vmatprep.mubr.bf16.mxu0 0
  %2789 = vmatmul.mubr.bf16.gmra.mrb[0].mxu0 %v2754
  %v2790 = vpop.f32.mrb[0].mxu0
  %v2791 = vadd.f32 0.0, %v2790
  %v2792 = vpop.f32.mrb[0].mxu0
  %v2793 = vpop.f32.mrb[0].mxu0
  %v2794 = vadd.f32 0.0, %v2793
  %v2795 = vpop.f32.mrb[0].mxu0
  %2796 = vdwg.mxu0
  %2798 = vrot.lane.b32.xlu0 %v2311, 64
  %v2799 = vpop.permute.xlu0 %2798
  %v2802 = vsel %vm364, %v2295, 0
  %2804 = vmatprep.subr.bf16.mxu0 0
  %2805 = vmatpush1.bf16.msra.mxu0 %v2799
  %2806 = vmatprep.subr.bf16.mxu0 0
  %2807 = vmatpush1.bf16.msra.mxu0 0
  %2808 = vmatprep.subr.bf16.mxu0 0
  %2809 = vmatpush1.bf16.msra.mxu0 0
  %2810 = vmatprep.subr.bf16.mxu0 0
  %2811 = vmatpush1.bf16.msra.mxu0 0
  %2812 = vmatprep.subr.bf16.mxu0 0
  %2813 = vmatpush1.bf16.msra.mxu0 0
  %2814 = vmatprep.subr.bf16.mxu0 0
  %2815 = vmatpush1.bf16.msra.mxu0 0
  %2816 = vmatprep.subr.bf16.mxu0 0
  %2817 = vmatpush1.bf16.msra.mxu0 0
  %2818 = vmatprep.subr.bf16.mxu0 0
  %2819 = vmatpush1.bf16.msra.mxu0 0
  %2820 = vmatprep.subr.bf16.mxu0 0
  %2821 = vmatpush1.bf16.msra.mxu0 0
  %2822 = vmatprep.subr.bf16.mxu0 0
  %2823 = vmatpush1.bf16.msra.mxu0 0
  %2824 = vmatprep.subr.bf16.mxu0 0
  %2825 = vmatpush1.bf16.msra.mxu0 0
  %2826 = vmatprep.subr.bf16.mxu0 0
  %2827 = vmatpush1.bf16.msra.mxu0 0
  %2828 = vmatprep.subr.bf16.mxu0 0
  %2829 = vmatpush1.bf16.msra.mxu0 0
  %2830 = vmatprep.subr.bf16.mxu0 0
  %2831 = vmatpush1.bf16.msra.mxu0 0
  %2832 = vmatprep.subr.bf16.mxu0 0
  %2833 = vmatpush1.bf16.msra.mxu0 0
  %2834 = vmatprep.subr.bf16.mxu0 0
  %2835 = vmatpush1.bf16.msra.mxu0 0
  %2836 = vmatprep.mubr.bf16.mxu0 0
  %2837 = vmatmul.mubr.bf16.gmra.mrb[0].mxu0 %v2802
  %v2838 = vpop.f32.mrb[0].mxu0
  %v2839 = vadd.f32 0.0, %v2838
  %v2840 = vpop.f32.mrb[0].mxu0
  %v2841 = vpop.f32.mrb[0].mxu0
  %v2842 = vadd.f32 0.0, %v2841
  %v2843 = vpop.f32.mrb[0].mxu0
  %2844 = vdwg.mxu0
  %2846 = vrot.lane.b32.xlu0 %v2312, 64
  %v2847 = vpop.permute.xlu0 %2846
  %v2850 = vsel %vm364, %v2296, 0
  %2852 = vmatprep.subr.bf16.mxu0 0
  %2853 = vmatpush1.bf16.msra.mxu0 %v2847
  %2854 = vmatprep.subr.bf16.mxu0 0
  %2855 = vmatpush1.bf16.msra.mxu0 0
  %2856 = vmatprep.subr.bf16.mxu0 0
  %2857 = vmatpush1.bf16.msra.mxu0 0
  %2858 = vmatprep.subr.bf16.mxu0 0
  %2859 = vmatpush1.bf16.msra.mxu0 0
  %2860 = vmatprep.subr.bf16.mxu0 0
  %2861 = vmatpush1.bf16.msra.mxu0 0
  %2862 = vmatprep.subr.bf16.mxu0 0
  %2863 = vmatpush1.bf16.msra.mxu0 0
  %2864 = vmatprep.subr.bf16.mxu0 0
  %2865 = vmatpush1.bf16.msra.mxu0 0
  %2866 = vmatprep.subr.bf16.mxu0 0
  %2867 = vmatpush1.bf16.msra.mxu0 0
  %2868 = vmatprep.subr.bf16.mxu0 0
  %2869 = vmatpush1.bf16.msra.mxu0 0
  %2870 = vmatprep.subr.bf16.mxu0 0
  %2871 = vmatpush1.bf16.msra.mxu0 0
  %2872 = vmatprep.subr.bf16.mxu0 0
  %2873 = vmatpush1.bf16.msra.mxu0 0
  %2874 = vmatprep.subr.bf16.mxu0 0
  %2875 = vmatpush1.bf16.msra.mxu0 0
  %2876 = vmatprep.subr.bf16.mxu0 0
  %2877 = vmatpush1.bf16.msra.mxu0 0
  %2878 = vmatprep.subr.bf16.mxu0 0
  %2879 = vmatpush1.bf16.msra.mxu0 0
  %2880 = vmatprep.subr.bf16.mxu0 0
  %2881 = vmatpush1.bf16.msra.mxu0 0
  %2882 = vmatprep.subr.bf16.mxu0 0
  %2883 = vmatpush1.bf16.msra.mxu0 0
  %2884 = vmatprep.mubr.bf16.mxu0 0
  %2885 = vmatmul.mubr.bf16.gmra.mrb[0].mxu0 %v2850
  %v2886 = vpop.f32.mrb[0].mxu0
  %v2887 = vadd.f32 0.0, %v2886
  %v2888 = vpop.f32.mrb[0].mxu0
  %v2889 = vpop.f32.mrb[0].mxu0
  %v2890 = vadd.f32 0.0, %v2889
  %v2891 = vpop.f32.mrb[0].mxu0
  %2892 = vdwg.mxu0
  %2894 = vrot.lane.b32.xlu0 %v2313, 64
  %v2895 = vpop.permute.xlu0 %2894
  %v2898 = vsel %vm364, %v2297, 0
  %2900 = vmatprep.subr.bf16.mxu0 0
  %2901 = vmatpush1.bf16.msra.mxu0 %v2895
  %2902 = vmatprep.subr.bf16.mxu0 0
  %2903 = vmatpush1.bf16.msra.mxu0 0
  %2904 = vmatprep.subr.bf16.mxu0 0
  %2905 = vmatpush1.bf16.msra.mxu0 0
  %2906 = vmatprep.subr.bf16.mxu0 0
  %2907 = vmatpush1.bf16.msra.mxu0 0
  %2908 = vmatprep.subr.bf16.mxu0 0
  %2909 = vmatpush1.bf16.msra.mxu0 0
  %2910 = vmatprep.subr.bf16.mxu0 0
  %2911 = vmatpush1.bf16.msra.mxu0 0
  %2912 = vmatprep.subr.bf16.mxu0 0
  %2913 = vmatpush1.bf16.msra.mxu0 0
  %2914 = vmatprep.subr.bf16.mxu0 0
  %2915 = vmatpush1.bf16.msra.mxu0 0
  %2916 = vmatprep.subr.bf16.mxu0 0
  %2917 = vmatpush1.bf16.msra.mxu0 0
  %2918 = vmatprep.subr.bf16.mxu0 0
  %2919 = vmatpush1.bf16.msra.mxu0 0
  %2920 = vmatprep.subr.bf16.mxu0 0
  %2921 = vmatpush1.bf16.msra.mxu0 0
  %2922 = vmatprep.subr.bf16.mxu0 0
  %2923 = vmatpush1.bf16.msra.mxu0 0
  %2924 = vmatprep.subr.bf16.mxu0 0
  %2925 = vmatpush1.bf16.msra.mxu0 0
  %2926 = vmatprep.subr.bf16.mxu0 0
  %2927 = vmatpush1.bf16.msra.mxu0 0
  %2928 = vmatprep.subr.bf16.mxu0 0
  %2929 = vmatpush1.bf16.msra.mxu0 0
  %2930 = vmatprep.subr.bf16.mxu0 0
  %2931 = vmatpush1.bf16.msra.mxu0 0
  %2932 = vmatprep.mubr.bf16.mxu0 0
  %2933 = vmatmul.mubr.bf16.gmra.mrb[0].mxu0 %v2898
  %v2934 = vpop.f32.mrb[0].mxu0
  %v2935 = vadd.f32 0.0, %v2934
  %v2936 = vpop.f32.mrb[0].mxu0
  %v2937 = vpop.f32.mrb[0].mxu0
  %v2938 = vadd.f32 0.0, %v2937
  %v2939 = vpop.f32.mrb[0].mxu0
  %2940 = vdwg.mxu0
  %2942 = vrot.lane.b32.xlu0 %v2314, 64
  %v2943 = vpop.permute.xlu0 %2942
  %v2946 = vsel %vm364, %v2298, 0
  %2948 = vmatprep.subr.bf16.mxu0 0
  %2949 = vmatpush1.bf16.msra.mxu0 %v2943
  %2950 = vmatprep.subr.bf16.mxu0 0
  %2951 = vmatpush1.bf16.msra.mxu0 0
  %2952 = vmatprep.subr.bf16.mxu0 0
  %2953 = vmatpush1.bf16.msra.mxu0 0
  %2954 = vmatprep.subr.bf16.mxu0 0
  %2955 = vmatpush1.bf16.msra.mxu0 0
  %2956 = vmatprep.subr.bf16.mxu0 0
  %2957 = vmatpush1.bf16.msra.mxu0 0
  %2958 = vmatprep.subr.bf16.mxu0 0
  %2959 = vmatpush1.bf16.msra.mxu0 0
  %2960 = vmatprep.subr.bf16.mxu0 0
  %2961 = vmatpush1.bf16.msra.mxu0 0
  %2962 = vmatprep.subr.bf16.mxu0 0
  %2963 = vmatpush1.bf16.msra.mxu0 0
  %2964 = vmatprep.subr.bf16.mxu0 0
  %2965 = vmatpush1.bf16.msra.mxu0 0
  %2966 = vmatprep.subr.bf16.mxu0 0
  %2967 = vmatpush1.bf16.msra.mxu0 0
  %2968 = vmatprep.subr.bf16.mxu0 0
  %2969 = vmatpush1.bf16.msra.mxu0 0
  %2970 = vmatprep.subr.bf16.mxu0 0
  %2971 = vmatpush1.bf16.msra.mxu0 0
  %2972 = vmatprep.subr.bf16.mxu0 0
  %2973 = vmatpush1.bf16.msra.mxu0 0
  %2974 = vmatprep.subr.bf16.mxu0 0
  %2975 = vmatpush1.bf16.msra.mxu0 0
  %2976 = vmatprep.subr.bf16.mxu0 0
  %2977 = vmatpush1.bf16.msra.mxu0 0
  %2978 = vmatprep.subr.bf16.mxu0 0
  %2979 = vmatpush1.bf16.msra.mxu0 0
  %2980 = vmatprep.mubr.bf16.mxu0 0
  %2981 = vmatmul.mubr.bf16.gmra.mrb[0].mxu0 %v2946
  %v2982 = vpop.f32.mrb[0].mxu0
  %v2983 = vadd.f32 0.0, %v2982
  %v2984 = vpop.f32.mrb[0].mxu0
  %v2985 = vpop.f32.mrb[0].mxu0
  %v2986 = vadd.f32 0.0, %v2985
  %v2987 = vpop.f32.mrb[0].mxu0
  %2988 = vdwg.mxu0
  %2990 = vrot.lane.b32.xlu0 %v2315, 64
  %v2991 = vpop.permute.xlu0 %2990
  %v2994 = vsel %vm364, %v2299, 0
  %2996 = vmatprep.subr.bf16.mxu0 0
  %2997 = vmatpush1.bf16.msra.mxu0 %v2991
  %2998 = vmatprep.subr.bf16.mxu0 0
  %2999 = vmatpush1.bf16.msra.mxu0 0
  %3000 = vmatprep.subr.bf16.mxu0 0
  %3001 = vmatpush1.bf16.msra.mxu0 0
  %3002 = vmatprep.subr.bf16.mxu0 0
  %3003 = vmatpush1.bf16.msra.mxu0 0
  %3004 = vmatprep.subr.bf16.mxu0 0
  %3005 = vmatpush1.bf16.msra.mxu0 0
  %3006 = vmatprep.subr.bf16.mxu0 0
  %3007 = vmatpush1.bf16.msra.mxu0 0
  %3008 = vmatprep.subr.bf16.mxu0 0
  %3009 = vmatpush1.bf16.msra.mxu0 0
  %3010 = vmatprep.subr.bf16.mxu0 0
  %3011 = vmatpush1.bf16.msra.mxu0 0
  %3012 = vmatprep.subr.bf16.mxu0 0
  %3013 = vmatpush1.bf16.msra.mxu0 0
  %3014 = vmatprep.subr.bf16.mxu0 0
  %3015 = vmatpush1.bf16.msra.mxu0 0
  %3016 = vmatprep.subr.bf16.mxu0 0
  %3017 = vmatpush1.bf16.msra.mxu0 0
  %3018 = vmatprep.subr.bf16.mxu0 0
  %3019 = vmatpush1.bf16.msra.mxu0 0
  %3020 = vmatprep.subr.bf16.mxu0 0
  %3021 = vmatpush1.bf16.msra.mxu0 0
  %3022 = vmatprep.subr.bf16.mxu0 0
  %3023 = vmatpush1.bf16.msra.mxu0 0
  %3024 = vmatprep.subr.bf16.mxu0 0
  %3025 = vmatpush1.bf16.msra.mxu0 0
  %3026 = vmatprep.subr.bf16.mxu0 0
  %3027 = vmatpush1.bf16.msra.mxu0 0
  %3028 = vmatprep.mubr.bf16.mxu0 0
  %3029 = vmatmul.mubr.bf16.gmra.mrb[0].mxu0 %v2994
  %v3030 = vpop.f32.mrb[0].mxu0
  %v3031 = vadd.f32 0.0, %v3030
  %v3032 = vpop.f32.mrb[0].mxu0
  %v3033 = vpop.f32.mrb[0].mxu0
  %v3034 = vadd.f32 0.0, %v3033
  %v3035 = vpop.f32.mrb[0].mxu0
  %3036 = vdwg.mxu0
  %3038 = vrot.lane.b32.xlu0 %v2316, 64
  %v3039 = vpop.permute.xlu0 %3038
  %v3042 = vsel %vm364, %v2300, 0
  %3044 = vmatprep.subr.bf16.mxu0 0
  %3045 = vmatpush1.bf16.msra.mxu0 %v3039
  %3046 = vmatprep.subr.bf16.mxu0 0
  %3047 = vmatpush1.bf16.msra.mxu0 0
  %3048 = vmatprep.subr.bf16.mxu0 0
  %3049 = vmatpush1.bf16.msra.mxu0 0
  %3050 = vmatprep.subr.bf16.mxu0 0
  %3051 = vmatpush1.bf16.msra.mxu0 0
  %3052 = vmatprep.subr.bf16.mxu0 0
  %3053 = vmatpush1.bf16.msra.mxu0 0
  %3054 = vmatprep.subr.bf16.mxu0 0
  %3055 = vmatpush1.bf16.msra.mxu0 0
  %3056 = vmatprep.subr.bf16.mxu0 0
  %3057 = vmatpush1.bf16.msra.mxu0 0
  %3058 = vmatprep.subr.bf16.mxu0 0
  %3059 = vmatpush1.bf16.msra.mxu0 0
  %3060 = vmatprep.subr.bf16.mxu0 0
  %3061 = vmatpush1.bf16.msra.mxu0 0
  %3062 = vmatprep.subr.bf16.mxu0 0
  %3063 = vmatpush1.bf16.msra.mxu0 0
  %3064 = vmatprep.subr.bf16.mxu0 0
  %3065 = vmatpush1.bf16.msra.mxu0 0
  %3066 = vmatprep.subr.bf16.mxu0 0
  %3067 = vmatpush1.bf16.msra.mxu0 0
  %3068 = vmatprep.subr.bf16.mxu0 0
  %3069 = vmatpush1.bf16.msra.mxu0 0
  %3070 = vmatprep.subr.bf16.mxu0 0
  %3071 = vmatpush1.bf16.msra.mxu0 0
  %3072 = vmatprep.subr.bf16.mxu0 0
  %3073 = vmatpush1.bf16.msra.mxu0 0
  %3074 = vmatprep.subr.bf16.mxu0 0
  %3075 = vmatpush1.bf16.msra.mxu0 0
  %3076 = vmatprep.mubr.bf16.mxu0 0
  %3077 = vmatmul.mubr.bf16.gmra.mrb[0].mxu0 %v3042
  %v3078 = vpop.f32.mrb[0].mxu0
  %v3079 = vadd.f32 0.0, %v3078
  %v3080 = vpop.f32.mrb[0].mxu0
  %v3081 = vpop.f32.mrb[0].mxu0
  %v3082 = vadd.f32 0.0, %v3081
  %v3083 = vpop.f32.mrb[0].mxu0
  %3084 = vdwg.mxu0
  %3101 = vrot.lane.b32.xlu0 %v2743, 16
  %v3102 = vpop.permute.xlu0 %3101
  %3103 = vrot.lane.b32.xlu0 %v2746, 16
  %v3104 = vpop.permute.xlu0 %3103
  %3105 = vrot.lane.b32.xlu0 %v2791, 16
  %v3106 = vpop.permute.xlu0 %3105
  %3107 = vrot.lane.b32.xlu0 %v2794, 16
  %v3108 = vpop.permute.xlu0 %3107
  %3109 = vrot.lane.b32.xlu0 %v2839, 16
  %v3110 = vpop.permute.xlu0 %3109
  %3111 = vrot.lane.b32.xlu0 %v2842, 16
  %v3112 = vpop.permute.xlu0 %3111
  %3113 = vrot.lane.b32.xlu0 %v2887, 16
  %v3114 = vpop.permute.xlu0 %3113
  %3115 = vrot.lane.b32.xlu0 %v2890, 16
  %v3116 = vpop.permute.xlu0 %3115
  %3117 = vrot.lane.b32.xlu0 %v2935, 16
  %v3118 = vpop.permute.xlu0 %3117
  %3119 = vrot.lane.b32.xlu0 %v2938, 16
  %v3120 = vpop.permute.xlu0 %3119
  %3121 = vrot.lane.b32.xlu0 %v2983, 16
  %v3122 = vpop.permute.xlu0 %3121
  %3123 = vrot.lane.b32.xlu0 %v2986, 16
  %v3124 = vpop.permute.xlu0 %3123
  %3125 = vrot.lane.b32.xlu0 %v3031, 16
  %v3126 = vpop.permute.xlu0 %3125
  %3127 = vrot.lane.b32.xlu0 %v3034, 16
  %v3128 = vpop.permute.xlu0 %3127
  %3129 = vrot.lane.b32.xlu0 %v3079, 16
  %v3130 = vpop.permute.xlu0 %3129
  %3131 = vrot.lane.b32.xlu0 %v3082, 16
  %v3132 = vpop.permute.xlu0 %3131
  %v3149 = vsel %vm364, %v2359, %v3102
  %v3150 = vsel %vm364, %v2362, %v3104
  %v3151 = vsel %vm364, %v2407, %v3106
  %v3152 = vsel %vm364, %v2410, %v3108
  %v3153 = vsel %vm364, %v2455, %v3110
  %v3154 = vsel %vm364, %v2458, %v3112
  %v3155 = vsel %vm364, %v2503, %v3114
  %v3156 = vsel %vm364, %v2506, %v3116
  %v3157 = vsel %vm364, %v2551, %v3118
  %v3158 = vsel %vm364, %v2554, %v3120
  %v3159 = vsel %vm364, %v2599, %v3122
  %v3160 = vsel %vm364, %v2602, %v3124
  %v3161 = vsel %vm364, %v2647, %v3126
  %v3162 = vsel %vm364, %v2650, %v3128
  %v3163 = vsel %vm364, %v2695, %v3130
  %v3164 = vsel %vm364, %v2698, %v3132
  %v3165 = vpack.c.bf16 %v3150, %v3149
  %v3166 = vpack.c.bf16 %v3152, %v3151
  %v3167 = vpack.c.bf16 %v3154, %v3153
  %v3168 = vpack.c.bf16 %v3156, %v3155
  %v3169 = vpack.c.bf16 %v3158, %v3157
  %v3170 = vpack.c.bf16 %v3160, %v3159
  %v3171 = vpack.c.bf16 %v3162, %v3161
  %v3172 = vpack.c.bf16 %v3164, %v3163
  %v3173 = vld [vmem:[%s3] sm:$0xf]
  %v3174 = vld [vmem:[%s3 + $0x4] sm:$0xf]
  %v3175 = vld [vmem:[%s3 + $0x8] sm:$0xf]
  %v3176 = vld [vmem:[%s3 + $0xc] sm:$0xf]
  %v3177 = vld [vmem:[%s4] sm:$0x1]
  %v3179 = vlaneseq
  %v3180 = vshrl.u32 %v3179, 7
  %v3181 = vsub.s32 0, %v3180
  %v3182 = vrot.slane %v3177, %v3181
  %v3188 = vunpack.c.l.b16 %v3173
  %v3189 = vunpack.c.l.b16 %v3174
  %v3190 = vunpack.c.l.b16 %v3175
  %v3191 = vunpack.c.l.b16 %v3176
  %v3192 = vpack.c.b16 %v3189, %v3188
  %v3193 = vpack.c.b16 %v3191, %v3190
  %v3197 = vsel %vm146, %v3165, 0
  %v3200 = vsel %vm146, %v3166, 0
  %v3203 = vsel %vm146, %v3167, 0
  %v3206 = vsel %vm146, %v3168, 0
  %v3209 = vsel %vm146, %v3169, 0
  %v3212 = vsel %vm146, %v3170, 0
  %v3215 = vsel %vm146, %v3171, 0
  %v3218 = vsel %vm146, %v3172, 0
  %3220 = vmatprep.subr.bf16.mxu0 0
  %3221 = vmatpush1.bf16.msra.mxu0 %v3192
  %3222 = vmatprep.subr.bf16.mxu0 0
  %3223 = vmatpush1.bf16.msra.mxu0 %v3193
  %3224 = vmatprep.subr.bf16.mxu0 0
  %3225 = vmatpush1.bf16.msra.mxu0 0
  %3226 = vmatprep.subr.bf16.mxu0 0
  %3227 = vmatpush1.bf16.msra.mxu0 0
  %3228 = vmatprep.subr.bf16.mxu0 0
  %3229 = vmatpush1.bf16.msra.mxu0 0
  %3230 = vmatprep.subr.bf16.mxu0 0
  %3231 = vmatpush1.bf16.msra.mxu0 0
  %3232 = vmatprep.subr.bf16.mxu0 0
  %3233 = vmatpush1.bf16.msra.mxu0 0
  %3234 = vmatprep.subr.bf16.mxu0 0
  %3235 = vmatpush1.bf16.msra.mxu0 0
  %3236 = vmatprep.subr.bf16.mxu0 0
  %3237 = vmatpush1.bf16.msra.mxu0 0
  %3238 = vmatprep.subr.bf16.mxu0 0
  %3239 = vmatpush1.bf16.msra.mxu0 0
  %3240 = vmatprep.subr.bf16.mxu0 0
  %3241 = vmatpush1.bf16.msra.mxu0 0
  %3242 = vmatprep.subr.bf16.mxu0 0
  %3243 = vmatpush1.bf16.msra.mxu0 0
  %3244 = vmatprep.subr.bf16.mxu0 0
  %3245 = vmatpush1.bf16.msra.mxu0 0
  %3246 = vmatprep.subr.bf16.mxu0 0
  %3247 = vmatpush1.bf16.msra.mxu0 0
  %3248 = vmatprep.subr.bf16.mxu0 0
  %3249 = vmatpush1.bf16.msra.mxu0 0
  %3250 = vmatprep.subr.bf16.mxu0 0
  %3251 = vmatpush1.bf16.msra.mxu0 0
  %3252 = vmatprep.mubr.bf16.mxu0 0
  %3253 = vmatmul.mubr.bf16.gmra.mrb[0].mxu0 %v3197
  %v3254 = vpop.f32.mrb[0].mxu0
  %v3255 = vadd.f32 %v3182, %v3254
  %v3256 = vpop.f32.mrb[0].mxu0
  %v3257 = vpop.f32.mrb[0].mxu0
  %v3258 = vadd.f32 %v3182, %v3257
  %v3259 = vpop.f32.mrb[0].mxu0
  %3260 = vmatprep.mubr.bf16.mxu0 0
  %3261 = vmatmul.mubr.bf16.gmra.mrb[0].mxu0 %v3200
  %v3262 = vpop.f32.mrb[0].mxu0
  %v3263 = vadd.f32 %v3182, %v3262
  %v3264 = vpop.f32.mrb[0].mxu0
  %v3265 = vpop.f32.mrb[0].mxu0
  %v3266 = vadd.f32 %v3182, %v3265
  %v3267 = vpop.f32.mrb[0].mxu0
  %3268 = vmatprep.mubr.bf16.mxu0 0
  %3269 = vmatmul.mubr.bf16.gmra.mrb[0].mxu0 %v3203
  %v3270 = vpop.f32.mrb[0].mxu0
  %v3271 = vadd.f32 %v3182, %v3270
  %v3272 = vpop.f32.mrb[0].mxu0
  %v3273 = vpop.f32.mrb[0].mxu0
  %v3274 = vadd.f32 %v3182, %v3273
  %v3275 = vpop.f32.mrb[0].mxu0
  %3276 = vmatprep.mubr.bf16.mxu0 0
  %3277 = vmatmul.mubr.bf16.gmra.mrb[0].mxu0 %v3206
  %v3278 = vpop.f32.mrb[0].mxu0
  %v3279 = vadd.f32 %v3182, %v3278
  %v3280 = vpop.f32.mrb[0].mxu0
  %v3281 = vpop.f32.mrb[0].mxu0
  %v3282 = vadd.f32 %v3182, %v3281
  %v3283 = vpop.f32.mrb[0].mxu0
  %3284 = vmatprep.mubr.bf16.mxu0 0
  %3285 = vmatmul.mubr.bf16.gmra.mrb[0].mxu0 %v3209
  %v3286 = vpop.f32.mrb[0].mxu0
  %v3287 = vadd.f32 %v3182, %v3286
  %v3288 = vpop.f32.mrb[0].mxu0
  %v3289 = vpop.f32.mrb[0].mxu0
  %v3290 = vadd.f32 %v3182, %v3289
  %v3291 = vpop.f32.mrb[0].mxu0
  %3292 = vmatprep.mubr.bf16.mxu0 0
  %3293 = vmatmul.mubr.bf16.gmra.mrb[0].mxu0 %v3212
  %v3294 = vpop.f32.mrb[0].mxu0
  %v3295 = vadd.f32 %v3182, %v3294
  %v3296 = vpop.f32.mrb[0].mxu0
  %v3297 = vpop.f32.mrb[0].mxu0
  %v3298 = vadd.f32 %v3182, %v3297
  %v3299 = vpop.f32.mrb[0].mxu0
  %3300 = vmatprep.mubr.bf16.mxu0 0
  %3301 = vmatmul.mubr.bf16.gmra.mrb[0].mxu0 %v3215
  %v3302 = vpop.f32.mrb[0].mxu0
  %v3303 = vadd.f32 %v3182, %v3302
  %v3304 = vpop.f32.mrb[0].mxu0
  %v3305 = vpop.f32.mrb[0].mxu0
  %v3306 = vadd.f32 %v3182, %v3305
  %v3307 = vpop.f32.mrb[0].mxu0
  %3308 = vmatprep.mubr.bf16.mxu0 0
  %3309 = vmatmul.mubr.bf16.gmra.mrb[0].mxu0 %v3218
  %v3310 = vpop.f32.mrb[0].mxu0
  %v3311 = vadd.f32 %v3182, %v3310
  %v3312 = vpop.f32.mrb[0].mxu0
  %v3313 = vpop.f32.mrb[0].mxu0
  %v3314 = vadd.f32 %v3182, %v3313
  %v3315 = vpop.f32.mrb[0].mxu0
  %3316 = vdwg.mxu0
  %v3317 = vld [vmem:[%s7] sm:$0x1]
  %v3318 = vld [vmem:[%s8] sm:$0x1]
  %v3319 = vsel %vm146, %v3255, 0.0
  %3320 = vadd.xlane.f32.xlu0 %v3319
  %v3321 = vpop.xlane.xlu0 %3320
  %v3322 = vsel %vm146, %v3258, 0.0
  %3323 = vadd.xlane.f32.xlu0 %v3322
  %v3324 = vpop.xlane.xlu0 %3323
  %v3325 = vsel %vm146, %v3263, 0.0
  %3326 = vadd.xlane.f32.xlu0 %v3325
  %v3327 = vpop.xlane.xlu0 %3326
  %v3328 = vsel %vm146, %v3266, 0.0
  %3329 = vadd.xlane.f32.xlu0 %v3328
  %v3330 = vpop.xlane.xlu0 %3329
  %v3331 = vsel %vm146, %v3271, 0.0
  %3332 = vadd.xlane.f32.xlu0 %v3331
  %v3333 = vpop.xlane.xlu0 %3332
  %v3334 = vsel %vm146, %v3274, 0.0
  %3335 = vadd.xlane.f32.xlu0 %v3334
  %v3336 = vpop.xlane.xlu0 %3335
  %v3337 = vsel %vm146, %v3279, 0.0
  %3338 = vadd.xlane.f32.xlu0 %v3337
  %v3339 = vpop.xlane.xlu0 %3338
  %v3340 = vsel %vm146, %v3282, 0.0
  %3341 = vadd.xlane.f32.xlu0 %v3340
  %v3342 = vpop.xlane.xlu0 %3341
  %v3343 = vsel %vm146, %v3287, 0.0
  %3344 = vadd.xlane.f32.xlu0 %v3343
  %v3345 = vpop.xlane.xlu0 %3344
  %v3346 = vsel %vm146, %v3290, 0.0
  %3347 = vadd.xlane.f32.xlu0 %v3346
  %v3348 = vpop.xlane.xlu0 %3347
  %v3349 = vsel %vm146, %v3295, 0.0
  %3350 = vadd.xlane.f32.xlu0 %v3349
  %v3351 = vpop.xlane.xlu0 %3350
  %v3352 = vsel %vm146, %v3298, 0.0
  %3353 = vadd.xlane.f32.xlu0 %v3352
  %v3354 = vpop.xlane.xlu0 %3353
  %v3355 = vsel %vm146, %v3303, 0.0
  %3356 = vadd.xlane.f32.xlu0 %v3355
  %v3357 = vpop.xlane.xlu0 %3356
  %v3358 = vsel %vm146, %v3306, 0.0
  %3359 = vadd.xlane.f32.xlu0 %v3358
  %v3360 = vpop.xlane.xlu0 %3359
  %v3361 = vsel %vm146, %v3311, 0.0
  %3362 = vadd.xlane.f32.xlu0 %v3361
  %v3363 = vpop.xlane.xlu0 %3362
  %v3364 = vsel %vm146, %v3314, 0.0
  %3365 = vadd.xlane.f32.xlu0 %v3364
  %v3366 = vpop.xlane.xlu0 %3365
  %v3367 = vrcp.pop 32.0
  %v3368 = vmul.f32 %v3321, %v3367
  %v3369 = vmul.f32 %v3324, %v3367
  %v3370 = vmul.f32 %v3327, %v3367
  %v3371 = vmul.f32 %v3330, %v3367
  %v3372 = vmul.f32 %v3333, %v3367
  %v3373 = vmul.f32 %v3336, %v3367
  %v3374 = vmul.f32 %v3339, %v3367
  %v3375 = vmul.f32 %v3342, %v3367
  %v3376 = vmul.f32 %v3345, %v3367
  %v3377 = vmul.f32 %v3348, %v3367
  %v3378 = vmul.f32 %v3351, %v3367
  %v3379 = vmul.f32 %v3354, %v3367
  %v3380 = vmul.f32 %v3357, %v3367
  %v3381 = vmul.f32 %v3360, %v3367
  %v3382 = vmul.f32 %v3363, %v3367
  %v3383 = vmul.f32 %v3366, %v3367
  %v3384 = vsub.f32 %v3255, %v3368
  %v3385 = vsub.f32 %v3258, %v3369
  %v3386 = vsub.f32 %v3263, %v3370
  %v3387 = vsub.f32 %v3266, %v3371
  %v3388 = vsub.f32 %v3271, %v3372
  %v3389 = vsub.f32 %v3274, %v3373
  %v3390 = vsub.f32 %v3279, %v3374
  %v3391 = vsub.f32 %v3282, %v3375
  %v3392 = vsub.f32 %v3287, %v3376
  %v3393 = vsub.f32 %v3290, %v3377
  %v3394 = vsub.f32 %v3295, %v3378
  %v3395 = vsub.f32 %v3298, %v3379
  %v3396 = vsub.f32 %v3303, %v3380
  %v3397 = vsub.f32 %v3306, %v3381
  %v3398 = vsub.f32 %v3311, %v3382
  %v3399 = vsub.f32 %v3314, %v3383
  %v3400 = vmul.f32 %v3384, %v3384
  %v3401 = vmul.f32 %v3385, %v3385
  %v3402 = vmul.f32 %v3386, %v3386
  %v3403 = vmul.f32 %v3387, %v3387
  %v3404 = vmul.f32 %v3388, %v3388
  %v3405 = vmul.f32 %v3389, %v3389
  %v3406 = vmul.f32 %v3390, %v3390
  %v3407 = vmul.f32 %v3391, %v3391
  %v3408 = vmul.f32 %v3392, %v3392
  %v3409 = vmul.f32 %v3393, %v3393
  %v3410 = vmul.f32 %v3394, %v3394
  %v3411 = vmul.f32 %v3395, %v3395
  %v3412 = vmul.f32 %v3396, %v3396
  %v3413 = vmul.f32 %v3397, %v3397
  %v3414 = vmul.f32 %v3398, %v3398
  %v3415 = vmul.f32 %v3399, %v3399
  %v3416 = vsel %vm146, %v3400, 0.0
  %3417 = vadd.xlane.f32.xlu0 %v3416
  %v3418 = vpop.xlane.xlu0 %3417
  %v3419 = vsel %vm146, %v3401, 0.0
  %3420 = vadd.xlane.f32.xlu0 %v3419
  %v3421 = vpop.xlane.xlu0 %3420
  %v3422 = vsel %vm146, %v3402, 0.0
  %3423 = vadd.xlane.f32.xlu0 %v3422
  %v3424 = vpop.xlane.xlu0 %3423
  %v3425 = vsel %vm146, %v3403, 0.0
  %3426 = vadd.xlane.f32.xlu0 %v3425
  %v3427 = vpop.xlane.xlu0 %3426
  %v3428 = vsel %vm146, %v3404, 0.0
  %3429 = vadd.xlane.f32.xlu0 %v3428
  %v3430 = vpop.xlane.xlu0 %3429
  %v3431 = vsel %vm146, %v3405, 0.0
  %3432 = vadd.xlane.f32.xlu0 %v3431
  %v3433 = vpop.xlane.xlu0 %3432
  %v3434 = vsel %vm146, %v3406, 0.0
  %3435 = vadd.xlane.f32.xlu0 %v3434
  %v3436 = vpop.xlane.xlu0 %3435
  %v3437 = vsel %vm146, %v3407, 0.0
  %3438 = vadd.xlane.f32.xlu0 %v3437
  %v3439 = vpop.xlane.xlu0 %3438
  %v3440 = vsel %vm146, %v3408, 0.0
  %3441 = vadd.xlane.f32.xlu0 %v3440
  %v3442 = vpop.xlane.xlu0 %3441
  %v3443 = vsel %vm146, %v3409, 0.0
  %3444 = vadd.xlane.f32.xlu0 %v3443
  %v3445 = vpop.xlane.xlu0 %3444
  %v3446 = vsel %vm146, %v3410, 0.0
  %3447 = vadd.xlane.f32.xlu0 %v3446
  %v3448 = vpop.xlane.xlu0 %3447
  %v3449 = vsel %vm146, %v3411, 0.0
  %3450 = vadd.xlane.f32.xlu0 %v3449
  %v3451 = vpop.xlane.xlu0 %3450
  %v3452 = vsel %vm146, %v3412, 0.0
  %3453 = vadd.xlane.f32.xlu0 %v3452
  %v3454 = vpop.xlane.xlu0 %3453
  %v3455 = vsel %vm146, %v3413, 0.0
  %3456 = vadd.xlane.f32.xlu0 %v3455
  %v3457 = vpop.xlane.xlu0 %3456
  %v3458 = vsel %vm146, %v3414, 0.0
  %3459 = vadd.xlane.f32.xlu0 %v3458
  %v3460 = vpop.xlane.xlu0 %3459
  %v3461 = vsel %vm146, %v3415, 0.0
  %3462 = vadd.xlane.f32.xlu0 %v3461
  %v3463 = vpop.xlane.xlu0 %3462
  %v3464 = vmul.f32 %v3418, %v3367
  %v3465 = vmul.f32 %v3421, %v3367
  %v3466 = vmul.f32 %v3424, %v3367
  %v3467 = vmul.f32 %v3427, %v3367
  %v3468 = vmul.f32 %v3430, %v3367
  %v3469 = vmul.f32 %v3433, %v3367
  %v3470 = vmul.f32 %v3436, %v3367
  %v3471 = vmul.f32 %v3439, %v3367
  %v3472 = vmul.f32 %v3442, %v3367
  %v3473 = vmul.f32 %v3445, %v3367
  %v3474 = vmul.f32 %v3448, %v3367
  %v3475 = vmul.f32 %v3451, %v3367
  %v3476 = vmul.f32 %v3454, %v3367
  %v3477 = vmul.f32 %v3457, %v3367
  %v3478 = vmul.f32 %v3460, %v3367
  %v3479 = vmul.f32 %v3463, %v3367
  %v3480 = vadd.f32 %v3464, 1e-05
  %v3481 = vadd.f32 %v3465, 1e-05
  %v3482 = vadd.f32 %v3466, 1e-05
  %v3483 = vadd.f32 %v3467, 1e-05
  %v3484 = vadd.f32 %v3468, 1e-05
  %v3485 = vadd.f32 %v3469, 1e-05
  %v3486 = vadd.f32 %v3470, 1e-05
  %v3487 = vadd.f32 %v3471, 1e-05
  %v3488 = vadd.f32 %v3472, 1e-05
  %v3489 = vadd.f32 %v3473, 1e-05
  %v3490 = vadd.f32 %v3474, 1e-05
  %v3491 = vadd.f32 %v3475, 1e-05
  %v3492 = vadd.f32 %v3476, 1e-05
  %v3493 = vadd.f32 %v3477, 1e-05
  %v3494 = vadd.f32 %v3478, 1e-05
  %v3495 = vadd.f32 %v3479, 1e-05
  %v3496 = vrsqrt.pop %v3480
  %v3497 = vrsqrt.pop %v3481
  %v3498 = vrsqrt.pop %v3482
  %v3499 = vrsqrt.pop %v3483
  %v3500 = vrsqrt.pop %v3484
  %v3501 = vrsqrt.pop %v3485
  %v3502 = vrsqrt.pop %v3486
  %v3503 = vrsqrt.pop %v3487
  %v3504 = vrsqrt.pop %v3488
  %v3505 = vrsqrt.pop %v3489
  %v3506 = vrsqrt.pop %v3490
  %v3507 = vrsqrt.pop %v3491
  %v3508 = vrsqrt.pop %v3492
  %v3509 = vrsqrt.pop %v3493
  %v3510 = vrsqrt.pop %v3494
  %v3511 = vrsqrt.pop %v3495
  %v3512 = vmul.f32 %v3384, %v3496
  %v3513 = vmul.f32 %v3385, %v3497
  %v3514 = vmul.f32 %v3386, %v3498
  %v3515 = vmul.f32 %v3387, %v3499
  %v3516 = vmul.f32 %v3388, %v3500
  %v3517 = vmul.f32 %v3389, %v3501
  %v3518 = vmul.f32 %v3390, %v3502
  %v3519 = vmul.f32 %v3391, %v3503
  %v3520 = vmul.f32 %v3392, %v3504
  %v3521 = vmul.f32 %v3393, %v3505
  %v3522 = vmul.f32 %v3394, %v3506
  %v3523 = vmul.f32 %v3395, %v3507
  %v3524 = vmul.f32 %v3396, %v3508
  %v3525 = vmul.f32 %v3397, %v3509
  %v3526 = vmul.f32 %v3398, %v3510
  %v3527 = vmul.f32 %v3399, %v3511
  %v3529 = vlaneseq
  %v3530 = vshrl.u32 %v3529, 7
  %v3531 = vsub.s32 0, %v3530
  %v3532 = vrot.slane %v3317, %v3531
  %v3534 = vmul.f32 %v3512, %v3532
  %v3535 = vmul.f32 %v3513, %v3532
  %v3536 = vmul.f32 %v3514, %v3532
  %v3537 = vmul.f32 %v3515, %v3532
  %v3538 = vmul.f32 %v3516, %v3532
  %v3539 = vmul.f32 %v3517, %v3532
  %v3540 = vmul.f32 %v3518, %v3532
  %v3541 = vmul.f32 %v3519, %v3532
  %v3542 = vmul.f32 %v3520, %v3532
  %v3543 = vmul.f32 %v3521, %v3532
  %v3544 = vmul.f32 %v3522, %v3532
  %v3545 = vmul.f32 %v3523, %v3532
  %v3546 = vmul.f32 %v3524, %v3532
  %v3547 = vmul.f32 %v3525, %v3532
  %v3548 = vmul.f32 %v3526, %v3532
  %v3549 = vmul.f32 %v3527, %v3532
  %v3551 = vlaneseq
  %v3552 = vshrl.u32 %v3551, 7
  %v3553 = vsub.s32 0, %v3552
  %v3554 = vrot.slane %v3318, %v3553
  %v3556 = vadd.f32 %v3534, %v3554
  %v3557 = vadd.f32 %v3535, %v3554
  %v3558 = vadd.f32 %v3536, %v3554
  %v3559 = vadd.f32 %v3537, %v3554
  %v3560 = vadd.f32 %v3538, %v3554
  %v3561 = vadd.f32 %v3539, %v3554
  %v3562 = vadd.f32 %v3540, %v3554
  %v3563 = vadd.f32 %v3541, %v3554
  %v3564 = vadd.f32 %v3542, %v3554
  %v3565 = vadd.f32 %v3543, %v3554
  %v3566 = vadd.f32 %v3544, %v3554
  %v3567 = vadd.f32 %v3545, %v3554
  %v3568 = vadd.f32 %v3546, %v3554
  %v3569 = vadd.f32 %v3547, %v3554
  %v3570 = vadd.f32 %v3548, %v3554
  %v3571 = vadd.f32 %v3549, %v3554
  %v3572 = vadd.f32 %v67, %v3556
  %v3573 = vadd.f32 %v68, %v3557
  %v3574 = vadd.f32 %v69, %v3558
  %v3575 = vadd.f32 %v70, %v3559
  %v3576 = vadd.f32 %v71, %v3560
  %v3577 = vadd.f32 %v72, %v3561
  %v3578 = vadd.f32 %v73, %v3562
  %v3579 = vadd.f32 %v74, %v3563
  %v3580 = vadd.f32 %v75, %v3564
  %v3581 = vadd.f32 %v76, %v3565
  %v3582 = vadd.f32 %v77, %v3566
  %v3583 = vadd.f32 %v78, %v3567
  %v3584 = vadd.f32 %v79, %v3568
  %v3585 = vadd.f32 %v80, %v3569
  %v3586 = vadd.f32 %v81, %v3570
  %v3587 = vadd.f32 %v82, %v3571
  %v3588 = vpack.c.bf16 %v3573, %v3572
  %v3589 = vpack.c.bf16 %v3575, %v3574
  %v3590 = vpack.c.bf16 %v3577, %v3576
  %v3591 = vpack.c.bf16 %v3579, %v3578
  %v3592 = vpack.c.bf16 %v3581, %v3580
  %v3593 = vpack.c.bf16 %v3583, %v3582
  %v3594 = vpack.c.bf16 %v3585, %v3584
  %v3595 = vpack.c.bf16 %v3587, %v3586
  %v3596 = vld [vmem:[%s9] sm:$0xf]
  %v3597 = vld [vmem:[%s9 + $0x4] sm:$0xf]
  %v3598 = vld [vmem:[%s9 + $0x8] sm:$0xf]
  %v3599 = vld [vmem:[%s9 + $0xc] sm:$0xf]
  %v3600 = vld [vmem:[%s10] sm:$0x1]
  %v3602 = vlaneseq
  %v3603 = vshrl.u32 %v3602, 7
  %v3604 = vsub.s32 0, %v3603
  %v3605 = vrot.slane %v3600, %v3604
  %v3611 = vunpack.c.l.b16 %v3596
  %v3612 = vunpack.c.l.b16 %v3597
  %v3613 = vunpack.c.l.b16 %v3598
  %v3614 = vunpack.c.l.b16 %v3599
  %v3615 = vpack.c.b16 %v3612, %v3611
  %v3616 = vpack.c.b16 %v3614, %v3613
  %v3620 = vsel %vm146, %v3588, 0
  %v3623 = vsel %vm146, %v3589, 0
  %v3626 = vsel %vm146, %v3590, 0
  %v3629 = vsel %vm146, %v3591, 0
  %v3632 = vsel %vm146, %v3592, 0
  %v3635 = vsel %vm146, %v3593, 0
  %v3638 = vsel %vm146, %v3594, 0
  %v3641 = vsel %vm146, %v3595, 0
  %3643 = vmatprep.subr.bf16.mxu0 0
  %3644 = vmatpush1.bf16.msra.mxu0 %v3615
  %3645 = vmatprep.subr.bf16.mxu0 0
  %3646 = vmatpush1.bf16.msra.mxu0 %v3616
  %3647 = vmatprep.subr.bf16.mxu0 0
  %3648 = vmatpush1.bf16.msra.mxu0 0
  %3649 = vmatprep.subr.bf16.mxu0 0
  %3650 = vmatpush1.bf16.msra.mxu0 0
  %3651 = vmatprep.subr.bf16.mxu0 0
  %3652 = vmatpush1.bf16.msra.mxu0 0
  %3653 = vmatprep.subr.bf16.mxu0 0
  %3654 = vmatpush1.bf16.msra.mxu0 0
  %3655 = vmatprep.subr.bf16.mxu0 0
  %3656 = vmatpush1.bf16.msra.mxu0 0
  %3657 = vmatprep.subr.bf16.mxu0 0
  %3658 = vmatpush1.bf16.msra.mxu0 0
  %3659 = vmatprep.subr.bf16.mxu0 0
  %3660 = vmatpush1.bf16.msra.mxu0 0
  %3661 = vmatprep.subr.bf16.mxu0 0
  %3662 = vmatpush1.bf16.msra.mxu0 0
  %3663 = vmatprep.subr.bf16.mxu0 0
  %3664 = vmatpush1.bf16.msra.mxu0 0
  %3665 = vmatprep.subr.bf16.mxu0 0
  %3666 = vmatpush1.bf16.msra.mxu0 0
  %3667 = vmatprep.subr.bf16.mxu0 0
  %3668 = vmatpush1.bf16.msra.mxu0 0
  %3669 = vmatprep.subr.bf16.mxu0 0
  %3670 = vmatpush1.bf16.msra.mxu0 0
  %3671 = vmatprep.subr.bf16.mxu0 0
  %3672 = vmatpush1.bf16.msra.mxu0 0
  %3673 = vmatprep.subr.bf16.mxu0 0
  %3674 = vmatpush1.bf16.msra.mxu0 0
  %3675 = vmatprep.mubr.bf16.mxu0 0
  %3676 = vmatmul.mubr.bf16.gmra.mrb[0].mxu0 %v3620
  %v3677 = vpop.f32.mrb[0].mxu0
  %v3678 = vadd.f32 %v3605, %v3677
  %v3679 = vpop.f32.mrb[0].mxu0
  %v3680 = vpop.f32.mrb[0].mxu0
  %v3681 = vadd.f32 %v3605, %v3680
  %v3682 = vpop.f32.mrb[0].mxu0
  %3683 = vmatprep.mubr.bf16.mxu0 0
  %3684 = vmatmul.mubr.bf16.gmra.mrb[0].mxu0 %v3623
  %v3685 = vpop.f32.mrb[0].mxu0
  %v3686 = vadd.f32 %v3605, %v3685
  %v3687 = vpop.f32.mrb[0].mxu0
  %v3688 = vpop.f32.mrb[0].mxu0
  %v3689 = vadd.f32 %v3605, %v3688
  %v3690 = vpop.f32.mrb[0].mxu0
  %3691 = vmatprep.mubr.bf16.mxu0 0
  %3692 = vmatmul.mubr.bf16.gmra.mrb[0].mxu0 %v3626
  %v3693 = vpop.f32.mrb[0].mxu0
  %v3694 = vadd.f32 %v3605, %v3693
  %v3695 = vpop.f32.mrb[0].mxu0
  %v3696 = vpop.f32.mrb[0].mxu0
  %v3697 = vadd.f32 %v3605, %v3696
  %v3698 = vpop.f32.mrb[0].mxu0
  %3699 = vmatprep.mubr.bf16.mxu0 0
  %3700 = vmatmul.mubr.bf16.gmra.mrb[0].mxu0 %v3629
  %v3701 = vpop.f32.mrb[0].mxu0
  %v3702 = vadd.f32 %v3605, %v3701
  %v3703 = vpop.f32.mrb[0].mxu0
  %v3704 = vpop.f32.mrb[0].mxu0
  %v3705 = vadd.f32 %v3605, %v3704
  %v3706 = vpop.f32.mrb[0].mxu0
  %3707 = vmatprep.mubr.bf16.mxu0 0
  %3708 = vmatmul.mubr.bf16.gmra.mrb[0].mxu0 %v3632
  %v3709 = vpop.f32.mrb[0].mxu0
  %v3710 = vadd.f32 %v3605, %v3709
  %v3711 = vpop.f32.mrb[0].mxu0
  %v3712 = vpop.f32.mrb[0].mxu0
  %v3713 = vadd.f32 %v3605, %v3712
  %v3714 = vpop.f32.mrb[0].mxu0
  %3715 = vmatprep.mubr.bf16.mxu0 0
  %3716 = vmatmul.mubr.bf16.gmra.mrb[0].mxu0 %v3635
  %v3717 = vpop.f32.mrb[0].mxu0
  %v3718 = vadd.f32 %v3605, %v3717
  %v3719 = vpop.f32.mrb[0].mxu0
  %v3720 = vpop.f32.mrb[0].mxu0
  %v3721 = vadd.f32 %v3605, %v3720
  %v3722 = vpop.f32.mrb[0].mxu0
  %3723 = vmatprep.mubr.bf16.mxu0 0
  %3724 = vmatmul.mubr.bf16.gmra.mrb[0].mxu0 %v3638
  %v3725 = vpop.f32.mrb[0].mxu0
  %v3726 = vadd.f32 %v3605, %v3725
  %v3727 = vpop.f32.mrb[0].mxu0
  %v3728 = vpop.f32.mrb[0].mxu0
  %v3729 = vadd.f32 %v3605, %v3728
  %v3730 = vpop.f32.mrb[0].mxu0
  %3731 = vmatprep.mubr.bf16.mxu0 0
  %3732 = vmatmul.mubr.bf16.gmra.mrb[0].mxu0 %v3641
  %v3733 = vpop.f32.mrb[0].mxu0
  %v3734 = vadd.f32 %v3605, %v3733
  %v3735 = vpop.f32.mrb[0].mxu0
  %v3736 = vpop.f32.mrb[0].mxu0
  %v3737 = vadd.f32 %v3605, %v3736
  %v3738 = vpop.f32.mrb[0].mxu0
  %3739 = vdwg.mxu0
  %v3740 = vmul.f32 %v3678, 0.5
  %v3741 = vmul.f32 %v3681, 0.5
  %v3742 = vmul.f32 %v3686, 0.5
  %v3743 = vmul.f32 %v3689, 0.5
  %v3744 = vmul.f32 %v3694, 0.5
  %v3745 = vmul.f32 %v3697, 0.5
  %v3746 = vmul.f32 %v3702, 0.5
  %v3747 = vmul.f32 %v3705, 0.5
  %v3748 = vmul.f32 %v3710, 0.5
  %v3749 = vmul.f32 %v3713, 0.5
  %v3750 = vmul.f32 %v3718, 0.5
  %v3751 = vmul.f32 %v3721, 0.5
  %v3752 = vmul.f32 %v3726, 0.5
  %v3753 = vmul.f32 %v3729, 0.5
  %v3754 = vmul.f32 %v3734, 0.5
  %v3755 = vmul.f32 %v3737, 0.5
  %v3756 = vmul.f32 %v3678, 0.70710677
  %v3757 = vmul.f32 %v3681, 0.70710677
  %v3758 = vmul.f32 %v3686, 0.70710677
  %v3759 = vmul.f32 %v3689, 0.70710677
  %v3760 = vmul.f32 %v3694, 0.70710677
  %v3761 = vmul.f32 %v3697, 0.70710677
  %v3762 = vmul.f32 %v3702, 0.70710677
  %v3763 = vmul.f32 %v3705, 0.70710677
  %v3764 = vmul.f32 %v3710, 0.70710677
  %v3765 = vmul.f32 %v3713, 0.70710677
  %v3766 = vmul.f32 %v3718, 0.70710677
  %v3767 = vmul.f32 %v3721, 0.70710677
  %v3768 = vmul.f32 %v3726, 0.70710677
  %v3769 = vmul.f32 %v3729, 0.70710677
  %v3770 = vmul.f32 %v3734, 0.70710677
  %v3771 = vmul.f32 %v3737, 0.70710677
  %vm3772 = vcmp.lt.f32.partialorder %v3756, 0.0
  %vm3773 = vcmp.lt.f32.partialorder %v3757, 0.0
  %vm3774 = vcmp.lt.f32.partialorder %v3758, 0.0
  %vm3775 = vcmp.lt.f32.partialorder %v3759, 0.0
  %vm3776 = vcmp.lt.f32.partialorder %v3760, 0.0
  %vm3777 = vcmp.lt.f32.partialorder %v3761, 0.0
  %vm3778 = vcmp.lt.f32.partialorder %v3762, 0.0
  %vm3779 = vcmp.lt.f32.partialorder %v3763, 0.0
  %vm3780 = vcmp.lt.f32.partialorder %v3764, 0.0
  %vm3781 = vcmp.lt.f32.partialorder %v3765, 0.0
  %vm3782 = vcmp.lt.f32.partialorder %v3766, 0.0
  %vm3783 = vcmp.lt.f32.partialorder %v3767, 0.0
  %vm3784 = vcmp.lt.f32.partialorder %v3768, 0.0
  %vm3785 = vcmp.lt.f32.partialorder %v3769, 0.0
  %vm3786 = vcmp.lt.f32.partialorder %v3770, 0.0
  %vm3787 = vcmp.lt.f32.partialorder %v3771, 0.0
  %v3788 = vsel %vm3772, -1.0, 1.0
  %v3789 = vsel %vm3773, -1.0, 1.0
  %v3790 = vsel %vm3774, -1.0, 1.0
  %v3791 = vsel %vm3775, -1.0, 1.0
  %v3792 = vsel %vm3776, -1.0, 1.0
  %v3793 = vsel %vm3777, -1.0, 1.0
  %v3794 = vsel %vm3778, -1.0, 1.0
  %v3795 = vsel %vm3779, -1.0, 1.0
  %v3796 = vsel %vm3780, -1.0, 1.0
  %v3797 = vsel %vm3781, -1.0, 1.0
  %v3798 = vsel %vm3782, -1.0, 1.0
  %v3799 = vsel %vm3783, -1.0, 1.0
  %v3800 = vsel %vm3784, -1.0, 1.0
  %v3801 = vsel %vm3785, -1.0, 1.0
  %v3802 = vsel %vm3786, -1.0, 1.0
  %v3803 = vsel %vm3787, -1.0, 1.0
  %v3804 = vand.u32 2147483647, %v3756
  %v3805 = vand.u32 2147483647, %v3757
  %v3806 = vand.u32 2147483647, %v3758
  %v3807 = vand.u32 2147483647, %v3759
  %v3808 = vand.u32 2147483647, %v3760
  %v3809 = vand.u32 2147483647, %v3761
  %v3810 = vand.u32 2147483647, %v3762
  %v3811 = vand.u32 2147483647, %v3763
  %v3812 = vand.u32 2147483647, %v3764
  %v3813 = vand.u32 2147483647, %v3765
  %v3814 = vand.u32 2147483647, %v3766
  %v3815 = vand.u32 2147483647, %v3767
  %v3816 = vand.u32 2147483647, %v3768
  %v3817 = vand.u32 2147483647, %v3769
  %v3818 = vand.u32 2147483647, %v3770
  %v3819 = vand.u32 2147483647, %v3771
  %v3820 = vmul.f32 %v3804, 0.3275911
  %v3821 = vmul.f32 %v3805, 0.3275911
  %v3822 = vmul.f32 %v3806, 0.3275911
  %v3823 = vmul.f32 %v3807, 0.3275911
  %v3824 = vmul.f32 %v3808, 0.3275911
  %v3825 = vmul.f32 %v3809, 0.3275911
  %v3826 = vmul.f32 %v3810, 0.3275911
  %v3827 = vmul.f32 %v3811, 0.3275911
  %v3828 = vmul.f32 %v3812, 0.3275911
  %v3829 = vmul.f32 %v3813, 0.3275911
  %v3830 = vmul.f32 %v3814, 0.3275911
  %v3831 = vmul.f32 %v3815, 0.3275911
  %v3832 = vmul.f32 %v3816, 0.3275911
  %v3833 = vmul.f32 %v3817, 0.3275911
  %v3834 = vmul.f32 %v3818, 0.3275911
  %v3835 = vmul.f32 %v3819, 0.3275911
  %v3836 = vadd.f32 %v3820, 1.0
  %v3837 = vadd.f32 %v3821, 1.0
  %v3838 = vadd.f32 %v3822, 1.0
  %v3839 = vadd.f32 %v3823, 1.0
  %v3840 = vadd.f32 %v3824, 1.0
  %v3841 = vadd.f32 %v3825, 1.0
  %v3842 = vadd.f32 %v3826, 1.0
  %v3843 = vadd.f32 %v3827, 1.0
  %v3844 = vadd.f32 %v3828, 1.0
  %v3845 = vadd.f32 %v3829, 1.0
  %v3846 = vadd.f32 %v3830, 1.0
  %v3847 = vadd.f32 %v3831, 1.0
  %v3848 = vadd.f32 %v3832, 1.0
  %v3849 = vadd.f32 %v3833, 1.0
  %v3850 = vadd.f32 %v3834, 1.0
  %v3851 = vadd.f32 %v3835, 1.0
  %v3852 = vrcp.pop %v3836
  %v3853 = vmul.f32 1.0, %v3852
  %v3854 = vrcp.pop %v3837
  %v3855 = vmul.f32 1.0, %v3854
  %v3856 = vrcp.pop %v3838
  %v3857 = vmul.f32 1.0, %v3856
  %v3858 = vrcp.pop %v3839
  %v3859 = vmul.f32 1.0, %v3858
  %v3860 = vrcp.pop %v3840
  %v3861 = vmul.f32 1.0, %v3860
  %v3862 = vrcp.pop %v3841
  %v3863 = vmul.f32 1.0, %v3862
  %v3864 = vrcp.pop %v3842
  %v3865 = vmul.f32 1.0, %v3864
  %v3866 = vrcp.pop %v3843
  %v3867 = vmul.f32 1.0, %v3866
  %v3868 = vrcp.pop %v3844
  %v3869 = vmul.f32 1.0, %v3868
  %v3870 = vrcp.pop %v3845
  %v3871 = vmul.f32 1.0, %v3870
  %v3872 = vrcp.pop %v3846
  %v3873 = vmul.f32 1.0, %v3872
  %v3874 = vrcp.pop %v3847
  %v3875 = vmul.f32 1.0, %v3874
  %v3876 = vrcp.pop %v3848
  %v3877 = vmul.f32 1.0, %v3876
  %v3878 = vrcp.pop %v3849
  %v3879 = vmul.f32 1.0, %v3878
  %v3880 = vrcp.pop %v3850
  %v3881 = vmul.f32 1.0, %v3880
  %v3882 = vrcp.pop %v3851
  %v3883 = vmul.f32 1.0, %v3882
  %v3884 = vmul.f32 %v3853, 1.0614054
  %v3885 = vmul.f32 %v3855, 1.0614054
  %v3886 = vmul.f32 %v3857, 1.0614054
  %v3887 = vmul.f32 %v3859, 1.0614054
  %v3888 = vmul.f32 %v3861, 1.0614054
  %v3889 = vmul.f32 %v3863, 1.0614054
  %v3890 = vmul.f32 %v3865, 1.0614054
  %v3891 = vmul.f32 %v3867, 1.0614054
  %v3892 = vmul.f32 %v3869, 1.0614054
  %v3893 = vmul.f32 %v3871, 1.0614054
  %v3894 = vmul.f32 %v3873, 1.0614054
  %v3895 = vmul.f32 %v3875, 1.0614054
  %v3896 = vmul.f32 %v3877, 1.0614054
  %v3897 = vmul.f32 %v3879, 1.0614054
  %v3898 = vmul.f32 %v3881, 1.0614054
  %v3899 = vmul.f32 %v3883, 1.0614054
  %v3900 = vadd.f32 %v3884, -1.4531521
  %v3901 = vadd.f32 %v3885, -1.4531521
  %v3902 = vadd.f32 %v3886, -1.4531521
  %v3903 = vadd.f32 %v3887, -1.4531521
  %v3904 = vadd.f32 %v3888, -1.4531521
  %v3905 = vadd.f32 %v3889, -1.4531521
  %v3906 = vadd.f32 %v3890, -1.4531521
  %v3907 = vadd.f32 %v3891, -1.4531521
  %v3908 = vadd.f32 %v3892, -1.4531521
  %v3909 = vadd.f32 %v3893, -1.4531521
  %v3910 = vadd.f32 %v3894, -1.4531521
  %v3911 = vadd.f32 %v3895, -1.4531521
  %v3912 = vadd.f32 %v3896, -1.4531521
  %v3913 = vadd.f32 %v3897, -1.4531521
  %v3914 = vadd.f32 %v3898, -1.4531521
  %v3915 = vadd.f32 %v3899, -1.4531521
  %v3916 = vmul.f32 %v3900, %v3853
  %v3917 = vmul.f32 %v3901, %v3855
  %v3918 = vmul.f32 %v3902, %v3857
  %v3919 = vmul.f32 %v3903, %v3859
  %v3920 = vmul.f32 %v3904, %v3861
  %v3921 = vmul.f32 %v3905, %v3863
  %v3922 = vmul.f32 %v3906, %v3865
  %v3923 = vmul.f32 %v3907, %v3867
  %v3924 = vmul.f32 %v3908, %v3869
  %v3925 = vmul.f32 %v3909, %v3871
  %v3926 = vmul.f32 %v3910, %v3873
  %v3927 = vmul.f32 %v3911, %v3875
  %v3928 = vmul.f32 %v3912, %v3877
  %v3929 = vmul.f32 %v3913, %v3879
  %v3930 = vmul.f32 %v3914, %v3881
  %v3931 = vmul.f32 %v3915, %v3883
  %v3932 = vadd.f32 %v3916, 1.4214138
  %v3933 = vadd.f32 %v3917, 1.4214138
  %v3934 = vadd.f32 %v3918, 1.4214138
  %v3935 = vadd.f32 %v3919, 1.4214138
  %v3936 = vadd.f32 %v3920, 1.4214138
  %v3937 = vadd.f32 %v3921, 1.4214138
  %v3938 = vadd.f32 %v3922, 1.4214138
  %v3939 = vadd.f32 %v3923, 1.4214138
  %v3940 = vadd.f32 %v3924, 1.4214138
  %v3941 = vadd.f32 %v3925, 1.4214138
  %v3942 = vadd.f32 %v3926, 1.4214138
  %v3943 = vadd.f32 %v3927, 1.4214138
  %v3944 = vadd.f32 %v3928, 1.4214138
  %v3945 = vadd.f32 %v3929, 1.4214138
  %v3946 = vadd.f32 %v3930, 1.4214138
  %v3947 = vadd.f32 %v3931, 1.4214138
  %v3948 = vmul.f32 %v3932, %v3853
  %v3949 = vmul.f32 %v3933, %v3855
  %v3950 = vmul.f32 %v3934, %v3857
  %v3951 = vmul.f32 %v3935, %v3859
  %v3952 = vmul.f32 %v3936, %v3861
  %v3953 = vmul.f32 %v3937, %v3863
  %v3954 = vmul.f32 %v3938, %v3865
  %v3955 = vmul.f32 %v3939, %v3867
  %v3956 = vmul.f32 %v3940, %v3869
  %v3957 = vmul.f32 %v3941, %v3871
  %v3958 = vmul.f32 %v3942, %v3873
  %v3959 = vmul.f32 %v3943, %v3875
  %v3960 = vmul.f32 %v3944, %v3877
  %v3961 = vmul.f32 %v3945, %v3879
  %v3962 = vmul.f32 %v3946, %v3881
  %v3963 = vmul.f32 %v3947, %v3883
  %v3964 = vadd.f32 %v3948, -0.28449672
  %v3965 = vadd.f32 %v3949, -0.28449672
  %v3966 = vadd.f32 %v3950, -0.28449672
  %v3967 = vadd.f32 %v3951, -0.28449672
  %v3968 = vadd.f32 %v3952, -0.28449672
  %v3969 = vadd.f32 %v3953, -0.28449672
  %v3970 = vadd.f32 %v3954, -0.28449672
  %v3971 = vadd.f32 %v3955, -0.28449672
  %v3972 = vadd.f32 %v3956, -0.28449672
  %v3973 = vadd.f32 %v3957, -0.28449672
  %v3974 = vadd.f32 %v3958, -0.28449672
  %v3975 = vadd.f32 %v3959, -0.28449672
  %v3976 = vadd.f32 %v3960, -0.28449672
  %v3977 = vadd.f32 %v3961, -0.28449672
  %v3978 = vadd.f32 %v3962, -0.28449672
  %v3979 = vadd.f32 %v3963, -0.28449672
  %v3980 = vmul.f32 %v3964, %v3853
  %v3981 = vmul.f32 %v3965, %v3855
  %v3982 = vmul.f32 %v3966, %v3857
  %v3983 = vmul.f32 %v3967, %v3859
  %v3984 = vmul.f32 %v3968, %v3861
  %v3985 = vmul.f32 %v3969, %v3863
  %v3986 = vmul.f32 %v3970, %v3865
  %v3987 = vmul.f32 %v3971, %v3867
  %v3988 = vmul.f32 %v3972, %v3869
  %v3989 = vmul.f32 %v3973, %v3871
  %v3990 = vmul.f32 %v3974, %v3873
  %v3991 = vmul.f32 %v3975, %v3875
  %v3992 = vmul.f32 %v3976, %v3877
  %v3993 = vmul.f32 %v3977, %v3879
  %v3994 = vmul.f32 %v3978, %v3881
  %v3995 = vmul.f32 %v3979, %v3883
  %v3996 = vadd.f32 %v3980, 0.2548296
  %v3997 = vadd.f32 %v3981, 0.2548296
  %v3998 = vadd.f32 %v3982, 0.2548296
  %v3999 = vadd.f32 %v3983, 0.2548296
  %v4000 = vadd.f32 %v3984, 0.2548296
  %v4001 = vadd.f32 %v3985, 0.2548296
  %v4002 = vadd.f32 %v3986, 0.2548296
  %v4003 = vadd.f32 %v3987, 0.2548296
  %v4004 = vadd.f32 %v3988, 0.2548296
  %v4005 = vadd.f32 %v3989, 0.2548296
  %v4006 = vadd.f32 %v3990, 0.2548296
  %v4007 = vadd.f32 %v3991, 0.2548296
  %v4008 = vadd.f32 %v3992, 0.2548296
  %v4009 = vadd.f32 %v3993, 0.2548296
  %v4010 = vadd.f32 %v3994, 0.2548296
  %v4011 = vadd.f32 %v3995, 0.2548296
  %v4012 = vmul.f32 %v3996, %v3853
  %v4013 = vmul.f32 %v3997, %v3855
  %v4014 = vmul.f32 %v3998, %v3857
  %v4015 = vmul.f32 %v3999, %v3859
  %v4016 = vmul.f32 %v4000, %v3861
  %v4017 = vmul.f32 %v4001, %v3863
  %v4018 = vmul.f32 %v4002, %v3865
  %v4019 = vmul.f32 %v4003, %v3867
  %v4020 = vmul.f32 %v4004, %v3869
  %v4021 = vmul.f32 %v4005, %v3871
  %v4022 = vmul.f32 %v4006, %v3873
  %v4023 = vmul.f32 %v4007, %v3875
  %v4024 = vmul.f32 %v4008, %v3877
  %v4025 = vmul.f32 %v4009, %v3879
  %v4026 = vmul.f32 %v4010, %v3881
  %v4027 = vmul.f32 %v4011, %v3883
  %v4028 = vsub.f32 0.0, %v3804
  %v4029 = vsub.f32 0.0, %v3805
  %v4030 = vsub.f32 0.0, %v3806
  %v4031 = vsub.f32 0.0, %v3807
  %v4032 = vsub.f32 0.0, %v3808
  %v4033 = vsub.f32 0.0, %v3809
  %v4034 = vsub.f32 0.0, %v3810
  %v4035 = vsub.f32 0.0, %v3811
  %v4036 = vsub.f32 0.0, %v3812
  %v4037 = vsub.f32 0.0, %v3813
  %v4038 = vsub.f32 0.0, %v3814
  %v4039 = vsub.f32 0.0, %v3815
  %v4040 = vsub.f32 0.0, %v3816
  %v4041 = vsub.f32 0.0, %v3817
  %v4042 = vsub.f32 0.0, %v3818
  %v4043 = vsub.f32 0.0, %v3819
  %v4044 = vmul.f32 %v4028, %v3804
  %v4045 = vmul.f32 %v4029, %v3805
  %v4046 = vmul.f32 %v4030, %v3806
  %v4047 = vmul.f32 %v4031, %v3807
  %v4048 = vmul.f32 %v4032, %v3808
  %v4049 = vmul.f32 %v4033, %v3809
  %v4050 = vmul.f32 %v4034, %v3810
  %v4051 = vmul.f32 %v4035, %v3811
  %v4052 = vmul.f32 %v4036, %v3812
  %v4053 = vmul.f32 %v4037, %v3813
  %v4054 = vmul.f32 %v4038, %v3814
  %v4055 = vmul.f32 %v4039, %v3815
  %v4056 = vmul.f32 %v4040, %v3816
  %v4057 = vmul.f32 %v4041, %v3817
  %v4058 = vmul.f32 %v4042, %v3818
  %v4059 = vmul.f32 %v4043, %v3819
  %v4060 = vmul.f32 %v4044, 1.442695
  %v4061 = vpow.pop %v4060
  %v4062 = vmul.f32 %v4045, 1.442695
  %v4063 = vpow.pop %v4062
  %v4064 = vmul.f32 %v4046, 1.442695
  %v4065 = vpow.pop %v4064
  %v4066 = vmul.f32 %v4047, 1.442695
  %v4067 = vpow.pop %v4066
  %v4068 = vmul.f32 %v4048, 1.442695
  %v4069 = vpow.pop %v4068
  %v4070 = vmul.f32 %v4049, 1.442695
  %v4071 = vpow.pop %v4070
  %v4072 = vmul.f32 %v4050, 1.442695
  %v4073 = vpow.pop %v4072
  %v4074 = vmul.f32 %v4051, 1.442695
  %v4075 = vpow.pop %v4074
  %v4076 = vmul.f32 %v4052, 1.442695
  %v4077 = vpow.pop %v4076
  %v4078 = vmul.f32 %v4053, 1.442695
  %v4079 = vpow.pop %v4078
  %v4080 = vmul.f32 %v4054, 1.442695
  %v4081 = vpow.pop %v4080
  %v4082 = vmul.f32 %v4055, 1.442695
  %v4083 = vpow.pop %v4082
  %v4084 = vmul.f32 %v4056, 1.442695
  %v4085 = vpow.pop %v4084
  %v4086 = vmul.f32 %v4057, 1.442695
  %v4087 = vpow.pop %v4086
  %v4088 = vmul.f32 %v4058, 1.442695
  %v4089 = vpow.pop %v4088
  %v4090 = vmul.f32 %v4059, 1.442695
  %v4091 = vpow.pop %v4090
  %v4092 = vmul.f32 %v4012, %v4061
  %v4093 = vmul.f32 %v4013, %v4063
  %v4094 = vmul.f32 %v4014, %v4065
  %v4095 = vmul.f32 %v4015, %v4067
  %v4096 = vmul.f32 %v4016, %v4069
  %v4097 = vmul.f32 %v4017, %v4071
  %v4098 = vmul.f32 %v4018, %v4073
  %v4099 = vmul.f32 %v4019, %v4075
  %v4100 = vmul.f32 %v4020, %v4077
  %v4101 = vmul.f32 %v4021, %v4079
  %v4102 = vmul.f32 %v4022, %v4081
  %v4103 = vmul.f32 %v4023, %v4083
  %v4104 = vmul.f32 %v4024, %v4085
  %v4105 = vmul.f32 %v4025, %v4087
  %v4106 = vmul.f32 %v4026, %v4089
  %v4107 = vmul.f32 %v4027, %v4091
  %v4108 = vsub.f32 1.0, %v4092
  %v4109 = vsub.f32 1.0, %v4093
  %v4110 = vsub.f32 1.0, %v4094
  %v4111 = vsub.f32 1.0, %v4095
  %v4112 = vsub.f32 1.0, %v4096
  %v4113 = vsub.f32 1.0, %v4097
  %v4114 = vsub.f32 1.0, %v4098
  %v4115 = vsub.f32 1.0, %v4099
  %v4116 = vsub.f32 1.0, %v4100
  %v4117 = vsub.f32 1.0, %v4101
  %v4118 = vsub.f32 1.0, %v4102
  %v4119 = vsub.f32 1.0, %v4103
  %v4120 = vsub.f32 1.0, %v4104
  %v4121 = vsub.f32 1.0, %v4105
  %v4122 = vsub.f32 1.0, %v4106
  %v4123 = vsub.f32 1.0, %v4107
  %v4124 = vmul.f32 %v3788, %v4108
  %v4125 = vmul.f32 %v3789, %v4109
  %v4126 = vmul.f32 %v3790, %v4110
  %v4127 = vmul.f32 %v3791, %v4111
  %v4128 = vmul.f32 %v3792, %v4112
  %v4129 = vmul.f32 %v3793, %v4113
  %v4130 = vmul.f32 %v3794, %v4114
  %v4131 = vmul.f32 %v3795, %v4115
  %v4132 = vmul.f32 %v3796, %v4116
  %v4133 = vmul.f32 %v3797, %v4117
  %v4134 = vmul.f32 %v3798, %v4118
  %v4135 = vmul.f32 %v3799, %v4119
  %v4136 = vmul.f32 %v3800, %v4120
  %v4137 = vmul.f32 %v3801, %v4121
  %v4138 = vmul.f32 %v3802, %v4122
  %v4139 = vmul.f32 %v3803, %v4123
  %v4140 = vadd.f32 %v4124, 1.0
  %v4141 = vadd.f32 %v4125, 1.0
  %v4142 = vadd.f32 %v4126, 1.0
  %v4143 = vadd.f32 %v4127, 1.0
  %v4144 = vadd.f32 %v4128, 1.0
  %v4145 = vadd.f32 %v4129, 1.0
  %v4146 = vadd.f32 %v4130, 1.0
  %v4147 = vadd.f32 %v4131, 1.0
  %v4148 = vadd.f32 %v4132, 1.0
  %v4149 = vadd.f32 %v4133, 1.0
  %v4150 = vadd.f32 %v4134, 1.0
  %v4151 = vadd.f32 %v4135, 1.0
  %v4152 = vadd.f32 %v4136, 1.0
  %v4153 = vadd.f32 %v4137, 1.0
  %v4154 = vadd.f32 %v4138, 1.0
  %v4155 = vadd.f32 %v4139, 1.0
  %v4156 = vmul.f32 %v3740, %v4140
  %v4157 = vmul.f32 %v3741, %v4141
  %v4158 = vmul.f32 %v3742, %v4142
  %v4159 = vmul.f32 %v3743, %v4143
  %v4160 = vmul.f32 %v3744, %v4144
  %v4161 = vmul.f32 %v3745, %v4145
  %v4162 = vmul.f32 %v3746, %v4146
  %v4163 = vmul.f32 %v3747, %v4147
  %v4164 = vmul.f32 %v3748, %v4148
  %v4165 = vmul.f32 %v3749, %v4149
  %v4166 = vmul.f32 %v3750, %v4150
  %v4167 = vmul.f32 %v3751, %v4151
  %v4168 = vmul.f32 %v3752, %v4152
  %v4169 = vmul.f32 %v3753, %v4153
  %v4170 = vmul.f32 %v3754, %v4154
  %v4171 = vmul.f32 %v3755, %v4155
  %v4172 = vpack.c.bf16 %v4157, %v4156
  %v4173 = vpack.c.bf16 %v4159, %v4158
  %v4174 = vpack.c.bf16 %v4161, %v4160
  %v4175 = vpack.c.bf16 %v4163, %v4162
  %v4176 = vpack.c.bf16 %v4165, %v4164
  %v4177 = vpack.c.bf16 %v4167, %v4166
  %v4178 = vpack.c.bf16 %v4169, %v4168
  %v4179 = vpack.c.bf16 %v4171, %v4170
  %v4180 = vld [vmem:[%s11] sm:$0xf]
  %v4181 = vld [vmem:[%s11 + $0x4] sm:$0xf]
  %v4182 = vld [vmem:[%s11 + $0x8] sm:$0xf]
  %v4183 = vld [vmem:[%s11 + $0xc] sm:$0xf]
  %v4184 = vld [vmem:[%s11 + $0x10] sm:$0xf]
  %v4185 = vld [vmem:[%s11 + $0x14] sm:$0xf]
  %v4186 = vld [vmem:[%s11 + $0x18] sm:$0xf]
  %v4187 = vld [vmem:[%s11 + $0x1c] sm:$0xf]
  %v4188 = vld [vmem:[%s12] sm:$0x1]
  %v4190 = vlaneseq
  %v4191 = vshrl.u32 %v4190, 7
  %v4192 = vsub.s32 0, %v4191
  %v4193 = vrot.slane %v4188, %v4192
  %v4203 = vunpack.c.l.b16 %v4180
  %v4204 = vunpack.c.l.b16 %v4181
  %v4205 = vunpack.c.l.b16 %v4182
  %v4206 = vunpack.c.l.b16 %v4183
  %v4207 = vunpack.c.l.b16 %v4184
  %v4208 = vunpack.c.l.b16 %v4185
  %v4209 = vunpack.c.l.b16 %v4186
  %v4210 = vunpack.c.l.b16 %v4187
  %v4211 = vpack.c.b16 %v4204, %v4203
  %v4212 = vpack.c.b16 %v4206, %v4205
  %v4213 = vpack.c.b16 %v4208, %v4207
  %v4214 = vpack.c.b16 %v4210, %v4209
  %vm4219 = vcmask 523264
  %v4221 = vsel %vm4219, %v4172, 0
  %v4224 = vsel %vm4219, %v4173, 0
  %v4227 = vsel %vm4219, %v4174, 0
  %v4230 = vsel %vm4219, %v4175, 0
  %v4233 = vsel %vm4219, %v4176, 0
  %v4236 = vsel %vm4219, %v4177, 0
  %v4239 = vsel %vm4219, %v4178, 0
  %v4242 = vsel %vm4219, %v4179, 0
  %4244 = vmatprep.subr.bf16.mxu0 0
  %4245 = vmatpush1.bf16.msra.mxu0 %v4211
  %4246 = vmatprep.subr.bf16.mxu0 0
  %4247 = vmatpush1.bf16.msra.mxu0 %v4212
  %4248 = vmatprep.subr.bf16.mxu0 0
  %4249 = vmatpush1.bf16.msra.mxu0 %v4213
  %4250 = vmatprep.subr.bf16.mxu0 0
  %4251 = vmatpush1.bf16.msra.mxu0 %v4214
  %4252 = vmatprep.subr.bf16.mxu0 0
  %4253 = vmatpush1.bf16.msra.mxu0 0
  %4254 = vmatprep.subr.bf16.mxu0 0
  %4255 = vmatpush1.bf16.msra.mxu0 0
  %4256 = vmatprep.subr.bf16.mxu0 0
  %4257 = vmatpush1.bf16.msra.mxu0 0
  %4258 = vmatprep.subr.bf16.mxu0 0
  %4259 = vmatpush1.bf16.msra.mxu0 0
  %4260 = vmatprep.subr.bf16.mxu0 0
  %4261 = vmatpush1.bf16.msra.mxu0 0
  %4262 = vmatprep.subr.bf16.mxu0 0
  %4263 = vmatpush1.bf16.msra.mxu0 0
  %4264 = vmatprep.subr.bf16.mxu0 0
  %4265 = vmatpush1.bf16.msra.mxu0 0
  %4266 = vmatprep.subr.bf16.mxu0 0
  %4267 = vmatpush1.bf16.msra.mxu0 0
  %4268 = vmatprep.subr.bf16.mxu0 0
  %4269 = vmatpush1.bf16.msra.mxu0 0
  %4270 = vmatprep.subr.bf16.mxu0 0
  %4271 = vmatpush1.bf16.msra.mxu0 0
  %4272 = vmatprep.subr.bf16.mxu0 0
  %4273 = vmatpush1.bf16.msra.mxu0 0
  %4274 = vmatprep.subr.bf16.mxu0 0
  %4275 = vmatpush1.bf16.msra.mxu0 0
  %4276 = vmatprep.mubr.bf16.mxu0 0
  %4277 = vmatmul.mubr.bf16.gmra.mrb[0].mxu0 %v4221
  %v4278 = vpop.f32.mrb[0].mxu0
  %v4279 = vadd.f32 %v4193, %v4278
  %v4280 = vpop.f32.mrb[0].mxu0
  %v4281 = vpop.f32.mrb[0].mxu0
  %v4282 = vadd.f32 %v4193, %v4281
  %v4283 = vpop.f32.mrb[0].mxu0
  %4284 = vmatprep.mubr.bf16.mxu0 0
  %4285 = vmatmul.mubr.bf16.gmra.mrb[0].mxu0 %v4224
  %v4286 = vpop.f32.mrb[0].mxu0
  %v4287 = vadd.f32 %v4193, %v4286
  %v4288 = vpop.f32.mrb[0].mxu0
  %v4289 = vpop.f32.mrb[0].mxu0
  %v4290 = vadd.f32 %v4193, %v4289
  %v4291 = vpop.f32.mrb[0].mxu0
  %4292 = vmatprep.mubr.bf16.mxu0 0
  %4293 = vmatmul.mubr.bf16.gmra.mrb[0].mxu0 %v4227
  %v4294 = vpop.f32.mrb[0].mxu0
  %v4295 = vadd.f32 %v4193, %v4294
  %v4296 = vpop.f32.mrb[0].mxu0
  %v4297 = vpop.f32.mrb[0].mxu0
  %v4298 = vadd.f32 %v4193, %v4297
  %v4299 = vpop.f32.mrb[0].mxu0
  %4300 = vmatprep.mubr.bf16.mxu0 0
  %4301 = vmatmul.mubr.bf16.gmra.mrb[0].mxu0 %v4230
  %v4302 = vpop.f32.mrb[0].mxu0
  %v4303 = vadd.f32 %v4193, %v4302
  %v4304 = vpop.f32.mrb[0].mxu0
  %v4305 = vpop.f32.mrb[0].mxu0
  %v4306 = vadd.f32 %v4193, %v4305
  %v4307 = vpop.f32.mrb[0].mxu0
  %4308 = vmatprep.mubr.bf16.mxu0 0
  %4309 = vmatmul.mubr.bf16.gmra.mrb[0].mxu0 %v4233
  %v4310 = vpop.f32.mrb[0].mxu0
  %v4311 = vadd.f32 %v4193, %v4310
  %v4312 = vpop.f32.mrb[0].mxu0
  %v4313 = vpop.f32.mrb[0].mxu0
  %v4314 = vadd.f32 %v4193, %v4313
  %v4315 = vpop.f32.mrb[0].mxu0
  %4316 = vmatprep.mubr.bf16.mxu0 0
  %4317 = vmatmul.mubr.bf16.gmra.mrb[0].mxu0 %v4236
  %v4318 = vpop.f32.mrb[0].mxu0
  %v4319 = vadd.f32 %v4193, %v4318
  %v4320 = vpop.f32.mrb[0].mxu0
  %v4321 = vpop.f32.mrb[0].mxu0
  %v4322 = vadd.f32 %v4193, %v4321
  %v4323 = vpop.f32.mrb[0].mxu0
  %4324 = vmatprep.mubr.bf16.mxu0 0
  %4325 = vmatmul.mubr.bf16.gmra.mrb[0].mxu0 %v4239
  %v4326 = vpop.f32.mrb[0].mxu0
  %v4327 = vadd.f32 %v4193, %v4326
  %v4328 = vpop.f32.mrb[0].mxu0
  %v4329 = vpop.f32.mrb[0].mxu0
  %v4330 = vadd.f32 %v4193, %v4329
  %v4331 = vpop.f32.mrb[0].mxu0
  %4332 = vmatprep.mubr.bf16.mxu0 0
  %4333 = vmatmul.mubr.bf16.gmra.mrb[0].mxu0 %v4242
  %v4334 = vpop.f32.mrb[0].mxu0
  %v4335 = vadd.f32 %v4193, %v4334
  %v4336 = vpop.f32.mrb[0].mxu0
  %v4337 = vpop.f32.mrb[0].mxu0
  %v4338 = vadd.f32 %v4193, %v4337
  %v4339 = vpop.f32.mrb[0].mxu0
  %4340 = vdwg.mxu0
  %v4341 = vld [vmem:[%s13] sm:$0x1]
  %v4342 = vld [vmem:[%s14] sm:$0x1]
  %v4343 = vsel %vm146, %v4279, 0.0
  %4344 = vadd.xlane.f32.xlu0 %v4343
  %v4345 = vpop.xlane.xlu0 %4344
  %v4346 = vsel %vm146, %v4282, 0.0
  %4347 = vadd.xlane.f32.xlu0 %v4346
  %v4348 = vpop.xlane.xlu0 %4347
  %v4349 = vsel %vm146, %v4287, 0.0
  %4350 = vadd.xlane.f32.xlu0 %v4349
  %v4351 = vpop.xlane.xlu0 %4350
  %v4352 = vsel %vm146, %v4290, 0.0
  %4353 = vadd.xlane.f32.xlu0 %v4352
  %v4354 = vpop.xlane.xlu0 %4353
  %v4355 = vsel %vm146, %v4295, 0.0
  %4356 = vadd.xlane.f32.xlu0 %v4355
  %v4357 = vpop.xlane.xlu0 %4356
  %v4358 = vsel %vm146, %v4298, 0.0
  %4359 = vadd.xlane.f32.xlu0 %v4358
  %v4360 = vpop.xlane.xlu0 %4359
  %v4361 = vsel %vm146, %v4303, 0.0
  %4362 = vadd.xlane.f32.xlu0 %v4361
  %v4363 = vpop.xlane.xlu0 %4362
  %v4364 = vsel %vm146, %v4306, 0.0
  %4365 = vadd.xlane.f32.xlu0 %v4364
  %v4366 = vpop.xlane.xlu0 %4365
  %v4367 = vsel %vm146, %v4311, 0.0
  %4368 = vadd.xlane.f32.xlu0 %v4367
  %v4369 = vpop.xlane.xlu0 %4368
  %v4370 = vsel %vm146, %v4314, 0.0
  %4371 = vadd.xlane.f32.xlu0 %v4370
  %v4372 = vpop.xlane.xlu0 %4371
  %v4373 = vsel %vm146, %v4319, 0.0
  %4374 = vadd.xlane.f32.xlu0 %v4373
  %v4375 = vpop.xlane.xlu0 %4374
  %v4376 = vsel %vm146, %v4322, 0.0
  %4377 = vadd.xlane.f32.xlu0 %v4376
  %v4378 = vpop.xlane.xlu0 %4377
  %v4379 = vsel %vm146, %v4327, 0.0
  %4380 = vadd.xlane.f32.xlu0 %v4379
  %v4381 = vpop.xlane.xlu0 %4380
  %v4382 = vsel %vm146, %v4330, 0.0
  %4383 = vadd.xlane.f32.xlu0 %v4382
  %v4384 = vpop.xlane.xlu0 %4383
  %v4385 = vsel %vm146, %v4335, 0.0
  %4386 = vadd.xlane.f32.xlu0 %v4385
  %v4387 = vpop.xlane.xlu0 %4386
  %v4388 = vsel %vm146, %v4338, 0.0
  %4389 = vadd.xlane.f32.xlu0 %v4388
  %v4390 = vpop.xlane.xlu0 %4389
  %v4391 = vmul.f32 %v4345, %v3367
  %v4392 = vmul.f32 %v4348, %v3367
  %v4393 = vmul.f32 %v4351, %v3367
  %v4394 = vmul.f32 %v4354, %v3367
  %v4395 = vmul.f32 %v4357, %v3367
  %v4396 = vmul.f32 %v4360, %v3367
  %v4397 = vmul.f32 %v4363, %v3367
  %v4398 = vmul.f32 %v4366, %v3367
  %v4399 = vmul.f32 %v4369, %v3367
  %v4400 = vmul.f32 %v4372, %v3367
  %v4401 = vmul.f32 %v4375, %v3367
  %v4402 = vmul.f32 %v4378, %v3367
  %v4403 = vmul.f32 %v4381, %v3367
  %v4404 = vmul.f32 %v4384, %v3367
  %v4405 = vmul.f32 %v4387, %v3367
  %v4406 = vmul.f32 %v4390, %v3367
  %v4407 = vsub.f32 %v4279, %v4391
  %v4408 = vsub.f32 %v4282, %v4392
  %v4409 = vsub.f32 %v4287, %v4393
  %v4410 = vsub.f32 %v4290, %v4394
  %v4411 = vsub.f32 %v4295, %v4395
  %v4412 = vsub.f32 %v4298, %v4396
  %v4413 = vsub.f32 %v4303, %v4397
  %v4414 = vsub.f32 %v4306, %v4398
  %v4415 = vsub.f32 %v4311, %v4399
  %v4416 = vsub.f32 %v4314, %v4400
  %v4417 = vsub.f32 %v4319, %v4401
  %v4418 = vsub.f32 %v4322, %v4402
  %v4419 = vsub.f32 %v4327, %v4403
  %v4420 = vsub.f32 %v4330, %v4404
  %v4421 = vsub.f32 %v4335, %v4405
  %v4422 = vsub.f32 %v4338, %v4406
  %v4423 = vmul.f32 %v4407, %v4407
  %v4424 = vmul.f32 %v4408, %v4408
  %v4425 = vmul.f32 %v4409, %v4409
  %v4426 = vmul.f32 %v4410, %v4410
  %v4427 = vmul.f32 %v4411, %v4411
  %v4428 = vmul.f32 %v4412, %v4412
  %v4429 = vmul.f32 %v4413, %v4413
  %v4430 = vmul.f32 %v4414, %v4414
  %v4431 = vmul.f32 %v4415, %v4415
  %v4432 = vmul.f32 %v4416, %v4416
  %v4433 = vmul.f32 %v4417, %v4417
  %v4434 = vmul.f32 %v4418, %v4418
  %v4435 = vmul.f32 %v4419, %v4419
  %v4436 = vmul.f32 %v4420, %v4420
  %v4437 = vmul.f32 %v4421, %v4421
  %v4438 = vmul.f32 %v4422, %v4422
  %v4439 = vsel %vm146, %v4423, 0.0
  %4440 = vadd.xlane.f32.xlu0 %v4439
  %v4441 = vpop.xlane.xlu0 %4440
  %v4442 = vsel %vm146, %v4424, 0.0
  %4443 = vadd.xlane.f32.xlu0 %v4442
  %v4444 = vpop.xlane.xlu0 %4443
  %v4445 = vsel %vm146, %v4425, 0.0
  %4446 = vadd.xlane.f32.xlu0 %v4445
  %v4447 = vpop.xlane.xlu0 %4446
  %v4448 = vsel %vm146, %v4426, 0.0
  %4449 = vadd.xlane.f32.xlu0 %v4448
  %v4450 = vpop.xlane.xlu0 %4449
  %v4451 = vsel %vm146, %v4427, 0.0
  %4452 = vadd.xlane.f32.xlu0 %v4451
  %v4453 = vpop.xlane.xlu0 %4452
  %v4454 = vsel %vm146, %v4428, 0.0
  %4455 = vadd.xlane.f32.xlu0 %v4454
  %v4456 = vpop.xlane.xlu0 %4455
  %v4457 = vsel %vm146, %v4429, 0.0
  %4458 = vadd.xlane.f32.xlu0 %v4457
  %v4459 = vpop.xlane.xlu0 %4458
  %v4460 = vsel %vm146, %v4430, 0.0
  %4461 = vadd.xlane.f32.xlu0 %v4460
  %v4462 = vpop.xlane.xlu0 %4461
  %v4463 = vsel %vm146, %v4431, 0.0
  %4464 = vadd.xlane.f32.xlu0 %v4463
  %v4465 = vpop.xlane.xlu0 %4464
  %v4466 = vsel %vm146, %v4432, 0.0
  %4467 = vadd.xlane.f32.xlu0 %v4466
  %v4468 = vpop.xlane.xlu0 %4467
  %v4469 = vsel %vm146, %v4433, 0.0
  %4470 = vadd.xlane.f32.xlu0 %v4469
  %v4471 = vpop.xlane.xlu0 %4470
  %v4472 = vsel %vm146, %v4434, 0.0
  %4473 = vadd.xlane.f32.xlu0 %v4472
  %v4474 = vpop.xlane.xlu0 %4473
  %v4475 = vsel %vm146, %v4435, 0.0
  %4476 = vadd.xlane.f32.xlu0 %v4475
  %v4477 = vpop.xlane.xlu0 %4476
  %v4478 = vsel %vm146, %v4436, 0.0
  %4479 = vadd.xlane.f32.xlu0 %v4478
  %v4480 = vpop.xlane.xlu0 %4479
  %v4481 = vsel %vm146, %v4437, 0.0
  %4482 = vadd.xlane.f32.xlu0 %v4481
  %v4483 = vpop.xlane.xlu0 %4482
  %v4484 = vsel %vm146, %v4438, 0.0
  %4485 = vadd.xlane.f32.xlu0 %v4484
  %v4486 = vpop.xlane.xlu0 %4485
  %v4487 = vmul.f32 %v4441, %v3367
  %v4488 = vmul.f32 %v4444, %v3367
  %v4489 = vmul.f32 %v4447, %v3367
  %v4490 = vmul.f32 %v4450, %v3367
  %v4491 = vmul.f32 %v4453, %v3367
  %v4492 = vmul.f32 %v4456, %v3367
  %v4493 = vmul.f32 %v4459, %v3367
  %v4494 = vmul.f32 %v4462, %v3367
  %v4495 = vmul.f32 %v4465, %v3367
  %v4496 = vmul.f32 %v4468, %v3367
  %v4497 = vmul.f32 %v4471, %v3367
  %v4498 = vmul.f32 %v4474, %v3367
  %v4499 = vmul.f32 %v4477, %v3367
  %v4500 = vmul.f32 %v4480, %v3367
  %v4501 = vmul.f32 %v4483, %v3367
  %v4502 = vmul.f32 %v4486, %v3367
  %v4503 = vadd.f32 %v4487, 1e-05
  %v4504 = vadd.f32 %v4488, 1e-05
  %v4505 = vadd.f32 %v4489, 1e-05
  %v4506 = vadd.f32 %v4490, 1e-05
  %v4507 = vadd.f32 %v4491, 1e-05
  %v4508 = vadd.f32 %v4492, 1e-05
  %v4509 = vadd.f32 %v4493, 1e-05
  %v4510 = vadd.f32 %v4494, 1e-05
  %v4511 = vadd.f32 %v4495, 1e-05
  %v4512 = vadd.f32 %v4496, 1e-05
  %v4513 = vadd.f32 %v4497, 1e-05
  %v4514 = vadd.f32 %v4498, 1e-05
  %v4515 = vadd.f32 %v4499, 1e-05
  %v4516 = vadd.f32 %v4500, 1e-05
  %v4517 = vadd.f32 %v4501, 1e-05
  %v4518 = vadd.f32 %v4502, 1e-05
  %v4519 = vrsqrt.pop %v4503
  %v4520 = vrsqrt.pop %v4504
  %v4521 = vrsqrt.pop %v4505
  %v4522 = vrsqrt.pop %v4506
  %v4523 = vrsqrt.pop %v4507
  %v4524 = vrsqrt.pop %v4508
  %v4525 = vrsqrt.pop %v4509
  %v4526 = vrsqrt.pop %v4510
  %v4527 = vrsqrt.pop %v4511
  %v4528 = vrsqrt.pop %v4512
  %v4529 = vrsqrt.pop %v4513
  %v4530 = vrsqrt.pop %v4514
  %v4531 = vrsqrt.pop %v4515
  %v4532 = vrsqrt.pop %v4516
  %v4533 = vrsqrt.pop %v4517
  %v4534 = vrsqrt.pop %v4518
  %v4535 = vmul.f32 %v4407, %v4519
  %v4536 = vmul.f32 %v4408, %v4520
  %v4537 = vmul.f32 %v4409, %v4521
  %v4538 = vmul.f32 %v4410, %v4522
  %v4539 = vmul.f32 %v4411, %v4523
  %v4540 = vmul.f32 %v4412, %v4524
  %v4541 = vmul.f32 %v4413, %v4525
  %v4542 = vmul.f32 %v4414, %v4526
  %v4543 = vmul.f32 %v4415, %v4527
  %v4544 = vmul.f32 %v4416, %v4528
  %v4545 = vmul.f32 %v4417, %v4529
  %v4546 = vmul.f32 %v4418, %v4530
  %v4547 = vmul.f32 %v4419, %v4531
  %v4548 = vmul.f32 %v4420, %v4532
  %v4549 = vmul.f32 %v4421, %v4533
  %v4550 = vmul.f32 %v4422, %v4534
  %v4552 = vlaneseq
  %v4553 = vshrl.u32 %v4552, 7
  %v4554 = vsub.s32 0, %v4553
  %v4555 = vrot.slane %v4341, %v4554
  %v4557 = vmul.f32 %v4535, %v4555
  %v4558 = vmul.f32 %v4536, %v4555
  %v4559 = vmul.f32 %v4537, %v4555
  %v4560 = vmul.f32 %v4538, %v4555
  %v4561 = vmul.f32 %v4539, %v4555
  %v4562 = vmul.f32 %v4540, %v4555
  %v4563 = vmul.f32 %v4541, %v4555
  %v4564 = vmul.f32 %v4542, %v4555
  %v4565 = vmul.f32 %v4543, %v4555
  %v4566 = vmul.f32 %v4544, %v4555
  %v4567 = vmul.f32 %v4545, %v4555
  %v4568 = vmul.f32 %v4546, %v4555
  %v4569 = vmul.f32 %v4547, %v4555
  %v4570 = vmul.f32 %v4548, %v4555
  %v4571 = vmul.f32 %v4549, %v4555
  %v4572 = vmul.f32 %v4550, %v4555
  %v4574 = vlaneseq
  %v4575 = vshrl.u32 %v4574, 7
  %v4576 = vsub.s32 0, %v4575
  %v4577 = vrot.slane %v4342, %v4576
  %v4579 = vadd.f32 %v4557, %v4577
  %v4580 = vadd.f32 %v4558, %v4577
  %v4581 = vadd.f32 %v4559, %v4577
  %v4582 = vadd.f32 %v4560, %v4577
  %v4583 = vadd.f32 %v4561, %v4577
  %v4584 = vadd.f32 %v4562, %v4577
  %v4585 = vadd.f32 %v4563, %v4577
  %v4586 = vadd.f32 %v4564, %v4577
  %v4587 = vadd.f32 %v4565, %v4577
  %v4588 = vadd.f32 %v4566, %v4577
  %v4589 = vadd.f32 %v4567, %v4577
  %v4590 = vadd.f32 %v4568, %v4577
  %v4591 = vadd.f32 %v4569, %v4577
  %v4592 = vadd.f32 %v4570, %v4577
  %v4593 = vadd.f32 %v4571, %v4577
  %v4594 = vadd.f32 %v4572, %v4577
  %v4595 = vadd.f32 %v3572, %v4579
  %v4596 = vadd.f32 %v3573, %v4580
  %v4597 = vadd.f32 %v3574, %v4581
  %v4598 = vadd.f32 %v3575, %v4582
  %v4599 = vadd.f32 %v3576, %v4583
  %v4600 = vadd.f32 %v3577, %v4584
  %v4601 = vadd.f32 %v3578, %v4585
  %v4602 = vadd.f32 %v3579, %v4586
  %v4603 = vadd.f32 %v3580, %v4587
  %v4604 = vadd.f32 %v3581, %v4588
  %v4605 = vadd.f32 %v3582, %v4589
  %v4606 = vadd.f32 %v3583, %v4590
  %v4607 = vadd.f32 %v3584, %v4591
  %v4608 = vadd.f32 %v3585, %v4592
  %v4609 = vadd.f32 %v3586, %v4593
  %v4610 = vadd.f32 %v3587, %v4594
  %v4611 = vpack.c.bf16 %v4596, %v4595
  %v4612 = vpack.c.bf16 %v4598, %v4597
  %v4613 = vpack.c.bf16 %v4600, %v4599
  %v4614 = vpack.c.bf16 %v4602, %v4601
  %v4615 = vpack.c.bf16 %v4604, %v4603
  %v4616 = vpack.c.bf16 %v4606, %v4605
  %v4617 = vpack.c.bf16 %v4608, %v4607
  %v4618 = vpack.c.bf16 %v4610, %v4609
  %v4627 = vunpack.c.l.b16 %v4611
  %v4628 = vunpack.c.h.b16 %v4611
  %v4629 = vunpack.c.l.b16 %v4612
  %v4630 = vunpack.c.h.b16 %v4612
  %v4631 = vunpack.c.l.b16 %v4613
  %v4632 = vunpack.c.h.b16 %v4613
  %v4633 = vunpack.c.l.b16 %v4614
  %v4634 = vunpack.c.h.b16 %v4614
  %v4635 = vunpack.c.l.b16 %v4615
  %v4636 = vunpack.c.h.b16 %v4615
  %v4637 = vunpack.c.l.b16 %v4616
  %v4638 = vunpack.c.h.b16 %v4616
  %v4639 = vunpack.c.l.b16 %v4617
  %v4640 = vunpack.c.h.b16 %v4617
  %v4641 = vunpack.c.l.b16 %v4618
  %v4642 = vunpack.c.h.b16 %v4618
  %v4643 = vpack.c.b16 %v4627, %v4627
  %v4644 = vpack.c.b16 %v4628, %v4628
  %v4645 = vpack.c.b16 %v4629, %v4629
  %v4646 = vpack.c.b16 %v4630, %v4630
  %v4647 = vpack.c.b16 %v4631, %v4631
  %v4648 = vpack.c.b16 %v4632, %v4632
  %v4649 = vpack.c.b16 %v4633, %v4633
  %v4650 = vpack.c.b16 %v4634, %v4634
  %v4651 = vpack.c.b16 %v4635, %v4635
  %v4652 = vpack.c.b16 %v4636, %v4636
  %v4653 = vpack.c.b16 %v4637, %v4637
  %v4654 = vpack.c.b16 %v4638, %v4638
  %v4655 = vpack.c.b16 %v4639, %v4639
  %v4656 = vpack.c.b16 %v4640, %v4640
  %v4657 = vpack.c.b16 %v4641, %v4641
  %v4658 = vpack.c.b16 %v4642, %v4642
  %vm4675 = vcmask 257024
  %4676 = vst.msk [vmem:[%s15] sm:$0xf] %vm4675, %v4643
  %4677 = vst.msk [vmem:[%s15 + $0x4] sm:$0xf] %vm4675, %v4644
  %4678 = vst.msk [vmem:[%s15 + $0x8] sm:$0xf] %vm4675, %v4645
  %4679 = vst.msk [vmem:[%s15 + $0xc] sm:$0xf] %vm4675, %v4646
  %4680 = vst.msk [vmem:[%s15 + $0x10] sm:$0xf] %vm4675, %v4647
  %4681 = vst.msk [vmem:[%s15 + $0x14] sm:$0xf] %vm4675, %v4648
  %4682 = vst.msk [vmem:[%s15 + $0x18] sm:$0xf] %vm4675, %v4649
  %4683 = vst.msk [vmem:[%s15 + $0x1c] sm:$0xf] %vm4675, %v4650
  %4684 = vst.msk [vmem:[%s15 + $0x20] sm:$0xf] %vm4675, %v4651
  %4685 = vst.msk [vmem:[%s15 + $0x24] sm:$0xf] %vm4675, %v4652
  %4686 = vst.msk [vmem:[%s15 + $0x28] sm:$0xf] %vm4675, %v4653
  %4687 = vst.msk [vmem:[%s15 + $0x2c] sm:$0xf] %vm4675, %v4654
  %4688 = vst.msk [vmem:[%s15 + $0x30] sm:$0xf] %vm4675, %v4655
  %4689 = vst.msk [vmem:[%s15 + $0x34] sm:$0xf] %vm4675, %v4656
  %4690 = vst.msk [vmem:[%s15 + $0x38] sm:$0xf] %vm4675, %v4657
  %4691 = vst.msk [vmem:[%s15 + $0x3c] sm:$0xf] %vm4675, %v4658
  // Predicated region
  $region62: #{swinv2_forward.8} parent=0 // pred_check
    _
  $region63: #{swinv2_forward.8} parent=0 // pred_check_branch
    %4693 = sbr.rel (0) target = $region65
  $region64: #{swinv2_forward.8} parent=0 // pred_region
    _
  $region65: #{swinv2_forward.8} parent=0 // pred_fallthru
    _
  // Predicated region
  $region66: #{swinv2_forward.8} parent=0 // pred_check
    _
  $region67: #{swinv2_forward.8} parent=0 // pred_check_branch
    %4695 = sbr.rel (0) target = $region69
  $region68: #{swinv2_forward.8} parent=0 // pred_region
    _
  $region69: #{swinv2_forward.8} parent=0 // pred_fallthru
    _

// kernel: swinv2_forward.11
$region0: #{swinv2_forward.11}
  #allocation0 [shape = 'u32[]', space=smem, size = 0x4, offset = 0x4, fixed_abs, tag = 'smem constant byte address 0x4 - core index']
  #allocation1 [shape = 'u32[144,128]{1,0:T(1,128)}', space=vmem, size = 0x12000, scoped, tag = 'internal scratch']
  %s0 = inlined_call_operand.vmem [shape: bf16[32,64], index: 0, kind: input, shape index: {}]
  %s1 = inlined_call_operand.vmem [shape: bf16[64,192], index: 1, kind: input, shape index: {}]
  %s2 = inlined_call_operand.vmem [shape: f32[1,192], index: 2, kind: input, shape index: {}]
  %s3 = inlined_call_operand.vmem [shape: bf16[64,64], index: 3, kind: input, shape index: {}]
  %s4 = inlined_call_operand.vmem [shape: f32[1,64], index: 4, kind: input, shape index: {}]
  %s5 = inlined_call_operand.vmem [shape: f32[8,1,1], index: 5, kind: input, shape index: {}]
  %s6 = inlined_call_operand.vmem [shape: f32[8,16,16], index: 6, kind: input, shape index: {}]
  %s7 = inlined_call_operand.vmem [shape: f32[1,64], index: 7, kind: input, shape index: {}]
  %s8 = inlined_call_operand.vmem [shape: f32[1,64], index: 8, kind: input, shape index: {}]
  %s9 = inlined_call_operand.vmem [shape: bf16[64,128], index: 9, kind: input, shape index: {}]
  %s10 = inlined_call_operand.vmem [shape: f32[1,128], index: 10, kind: input, shape index: {}]
  %s11 = inlined_call_operand.vmem [shape: bf16[128,64], index: 11, kind: input, shape index: {}]
  %s12 = inlined_call_operand.vmem [shape: f32[1,64], index: 12, kind: input, shape index: {}]
  %s13 = inlined_call_operand.vmem [shape: f32[1,64], index: 13, kind: input, shape index: {}]
  %s14 = inlined_call_operand.vmem [shape: f32[1,64], index: 14, kind: input, shape index: {}]
  %s15 = inlined_call_operand.vmem [shape: bf16[32,64], index: 15, kind: output, shape index: {}]
  %s16 = sld [smem:[#allocation0]]
  $region70: #{swinv2_forward.11} parent=0
    _
  %s18 = ssub.s32 1, %s16
  %s19 = scalar_select 0, %s18, %s16
  // Predicated region
  $region2: #{swinv2_forward.11} parent=0 // pred_check
    _
  $region3: #{swinv2_forward.11} parent=0 // pred_check_branch
    %21 = sbr.rel (0) target = $region5
  $region4: #{swinv2_forward.11} parent=0 // pred_region
    _
  $region5: #{swinv2_forward.11} parent=0 // pred_fallthru
    _
  // Predicated region
  $region6: #{swinv2_forward.11} parent=0 // pred_check
    _
  $region7: #{swinv2_forward.11} parent=0 // pred_check_branch
    %23 = sbr.rel (0) target = $region9
  $region8: #{swinv2_forward.11} parent=0 // pred_region
    _
  $region9: #{swinv2_forward.11} parent=0 // pred_fallthru
    _
  // Predicated region
  $region10: #{swinv2_forward.11} parent=0 // pred_check
    _
  $region11: #{swinv2_forward.11} parent=0 // pred_check_branch
    %25 = sbr.rel (0) target = $region13
  $region12: #{swinv2_forward.11} parent=0 // pred_region
    _
  $region13: #{swinv2_forward.11} parent=0 // pred_fallthru
    _
  // Predicated region
  $region14: #{swinv2_forward.11} parent=0 // pred_check
    _
  $region15: #{swinv2_forward.11} parent=0 // pred_check_branch
    %27 = sbr.rel (0) target = $region17
  $region16: #{swinv2_forward.11} parent=0 // pred_region
    _
  $region17: #{swinv2_forward.11} parent=0 // pred_fallthru
    _
  // Predicated region
  $region18: #{swinv2_forward.11} parent=0 // pred_check
    _
  $region19: #{swinv2_forward.11} parent=0 // pred_check_branch
    %29 = sbr.rel (0) target = $region21
  $region20: #{swinv2_forward.11} parent=0 // pred_region
    _
  $region21: #{swinv2_forward.11} parent=0 // pred_fallthru
    _
  // Predicated region
  $region22: #{swinv2_forward.11} parent=0 // pred_check
    _
  $region23: #{swinv2_forward.11} parent=0 // pred_check_branch
    %31 = sbr.rel (0) target = $region25
  $region24: #{swinv2_forward.11} parent=0 // pred_region
    _
  $region25: #{swinv2_forward.11} parent=0 // pred_fallthru
    _
  // Predicated region
  $region26: #{swinv2_forward.11} parent=0 // pred_check
    _
  $region27: #{swinv2_forward.11} parent=0 // pred_check_branch
    %33 = sbr.rel (0) target = $region29
  $region28: #{swinv2_forward.11} parent=0 // pred_region
    _
  $region29: #{swinv2_forward.11} parent=0 // pred_fallthru
    _
  // Predicated region
  $region30: #{swinv2_forward.11} parent=0 // pred_check
    _
  $region31: #{swinv2_forward.11} parent=0 // pred_check_branch
    %35 = sbr.rel (0) target = $region33
  $region32: #{swinv2_forward.11} parent=0 // pred_region
    _
  $region33: #{swinv2_forward.11} parent=0 // pred_fallthru
    _
  // Predicated region
  $region34: #{swinv2_forward.11} parent=0 // pred_check
    _
  $region35: #{swinv2_forward.11} parent=0 // pred_check_branch
    %37 = sbr.rel (0) target = $region37
  $region36: #{swinv2_forward.11} parent=0 // pred_region
    _
  $region37: #{swinv2_forward.11} parent=0 // pred_fallthru
    _
  // Predicated region
  $region38: #{swinv2_forward.11} parent=0 // pred_check
    _
  $region39: #{swinv2_forward.11} parent=0 // pred_check_branch
    %39 = sbr.rel (0) target = $region41
  $region40: #{swinv2_forward.11} parent=0 // pred_region
    _
  $region41: #{swinv2_forward.11} parent=0 // pred_fallthru
    _
  // Predicated region
  $region42: #{swinv2_forward.11} parent=0 // pred_check
    _
  $region43: #{swinv2_forward.11} parent=0 // pred_check_branch
    %41 = sbr.rel (0) target = $region45
  $region44: #{swinv2_forward.11} parent=0 // pred_region
    _
  $region45: #{swinv2_forward.11} parent=0 // pred_fallthru
    _
  // Predicated region
  $region46: #{swinv2_forward.11} parent=0 // pred_check
    _
  $region47: #{swinv2_forward.11} parent=0 // pred_check_branch
    %43 = sbr.rel (0) target = $region49
  $region48: #{swinv2_forward.11} parent=0 // pred_region
    _
  $region49: #{swinv2_forward.11} parent=0 // pred_fallthru
    _
  // Predicated region
  $region50: #{swinv2_forward.11} parent=0 // pred_check
    _
  $region51: #{swinv2_forward.11} parent=0 // pred_check_branch
    %45 = sbr.rel (0) target = $region53
  $region52: #{swinv2_forward.11} parent=0 // pred_region
    _
  $region53: #{swinv2_forward.11} parent=0 // pred_fallthru
    _
  // Predicated region
  $region54: #{swinv2_forward.11} parent=0 // pred_check
    _
  $region55: #{swinv2_forward.11} parent=0 // pred_check_branch
    %47 = sbr.rel (0) target = $region57
  $region56: #{swinv2_forward.11} parent=0 // pred_region
    _
  $region57: #{swinv2_forward.11} parent=0 // pred_fallthru
    _
  // Predicated region
  $region58: #{swinv2_forward.11} parent=0 // pred_check
    _
  $region59: #{swinv2_forward.11} parent=0 // pred_check_branch
    %49 = sbr.rel (0) target = $region61
  $region60: #{swinv2_forward.11} parent=0 // pred_region
    _
  $region61: #{swinv2_forward.11} parent=0 // pred_fallthru
    _
  %v51 = vld [vmem:[%s0] sm:$0xf]
  %v52 = vld [vmem:[%s0 + $0x4] sm:$0xf]
  %v53 = vld [vmem:[%s0 + $0x8] sm:$0xf]
  %v54 = vld [vmem:[%s0 + $0xc] sm:$0xf]
  %v55 = vunpack.c.l.bf16 %v51
  %v56 = vunpack.c.l.bf16 %v52
  %v57 = vunpack.c.l.bf16 %v53
  %v58 = vunpack.c.l.bf16 %v54
  %v59 = vld [vmem:[%s1] sm:$0xff]
  %v60 = vld [vmem:[%s1 + $0x8] sm:$0xff]
  %v61 = vld [vmem:[%s1 + $0x10] sm:$0xff]
  %v62 = vld [vmem:[%s1 + $0x18] sm:$0xff]
  %v63 = vld [vmem:[%s1 + $0x20] sm:$0xff]
  %v64 = vld [vmem:[%s1 + $0x28] sm:$0xff]
  %v65 = vld [vmem:[%s1 + $0x30] sm:$0xff]
  %v66 = vld [vmem:[%s1 + $0x38] sm:$0xff]
  %v67 = vld [vmem:[%s2] sm:$0x3]
  %v69 = vlaneseq
  %v70 = vshrl.u32 %v69, 7
  %v71 = vsub.s32 0, %v70
  %v72 = vrot.slane %v67, %v71
  %v73 = vlaneseq
  %v74 = vshrl.u32 %v73, 7
  %v75 = vsub.s32 1, %v74
  %v76 = vrot.slane %v67, %v75
  %v83 = vunpack.c.l.b16 %v51
  %v84 = vunpack.c.l.b16 %v52
  %v85 = vunpack.c.l.b16 %v53
  %v86 = vunpack.c.l.b16 %v54
  %v87 = vpack.c.b16 %v84, %v83
  %v88 = vpack.c.b16 %v86, %v85
  %v97 = vunpack.c.l.b16 %v59
  %v98 = vunpack.c.h.b16 %v59
  %v99 = vunpack.c.l.b16 %v60
  %v100 = vunpack.c.h.b16 %v60
  %v101 = vunpack.c.l.b16 %v61
  %v102 = vunpack.c.h.b16 %v61
  %v103 = vunpack.c.l.b16 %v62
  %v104 = vunpack.c.h.b16 %v62
  %v105 = vunpack.c.l.b16 %v63
  %v106 = vunpack.c.h.b16 %v63
  %v107 = vunpack.c.l.b16 %v64
  %v108 = vunpack.c.h.b16 %v64
  %v109 = vunpack.c.l.b16 %v65
  %v110 = vunpack.c.h.b16 %v65
  %v111 = vunpack.c.l.b16 %v66
  %v112 = vunpack.c.h.b16 %v66
  %v113 = vpack.c.b16 %v99, %v97
  %v114 = vpack.c.b16 %v100, %v98
  %v115 = vpack.c.b16 %v103, %v101
  %v116 = vpack.c.b16 %v104, %v102
  %v117 = vpack.c.b16 %v107, %v105
  %v118 = vpack.c.b16 %v108, %v106
  %v119 = vpack.c.b16 %v111, %v109
  %v120 = vpack.c.b16 %v112, %v110
  %vm129 = vcmask 523264
  %v131 = vsel %vm129, %v87, 0
  %v134 = vsel %vm129, %v88, 0
  %136 = vmatprep.subr.bf16.mxu0 %v114
  %137 = vmatpush1.bf16.msra.mxu0 %v113
  %138 = vmatprep.subr.bf16.mxu0 %v116
  %139 = vmatpush1.bf16.msra.mxu0 %v115
  %140 = vmatprep.subr.bf16.mxu0 %v118
  %141 = vmatpush1.bf16.msra.mxu0 %v117
  %142 = vmatprep.subr.bf16.mxu0 %v120
  %143 = vmatpush1.bf16.msra.mxu0 %v119
  %144 = vmatprep.subr.bf16.mxu0 0
  %145 = vmatpush1.bf16.msra.mxu0 0
  %146 = vmatprep.subr.bf16.mxu0 0
  %147 = vmatpush1.bf16.msra.mxu0 0
  %148 = vmatprep.subr.bf16.mxu0 0
  %149 = vmatpush1.bf16.msra.mxu0 0
  %150 = vmatprep.subr.bf16.mxu0 0
  %151 = vmatpush1.bf16.msra.mxu0 0
  %152 = vmatprep.subr.bf16.mxu0 0
  %153 = vmatpush1.bf16.msra.mxu0 0
  %154 = vmatprep.subr.bf16.mxu0 0
  %155 = vmatpush1.bf16.msra.mxu0 0
  %156 = vmatprep.subr.bf16.mxu0 0
  %157 = vmatpush1.bf16.msra.mxu0 0
  %158 = vmatprep.subr.bf16.mxu0 0
  %159 = vmatpush1.bf16.msra.mxu0 0
  %160 = vmatprep.subr.bf16.mxu0 0
  %161 = vmatpush1.bf16.msra.mxu0 0
  %162 = vmatprep.subr.bf16.mxu0 0
  %163 = vmatpush1.bf16.msra.mxu0 0
  %164 = vmatprep.subr.bf16.mxu0 0
  %165 = vmatpush1.bf16.msra.mxu0 0
  %166 = vmatprep.subr.bf16.mxu0 0
  %167 = vmatpush1.bf16.msra.mxu0 0
  %168 = vmatprep.mubr.bf16.mxu0 0
  %169 = vmatmul.mubr.bf16.gmra.mrb[0].mxu0 %v131
  %v170 = vpop.f32.mrb[0].mxu0
  %v171 = vadd.f32 %v72, %v170
  %v172 = vpop.f32.mrb[0].mxu0
  %v173 = vadd.f32 %v76, %v172
  %v174 = vpop.f32.mrb[0].mxu0
  %v175 = vadd.f32 %v72, %v174
  %v176 = vpop.f32.mrb[0].mxu0
  %v177 = vadd.f32 %v76, %v176
  %178 = vmatprep.mubr.bf16.mxu0 0
  %179 = vmatmul.mubr.bf16.gmra.mrb[0].mxu0 %v134
  %v180 = vpop.f32.mrb[0].mxu0
  %v181 = vadd.f32 %v72, %v180
  %v182 = vpop.f32.mrb[0].mxu0
  %v183 = vadd.f32 %v76, %v182
  %v184 = vpop.f32.mrb[0].mxu0
  %v185 = vadd.f32 %v72, %v184
  %v186 = vpop.f32.mrb[0].mxu0
  %v187 = vadd.f32 %v76, %v186
  %188 = vdwg.mxu0
  %193 = vrot.lane.b32.xlu0 %v171, 112
  %v194 = vpop.permute.xlu0 %193
  %195 = vrot.lane.b32.xlu0 %v175, 112
  %v196 = vpop.permute.xlu0 %195
  %197 = vrot.lane.b32.xlu0 %v181, 112
  %v198 = vpop.permute.xlu0 %197
  %199 = vrot.lane.b32.xlu0 %v185, 112
  %v200 = vpop.permute.xlu0 %199
  %205 = vrot.lane.b32.xlu0 %v171, 96
  %v206 = vpop.permute.xlu0 %205
  %207 = vrot.lane.b32.xlu0 %v175, 96
  %v208 = vpop.permute.xlu0 %207
  %209 = vrot.lane.b32.xlu0 %v181, 96
  %v210 = vpop.permute.xlu0 %209
  %211 = vrot.lane.b32.xlu0 %v185, 96
  %v212 = vpop.permute.xlu0 %211
  %217 = vrot.lane.b32.xlu0 %v171, 80
  %v218 = vpop.permute.xlu0 %217
  %219 = vrot.lane.b32.xlu0 %v175, 80
  %v220 = vpop.permute.xlu0 %219
  %221 = vrot.lane.b32.xlu0 %v181, 80
  %v222 = vpop.permute.xlu0 %221
  %223 = vrot.lane.b32.xlu0 %v185, 80
  %v224 = vpop.permute.xlu0 %223
  %233 = vrot.lane.b32.xlu0 %v173, 112
  %v234 = vpop.permute.xlu0 %233
  %235 = vrot.lane.b32.xlu0 %v177, 112
  %v236 = vpop.permute.xlu0 %235
  %237 = vrot.lane.b32.xlu0 %v183, 112
  %v238 = vpop.permute.xlu0 %237
  %239 = vrot.lane.b32.xlu0 %v187, 112
  %v240 = vpop.permute.xlu0 %239
  %245 = vrot.lane.b32.xlu0 %v173, 96
  %v246 = vpop.permute.xlu0 %245
  %247 = vrot.lane.b32.xlu0 %v177, 96
  %v248 = vpop.permute.xlu0 %247
  %249 = vrot.lane.b32.xlu0 %v183, 96
  %v250 = vpop.permute.xlu0 %249
  %251 = vrot.lane.b32.xlu0 %v187, 96
  %v252 = vpop.permute.xlu0 %251
  %257 = vrot.lane.b32.xlu0 %v173, 80
  %v258 = vpop.permute.xlu0 %257
  %259 = vrot.lane.b32.xlu0 %v177, 80
  %v260 = vpop.permute.xlu0 %259
  %261 = vrot.lane.b32.xlu0 %v183, 80
  %v262 = vpop.permute.xlu0 %261
  %263 = vrot.lane.b32.xlu0 %v187, 80
  %v264 = vpop.permute.xlu0 %263
  %v269 = vmul.f32 %v171, %v171
  %v270 = vmul.f32 %v175, %v175
  %v271 = vmul.f32 %v181, %v181
  %v272 = vmul.f32 %v185, %v185
  %v273 = vmul.f32 %v194, %v194
  %v274 = vmul.f32 %v196, %v196
  %v275 = vmul.f32 %v198, %v198
  %v276 = vmul.f32 %v200, %v200
  %v277 = vmul.f32 %v206, %v206
  %v278 = vmul.f32 %v208, %v208
  %v279 = vmul.f32 %v210, %v210
  %v280 = vmul.f32 %v212, %v212
  %v281 = vmul.f32 %v218, %v218
  %v282 = vmul.f32 %v220, %v220
  %v283 = vmul.f32 %v222, %v222
  %v284 = vmul.f32 %v224, %v224
  %vm285 = vcmask 130048
  %v286 = vsel %vm285, %v269, 0.0
  %287 = vadd.xlane.f32.xlu0 %v286
  %v288 = vpop.xlane.xlu0 %287
  %v289 = vsel %vm285, %v270, 0.0
  %290 = vadd.xlane.f32.xlu0 %v289
  %v291 = vpop.xlane.xlu0 %290
  %v292 = vsel %vm285, %v271, 0.0
  %293 = vadd.xlane.f32.xlu0 %v292
  %v294 = vpop.xlane.xlu0 %293
  %v295 = vsel %vm285, %v272, 0.0
  %296 = vadd.xlane.f32.xlu0 %v295
  %v297 = vpop.xlane.xlu0 %296
  %v298 = vsel %vm285, %v273, 0.0
  %299 = vadd.xlane.f32.xlu0 %v298
  %v300 = vpop.xlane.xlu0 %299
  %v301 = vsel %vm285, %v274, 0.0
  %302 = vadd.xlane.f32.xlu0 %v301
  %v303 = vpop.xlane.xlu0 %302
  %v304 = vsel %vm285, %v275, 0.0
  %305 = vadd.xlane.f32.xlu0 %v304
  %v306 = vpop.xlane.xlu0 %305
  %v307 = vsel %vm285, %v276, 0.0
  %308 = vadd.xlane.f32.xlu0 %v307
  %v309 = vpop.xlane.xlu0 %308
  %v310 = vsel %vm285, %v277, 0.0
  %311 = vadd.xlane.f32.xlu0 %v310
  %v312 = vpop.xlane.xlu0 %311
  %v313 = vsel %vm285, %v278, 0.0
  %314 = vadd.xlane.f32.xlu0 %v313
  %v315 = vpop.xlane.xlu0 %314
  %v316 = vsel %vm285, %v279, 0.0
  %317 = vadd.xlane.f32.xlu0 %v316
  %v318 = vpop.xlane.xlu0 %317
  %v319 = vsel %vm285, %v280, 0.0
  %320 = vadd.xlane.f32.xlu0 %v319
  %v321 = vpop.xlane.xlu0 %320
  %v322 = vsel %vm285, %v281, 0.0
  %323 = vadd.xlane.f32.xlu0 %v322
  %v324 = vpop.xlane.xlu0 %323
  %v325 = vsel %vm285, %v282, 0.0
  %326 = vadd.xlane.f32.xlu0 %v325
  %v327 = vpop.xlane.xlu0 %326
  %v328 = vsel %vm285, %v283, 0.0
  %329 = vadd.xlane.f32.xlu0 %v328
  %v330 = vpop.xlane.xlu0 %329
  %v331 = vsel %vm285, %v284, 0.0
  %332 = vadd.xlane.f32.xlu0 %v331
  %v333 = vpop.xlane.xlu0 %332
  %v334 = vmax.f32 %v288, 1e-24
  %v335 = vmax.f32 %v291, 1e-24
  %v336 = vmax.f32 %v294, 1e-24
  %v337 = vmax.f32 %v297, 1e-24
  %v338 = vmax.f32 %v300, 1e-24
  %v339 = vmax.f32 %v303, 1e-24
  %v340 = vmax.f32 %v306, 1e-24
  %v341 = vmax.f32 %v309, 1e-24
  %v342 = vmax.f32 %v312, 1e-24
  %v343 = vmax.f32 %v315, 1e-24
  %v344 = vmax.f32 %v318, 1e-24
  %v345 = vmax.f32 %v321, 1e-24
  %v346 = vmax.f32 %v324, 1e-24
  %v347 = vmax.f32 %v327, 1e-24
  %v348 = vmax.f32 %v330, 1e-24
  %v349 = vmax.f32 %v333, 1e-24
  %v350 = vrsqrt.pop %v334
  %v351 = vrsqrt.pop %v335
  %v352 = vrsqrt.pop %v336
  %v353 = vrsqrt.pop %v337
  %v354 = vrsqrt.pop %v338
  %v355 = vrsqrt.pop %v339
  %v356 = vrsqrt.pop %v340
  %v357 = vrsqrt.pop %v341
  %v358 = vrsqrt.pop %v342
  %v359 = vrsqrt.pop %v343
  %v360 = vrsqrt.pop %v344
  %v361 = vrsqrt.pop %v345
  %v362 = vrsqrt.pop %v346
  %v363 = vrsqrt.pop %v347
  %v364 = vrsqrt.pop %v348
  %v365 = vrsqrt.pop %v349
  %v366 = vmul.f32 %v171, %v350
  %v367 = vmul.f32 %v175, %v351
  %v368 = vmul.f32 %v181, %v352
  %v369 = vmul.f32 %v185, %v353
  %v370 = vmul.f32 %v194, %v354
  %v371 = vmul.f32 %v196, %v355
  %v372 = vmul.f32 %v198, %v356
  %v373 = vmul.f32 %v200, %v357
  %v374 = vmul.f32 %v206, %v358
  %v375 = vmul.f32 %v208, %v359
  %v376 = vmul.f32 %v210, %v360
  %v377 = vmul.f32 %v212, %v361
  %v378 = vmul.f32 %v218, %v362
  %v379 = vmul.f32 %v220, %v363
  %v380 = vmul.f32 %v222, %v364
  %v381 = vmul.f32 %v224, %v365
  %398 = vrot.lane.b32.xlu0 %v269, 64
  %v399 = vpop.permute.xlu0 %398
  %400 = vrot.lane.b32.xlu0 %v270, 64
  %v401 = vpop.permute.xlu0 %400
  %402 = vrot.lane.b32.xlu0 %v271, 64
  %v403 = vpop.permute.xlu0 %402
  %404 = vrot.lane.b32.xlu0 %v272, 64
  %v405 = vpop.permute.xlu0 %404
  %406 = vrot.lane.b32.xlu0 %v273, 64
  %v407 = vpop.permute.xlu0 %406
  %408 = vrot.lane.b32.xlu0 %v274, 64
  %v409 = vpop.permute.xlu0 %408
  %410 = vrot.lane.b32.xlu0 %v275, 64
  %v411 = vpop.permute.xlu0 %410
  %412 = vrot.lane.b32.xlu0 %v276, 64
  %v413 = vpop.permute.xlu0 %412
  %414 = vrot.lane.b32.xlu0 %v277, 64
  %v415 = vpop.permute.xlu0 %414
  %416 = vrot.lane.b32.xlu0 %v278, 64
  %v417 = vpop.permute.xlu0 %416
  %418 = vrot.lane.b32.xlu0 %v279, 64
  %v419 = vpop.permute.xlu0 %418
  %420 = vrot.lane.b32.xlu0 %v280, 64
  %v421 = vpop.permute.xlu0 %420
  %422 = vrot.lane.b32.xlu0 %v281, 64
  %v423 = vpop.permute.xlu0 %422
  %424 = vrot.lane.b32.xlu0 %v282, 64
  %v425 = vpop.permute.xlu0 %424
  %426 = vrot.lane.b32.xlu0 %v283, 64
  %v427 = vpop.permute.xlu0 %426
  %428 = vrot.lane.b32.xlu0 %v284, 64
  %v429 = vpop.permute.xlu0 %428
  %v446 = vsel %vm285, %v399, 0.0
  %447 = vadd.xlane.f32.xlu0 %v446
  %v448 = vpop.xlane.xlu0 %447
  %v449 = vsel %vm285, %v401, 0.0
  %450 = vadd.xlane.f32.xlu0 %v449
  %v451 = vpop.xlane.xlu0 %450
  %v452 = vsel %vm285, %v403, 0.0
  %453 = vadd.xlane.f32.xlu0 %v452
  %v454 = vpop.xlane.xlu0 %453
  %v455 = vsel %vm285, %v405, 0.0
  %456 = vadd.xlane.f32.xlu0 %v455
  %v457 = vpop.xlane.xlu0 %456
  %v458 = vsel %vm285, %v407, 0.0
  %459 = vadd.xlane.f32.xlu0 %v458
  %v460 = vpop.xlane.xlu0 %459
  %v461 = vsel %vm285, %v409, 0.0
  %462 = vadd.xlane.f32.xlu0 %v461
  %v463 = vpop.xlane.xlu0 %462
  %v464 = vsel %vm285, %v411, 0.0
  %465 = vadd.xlane.f32.xlu0 %v464
  %v466 = vpop.xlane.xlu0 %465
  %v467 = vsel %vm285, %v413, 0.0
  %468 = vadd.xlane.f32.xlu0 %v467
  %v469 = vpop.xlane.xlu0 %468
  %v470 = vsel %vm285, %v415, 0.0
  %471 = vadd.xlane.f32.xlu0 %v470
  %v472 = vpop.xlane.xlu0 %471
  %v473 = vsel %vm285, %v417, 0.0
  %474 = vadd.xlane.f32.xlu0 %v473
  %v475 = vpop.xlane.xlu0 %474
  %v476 = vsel %vm285, %v419, 0.0
  %477 = vadd.xlane.f32.xlu0 %v476
  %v478 = vpop.xlane.xlu0 %477
  %v479 = vsel %vm285, %v421, 0.0
  %480 = vadd.xlane.f32.xlu0 %v479
  %v481 = vpop.xlane.xlu0 %480
  %v482 = vsel %vm285, %v423, 0.0
  %483 = vadd.xlane.f32.xlu0 %v482
  %v484 = vpop.xlane.xlu0 %483
  %v485 = vsel %vm285, %v425, 0.0
  %486 = vadd.xlane.f32.xlu0 %v485
  %v487 = vpop.xlane.xlu0 %486
  %v488 = vsel %vm285, %v427, 0.0
  %489 = vadd.xlane.f32.xlu0 %v488
  %v490 = vpop.xlane.xlu0 %489
  %v491 = vsel %vm285, %v429, 0.0
  %492 = vadd.xlane.f32.xlu0 %v491
  %v493 = vpop.xlane.xlu0 %492
  %v494 = vmax.f32 %v448, 1e-24
  %v495 = vmax.f32 %v451, 1e-24
  %v496 = vmax.f32 %v454, 1e-24
  %v497 = vmax.f32 %v457, 1e-24
  %v498 = vmax.f32 %v460, 1e-24
  %v499 = vmax.f32 %v463, 1e-24
  %v500 = vmax.f32 %v466, 1e-24
  %v501 = vmax.f32 %v469, 1e-24
  %v502 = vmax.f32 %v472, 1e-24
  %v503 = vmax.f32 %v475, 1e-24
  %v504 = vmax.f32 %v478, 1e-24
  %v505 = vmax.f32 %v481, 1e-24
  %v506 = vmax.f32 %v484, 1e-24
  %v507 = vmax.f32 %v487, 1e-24
  %v508 = vmax.f32 %v490, 1e-24
  %v509 = vmax.f32 %v493, 1e-24
  %v510 = vrsqrt.pop %v494
  %v511 = vrsqrt.pop %v495
  %v512 = vrsqrt.pop %v496
  %v513 = vrsqrt.pop %v497
  %v514 = vrsqrt.pop %v498
  %v515 = vrsqrt.pop %v499
  %v516 = vrsqrt.pop %v500
  %v517 = vrsqrt.pop %v501
  %v518 = vrsqrt.pop %v502
  %v519 = vrsqrt.pop %v503
  %v520 = vrsqrt.pop %v504
  %v521 = vrsqrt.pop %v505
  %v522 = vrsqrt.pop %v506
  %v523 = vrsqrt.pop %v507
  %v524 = vrsqrt.pop %v508
  %v525 = vrsqrt.pop %v509
  %v526 = vmul.f32 %v171, %v510
  %v527 = vmul.f32 %v175, %v511
  %v528 = vmul.f32 %v181, %v512
  %v529 = vmul.f32 %v185, %v513
  %v530 = vmul.f32 %v194, %v514
  %v531 = vmul.f32 %v196, %v515
  %v532 = vmul.f32 %v198, %v516
  %v533 = vmul.f32 %v200, %v517
  %v534 = vmul.f32 %v206, %v518
  %v535 = vmul.f32 %v208, %v519
  %v536 = vmul.f32 %v210, %v520
  %v537 = vmul.f32 %v212, %v521
  %v538 = vmul.f32 %v218, %v522
  %v539 = vmul.f32 %v220, %v523
  %v540 = vmul.f32 %v222, %v524
  %v541 = vmul.f32 %v224, %v525
  %v542 = vld [vmem:[%s5] sm:$0x1]
  %v543 = vld [vmem:[%s5 + $0x1] sm:$0x1]
  %v544 = vld [vmem:[%s5 + $0x2] sm:$0x1]
  %v545 = vld [vmem:[%s5 + $0x3] sm:$0x1]
  %v546 = vld [vmem:[%s5 + $0x4] sm:$0x1]
  %v547 = vld [vmem:[%s5 + $0x5] sm:$0x1]
  %v548 = vld [vmem:[%s5 + $0x6] sm:$0x1]
  %v549 = vld [vmem:[%s5 + $0x7] sm:$0x1]
  %v558 = vlaneseq
  %v559 = vshrl.u32 %v558, 7
  %v560 = vsub.s32 0, %v559
  %v561 = vrot.slane %v542, %v560
  %v562 = vlaneseq
  %v563 = vshrl.u32 %v562, 7
  %v564 = vsub.s32 0, %v563
  %v565 = vrot.slane %v543, %v564
  %v566 = vlaneseq
  %v567 = vshrl.u32 %v566, 7
  %v568 = vsub.s32 0, %v567
  %v569 = vrot.slane %v544, %v568
  %v570 = vlaneseq
  %v571 = vshrl.u32 %v570, 7
  %v572 = vsub.s32 0, %v571
  %v573 = vrot.slane %v545, %v572
  %v574 = vlaneseq
  %v575 = vshrl.u32 %v574, 7
  %v576 = vsub.s32 0, %v575
  %v577 = vrot.slane %v546, %v576
  %v578 = vlaneseq
  %v579 = vshrl.u32 %v578, 7
  %v580 = vsub.s32 0, %v579
  %v581 = vrot.slane %v547, %v580
  %v582 = vlaneseq
  %v583 = vshrl.u32 %v582, 7
  %v584 = vsub.s32 0, %v583
  %v585 = vrot.slane %v548, %v584
  %v586 = vlaneseq
  %v587 = vshrl.u32 %v586, 7
  %v588 = vsub.s32 0, %v587
  %v589 = vrot.slane %v549, %v588
  %590 = vset.pattern.permute.xlu0 0
  %591 = vperm.xlu0 %590, %v561
  %v592 = vpop.permute.xlu0 %591
  %594 = vset.pattern.permute.xlu0 0
  %595 = vperm.xlu0 %594, %v565
  %v596 = vpop.permute.xlu0 %595
  %598 = vset.pattern.permute.xlu0 0
  %599 = vperm.xlu0 %598, %v569
  %v600 = vpop.permute.xlu0 %599
  %602 = vset.pattern.permute.xlu0 0
  %603 = vperm.xlu0 %602, %v573
  %v604 = vpop.permute.xlu0 %603
  %606 = vset.pattern.permute.xlu0 0
  %607 = vperm.xlu0 %606, %v577
  %v608 = vpop.permute.xlu0 %607
  %610 = vset.pattern.permute.xlu0 0
  %611 = vperm.xlu0 %610, %v581
  %v612 = vpop.permute.xlu0 %611
  %614 = vset.pattern.permute.xlu0 0
  %615 = vperm.xlu0 %614, %v585
  %v616 = vpop.permute.xlu0 %615
  %618 = vset.pattern.permute.xlu0 0
  %619 = vperm.xlu0 %618, %v589
  %v620 = vpop.permute.xlu0 %619
  %v622 = vmul.f32 %v366, %v592
  %v623 = vmul.f32 %v367, %v592
  %v624 = vmul.f32 %v368, %v596
  %v625 = vmul.f32 %v369, %v596
  %v626 = vmul.f32 %v370, %v600
  %v627 = vmul.f32 %v371, %v600
  %v628 = vmul.f32 %v372, %v604
  %v629 = vmul.f32 %v373, %v604
  %v630 = vmul.f32 %v374, %v608
  %v631 = vmul.f32 %v375, %v608
  %v632 = vmul.f32 %v376, %v612
  %v633 = vmul.f32 %v377, %v612
  %v634 = vmul.f32 %v378, %v616
  %v635 = vmul.f32 %v379, %v616
  %v636 = vmul.f32 %v380, %v620
  %v637 = vmul.f32 %v381, %v620
  %v638 = vpack.c.bf16 %v623, %v622
  %v639 = vpack.c.bf16 %v625, %v624
  %v640 = vpack.c.bf16 %v627, %v626
  %v641 = vpack.c.bf16 %v629, %v628
  %v642 = vpack.c.bf16 %v631, %v630
  %v643 = vpack.c.bf16 %v633, %v632
  %v644 = vpack.c.bf16 %v635, %v634
  %v645 = vpack.c.bf16 %v637, %v636
  %v646 = vpack.c.bf16 %v527, %v526
  %v647 = vpack.c.bf16 %v529, %v528
  %v648 = vpack.c.bf16 %v531, %v530
  %v649 = vpack.c.bf16 %v533, %v532
  %v650 = vpack.c.bf16 %v535, %v534
  %v651 = vpack.c.bf16 %v537, %v536
  %v652 = vpack.c.bf16 %v539, %v538
  %v653 = vpack.c.bf16 %v541, %v540
  %v654 = vld [vmem:[%s6] sm:$0xff]
  %v655 = vld [vmem:[%s6 + $0x8] sm:$0xff]
  %v656 = vld [vmem:[%s6 + $0x10] sm:$0xff]
  %v657 = vld [vmem:[%s6 + $0x18] sm:$0xff]
  %v658 = vld [vmem:[%s6 + $0x20] sm:$0xff]
  %v659 = vld [vmem:[%s6 + $0x28] sm:$0xff]
  %v660 = vld [vmem:[%s6 + $0x30] sm:$0xff]
  %v661 = vld [vmem:[%s6 + $0x38] sm:$0xff]
  %v662 = vld [vmem:[%s6 + $0x40] sm:$0xff]
  %v663 = vld [vmem:[%s6 + $0x48] sm:$0xff]
  %v664 = vld [vmem:[%s6 + $0x50] sm:$0xff]
  %v665 = vld [vmem:[%s6 + $0x58] sm:$0xff]
  %v666 = vld [vmem:[%s6 + $0x60] sm:$0xff]
  %v667 = vld [vmem:[%s6 + $0x68] sm:$0xff]
  %v668 = vld [vmem:[%s6 + $0x70] sm:$0xff]
  %v669 = vld [vmem:[%s6 + $0x78] sm:$0xff]
  %671 = vrot.lane.b32.xlu0 %v646, 64
  %v672 = vpop.permute.xlu0 %671
  %v674 = vsel %vm285, %v638, 0
  %v677 = vsel %vm285, %v672, 0
  %679 = vmatprep.subr.bf16.mxu0 0
  %680 = vmatpush1.bf16.xpose.msra.mxu0 %v677
  %681 = vmatprep.subr.bf16.mxu0 0
  %682 = vmatpush1.bf16.xpose.msra.mxu0 0
  %683 = vmatprep.subr.bf16.mxu0 0
  %684 = vmatpush1.bf16.xpose.msra.mxu0 0
  %685 = vmatprep.subr.bf16.mxu0 0
  %686 = vmatpush1.bf16.xpose.msra.mxu0 0
  %687 = vmatprep.subr.bf16.mxu0 0
  %688 = vmatpush1.bf16.xpose.msra.mxu0 0
  %689 = vmatprep.subr.bf16.mxu0 0
  %690 = vmatpush1.bf16.xpose.msra.mxu0 0
  %691 = vmatprep.subr.bf16.mxu0 0
  %692 = vmatpush1.bf16.xpose.msra.mxu0 0
  %693 = vmatprep.subr.bf16.mxu0 0
  %694 = vmatpush1.bf16.xpose.msra.mxu0 0
  %695 = vmatprep.subr.bf16.mxu0 0
  %696 = vmatpush1.bf16.xpose.msra.mxu0 0
  %697 = vmatprep.subr.bf16.mxu0 0
  %698 = vmatpush1.bf16.xpose.msra.mxu0 0
  %699 = vmatprep.subr.bf16.mxu0 0
  %700 = vmatpush1.bf16.xpose.msra.mxu0 0
  %701 = vmatprep.subr.bf16.mxu0 0
  %702 = vmatpush1.bf16.xpose.msra.mxu0 0
  %703 = vmatprep.subr.bf16.mxu0 0
  %704 = vmatpush1.bf16.xpose.msra.mxu0 0
  %705 = vmatprep.subr.bf16.mxu0 0
  %706 = vmatpush1.bf16.xpose.msra.mxu0 0
  %707 = vmatprep.subr.bf16.mxu0 0
  %708 = vmatpush1.bf16.xpose.msra.mxu0 0
  %709 = vmatprep.subr.bf16.mxu0 0
  %710 = vmatpush1.bf16.xpose.msra.mxu0 0
  %711 = vmatprep.mubr.bf16.mxu0 0
  %712 = vmatmul.mubr.bf16.gmra.mrb[0].mxu0 %v674
  %v713 = vpop.f32.mrb[0].mxu0
  %v714 = vadd.f32 %v654, %v713
  %v715 = vpop.f32.mrb[0].mxu0
  %v716 = vpop.f32.mrb[0].mxu0
  %v717 = vadd.f32 %v655, %v716
  %v718 = vpop.f32.mrb[0].mxu0
  %719 = vdwg.mxu0
  %721 = vrot.lane.b32.xlu0 %v647, 64
  %v722 = vpop.permute.xlu0 %721
  %v724 = vsel %vm285, %v639, 0
  %v727 = vsel %vm285, %v722, 0
  %729 = vmatprep.subr.bf16.mxu0 0
  %730 = vmatpush1.bf16.xpose.msra.mxu0 %v727
  %731 = vmatprep.subr.bf16.mxu0 0
  %732 = vmatpush1.bf16.xpose.msra.mxu0 0
  %733 = vmatprep.subr.bf16.mxu0 0
  %734 = vmatpush1.bf16.xpose.msra.mxu0 0
  %735 = vmatprep.subr.bf16.mxu0 0
  %736 = vmatpush1.bf16.xpose.msra.mxu0 0
  %737 = vmatprep.subr.bf16.mxu0 0
  %738 = vmatpush1.bf16.xpose.msra.mxu0 0
  %739 = vmatprep.subr.bf16.mxu0 0
  %740 = vmatpush1.bf16.xpose.msra.mxu0 0
  %741 = vmatprep.subr.bf16.mxu0 0
  %742 = vmatpush1.bf16.xpose.msra.mxu0 0
  %743 = vmatprep.subr.bf16.mxu0 0
  %744 = vmatpush1.bf16.xpose.msra.mxu0 0
  %745 = vmatprep.subr.bf16.mxu0 0
  %746 = vmatpush1.bf16.xpose.msra.mxu0 0
  %747 = vmatprep.subr.bf16.mxu0 0
  %748 = vmatpush1.bf16.xpose.msra.mxu0 0
  %749 = vmatprep.subr.bf16.mxu0 0
  %750 = vmatpush1.bf16.xpose.msra.mxu0 0
  %751 = vmatprep.subr.bf16.mxu0 0
  %752 = vmatpush1.bf16.xpose.msra.mxu0 0
  %753 = vmatprep.subr.bf16.mxu0 0
  %754 = vmatpush1.bf16.xpose.msra.mxu0 0
  %755 = vmatprep.subr.bf16.mxu0 0
  %756 = vmatpush1.bf16.xpose.msra.mxu0 0
  %757 = vmatprep.subr.bf16.mxu0 0
  %758 = vmatpush1.bf16.xpose.msra.mxu0 0
  %759 = vmatprep.subr.bf16.mxu0 0
  %760 = vmatpush1.bf16.xpose.msra.mxu0 0
  %761 = vmatprep.mubr.bf16.mxu0 0
  %762 = vmatmul.mubr.bf16.gmra.mrb[0].mxu0 %v724
  %v763 = vpop.f32.mrb[0].mxu0
  %v764 = vadd.f32 %v656, %v763
  %v765 = vpop.f32.mrb[0].mxu0
  %v766 = vpop.f32.mrb[0].mxu0
  %v767 = vadd.f32 %v657, %v766
  %v768 = vpop.f32.mrb[0].mxu0
  %769 = vdwg.mxu0
  %771 = vrot.lane.b32.xlu0 %v648, 64
  %v772 = vpop.permute.xlu0 %771
  %v774 = vsel %vm285, %v640, 0
  %v777 = vsel %vm285, %v772, 0
  %779 = vmatprep.subr.bf16.mxu0 0
  %780 = vmatpush1.bf16.xpose.msra.mxu0 %v777
  %781 = vmatprep.subr.bf16.mxu0 0
  %782 = vmatpush1.bf16.xpose.msra.mxu0 0
  %783 = vmatprep.subr.bf16.mxu0 0
  %784 = vmatpush1.bf16.xpose.msra.mxu0 0
  %785 = vmatprep.subr.bf16.mxu0 0
  %786 = vmatpush1.bf16.xpose.msra.mxu0 0
  %787 = vmatprep.subr.bf16.mxu0 0
  %788 = vmatpush1.bf16.xpose.msra.mxu0 0
  %789 = vmatprep.subr.bf16.mxu0 0
  %790 = vmatpush1.bf16.xpose.msra.mxu0 0
  %791 = vmatprep.subr.bf16.mxu0 0
  %792 = vmatpush1.bf16.xpose.msra.mxu0 0
  %793 = vmatprep.subr.bf16.mxu0 0
  %794 = vmatpush1.bf16.xpose.msra.mxu0 0
  %795 = vmatprep.subr.bf16.mxu0 0
  %796 = vmatpush1.bf16.xpose.msra.mxu0 0
  %797 = vmatprep.subr.bf16.mxu0 0
  %798 = vmatpush1.bf16.xpose.msra.mxu0 0
  %799 = vmatprep.subr.bf16.mxu0 0
  %800 = vmatpush1.bf16.xpose.msra.mxu0 0
  %801 = vmatprep.subr.bf16.mxu0 0
  %802 = vmatpush1.bf16.xpose.msra.mxu0 0
  %803 = vmatprep.subr.bf16.mxu0 0
  %804 = vmatpush1.bf16.xpose.msra.mxu0 0
  %805 = vmatprep.subr.bf16.mxu0 0
  %806 = vmatpush1.bf16.xpose.msra.mxu0 0
  %807 = vmatprep.subr.bf16.mxu0 0
  %808 = vmatpush1.bf16.xpose.msra.mxu0 0
  %809 = vmatprep.subr.bf16.mxu0 0
  %810 = vmatpush1.bf16.xpose.msra.mxu0 0
  %811 = vmatprep.mubr.bf16.mxu0 0
  %812 = vmatmul.mubr.bf16.gmra.mrb[0].mxu0 %v774
  %v813 = vpop.f32.mrb[0].mxu0
  %v814 = vadd.f32 %v658, %v813
  %v815 = vpop.f32.mrb[0].mxu0
  %v816 = vpop.f32.mrb[0].mxu0
  %v817 = vadd.f32 %v659, %v816
  %v818 = vpop.f32.mrb[0].mxu0
  %819 = vdwg.mxu0
  %821 = vrot.lane.b32.xlu0 %v649, 64
  %v822 = vpop.permute.xlu0 %821
  %v824 = vsel %vm285, %v641, 0
  %v827 = vsel %vm285, %v822, 0
  %829 = vmatprep.subr.bf16.mxu0 0
  %830 = vmatpush1.bf16.xpose.msra.mxu0 %v827
  %831 = vmatprep.subr.bf16.mxu0 0
  %832 = vmatpush1.bf16.xpose.msra.mxu0 0
  %833 = vmatprep.subr.bf16.mxu0 0
  %834 = vmatpush1.bf16.xpose.msra.mxu0 0
  %835 = vmatprep.subr.bf16.mxu0 0
  %836 = vmatpush1.bf16.xpose.msra.mxu0 0
  %837 = vmatprep.subr.bf16.mxu0 0
  %838 = vmatpush1.bf16.xpose.msra.mxu0 0
  %839 = vmatprep.subr.bf16.mxu0 0
  %840 = vmatpush1.bf16.xpose.msra.mxu0 0
  %841 = vmatprep.subr.bf16.mxu0 0
  %842 = vmatpush1.bf16.xpose.msra.mxu0 0
  %843 = vmatprep.subr.bf16.mxu0 0
  %844 = vmatpush1.bf16.xpose.msra.mxu0 0
  %845 = vmatprep.subr.bf16.mxu0 0
  %846 = vmatpush1.bf16.xpose.msra.mxu0 0
  %847 = vmatprep.subr.bf16.mxu0 0
  %848 = vmatpush1.bf16.xpose.msra.mxu0 0
  %849 = vmatprep.subr.bf16.mxu0 0
  %850 = vmatpush1.bf16.xpose.msra.mxu0 0
  %851 = vmatprep.subr.bf16.mxu0 0
  %852 = vmatpush1.bf16.xpose.msra.mxu0 0
  %853 = vmatprep.subr.bf16.mxu0 0
  %854 = vmatpush1.bf16.xpose.msra.mxu0 0
  %855 = vmatprep.subr.bf16.mxu0 0
  %856 = vmatpush1.bf16.xpose.msra.mxu0 0
  %857 = vmatprep.subr.bf16.mxu0 0
  %858 = vmatpush1.bf16.xpose.msra.mxu0 0
  %859 = vmatprep.subr.bf16.mxu0 0
  %860 = vmatpush1.bf16.xpose.msra.mxu0 0
  %861 = vmatprep.mubr.bf16.mxu0 0
  %862 = vmatmul.mubr.bf16.gmra.mrb[0].mxu0 %v824
  %v863 = vpop.f32.mrb[0].mxu0
  %v864 = vadd.f32 %v660, %v863
  %v865 = vpop.f32.mrb[0].mxu0
  %v866 = vpop.f32.mrb[0].mxu0
  %v867 = vadd.f32 %v661, %v866
  %v868 = vpop.f32.mrb[0].mxu0
  %869 = vdwg.mxu0
  %871 = vrot.lane.b32.xlu0 %v650, 64
  %v872 = vpop.permute.xlu0 %871
  %v874 = vsel %vm285, %v642, 0
  %v877 = vsel %vm285, %v872, 0
  %879 = vmatprep.subr.bf16.mxu0 0
  %880 = vmatpush1.bf16.xpose.msra.mxu0 %v877
  %881 = vmatprep.subr.bf16.mxu0 0
  %882 = vmatpush1.bf16.xpose.msra.mxu0 0
  %883 = vmatprep.subr.bf16.mxu0 0
  %884 = vmatpush1.bf16.xpose.msra.mxu0 0
  %885 = vmatprep.subr.bf16.mxu0 0
  %886 = vmatpush1.bf16.xpose.msra.mxu0 0
  %887 = vmatprep.subr.bf16.mxu0 0
  %888 = vmatpush1.bf16.xpose.msra.mxu0 0
  %889 = vmatprep.subr.bf16.mxu0 0
  %890 = vmatpush1.bf16.xpose.msra.mxu0 0
  %891 = vmatprep.subr.bf16.mxu0 0
  %892 = vmatpush1.bf16.xpose.msra.mxu0 0
  %893 = vmatprep.subr.bf16.mxu0 0
  %894 = vmatpush1.bf16.xpose.msra.mxu0 0
  %895 = vmatprep.subr.bf16.mxu0 0
  %896 = vmatpush1.bf16.xpose.msra.mxu0 0
  %897 = vmatprep.subr.bf16.mxu0 0
  %898 = vmatpush1.bf16.xpose.msra.mxu0 0
  %899 = vmatprep.subr.bf16.mxu0 0
  %900 = vmatpush1.bf16.xpose.msra.mxu0 0
  %901 = vmatprep.subr.bf16.mxu0 0
  %902 = vmatpush1.bf16.xpose.msra.mxu0 0
  %903 = vmatprep.subr.bf16.mxu0 0
  %904 = vmatpush1.bf16.xpose.msra.mxu0 0
  %905 = vmatprep.subr.bf16.mxu0 0
  %906 = vmatpush1.bf16.xpose.msra.mxu0 0
  %907 = vmatprep.subr.bf16.mxu0 0
  %908 = vmatpush1.bf16.xpose.msra.mxu0 0
  %909 = vmatprep.subr.bf16.mxu0 0
  %910 = vmatpush1.bf16.xpose.msra.mxu0 0
  %911 = vmatprep.mubr.bf16.mxu0 0
  %912 = vmatmul.mubr.bf16.gmra.mrb[0].mxu0 %v874
  %v913 = vpop.f32.mrb[0].mxu0
  %v914 = vadd.f32 %v662, %v913
  %v915 = vpop.f32.mrb[0].mxu0
  %v916 = vpop.f32.mrb[0].mxu0
  %v917 = vadd.f32 %v663, %v916
  %v918 = vpop.f32.mrb[0].mxu0
  %919 = vdwg.mxu0
  %921 = vrot.lane.b32.xlu0 %v651, 64
  %v922 = vpop.permute.xlu0 %921
  %v924 = vsel %vm285, %v643, 0
  %v927 = vsel %vm285, %v922, 0
  %929 = vmatprep.subr.bf16.mxu0 0
  %930 = vmatpush1.bf16.xpose.msra.mxu0 %v927
  %931 = vmatprep.subr.bf16.mxu0 0
  %932 = vmatpush1.bf16.xpose.msra.mxu0 0
  %933 = vmatprep.subr.bf16.mxu0 0
  %934 = vmatpush1.bf16.xpose.msra.mxu0 0
  %935 = vmatprep.subr.bf16.mxu0 0
  %936 = vmatpush1.bf16.xpose.msra.mxu0 0
  %937 = vmatprep.subr.bf16.mxu0 0
  %938 = vmatpush1.bf16.xpose.msra.mxu0 0
  %939 = vmatprep.subr.bf16.mxu0 0
  %940 = vmatpush1.bf16.xpose.msra.mxu0 0
  %941 = vmatprep.subr.bf16.mxu0 0
  %942 = vmatpush1.bf16.xpose.msra.mxu0 0
  %943 = vmatprep.subr.bf16.mxu0 0
  %944 = vmatpush1.bf16.xpose.msra.mxu0 0
  %945 = vmatprep.subr.bf16.mxu0 0
  %946 = vmatpush1.bf16.xpose.msra.mxu0 0
  %947 = vmatprep.subr.bf16.mxu0 0
  %948 = vmatpush1.bf16.xpose.msra.mxu0 0
  %949 = vmatprep.subr.bf16.mxu0 0
  %950 = vmatpush1.bf16.xpose.msra.mxu0 0
  %951 = vmatprep.subr.bf16.mxu0 0
  %952 = vmatpush1.bf16.xpose.msra.mxu0 0
  %953 = vmatprep.subr.bf16.mxu0 0
  %954 = vmatpush1.bf16.xpose.msra.mxu0 0
  %955 = vmatprep.subr.bf16.mxu0 0
  %956 = vmatpush1.bf16.xpose.msra.mxu0 0
  %957 = vmatprep.subr.bf16.mxu0 0
  %958 = vmatpush1.bf16.xpose.msra.mxu0 0
  %959 = vmatprep.subr.bf16.mxu0 0
  %960 = vmatpush1.bf16.xpose.msra.mxu0 0
  %961 = vmatprep.mubr.bf16.mxu0 0
  %962 = vmatmul.mubr.bf16.gmra.mrb[0].mxu0 %v924
  %v963 = vpop.f32.mrb[0].mxu0
  %v964 = vadd.f32 %v664, %v963
  %v965 = vpop.f32.mrb[0].mxu0
  %v966 = vpop.f32.mrb[0].mxu0
  %v967 = vadd.f32 %v665, %v966
  %v968 = vpop.f32.mrb[0].mxu0
  %969 = vdwg.mxu0
  %971 = vrot.lane.b32.xlu0 %v652, 64
  %v972 = vpop.permute.xlu0 %971
  %v974 = vsel %vm285, %v644, 0
  %v977 = vsel %vm285, %v972, 0
  %979 = vmatprep.subr.bf16.mxu0 0
  %980 = vmatpush1.bf16.xpose.msra.mxu0 %v977
  %981 = vmatprep.subr.bf16.mxu0 0
  %982 = vmatpush1.bf16.xpose.msra.mxu0 0
  %983 = vmatprep.subr.bf16.mxu0 0
  %984 = vmatpush1.bf16.xpose.msra.mxu0 0
  %985 = vmatprep.subr.bf16.mxu0 0
  %986 = vmatpush1.bf16.xpose.msra.mxu0 0
  %987 = vmatprep.subr.bf16.mxu0 0
  %988 = vmatpush1.bf16.xpose.msra.mxu0 0
  %989 = vmatprep.subr.bf16.mxu0 0
  %990 = vmatpush1.bf16.xpose.msra.mxu0 0
  %991 = vmatprep.subr.bf16.mxu0 0
  %992 = vmatpush1.bf16.xpose.msra.mxu0 0
  %993 = vmatprep.subr.bf16.mxu0 0
  %994 = vmatpush1.bf16.xpose.msra.mxu0 0
  %995 = vmatprep.subr.bf16.mxu0 0
  %996 = vmatpush1.bf16.xpose.msra.mxu0 0
  %997 = vmatprep.subr.bf16.mxu0 0
  %998 = vmatpush1.bf16.xpose.msra.mxu0 0
  %999 = vmatprep.subr.bf16.mxu0 0
  %1000 = vmatpush1.bf16.xpose.msra.mxu0 0
  %1001 = vmatprep.subr.bf16.mxu0 0
  %1002 = vmatpush1.bf16.xpose.msra.mxu0 0
  %1003 = vmatprep.subr.bf16.mxu0 0
  %1004 = vmatpush1.bf16.xpose.msra.mxu0 0
  %1005 = vmatprep.subr.bf16.mxu0 0
  %1006 = vmatpush1.bf16.xpose.msra.mxu0 0
  %1007 = vmatprep.subr.bf16.mxu0 0
  %1008 = vmatpush1.bf16.xpose.msra.mxu0 0
  %1009 = vmatprep.subr.bf16.mxu0 0
  %1010 = vmatpush1.bf16.xpose.msra.mxu0 0
  %1011 = vmatprep.mubr.bf16.mxu0 0
  %1012 = vmatmul.mubr.bf16.gmra.mrb[0].mxu0 %v974
  %v1013 = vpop.f32.mrb[0].mxu0
  %v1014 = vadd.f32 %v666, %v1013
  %v1015 = vpop.f32.mrb[0].mxu0
  %v1016 = vpop.f32.mrb[0].mxu0
  %v1017 = vadd.f32 %v667, %v1016
  %v1018 = vpop.f32.mrb[0].mxu0
  %1019 = vdwg.mxu0
  %1021 = vrot.lane.b32.xlu0 %v653, 64
  %v1022 = vpop.permute.xlu0 %1021
  %v1024 = vsel %vm285, %v645, 0
  %v1027 = vsel %vm285, %v1022, 0
  %1029 = vmatprep.subr.bf16.mxu0 0
  %1030 = vmatpush1.bf16.xpose.msra.mxu0 %v1027
  %1031 = vmatprep.subr.bf16.mxu0 0
  %1032 = vmatpush1.bf16.xpose.msra.mxu0 0
  %1033 = vmatprep.subr.bf16.mxu0 0
  %1034 = vmatpush1.bf16.xpose.msra.mxu0 0
  %1035 = vmatprep.subr.bf16.mxu0 0
  %1036 = vmatpush1.bf16.xpose.msra.mxu0 0
  %1037 = vmatprep.subr.bf16.mxu0 0
  %1038 = vmatpush1.bf16.xpose.msra.mxu0 0
  %1039 = vmatprep.subr.bf16.mxu0 0
  %1040 = vmatpush1.bf16.xpose.msra.mxu0 0
  %1041 = vmatprep.subr.bf16.mxu0 0
  %1042 = vmatpush1.bf16.xpose.msra.mxu0 0
  %1043 = vmatprep.subr.bf16.mxu0 0
  %1044 = vmatpush1.bf16.xpose.msra.mxu0 0
  %1045 = vmatprep.subr.bf16.mxu0 0
  %1046 = vmatpush1.bf16.xpose.msra.mxu0 0
  %1047 = vmatprep.subr.bf16.mxu0 0
  %1048 = vmatpush1.bf16.xpose.msra.mxu0 0
  %1049 = vmatprep.subr.bf16.mxu0 0
  %1050 = vmatpush1.bf16.xpose.msra.mxu0 0
  %1051 = vmatprep.subr.bf16.mxu0 0
  %1052 = vmatpush1.bf16.xpose.msra.mxu0 0
  %1053 = vmatprep.subr.bf16.mxu0 0
  %1054 = vmatpush1.bf16.xpose.msra.mxu0 0
  %1055 = vmatprep.subr.bf16.mxu0 0
  %1056 = vmatpush1.bf16.xpose.msra.mxu0 0
  %1057 = vmatprep.subr.bf16.mxu0 0
  %1058 = vmatpush1.bf16.xpose.msra.mxu0 0
  %1059 = vmatprep.subr.bf16.mxu0 0
  %1060 = vmatpush1.bf16.xpose.msra.mxu0 0
  %1061 = vmatprep.mubr.bf16.mxu0 0
  %1062 = vmatmul.mubr.bf16.gmra.mrb[0].mxu0 %v1024
  %v1063 = vpop.f32.mrb[0].mxu0
  %v1064 = vadd.f32 %v668, %v1063
  %v1065 = vpop.f32.mrb[0].mxu0
  %v1066 = vpop.f32.mrb[0].mxu0
  %v1067 = vadd.f32 %v669, %v1066
  %v1068 = vpop.f32.mrb[0].mxu0
  %1069 = vdwg.mxu0
  %v1070 = vsel %vm285, %v714, -inf
  %1071 = vmax.xlane.f32.xlu0 %v1070
  %v1072 = vpop.xlane.xlu0 %1071
  %v1073 = vsel %vm285, %v717, -inf
  %1074 = vmax.xlane.f32.xlu0 %v1073
  %v1075 = vpop.xlane.xlu0 %1074
  %v1076 = vsel %vm285, %v764, -inf
  %1077 = vmax.xlane.f32.xlu0 %v1076
  %v1078 = vpop.xlane.xlu0 %1077
  %v1079 = vsel %vm285, %v767, -inf
  %1080 = vmax.xlane.f32.xlu0 %v1079
  %v1081 = vpop.xlane.xlu0 %1080
  %v1082 = vsel %vm285, %v814, -inf
  %1083 = vmax.xlane.f32.xlu0 %v1082
  %v1084 = vpop.xlane.xlu0 %1083
  %v1085 = vsel %vm285, %v817, -inf
  %1086 = vmax.xlane.f32.xlu0 %v1085
  %v1087 = vpop.xlane.xlu0 %1086
  %v1088 = vsel %vm285, %v864, -inf
  %1089 = vmax.xlane.f32.xlu0 %v1088
  %v1090 = vpop.xlane.xlu0 %1089
  %v1091 = vsel %vm285, %v867, -inf
  %1092 = vmax.xlane.f32.xlu0 %v1091
  %v1093 = vpop.xlane.xlu0 %1092
  %v1094 = vsel %vm285, %v914, -inf
  %1095 = vmax.xlane.f32.xlu0 %v1094
  %v1096 = vpop.xlane.xlu0 %1095
  %v1097 = vsel %vm285, %v917, -inf
  %1098 = vmax.xlane.f32.xlu0 %v1097
  %v1099 = vpop.xlane.xlu0 %1098
  %v1100 = vsel %vm285, %v964, -inf
  %1101 = vmax.xlane.f32.xlu0 %v1100
  %v1102 = vpop.xlane.xlu0 %1101
  %v1103 = vsel %vm285, %v967, -inf
  %1104 = vmax.xlane.f32.xlu0 %v1103
  %v1105 = vpop.xlane.xlu0 %1104
  %v1106 = vsel %vm285, %v1014, -inf
  %1107 = vmax.xlane.f32.xlu0 %v1106
  %v1108 = vpop.xlane.xlu0 %1107
  %v1109 = vsel %vm285, %v1017, -inf
  %1110 = vmax.xlane.f32.xlu0 %v1109
  %v1111 = vpop.xlane.xlu0 %1110
  %v1112 = vsel %vm285, %v1064, -inf
  %1113 = vmax.xlane.f32.xlu0 %v1112
  %v1114 = vpop.xlane.xlu0 %1113
  %v1115 = vsel %vm285, %v1067, -inf
  %1116 = vmax.xlane.f32.xlu0 %v1115
  %v1117 = vpop.xlane.xlu0 %1116
  %v1118 = vsub.f32 %v714, %v1072
  %v1119 = vsub.f32 %v717, %v1075
  %v1120 = vsub.f32 %v764, %v1078
  %v1121 = vsub.f32 %v767, %v1081
  %v1122 = vsub.f32 %v814, %v1084
  %v1123 = vsub.f32 %v817, %v1087
  %v1124 = vsub.f32 %v864, %v1090
  %v1125 = vsub.f32 %v867, %v1093
  %v1126 = vsub.f32 %v914, %v1096
  %v1127 = vsub.f32 %v917, %v1099
  %v1128 = vsub.f32 %v964, %v1102
  %v1129 = vsub.f32 %v967, %v1105
  %v1130 = vsub.f32 %v1014, %v1108
  %v1131 = vsub.f32 %v1017, %v1111
  %v1132 = vsub.f32 %v1064, %v1114
  %v1133 = vsub.f32 %v1067, %v1117
  %v1134 = vmul.f32 %v1118, 1.442695
  %v1135 = vpow.pop %v1134
  %v1136 = vmul.f32 %v1119, 1.442695
  %v1137 = vpow.pop %v1136
  %v1138 = vmul.f32 %v1120, 1.442695
  %v1139 = vpow.pop %v1138
  %v1140 = vmul.f32 %v1121, 1.442695
  %v1141 = vpow.pop %v1140
  %v1142 = vmul.f32 %v1122, 1.442695
  %v1143 = vpow.pop %v1142
  %v1144 = vmul.f32 %v1123, 1.442695
  %v1145 = vpow.pop %v1144
  %v1146 = vmul.f32 %v1124, 1.442695
  %v1147 = vpow.pop %v1146
  %v1148 = vmul.f32 %v1125, 1.442695
  %v1149 = vpow.pop %v1148
  %v1150 = vmul.f32 %v1126, 1.442695
  %v1151 = vpow.pop %v1150
  %v1152 = vmul.f32 %v1127, 1.442695
  %v1153 = vpow.pop %v1152
  %v1154 = vmul.f32 %v1128, 1.442695
  %v1155 = vpow.pop %v1154
  %v1156 = vmul.f32 %v1129, 1.442695
  %v1157 = vpow.pop %v1156
  %v1158 = vmul.f32 %v1130, 1.442695
  %v1159 = vpow.pop %v1158
  %v1160 = vmul.f32 %v1131, 1.442695
  %v1161 = vpow.pop %v1160
  %v1162 = vmul.f32 %v1132, 1.442695
  %v1163 = vpow.pop %v1162
  %v1164 = vmul.f32 %v1133, 1.442695
  %v1165 = vpow.pop %v1164
  %v1166 = vsel %vm285, %v1135, 0.0
  %1167 = vadd.xlane.f32.xlu0 %v1166
  %v1168 = vpop.xlane.xlu0 %1167
  %v1169 = vsel %vm285, %v1137, 0.0
  %1170 = vadd.xlane.f32.xlu0 %v1169
  %v1171 = vpop.xlane.xlu0 %1170
  %v1172 = vsel %vm285, %v1139, 0.0
  %1173 = vadd.xlane.f32.xlu0 %v1172
  %v1174 = vpop.xlane.xlu0 %1173
  %v1175 = vsel %vm285, %v1141, 0.0
  %1176 = vadd.xlane.f32.xlu0 %v1175
  %v1177 = vpop.xlane.xlu0 %1176
  %v1178 = vsel %vm285, %v1143, 0.0
  %1179 = vadd.xlane.f32.xlu0 %v1178
  %v1180 = vpop.xlane.xlu0 %1179
  %v1181 = vsel %vm285, %v1145, 0.0
  %1182 = vadd.xlane.f32.xlu0 %v1181
  %v1183 = vpop.xlane.xlu0 %1182
  %v1184 = vsel %vm285, %v1147, 0.0
  %1185 = vadd.xlane.f32.xlu0 %v1184
  %v1186 = vpop.xlane.xlu0 %1185
  %v1187 = vsel %vm285, %v1149, 0.0
  %1188 = vadd.xlane.f32.xlu0 %v1187
  %v1189 = vpop.xlane.xlu0 %1188
  %v1190 = vsel %vm285, %v1151, 0.0
  %1191 = vadd.xlane.f32.xlu0 %v1190
  %v1192 = vpop.xlane.xlu0 %1191
  %v1193 = vsel %vm285, %v1153, 0.0
  %1194 = vadd.xlane.f32.xlu0 %v1193
  %v1195 = vpop.xlane.xlu0 %1194
  %v1196 = vsel %vm285, %v1155, 0.0
  %1197 = vadd.xlane.f32.xlu0 %v1196
  %v1198 = vpop.xlane.xlu0 %1197
  %v1199 = vsel %vm285, %v1157, 0.0
  %1200 = vadd.xlane.f32.xlu0 %v1199
  %v1201 = vpop.xlane.xlu0 %1200
  %v1202 = vsel %vm285, %v1159, 0.0
  %1203 = vadd.xlane.f32.xlu0 %v1202
  %v1204 = vpop.xlane.xlu0 %1203
  %v1205 = vsel %vm285, %v1161, 0.0
  %1206 = vadd.xlane.f32.xlu0 %v1205
  %v1207 = vpop.xlane.xlu0 %1206
  %v1208 = vsel %vm285, %v1163, 0.0
  %1209 = vadd.xlane.f32.xlu0 %v1208
  %v1210 = vpop.xlane.xlu0 %1209
  %v1211 = vsel %vm285, %v1165, 0.0
  %1212 = vadd.xlane.f32.xlu0 %v1211
  %v1213 = vpop.xlane.xlu0 %1212
  %v1214 = vrcp.pop %v1168
  %v1215 = vrcp.pop %v1171
  %v1216 = vrcp.pop %v1174
  %v1217 = vrcp.pop %v1177
  %v1218 = vrcp.pop %v1180
  %v1219 = vrcp.pop %v1183
  %v1220 = vrcp.pop %v1186
  %v1221 = vrcp.pop %v1189
  %v1222 = vrcp.pop %v1192
  %v1223 = vrcp.pop %v1195
  %v1224 = vrcp.pop %v1198
  %v1225 = vrcp.pop %v1201
  %v1226 = vrcp.pop %v1204
  %v1227 = vrcp.pop %v1207
  %v1228 = vrcp.pop %v1210
  %v1229 = vrcp.pop %v1213
  %v1230 = vmul.f32 %v1135, %v1214
  %v1231 = vmul.f32 %v1137, %v1215
  %v1232 = vmul.f32 %v1139, %v1216
  %v1233 = vmul.f32 %v1141, %v1217
  %v1234 = vmul.f32 %v1143, %v1218
  %v1235 = vmul.f32 %v1145, %v1219
  %v1236 = vmul.f32 %v1147, %v1220
  %v1237 = vmul.f32 %v1149, %v1221
  %v1238 = vmul.f32 %v1151, %v1222
  %v1239 = vmul.f32 %v1153, %v1223
  %v1240 = vmul.f32 %v1155, %v1224
  %v1241 = vmul.f32 %v1157, %v1225
  %v1242 = vmul.f32 %v1159, %v1226
  %v1243 = vmul.f32 %v1161, %v1227
  %v1244 = vmul.f32 %v1163, %v1228
  %v1245 = vmul.f32 %v1165, %v1229
  %v1246 = vpack.c.bf16 %v1231, %v1230
  %v1247 = vpack.c.bf16 %v1233, %v1232
  %v1248 = vpack.c.bf16 %v1235, %v1234
  %v1249 = vpack.c.bf16 %v1237, %v1236
  %v1250 = vpack.c.bf16 %v1239, %v1238
  %v1251 = vpack.c.bf16 %v1241, %v1240
  %v1252 = vpack.c.bf16 %v1243, %v1242
  %v1253 = vpack.c.bf16 %v1245, %v1244
  %v1254 = vpack.c.bf16 %v177, %v173
  %v1255 = vpack.c.bf16 %v187, %v183
  %v1256 = vpack.c.bf16 %v236, %v234
  %v1257 = vpack.c.bf16 %v240, %v238
  %v1258 = vpack.c.bf16 %v248, %v246
  %v1259 = vpack.c.bf16 %v252, %v250
  %v1260 = vpack.c.bf16 %v260, %v258
  %v1261 = vpack.c.bf16 %v264, %v262
  %v1263 = vsel %vm285, %v1246, 0
  %1265 = vmatprep.subr.bf16.mxu0 0
  %1266 = vmatpush1.bf16.msra.mxu0 %v1254
  %1267 = vmatprep.subr.bf16.mxu0 0
  %1268 = vmatpush1.bf16.msra.mxu0 0
  %1269 = vmatprep.subr.bf16.mxu0 0
  %1270 = vmatpush1.bf16.msra.mxu0 0
  %1271 = vmatprep.subr.bf16.mxu0 0
  %1272 = vmatpush1.bf16.msra.mxu0 0
  %1273 = vmatprep.subr.bf16.mxu0 0
  %1274 = vmatpush1.bf16.msra.mxu0 0
  %1275 = vmatprep.subr.bf16.mxu0 0
  %1276 = vmatpush1.bf16.msra.mxu0 0
  %1277 = vmatprep.subr.bf16.mxu0 0
  %1278 = vmatpush1.bf16.msra.mxu0 0
  %1279 = vmatprep.subr.bf16.mxu0 0
  %1280 = vmatpush1.bf16.msra.mxu0 0
  %1281 = vmatprep.subr.bf16.mxu0 0
  %1282 = vmatpush1.bf16.msra.mxu0 0
  %1283 = vmatprep.subr.bf16.mxu0 0
  %1284 = vmatpush1.bf16.msra.mxu0 0
  %1285 = vmatprep.subr.bf16.mxu0 0
  %1286 = vmatpush1.bf16.msra.mxu0 0
  %1287 = vmatprep.subr.bf16.mxu0 0
  %1288 = vmatpush1.bf16.msra.mxu0 0
  %1289 = vmatprep.subr.bf16.mxu0 0
  %1290 = vmatpush1.bf16.msra.mxu0 0
  %1291 = vmatprep.subr.bf16.mxu0 0
  %1292 = vmatpush1.bf16.msra.mxu0 0
  %1293 = vmatprep.subr.bf16.mxu0 0
  %1294 = vmatpush1.bf16.msra.mxu0 0
  %1295 = vmatprep.subr.bf16.mxu0 0
  %1296 = vmatpush1.bf16.msra.mxu0 0
  %1297 = vmatprep.mubr.bf16.mxu0 0
  %1298 = vmatmul.mubr.bf16.gmra.mrb[0].mxu0 %v1263
  %v1299 = vpop.f32.mrb[0].mxu0
  %v1300 = vadd.f32 0.0, %v1299
  %v1301 = vpop.f32.mrb[0].mxu0
  %v1302 = vpop.f32.mrb[0].mxu0
  %v1303 = vadd.f32 0.0, %v1302
  %v1304 = vpop.f32.mrb[0].mxu0
  %1305 = vdwg.mxu0
  %v1307 = vsel %vm285, %v1247, 0
  %1309 = vmatprep.subr.bf16.mxu0 0
  %1310 = vmatpush1.bf16.msra.mxu0 %v1255
  %1311 = vmatprep.subr.bf16.mxu0 0
  %1312 = vmatpush1.bf16.msra.mxu0 0
  %1313 = vmatprep.subr.bf16.mxu0 0
  %1314 = vmatpush1.bf16.msra.mxu0 0
  %1315 = vmatprep.subr.bf16.mxu0 0
  %1316 = vmatpush1.bf16.msra.mxu0 0
  %1317 = vmatprep.subr.bf16.mxu0 0
  %1318 = vmatpush1.bf16.msra.mxu0 0
  %1319 = vmatprep.subr.bf16.mxu0 0
  %1320 = vmatpush1.bf16.msra.mxu0 0
  %1321 = vmatprep.subr.bf16.mxu0 0
  %1322 = vmatpush1.bf16.msra.mxu0 0
  %1323 = vmatprep.subr.bf16.mxu0 0
  %1324 = vmatpush1.bf16.msra.mxu0 0
  %1325 = vmatprep.subr.bf16.mxu0 0
  %1326 = vmatpush1.bf16.msra.mxu0 0
  %1327 = vmatprep.subr.bf16.mxu0 0
  %1328 = vmatpush1.bf16.msra.mxu0 0
  %1329 = vmatprep.subr.bf16.mxu0 0
  %1330 = vmatpush1.bf16.msra.mxu0 0
  %1331 = vmatprep.subr.bf16.mxu0 0
  %1332 = vmatpush1.bf16.msra.mxu0 0
  %1333 = vmatprep.subr.bf16.mxu0 0
  %1334 = vmatpush1.bf16.msra.mxu0 0
  %1335 = vmatprep.subr.bf16.mxu0 0
  %1336 = vmatpush1.bf16.msra.mxu0 0
  %1337 = vmatprep.subr.bf16.mxu0 0
  %1338 = vmatpush1.bf16.msra.mxu0 0
  %1339 = vmatprep.subr.bf16.mxu0 0
  %1340 = vmatpush1.bf16.msra.mxu0 0
  %1341 = vmatprep.mubr.bf16.mxu0 0
  %1342 = vmatmul.mubr.bf16.gmra.mrb[0].mxu0 %v1307
  %v1343 = vpop.f32.mrb[0].mxu0
  %v1344 = vadd.f32 0.0, %v1343
  %v1345 = vpop.f32.mrb[0].mxu0
  %v1346 = vpop.f32.mrb[0].mxu0
  %v1347 = vadd.f32 0.0, %v1346
  %v1348 = vpop.f32.mrb[0].mxu0
  %1349 = vdwg.mxu0
  %v1351 = vsel %vm285, %v1248, 0
  %1353 = vmatprep.subr.bf16.mxu0 0
  %1354 = vmatpush1.bf16.msra.mxu0 %v1256
  %1355 = vmatprep.subr.bf16.mxu0 0
  %1356 = vmatpush1.bf16.msra.mxu0 0
  %1357 = vmatprep.subr.bf16.mxu0 0
  %1358 = vmatpush1.bf16.msra.mxu0 0
  %1359 = vmatprep.subr.bf16.mxu0 0
  %1360 = vmatpush1.bf16.msra.mxu0 0
  %1361 = vmatprep.subr.bf16.mxu0 0
  %1362 = vmatpush1.bf16.msra.mxu0 0
  %1363 = vmatprep.subr.bf16.mxu0 0
  %1364 = vmatpush1.bf16.msra.mxu0 0
  %1365 = vmatprep.subr.bf16.mxu0 0
  %1366 = vmatpush1.bf16.msra.mxu0 0
  %1367 = vmatprep.subr.bf16.mxu0 0
  %1368 = vmatpush1.bf16.msra.mxu0 0
  %1369 = vmatprep.subr.bf16.mxu0 0
  %1370 = vmatpush1.bf16.msra.mxu0 0
  %1371 = vmatprep.subr.bf16.mxu0 0
  %1372 = vmatpush1.bf16.msra.mxu0 0
  %1373 = vmatprep.subr.bf16.mxu0 0
  %1374 = vmatpush1.bf16.msra.mxu0 0
  %1375 = vmatprep.subr.bf16.mxu0 0
  %1376 = vmatpush1.bf16.msra.mxu0 0
  %1377 = vmatprep.subr.bf16.mxu0 0
  %1378 = vmatpush1.bf16.msra.mxu0 0
  %1379 = vmatprep.subr.bf16.mxu0 0
  %1380 = vmatpush1.bf16.msra.mxu0 0
  %1381 = vmatprep.subr.bf16.mxu0 0
  %1382 = vmatpush1.bf16.msra.mxu0 0
  %1383 = vmatprep.subr.bf16.mxu0 0
  %1384 = vmatpush1.bf16.msra.mxu0 0
  %1385 = vmatprep.mubr.bf16.mxu0 0
  %1386 = vmatmul.mubr.bf16.gmra.mrb[0].mxu0 %v1351
  %v1387 = vpop.f32.mrb[0].mxu0
  %v1388 = vadd.f32 0.0, %v1387
  %v1389 = vpop.f32.mrb[0].mxu0
  %v1390 = vpop.f32.mrb[0].mxu0
  %v1391 = vadd.f32 0.0, %v1390
  %v1392 = vpop.f32.mrb[0].mxu0
  %1393 = vdwg.mxu0
  %v1395 = vsel %vm285, %v1249, 0
  %1397 = vmatprep.subr.bf16.mxu0 0
  %1398 = vmatpush1.bf16.msra.mxu0 %v1257
  %1399 = vmatprep.subr.bf16.mxu0 0
  %1400 = vmatpush1.bf16.msra.mxu0 0
  %1401 = vmatprep.subr.bf16.mxu0 0
  %1402 = vmatpush1.bf16.msra.mxu0 0
  %1403 = vmatprep.subr.bf16.mxu0 0
  %1404 = vmatpush1.bf16.msra.mxu0 0
  %1405 = vmatprep.subr.bf16.mxu0 0
  %1406 = vmatpush1.bf16.msra.mxu0 0
  %1407 = vmatprep.subr.bf16.mxu0 0
  %1408 = vmatpush1.bf16.msra.mxu0 0
  %1409 = vmatprep.subr.bf16.mxu0 0
  %1410 = vmatpush1.bf16.msra.mxu0 0
  %1411 = vmatprep.subr.bf16.mxu0 0
  %1412 = vmatpush1.bf16.msra.mxu0 0
  %1413 = vmatprep.subr.bf16.mxu0 0
  %1414 = vmatpush1.bf16.msra.mxu0 0
  %1415 = vmatprep.subr.bf16.mxu0 0
  %1416 = vmatpush1.bf16.msra.mxu0 0
  %1417 = vmatprep.subr.bf16.mxu0 0
  %1418 = vmatpush1.bf16.msra.mxu0 0
  %1419 = vmatprep.subr.bf16.mxu0 0
  %1420 = vmatpush1.bf16.msra.mxu0 0
  %1421 = vmatprep.subr.bf16.mxu0 0
  %1422 = vmatpush1.bf16.msra.mxu0 0
  %1423 = vmatprep.subr.bf16.mxu0 0
  %1424 = vmatpush1.bf16.msra.mxu0 0
  %1425 = vmatprep.subr.bf16.mxu0 0
  %1426 = vmatpush1.bf16.msra.mxu0 0
  %1427 = vmatprep.subr.bf16.mxu0 0
  %1428 = vmatpush1.bf16.msra.mxu0 0
  %1429 = vmatprep.mubr.bf16.mxu0 0
  %1430 = vmatmul.mubr.bf16.gmra.mrb[0].mxu0 %v1395
  %v1431 = vpop.f32.mrb[0].mxu0
  %v1432 = vadd.f32 0.0, %v1431
  %v1433 = vpop.f32.mrb[0].mxu0
  %v1434 = vpop.f32.mrb[0].mxu0
  %v1435 = vadd.f32 0.0, %v1434
  %v1436 = vpop.f32.mrb[0].mxu0
  %1437 = vdwg.mxu0
  %v1439 = vsel %vm285, %v1250, 0
  %1441 = vmatprep.subr.bf16.mxu0 0
  %1442 = vmatpush1.bf16.msra.mxu0 %v1258
  %1443 = vmatprep.subr.bf16.mxu0 0
  %1444 = vmatpush1.bf16.msra.mxu0 0
  %1445 = vmatprep.subr.bf16.mxu0 0
  %1446 = vmatpush1.bf16.msra.mxu0 0
  %1447 = vmatprep.subr.bf16.mxu0 0
  %1448 = vmatpush1.bf16.msra.mxu0 0
  %1449 = vmatprep.subr.bf16.mxu0 0
  %1450 = vmatpush1.bf16.msra.mxu0 0
  %1451 = vmatprep.subr.bf16.mxu0 0
  %1452 = vmatpush1.bf16.msra.mxu0 0
  %1453 = vmatprep.subr.bf16.mxu0 0
  %1454 = vmatpush1.bf16.msra.mxu0 0
  %1455 = vmatprep.subr.bf16.mxu0 0
  %1456 = vmatpush1.bf16.msra.mxu0 0
  %1457 = vmatprep.subr.bf16.mxu0 0
  %1458 = vmatpush1.bf16.msra.mxu0 0
  %1459 = vmatprep.subr.bf16.mxu0 0
  %1460 = vmatpush1.bf16.msra.mxu0 0
  %1461 = vmatprep.subr.bf16.mxu0 0
  %1462 = vmatpush1.bf16.msra.mxu0 0
  %1463 = vmatprep.subr.bf16.mxu0 0
  %1464 = vmatpush1.bf16.msra.mxu0 0
  %1465 = vmatprep.subr.bf16.mxu0 0
  %1466 = vmatpush1.bf16.msra.mxu0 0
  %1467 = vmatprep.subr.bf16.mxu0 0
  %1468 = vmatpush1.bf16.msra.mxu0 0
  %1469 = vmatprep.subr.bf16.mxu0 0
  %1470 = vmatpush1.bf16.msra.mxu0 0
  %1471 = vmatprep.subr.bf16.mxu0 0
  %1472 = vmatpush1.bf16.msra.mxu0 0
  %1473 = vmatprep.mubr.bf16.mxu0 0
  %1474 = vmatmul.mubr.bf16.gmra.mrb[0].mxu0 %v1439
  %v1475 = vpop.f32.mrb[0].mxu0
  %v1476 = vadd.f32 0.0, %v1475
  %v1477 = vpop.f32.mrb[0].mxu0
  %v1478 = vpop.f32.mrb[0].mxu0
  %v1479 = vadd.f32 0.0, %v1478
  %v1480 = vpop.f32.mrb[0].mxu0
  %1481 = vdwg.mxu0
  %v1483 = vsel %vm285, %v1251, 0
  %1485 = vmatprep.subr.bf16.mxu0 0
  %1486 = vmatpush1.bf16.msra.mxu0 %v1259
  %1487 = vmatprep.subr.bf16.mxu0 0
  %1488 = vmatpush1.bf16.msra.mxu0 0
  %1489 = vmatprep.subr.bf16.mxu0 0
  %1490 = vmatpush1.bf16.msra.mxu0 0
  %1491 = vmatprep.subr.bf16.mxu0 0
  %1492 = vmatpush1.bf16.msra.mxu0 0
  %1493 = vmatprep.subr.bf16.mxu0 0
  %1494 = vmatpush1.bf16.msra.mxu0 0
  %1495 = vmatprep.subr.bf16.mxu0 0
  %1496 = vmatpush1.bf16.msra.mxu0 0
  %1497 = vmatprep.subr.bf16.mxu0 0
  %1498 = vmatpush1.bf16.msra.mxu0 0
  %1499 = vmatprep.subr.bf16.mxu0 0
  %1500 = vmatpush1.bf16.msra.mxu0 0
  %1501 = vmatprep.subr.bf16.mxu0 0
  %1502 = vmatpush1.bf16.msra.mxu0 0
  %1503 = vmatprep.subr.bf16.mxu0 0
  %1504 = vmatpush1.bf16.msra.mxu0 0
  %1505 = vmatprep.subr.bf16.mxu0 0
  %1506 = vmatpush1.bf16.msra.mxu0 0
  %1507 = vmatprep.subr.bf16.mxu0 0
  %1508 = vmatpush1.bf16.msra.mxu0 0
  %1509 = vmatprep.subr.bf16.mxu0 0
  %1510 = vmatpush1.bf16.msra.mxu0 0
  %1511 = vmatprep.subr.bf16.mxu0 0
  %1512 = vmatpush1.bf16.msra.mxu0 0
  %1513 = vmatprep.subr.bf16.mxu0 0
  %1514 = vmatpush1.bf16.msra.mxu0 0
  %1515 = vmatprep.subr.bf16.mxu0 0
  %1516 = vmatpush1.bf16.msra.mxu0 0
  %1517 = vmatprep.mubr.bf16.mxu0 0
  %1518 = vmatmul.mubr.bf16.gmra.mrb[0].mxu0 %v1483
  %v1519 = vpop.f32.mrb[0].mxu0
  %v1520 = vadd.f32 0.0, %v1519
  %v1521 = vpop.f32.mrb[0].mxu0
  %v1522 = vpop.f32.mrb[0].mxu0
  %v1523 = vadd.f32 0.0, %v1522
  %v1524 = vpop.f32.mrb[0].mxu0
  %1525 = vdwg.mxu0
  %v1527 = vsel %vm285, %v1252, 0
  %1529 = vmatprep.subr.bf16.mxu0 0
  %1530 = vmatpush1.bf16.msra.mxu0 %v1260
  %1531 = vmatprep.subr.bf16.mxu0 0
  %1532 = vmatpush1.bf16.msra.mxu0 0
  %1533 = vmatprep.subr.bf16.mxu0 0
  %1534 = vmatpush1.bf16.msra.mxu0 0
  %1535 = vmatprep.subr.bf16.mxu0 0
  %1536 = vmatpush1.bf16.msra.mxu0 0
  %1537 = vmatprep.subr.bf16.mxu0 0
  %1538 = vmatpush1.bf16.msra.mxu0 0
  %1539 = vmatprep.subr.bf16.mxu0 0
  %1540 = vmatpush1.bf16.msra.mxu0 0
  %1541 = vmatprep.subr.bf16.mxu0 0
  %1542 = vmatpush1.bf16.msra.mxu0 0
  %1543 = vmatprep.subr.bf16.mxu0 0
  %1544 = vmatpush1.bf16.msra.mxu0 0
  %1545 = vmatprep.subr.bf16.mxu0 0
  %1546 = vmatpush1.bf16.msra.mxu0 0
  %1547 = vmatprep.subr.bf16.mxu0 0
  %1548 = vmatpush1.bf16.msra.mxu0 0
  %1549 = vmatprep.subr.bf16.mxu0 0
  %1550 = vmatpush1.bf16.msra.mxu0 0
  %1551 = vmatprep.subr.bf16.mxu0 0
  %1552 = vmatpush1.bf16.msra.mxu0 0
  %1553 = vmatprep.subr.bf16.mxu0 0
  %1554 = vmatpush1.bf16.msra.mxu0 0
  %1555 = vmatprep.subr.bf16.mxu0 0
  %1556 = vmatpush1.bf16.msra.mxu0 0
  %1557 = vmatprep.subr.bf16.mxu0 0
  %1558 = vmatpush1.bf16.msra.mxu0 0
  %1559 = vmatprep.subr.bf16.mxu0 0
  %1560 = vmatpush1.bf16.msra.mxu0 0
  %1561 = vmatprep.mubr.bf16.mxu0 0
  %1562 = vmatmul.mubr.bf16.gmra.mrb[0].mxu0 %v1527
  %v1563 = vpop.f32.mrb[0].mxu0
  %v1564 = vadd.f32 0.0, %v1563
  %v1565 = vpop.f32.mrb[0].mxu0
  %v1566 = vpop.f32.mrb[0].mxu0
  %v1567 = vadd.f32 0.0, %v1566
  %v1568 = vpop.f32.mrb[0].mxu0
  %1569 = vdwg.mxu0
  %v1571 = vsel %vm285, %v1253, 0
  %1573 = vmatprep.subr.bf16.mxu0 0
  %1574 = vmatpush1.bf16.msra.mxu0 %v1261
  %1575 = vmatprep.subr.bf16.mxu0 0
  %1576 = vmatpush1.bf16.msra.mxu0 0
  %1577 = vmatprep.subr.bf16.mxu0 0
  %1578 = vmatpush1.bf16.msra.mxu0 0
  %1579 = vmatprep.subr.bf16.mxu0 0
  %1580 = vmatpush1.bf16.msra.mxu0 0
  %1581 = vmatprep.subr.bf16.mxu0 0
  %1582 = vmatpush1.bf16.msra.mxu0 0
  %1583 = vmatprep.subr.bf16.mxu0 0
  %1584 = vmatpush1.bf16.msra.mxu0 0
  %1585 = vmatprep.subr.bf16.mxu0 0
  %1586 = vmatpush1.bf16.msra.mxu0 0
  %1587 = vmatprep.subr.bf16.mxu0 0
  %1588 = vmatpush1.bf16.msra.mxu0 0
  %1589 = vmatprep.subr.bf16.mxu0 0
  %1590 = vmatpush1.bf16.msra.mxu0 0
  %1591 = vmatprep.subr.bf16.mxu0 0
  %1592 = vmatpush1.bf16.msra.mxu0 0
  %1593 = vmatprep.subr.bf16.mxu0 0
  %1594 = vmatpush1.bf16.msra.mxu0 0
  %1595 = vmatprep.subr.bf16.mxu0 0
  %1596 = vmatpush1.bf16.msra.mxu0 0
  %1597 = vmatprep.subr.bf16.mxu0 0
  %1598 = vmatpush1.bf16.msra.mxu0 0
  %1599 = vmatprep.subr.bf16.mxu0 0
  %1600 = vmatpush1.bf16.msra.mxu0 0
  %1601 = vmatprep.subr.bf16.mxu0 0
  %1602 = vmatpush1.bf16.msra.mxu0 0
  %1603 = vmatprep.subr.bf16.mxu0 0
  %1604 = vmatpush1.bf16.msra.mxu0 0
  %1605 = vmatprep.mubr.bf16.mxu0 0
  %1606 = vmatmul.mubr.bf16.gmra.mrb[0].mxu0 %v1571
  %v1607 = vpop.f32.mrb[0].mxu0
  %v1608 = vadd.f32 0.0, %v1607
  %v1609 = vpop.f32.mrb[0].mxu0
  %v1610 = vpop.f32.mrb[0].mxu0
  %v1611 = vadd.f32 0.0, %v1610
  %v1612 = vpop.f32.mrb[0].mxu0
  %1613 = vdwg.mxu0
  %1618 = vrot.lane.b32.xlu0 %v1388, 16
  %v1619 = vpop.permute.xlu0 %1618
  %1620 = vrot.lane.b32.xlu0 %v1391, 16
  %v1621 = vpop.permute.xlu0 %1620
  %1622 = vrot.lane.b32.xlu0 %v1432, 16
  %v1623 = vpop.permute.xlu0 %1622
  %1624 = vrot.lane.b32.xlu0 %v1435, 16
  %v1625 = vpop.permute.xlu0 %1624
  %1634 = vrot.lane.b32.xlu0 %v1476, 32
  %v1635 = vpop.permute.xlu0 %1634
  %1636 = vrot.lane.b32.xlu0 %v1479, 32
  %v1637 = vpop.permute.xlu0 %1636
  %1638 = vrot.lane.b32.xlu0 %v1520, 32
  %v1639 = vpop.permute.xlu0 %1638
  %1640 = vrot.lane.b32.xlu0 %v1523, 32
  %v1641 = vpop.permute.xlu0 %1640
  %1650 = vrot.lane.b32.xlu0 %v1564, 48
  %v1651 = vpop.permute.xlu0 %1650
  %1652 = vrot.lane.b32.xlu0 %v1567, 48
  %v1653 = vpop.permute.xlu0 %1652
  %1654 = vrot.lane.b32.xlu0 %v1608, 48
  %v1655 = vpop.permute.xlu0 %1654
  %1656 = vrot.lane.b32.xlu0 %v1611, 48
  %v1657 = vpop.permute.xlu0 %1656
  %v1662 = vsel %vm285, %v1300, %v1619
  %v1663 = vsel %vm285, %v1303, %v1621
  %v1664 = vsel %vm285, %v1344, %v1623
  %v1665 = vsel %vm285, %v1347, %v1625
  %vm1666 = vcmask 261120
  %v1667 = vsel %vm1666, %v1662, %v1635
  %v1668 = vsel %vm1666, %v1663, %v1637
  %v1669 = vsel %vm1666, %v1664, %v1639
  %v1670 = vsel %vm1666, %v1665, %v1641
  %vm1671 = vcmask 392192
  %v1672 = vsel %vm1671, %v1667, %v1651
  %v1673 = vsel %vm1671, %v1668, %v1653
  %v1674 = vsel %vm1671, %v1669, %v1655
  %v1675 = vsel %vm1671, %v1670, %v1657
  %v1676 = vpack.c.bf16 %v1673, %v1672
  %v1677 = vpack.c.bf16 %v1675, %v1674
  %v1678 = vld [vmem:[%s3] sm:$0xf]
  %v1679 = vld [vmem:[%s3 + $0x4] sm:$0xf]
  %v1680 = vld [vmem:[%s3 + $0x8] sm:$0xf]
  %v1681 = vld [vmem:[%s3 + $0xc] sm:$0xf]
  %v1682 = vld [vmem:[%s3 + $0x10] sm:$0xf]
  %v1683 = vld [vmem:[%s3 + $0x14] sm:$0xf]
  %v1684 = vld [vmem:[%s3 + $0x18] sm:$0xf]
  %v1685 = vld [vmem:[%s3 + $0x1c] sm:$0xf]
  %v1686 = vld [vmem:[%s4] sm:$0x1]
  %v1688 = vlaneseq
  %v1689 = vshrl.u32 %v1688, 7
  %v1690 = vsub.s32 0, %v1689
  %v1691 = vrot.slane %v1686, %v1690
  %v1701 = vunpack.c.l.b16 %v1678
  %v1702 = vunpack.c.l.b16 %v1679
  %v1703 = vunpack.c.l.b16 %v1680
  %v1704 = vunpack.c.l.b16 %v1681
  %v1705 = vunpack.c.l.b16 %v1682
  %v1706 = vunpack.c.l.b16 %v1683
  %v1707 = vunpack.c.l.b16 %v1684
  %v1708 = vunpack.c.l.b16 %v1685
  %v1709 = vpack.c.b16 %v1702, %v1701
  %v1710 = vpack.c.b16 %v1704, %v1703
  %v1711 = vpack.c.b16 %v1706, %v1705
  %v1712 = vpack.c.b16 %v1708, %v1707
  %v1718 = vsel %vm129, %v1676, 0
  %v1721 = vsel %vm129, %v1677, 0
  %1723 = vmatprep.subr.bf16.mxu0 0
  %1724 = vmatpush1.bf16.msra.mxu0 %v1709
  %1725 = vmatprep.subr.bf16.mxu0 0
  %1726 = vmatpush1.bf16.msra.mxu0 %v1710
  %1727 = vmatprep.subr.bf16.mxu0 0
  %1728 = vmatpush1.bf16.msra.mxu0 %v1711
  %1729 = vmatprep.subr.bf16.mxu0 0
  %1730 = vmatpush1.bf16.msra.mxu0 %v1712
  %1731 = vmatprep.subr.bf16.mxu0 0
  %1732 = vmatpush1.bf16.msra.mxu0 0
  %1733 = vmatprep.subr.bf16.mxu0 0
  %1734 = vmatpush1.bf16.msra.mxu0 0
  %1735 = vmatprep.subr.bf16.mxu0 0
  %1736 = vmatpush1.bf16.msra.mxu0 0
  %1737 = vmatprep.subr.bf16.mxu0 0
  %1738 = vmatpush1.bf16.msra.mxu0 0
  %1739 = vmatprep.subr.bf16.mxu0 0
  %1740 = vmatpush1.bf16.msra.mxu0 0
  %1741 = vmatprep.subr.bf16.mxu0 0
  %1742 = vmatpush1.bf16.msra.mxu0 0
  %1743 = vmatprep.subr.bf16.mxu0 0
  %1744 = vmatpush1.bf16.msra.mxu0 0
  %1745 = vmatprep.subr.bf16.mxu0 0
  %1746 = vmatpush1.bf16.msra.mxu0 0
  %1747 = vmatprep.subr.bf16.mxu0 0
  %1748 = vmatpush1.bf16.msra.mxu0 0
  %1749 = vmatprep.subr.bf16.mxu0 0
  %1750 = vmatpush1.bf16.msra.mxu0 0
  %1751 = vmatprep.subr.bf16.mxu0 0
  %1752 = vmatpush1.bf16.msra.mxu0 0
  %1753 = vmatprep.subr.bf16.mxu0 0
  %1754 = vmatpush1.bf16.msra.mxu0 0
  %1755 = vmatprep.mubr.bf16.mxu0 0
  %1756 = vmatmul.mubr.bf16.gmra.mrb[0].mxu0 %v1718
  %v1757 = vpop.f32.mrb[0].mxu0
  %v1758 = vadd.f32 %v1691, %v1757
  %v1759 = vpop.f32.mrb[0].mxu0
  %v1760 = vpop.f32.mrb[0].mxu0
  %v1761 = vadd.f32 %v1691, %v1760
  %v1762 = vpop.f32.mrb[0].mxu0
  %1763 = vmatprep.mubr.bf16.mxu0 0
  %1764 = vmatmul.mubr.bf16.gmra.mrb[0].mxu0 %v1721
  %v1765 = vpop.f32.mrb[0].mxu0
  %v1766 = vadd.f32 %v1691, %v1765
  %v1767 = vpop.f32.mrb[0].mxu0
  %v1768 = vpop.f32.mrb[0].mxu0
  %v1769 = vadd.f32 %v1691, %v1768
  %v1770 = vpop.f32.mrb[0].mxu0
  %1771 = vdwg.mxu0
  %v1772 = vld [vmem:[%s7] sm:$0x1]
  %v1773 = vld [vmem:[%s8] sm:$0x1]
  %v1774 = vsel %vm129, %v1758, 0.0
  %1775 = vadd.xlane.f32.xlu0 %v1774
  %v1776 = vpop.xlane.xlu0 %1775
  %v1777 = vsel %vm129, %v1761, 0.0
  %1778 = vadd.xlane.f32.xlu0 %v1777
  %v1779 = vpop.xlane.xlu0 %1778
  %v1780 = vsel %vm129, %v1766, 0.0
  %1781 = vadd.xlane.f32.xlu0 %v1780
  %v1782 = vpop.xlane.xlu0 %1781
  %v1783 = vsel %vm129, %v1769, 0.0
  %1784 = vadd.xlane.f32.xlu0 %v1783
  %v1785 = vpop.xlane.xlu0 %1784
  %v1786 = vrcp.pop 64.0
  %v1787 = vmul.f32 %v1776, %v1786
  %v1788 = vmul.f32 %v1779, %v1786
  %v1789 = vmul.f32 %v1782, %v1786
  %v1790 = vmul.f32 %v1785, %v1786
  %v1791 = vsub.f32 %v1758, %v1787
  %v1792 = vsub.f32 %v1761, %v1788
  %v1793 = vsub.f32 %v1766, %v1789
  %v1794 = vsub.f32 %v1769, %v1790
  %v1795 = vmul.f32 %v1791, %v1791
  %v1796 = vmul.f32 %v1792, %v1792
  %v1797 = vmul.f32 %v1793, %v1793
  %v1798 = vmul.f32 %v1794, %v1794
  %v1799 = vsel %vm129, %v1795, 0.0
  %1800 = vadd.xlane.f32.xlu0 %v1799
  %v1801 = vpop.xlane.xlu0 %1800
  %v1802 = vsel %vm129, %v1796, 0.0
  %1803 = vadd.xlane.f32.xlu0 %v1802
  %v1804 = vpop.xlane.xlu0 %1803
  %v1805 = vsel %vm129, %v1797, 0.0
  %1806 = vadd.xlane.f32.xlu0 %v1805
  %v1807 = vpop.xlane.xlu0 %1806
  %v1808 = vsel %vm129, %v1798, 0.0
  %1809 = vadd.xlane.f32.xlu0 %v1808
  %v1810 = vpop.xlane.xlu0 %1809
  %v1811 = vmul.f32 %v1801, %v1786
  %v1812 = vmul.f32 %v1804, %v1786
  %v1813 = vmul.f32 %v1807, %v1786
  %v1814 = vmul.f32 %v1810, %v1786
  %v1815 = vadd.f32 %v1811, 1e-05
  %v1816 = vadd.f32 %v1812, 1e-05
  %v1817 = vadd.f32 %v1813, 1e-05
  %v1818 = vadd.f32 %v1814, 1e-05
  %v1819 = vrsqrt.pop %v1815
  %v1820 = vrsqrt.pop %v1816
  %v1821 = vrsqrt.pop %v1817
  %v1822 = vrsqrt.pop %v1818
  %v1823 = vmul.f32 %v1791, %v1819
  %v1824 = vmul.f32 %v1792, %v1820
  %v1825 = vmul.f32 %v1793, %v1821
  %v1826 = vmul.f32 %v1794, %v1822
  %v1828 = vlaneseq
  %v1829 = vshrl.u32 %v1828, 7
  %v1830 = vsub.s32 0, %v1829
  %v1831 = vrot.slane %v1772, %v1830
  %v1833 = vmul.f32 %v1823, %v1831
  %v1834 = vmul.f32 %v1824, %v1831
  %v1835 = vmul.f32 %v1825, %v1831
  %v1836 = vmul.f32 %v1826, %v1831
  %v1838 = vlaneseq
  %v1839 = vshrl.u32 %v1838, 7
  %v1840 = vsub.s32 0, %v1839
  %v1841 = vrot.slane %v1773, %v1840
  %v1843 = vadd.f32 %v1833, %v1841
  %v1844 = vadd.f32 %v1834, %v1841
  %v1845 = vadd.f32 %v1835, %v1841
  %v1846 = vadd.f32 %v1836, %v1841
  %v1847 = vadd.f32 %v55, %v1843
  %v1848 = vadd.f32 %v56, %v1844
  %v1849 = vadd.f32 %v57, %v1845
  %v1850 = vadd.f32 %v58, %v1846
  %v1851 = vpack.c.bf16 %v1848, %v1847
  %v1852 = vpack.c.bf16 %v1850, %v1849
  %v1853 = vld [vmem:[%s9] sm:$0xf]
  %v1854 = vld [vmem:[%s9 + $0x4] sm:$0xf]
  %v1855 = vld [vmem:[%s9 + $0x8] sm:$0xf]
  %v1856 = vld [vmem:[%s9 + $0xc] sm:$0xf]
  %v1857 = vld [vmem:[%s9 + $0x10] sm:$0xf]
  %v1858 = vld [vmem:[%s9 + $0x14] sm:$0xf]
  %v1859 = vld [vmem:[%s9 + $0x18] sm:$0xf]
  %v1860 = vld [vmem:[%s9 + $0x1c] sm:$0xf]
  %v1861 = vld [vmem:[%s10] sm:$0x1]
  %v1863 = vlaneseq
  %v1864 = vshrl.u32 %v1863, 7
  %v1865 = vsub.s32 0, %v1864
  %v1866 = vrot.slane %v1861, %v1865
  %v1876 = vunpack.c.l.b16 %v1853
  %v1877 = vunpack.c.l.b16 %v1854
  %v1878 = vunpack.c.l.b16 %v1855
  %v1879 = vunpack.c.l.b16 %v1856
  %v1880 = vunpack.c.l.b16 %v1857
  %v1881 = vunpack.c.l.b16 %v1858
  %v1882 = vunpack.c.l.b16 %v1859
  %v1883 = vunpack.c.l.b16 %v1860
  %v1884 = vpack.c.b16 %v1877, %v1876
  %v1885 = vpack.c.b16 %v1879, %v1878
  %v1886 = vpack.c.b16 %v1881, %v1880
  %v1887 = vpack.c.b16 %v1883, %v1882
  %v1893 = vsel %vm129, %v1851, 0
  %v1896 = vsel %vm129, %v1852, 0
  %1898 = vmatprep.subr.bf16.mxu0 0
  %1899 = vmatpush1.bf16.msra.mxu0 %v1884
  %1900 = vmatprep.subr.bf16.mxu0 0
  %1901 = vmatpush1.bf16.msra.mxu0 %v1885
  %1902 = vmatprep.subr.bf16.mxu0 0
  %1903 = vmatpush1.bf16.msra.mxu0 %v1886
  %1904 = vmatprep.subr.bf16.mxu0 0
  %1905 = vmatpush1.bf16.msra.mxu0 %v1887
  %1906 = vmatprep.subr.bf16.mxu0 0
  %1907 = vmatpush1.bf16.msra.mxu0 0
  %1908 = vmatprep.subr.bf16.mxu0 0
  %1909 = vmatpush1.bf16.msra.mxu0 0
  %1910 = vmatprep.subr.bf16.mxu0 0
  %1911 = vmatpush1.bf16.msra.mxu0 0
  %1912 = vmatprep.subr.bf16.mxu0 0
  %1913 = vmatpush1.bf16.msra.mxu0 0
  %1914 = vmatprep.subr.bf16.mxu0 0
  %1915 = vmatpush1.bf16.msra.mxu0 0
  %1916 = vmatprep.subr.bf16.mxu0 0
  %1917 = vmatpush1.bf16.msra.mxu0 0
  %1918 = vmatprep.subr.bf16.mxu0 0
  %1919 = vmatpush1.bf16.msra.mxu0 0
  %1920 = vmatprep.subr.bf16.mxu0 0
  %1921 = vmatpush1.bf16.msra.mxu0 0
  %1922 = vmatprep.subr.bf16.mxu0 0
  %1923 = vmatpush1.bf16.msra.mxu0 0
  %1924 = vmatprep.subr.bf16.mxu0 0
  %1925 = vmatpush1.bf16.msra.mxu0 0
  %1926 = vmatprep.subr.bf16.mxu0 0
  %1927 = vmatpush1.bf16.msra.mxu0 0
  %1928 = vmatprep.subr.bf16.mxu0 0
  %1929 = vmatpush1.bf16.msra.mxu0 0
  %1930 = vmatprep.mubr.bf16.mxu0 0
  %1931 = vmatmul.mubr.bf16.gmra.mrb[0].mxu0 %v1893
  %v1932 = vpop.f32.mrb[0].mxu0
  %v1933 = vadd.f32 %v1866, %v1932
  %v1934 = vpop.f32.mrb[0].mxu0
  %v1935 = vpop.f32.mrb[0].mxu0
  %v1936 = vadd.f32 %v1866, %v1935
  %v1937 = vpop.f32.mrb[0].mxu0
  %1938 = vmatprep.mubr.bf16.mxu0 0
  %1939 = vmatmul.mubr.bf16.gmra.mrb[0].mxu0 %v1896
  %v1940 = vpop.f32.mrb[0].mxu0
  %v1941 = vadd.f32 %v1866, %v1940
  %v1942 = vpop.f32.mrb[0].mxu0
  %v1943 = vpop.f32.mrb[0].mxu0
  %v1944 = vadd.f32 %v1866, %v1943
  %v1945 = vpop.f32.mrb[0].mxu0
  %1946 = vdwg.mxu0
  %v1947 = vmul.f32 %v1933, 0.5
  %v1948 = vmul.f32 %v1936, 0.5
  %v1949 = vmul.f32 %v1941, 0.5
  %v1950 = vmul.f32 %v1944, 0.5
  %v1951 = vmul.f32 %v1933, 0.70710677
  %v1952 = vmul.f32 %v1936, 0.70710677
  %v1953 = vmul.f32 %v1941, 0.70710677
  %v1954 = vmul.f32 %v1944, 0.70710677
  %vm1955 = vcmp.lt.f32.partialorder %v1951, 0.0
  %vm1956 = vcmp.lt.f32.partialorder %v1952, 0.0
  %vm1957 = vcmp.lt.f32.partialorder %v1953, 0.0
  %vm1958 = vcmp.lt.f32.partialorder %v1954, 0.0
  %v1959 = vsel %vm1955, -1.0, 1.0
  %v1960 = vsel %vm1956, -1.0, 1.0
  %v1961 = vsel %vm1957, -1.0, 1.0
  %v1962 = vsel %vm1958, -1.0, 1.0
  %v1963 = vand.u32 2147483647, %v1951
  %v1964 = vand.u32 2147483647, %v1952
  %v1965 = vand.u32 2147483647, %v1953
  %v1966 = vand.u32 2147483647, %v1954
  %v1967 = vmul.f32 %v1963, 0.3275911
  %v1968 = vmul.f32 %v1964, 0.3275911
  %v1969 = vmul.f32 %v1965, 0.3275911
  %v1970 = vmul.f32 %v1966, 0.3275911
  %v1971 = vadd.f32 %v1967, 1.0
  %v1972 = vadd.f32 %v1968, 1.0
  %v1973 = vadd.f32 %v1969, 1.0
  %v1974 = vadd.f32 %v1970, 1.0
  %v1975 = vrcp.pop %v1971
  %v1976 = vmul.f32 1.0, %v1975
  %v1977 = vrcp.pop %v1972
  %v1978 = vmul.f32 1.0, %v1977
  %v1979 = vrcp.pop %v1973
  %v1980 = vmul.f32 1.0, %v1979
  %v1981 = vrcp.pop %v1974
  %v1982 = vmul.f32 1.0, %v1981
  %v1983 = vmul.f32 %v1976, 1.0614054
  %v1984 = vmul.f32 %v1978, 1.0614054
  %v1985 = vmul.f32 %v1980, 1.0614054
  %v1986 = vmul.f32 %v1982, 1.0614054
  %v1987 = vadd.f32 %v1983, -1.4531521
  %v1988 = vadd.f32 %v1984, -1.4531521
  %v1989 = vadd.f32 %v1985, -1.4531521
  %v1990 = vadd.f32 %v1986, -1.4531521
  %v1991 = vmul.f32 %v1987, %v1976
  %v1992 = vmul.f32 %v1988, %v1978
  %v1993 = vmul.f32 %v1989, %v1980
  %v1994 = vmul.f32 %v1990, %v1982
  %v1995 = vadd.f32 %v1991, 1.4214138
  %v1996 = vadd.f32 %v1992, 1.4214138
  %v1997 = vadd.f32 %v1993, 1.4214138
  %v1998 = vadd.f32 %v1994, 1.4214138
  %v1999 = vmul.f32 %v1995, %v1976
  %v2000 = vmul.f32 %v1996, %v1978
  %v2001 = vmul.f32 %v1997, %v1980
  %v2002 = vmul.f32 %v1998, %v1982
  %v2003 = vadd.f32 %v1999, -0.28449672
  %v2004 = vadd.f32 %v2000, -0.28449672
  %v2005 = vadd.f32 %v2001, -0.28449672
  %v2006 = vadd.f32 %v2002, -0.28449672
  %v2007 = vmul.f32 %v2003, %v1976
  %v2008 = vmul.f32 %v2004, %v1978
  %v2009 = vmul.f32 %v2005, %v1980
  %v2010 = vmul.f32 %v2006, %v1982
  %v2011 = vadd.f32 %v2007, 0.2548296
  %v2012 = vadd.f32 %v2008, 0.2548296
  %v2013 = vadd.f32 %v2009, 0.2548296
  %v2014 = vadd.f32 %v2010, 0.2548296
  %v2015 = vmul.f32 %v2011, %v1976
  %v2016 = vmul.f32 %v2012, %v1978
  %v2017 = vmul.f32 %v2013, %v1980
  %v2018 = vmul.f32 %v2014, %v1982
  %v2019 = vsub.f32 0.0, %v1963
  %v2020 = vsub.f32 0.0, %v1964
  %v2021 = vsub.f32 0.0, %v1965
  %v2022 = vsub.f32 0.0, %v1966
  %v2023 = vmul.f32 %v2019, %v1963
  %v2024 = vmul.f32 %v2020, %v1964
  %v2025 = vmul.f32 %v2021, %v1965
  %v2026 = vmul.f32 %v2022, %v1966
  %v2027 = vmul.f32 %v2023, 1.442695
  %v2028 = vpow.pop %v2027
  %v2029 = vmul.f32 %v2024, 1.442695
  %v2030 = vpow.pop %v2029
  %v2031 = vmul.f32 %v2025, 1.442695
  %v2032 = vpow.pop %v2031
  %v2033 = vmul.f32 %v2026, 1.442695
  %v2034 = vpow.pop %v2033
  %v2035 = vmul.f32 %v2015, %v2028
  %v2036 = vmul.f32 %v2016, %v2030
  %v2037 = vmul.f32 %v2017, %v2032
  %v2038 = vmul.f32 %v2018, %v2034
  %v2039 = vsub.f32 1.0, %v2035
  %v2040 = vsub.f32 1.0, %v2036
  %v2041 = vsub.f32 1.0, %v2037
  %v2042 = vsub.f32 1.0, %v2038
  %v2043 = vmul.f32 %v1959, %v2039
  %v2044 = vmul.f32 %v1960, %v2040
  %v2045 = vmul.f32 %v1961, %v2041
  %v2046 = vmul.f32 %v1962, %v2042
  %v2047 = vadd.f32 %v2043, 1.0
  %v2048 = vadd.f32 %v2044, 1.0
  %v2049 = vadd.f32 %v2045, 1.0
  %v2050 = vadd.f32 %v2046, 1.0
  %v2051 = vmul.f32 %v1947, %v2047
  %v2052 = vmul.f32 %v1948, %v2048
  %v2053 = vmul.f32 %v1949, %v2049
  %v2054 = vmul.f32 %v1950, %v2050
  %v2055 = vpack.c.bf16 %v2052, %v2051
  %v2056 = vpack.c.bf16 %v2054, %v2053
  %v2057 = vld [vmem:[%s11] sm:$0xf]
  %v2058 = vld [vmem:[%s11 + $0x4] sm:$0xf]
  %v2059 = vld [vmem:[%s11 + $0x8] sm:$0xf]
  %v2060 = vld [vmem:[%s11 + $0xc] sm:$0xf]
  %v2061 = vld [vmem:[%s11 + $0x10] sm:$0xf]
  %v2062 = vld [vmem:[%s11 + $0x14] sm:$0xf]
  %v2063 = vld [vmem:[%s11 + $0x18] sm:$0xf]
  %v2064 = vld [vmem:[%s11 + $0x1c] sm:$0xf]
  %v2065 = vld [vmem:[%s11 + $0x20] sm:$0xf]
  %v2066 = vld [vmem:[%s11 + $0x24] sm:$0xf]
  %v2067 = vld [vmem:[%s11 + $0x28] sm:$0xf]
  %v2068 = vld [vmem:[%s11 + $0x2c] sm:$0xf]
  %v2069 = vld [vmem:[%s11 + $0x30] sm:$0xf]
  %v2070 = vld [vmem:[%s11 + $0x34] sm:$0xf]
  %v2071 = vld [vmem:[%s11 + $0x38] sm:$0xf]
  %v2072 = vld [vmem:[%s11 + $0x3c] sm:$0xf]
  %v2073 = vld [vmem:[%s12] sm:$0x1]
  %v2075 = vlaneseq
  %v2076 = vshrl.u32 %v2075, 7
  %v2077 = vsub.s32 0, %v2076
  %v2078 = vrot.slane %v2073, %v2077
  %v2096 = vunpack.c.l.b16 %v2057
  %v2097 = vunpack.c.l.b16 %v2058
  %v2098 = vunpack.c.l.b16 %v2059
  %v2099 = vunpack.c.l.b16 %v2060
  %v2100 = vunpack.c.l.b16 %v2061
  %v2101 = vunpack.c.l.b16 %v2062
  %v2102 = vunpack.c.l.b16 %v2063
  %v2103 = vunpack.c.l.b16 %v2064
  %v2104 = vunpack.c.l.b16 %v2065
  %v2105 = vunpack.c.l.b16 %v2066
  %v2106 = vunpack.c.l.b16 %v2067
  %v2107 = vunpack.c.l.b16 %v2068
  %v2108 = vunpack.c.l.b16 %v2069
  %v2109 = vunpack.c.l.b16 %v2070
  %v2110 = vunpack.c.l.b16 %v2071
  %v2111 = vunpack.c.l.b16 %v2072
  %v2112 = vpack.c.b16 %v2097, %v2096
  %v2113 = vpack.c.b16 %v2099, %v2098
  %v2114 = vpack.c.b16 %v2101, %v2100
  %v2115 = vpack.c.b16 %v2103, %v2102
  %v2116 = vpack.c.b16 %v2105, %v2104
  %v2117 = vpack.c.b16 %v2107, %v2106
  %v2118 = vpack.c.b16 %v2109, %v2108
  %v2119 = vpack.c.b16 %v2111, %v2110
  %2128 = vmatprep.subr.bf16.mxu0 0
  %2129 = vmatpush1.bf16.msra.mxu0 %v2112
  %2130 = vmatprep.subr.bf16.mxu0 0
  %2131 = vmatpush1.bf16.msra.mxu0 %v2113
  %2132 = vmatprep.subr.bf16.mxu0 0
  %2133 = vmatpush1.bf16.msra.mxu0 %v2114
  %2134 = vmatprep.subr.bf16.mxu0 0
  %2135 = vmatpush1.bf16.msra.mxu0 %v2115
  %2136 = vmatprep.subr.bf16.mxu0 0
  %2137 = vmatpush1.bf16.msra.mxu0 %v2116
  %2138 = vmatprep.subr.bf16.mxu0 0
  %2139 = vmatpush1.bf16.msra.mxu0 %v2117
  %2140 = vmatprep.subr.bf16.mxu0 0
  %2141 = vmatpush1.bf16.msra.mxu0 %v2118
  %2142 = vmatprep.subr.bf16.mxu0 0
  %2143 = vmatpush1.bf16.msra.mxu0 %v2119
  %2144 = vmatprep.subr.bf16.mxu0 0
  %2145 = vmatpush1.bf16.msra.mxu0 0
  %2146 = vmatprep.subr.bf16.mxu0 0
  %2147 = vmatpush1.bf16.msra.mxu0 0
  %2148 = vmatprep.subr.bf16.mxu0 0
  %2149 = vmatpush1.bf16.msra.mxu0 0
  %2150 = vmatprep.subr.bf16.mxu0 0
  %2151 = vmatpush1.bf16.msra.mxu0 0
  %2152 = vmatprep.subr.bf16.mxu0 0
  %2153 = vmatpush1.bf16.msra.mxu0 0
  %2154 = vmatprep.subr.bf16.mxu0 0
  %2155 = vmatpush1.bf16.msra.mxu0 0
  %2156 = vmatprep.subr.bf16.mxu0 0
  %2157 = vmatpush1.bf16.msra.mxu0 0
  %2158 = vmatprep.subr.bf16.mxu0 0
  %2159 = vmatpush1.bf16.msra.mxu0 0
  %2160 = vmatprep.mubr.bf16.mxu0 0
  %2161 = vmatmul.mubr.bf16.gmra.mrb[0].mxu0 %v2055
  %v2162 = vpop.f32.mrb[0].mxu0
  %v2163 = vadd.f32 %v2078, %v2162
  %v2164 = vpop.f32.mrb[0].mxu0
  %v2165 = vpop.f32.mrb[0].mxu0
  %v2166 = vadd.f32 %v2078, %v2165
  %v2167 = vpop.f32.mrb[0].mxu0
  %2168 = vmatprep.mubr.bf16.mxu0 0
  %2169 = vmatmul.mubr.bf16.gmra.mrb[0].mxu0 %v2056
  %v2170 = vpop.f32.mrb[0].mxu0
  %v2171 = vadd.f32 %v2078, %v2170
  %v2172 = vpop.f32.mrb[0].mxu0
  %v2173 = vpop.f32.mrb[0].mxu0
  %v2174 = vadd.f32 %v2078, %v2173
  %v2175 = vpop.f32.mrb[0].mxu0
  %2176 = vdwg.mxu0
  %v2177 = vld [vmem:[%s13] sm:$0x1]
  %v2178 = vld [vmem:[%s14] sm:$0x1]
  %v2179 = vsel %vm129, %v2163, 0.0
  %2180 = vadd.xlane.f32.xlu0 %v2179
  %v2181 = vpop.xlane.xlu0 %2180
  %v2182 = vsel %vm129, %v2166, 0.0
  %2183 = vadd.xlane.f32.xlu0 %v2182
  %v2184 = vpop.xlane.xlu0 %2183
  %v2185 = vsel %vm129, %v2171, 0.0
  %2186 = vadd.xlane.f32.xlu0 %v2185
  %v2187 = vpop.xlane.xlu0 %2186
  %v2188 = vsel %vm129, %v2174, 0.0
  %2189 = vadd.xlane.f32.xlu0 %v2188
  %v2190 = vpop.xlane.xlu0 %2189
  %v2191 = vmul.f32 %v2181, %v1786
  %v2192 = vmul.f32 %v2184, %v1786
  %v2193 = vmul.f32 %v2187, %v1786
  %v2194 = vmul.f32 %v2190, %v1786
  %v2195 = vsub.f32 %v2163, %v2191
  %v2196 = vsub.f32 %v2166, %v2192
  %v2197 = vsub.f32 %v2171, %v2193
  %v2198 = vsub.f32 %v2174, %v2194
  %v2199 = vmul.f32 %v2195, %v2195
  %v2200 = vmul.f32 %v2196, %v2196
  %v2201 = vmul.f32 %v2197, %v2197
  %v2202 = vmul.f32 %v2198, %v2198
  %v2203 = vsel %vm129, %v2199, 0.0
  %2204 = vadd.xlane.f32.xlu0 %v2203
  %v2205 = vpop.xlane.xlu0 %2204
  %v2206 = vsel %vm129, %v2200, 0.0
  %2207 = vadd.xlane.f32.xlu0 %v2206
  %v2208 = vpop.xlane.xlu0 %2207
  %v2209 = vsel %vm129, %v2201, 0.0
  %2210 = vadd.xlane.f32.xlu0 %v2209
  %v2211 = vpop.xlane.xlu0 %2210
  %v2212 = vsel %vm129, %v2202, 0.0
  %2213 = vadd.xlane.f32.xlu0 %v2212
  %v2214 = vpop.xlane.xlu0 %2213
  %v2215 = vmul.f32 %v2205, %v1786
  %v2216 = vmul.f32 %v2208, %v1786
  %v2217 = vmul.f32 %v2211, %v1786
  %v2218 = vmul.f32 %v2214, %v1786
  %v2219 = vadd.f32 %v2215, 1e-05
  %v2220 = vadd.f32 %v2216, 1e-05
  %v2221 = vadd.f32 %v2217, 1e-05
  %v2222 = vadd.f32 %v2218, 1e-05
  %v2223 = vrsqrt.pop %v2219
  %v2224 = vrsqrt.pop %v2220
  %v2225 = vrsqrt.pop %v2221
  %v2226 = vrsqrt.pop %v2222
  %v2227 = vmul.f32 %v2195, %v2223
  %v2228 = vmul.f32 %v2196, %v2224
  %v2229 = vmul.f32 %v2197, %v2225
  %v2230 = vmul.f32 %v2198, %v2226
  %v2232 = vlaneseq
  %v2233 = vshrl.u32 %v2232, 7
  %v2234 = vsub.s32 0, %v2233
  %v2235 = vrot.slane %v2177, %v2234
  %v2237 = vmul.f32 %v2227, %v2235
  %v2238 = vmul.f32 %v2228, %v2235
  %v2239 = vmul.f32 %v2229, %v2235
  %v2240 = vmul.f32 %v2230, %v2235
  %v2242 = vlaneseq
  %v2243 = vshrl.u32 %v2242, 7
  %v2244 = vsub.s32 0, %v2243
  %v2245 = vrot.slane %v2178, %v2244
  %v2247 = vadd.f32 %v2237, %v2245
  %v2248 = vadd.f32 %v2238, %v2245
  %v2249 = vadd.f32 %v2239, %v2245
  %v2250 = vadd.f32 %v2240, %v2245
  %v2251 = vadd.f32 %v1847, %v2247
  %v2252 = vadd.f32 %v1848, %v2248
  %v2253 = vadd.f32 %v1849, %v2249
  %v2254 = vadd.f32 %v1850, %v2250
  %v2255 = vpack.c.bf16 %v2252, %v2251
  %v2256 = vpack.c.bf16 %v2254, %v2253
  %v2259 = vunpack.c.l.b16 %v2255
  %v2260 = vunpack.c.h.b16 %v2255
  %v2261 = vunpack.c.l.b16 %v2256
  %v2262 = vunpack.c.h.b16 %v2256
  %v2263 = vpack.c.b16 %v2259, %v2259
  %v2264 = vpack.c.b16 %v2260, %v2260
  %v2265 = vpack.c.b16 %v2261, %v2261
  %v2266 = vpack.c.b16 %v2262, %v2262
  %vm2271 = vcmask 519168
  %2272 = vst.msk [vmem:[%s15] sm:$0xf] %vm2271, %v2263
  %2273 = vst.msk [vmem:[%s15 + $0x4] sm:$0xf] %vm2271, %v2264
  %2274 = vst.msk [vmem:[%s15 + $0x8] sm:$0xf] %vm2271, %v2265
  %2275 = vst.msk [vmem:[%s15 + $0xc] sm:$0xf] %vm2271, %v2266
  // Predicated region
  $region62: #{swinv2_forward.11} parent=0 // pred_check
    _
  $region63: #{swinv2_forward.11} parent=0 // pred_check_branch
    %2277 = sbr.rel (0) target = $region65
  $region64: #{swinv2_forward.11} parent=0 // pred_region
    _
  $region65: #{swinv2_forward.11} parent=0 // pred_fallthru
    _
  // Predicated region
  $region66: #{swinv2_forward.11} parent=0 // pred_check
    _
  $region67: #{swinv2_forward.11} parent=0 // pred_check_branch
    %2279 = sbr.rel (0) target = $region69
  $region68: #{swinv2_forward.11} parent=0 // pred_region
    _
  $region69: #{swinv2_forward.11} parent=0 // pred_fallthru
    _

</llo_original>
